<compile_context>
chip_gen: v6e
topology: v6e:2x2x1
jax: 0.10.0
libtpu: 0.0.40
codegen_flags: <defaults>
</compile_context>

<pallas_src>
import jax
import jax.numpy as jnp
from jax import lax
from jax.experimental import pallas as pl
from jax.experimental.pallas import tpu as pltpu


# ----------------------------------------------------------------------------
# In-kernel helpers
# ----------------------------------------------------------------------------
def _column_slabs(x_ref, width):
    """Padded (Hp, width+2, C) ref -> 3 column-shifted slabs of shape (Hp*width, C).

    Tap (dy, dx) of a 3x3 (or polyphase 2x2) conv is then an 8-aligned row slice
    of slab dx, so no per-tap relayout and no HBM im2col is ever materialized.
    """
    Hp = x_ref.shape[0]
    C = x_ref.shape[2]
    return [x_ref[:, s:s + width, :].reshape(Hp * width, C) for s in range(3)]


def _make_stem_kernel(H, W):
    """3x3 'same' conv, no activation (the following ResBlock applies ReLU)."""
    def kernel(x_ref, w_ref, b_ref, o_ref):
        M = H * W
        Cout = o_ref.shape[-1]
        slabs = _column_slabs(x_ref, W)
        acc = jnp.zeros((M, Cout), jnp.float32)
        for dy in range(3):
            for dx in range(3):
                acc = acc + lax.dot_general(
                    slabs[dx][dy * W: dy * W + M, :], w_ref[dy, dx],
                    (((1,), (0,)), ((), ())),
                    preferred_element_type=jnp.float32)
        o_ref[...] = acc + b_ref[...]
    return kernel


def _make_resblock_kernel(H, W):
    """Fused ResBlock: relu -> 3x3 conv -> relu -> 1x1 conv -> + identity."""
    def kernel(x_ref, w1_ref, b1_ref, w2_ref, b2_ref, o_ref):
        M = H * W
        rh = b1_ref.shape[-1]
        raw = _column_slabs(x_ref, W)                 # un-relu'd (for identity)
        ident = raw[1][W: W + M, :]                   # center tap == identity
        slabs = [jnp.maximum(s, 0.0) for s in raw]    # ResBlock relu's its input
        acc = jnp.zeros((M, rh), jnp.float32)
        for dy in range(3):
            for dx in range(3):
                acc = acc + lax.dot_general(
                    slabs[dx][dy * W: dy * W + M, :], w1_ref[dy, dx],
                    (((1,), (0,)), ((), ())),
                    preferred_element_type=jnp.float32)
        r = jnp.maximum(acc + b1_ref[...], 0.0)       # relu(conv3x3 + b1)
        out = lax.dot_general(r, w2_ref[...], (((1,), (0,)), ((), ())),
                              preferred_element_type=jnp.float32)
        o_ref[...] = out + b2_ref[...] + ident
    return kernel


def _make_convt_kernel(Hi, Wi, relu_in, relu_out, transpose_out):
    """ConvTranspose2d(k=4, s=2, p=1) via polyphase: 4 independent 2x2 convs.

    Phase (py, px) output pixel (i, j) = sum_{d,e in {0,1}}
        P[i+py+d, j+px+e, :] @ W[:, :, 3-py-2d, 3-px-2e]
    where P is the input padded by 1.  transpose_out=True accumulates (Co, M)
    so the store is lane-dense (used for the final Cout=3 layer).
    """
    def kernel(x_ref, w_ref, b_ref, o_ref):
        Hp = x_ref.shape[0]
        Ci = x_ref.shape[2]
        M = Hi * Wi
        slabs = _column_slabs(x_ref, Wi)
        if relu_in:
            slabs = [jnp.maximum(s, 0.0) for s in slabs]
        for py in range(2):
            for px in range(2):
                if transpose_out:
                    Co = o_ref.shape[2]
                    acc = jnp.zeros((Co, M), jnp.float32)
                else:
                    Co = o_ref.shape[3]
                    acc = jnp.zeros((M, Co), jnp.float32)
                for d in range(2):
                    for e in range(2):
                        xt = slabs[px + e][(py + d) * Wi: (py + d) * Wi + M, :]
                        wt = w_ref[3 - py - 2 * d, 3 - px - 2 * e]
                        if transpose_out:   # (Co,Ci) x (M,Ci)^T -> (Co, M)
                            acc = acc + lax.dot_general(
                                wt, xt, (((1,), (1,)), ((), ())),
                                preferred_element_type=jnp.float32)
                        else:               # (M,Ci) x (Ci,Co) -> (M, Co)
                            acc = acc + lax.dot_general(
                                xt, wt, (((1,), (0,)), ((), ())),
                                preferred_element_type=jnp.float32)
                acc = acc + b_ref[...]
                if relu_out:
                    acc = jnp.maximum(acc, 0.0)
                o_ref[py, px, :, :] = acc
    return kernel


# ----------------------------------------------------------------------------
# pallas_call wrappers (grid over batch; weights resident via constant index)
# ----------------------------------------------------------------------------
def _batch_spec(per_image_shape):
    nd = len(per_image_shape)
    return pl.BlockSpec((None,) + tuple(per_image_shape),
                        lambda n: (n,) + (0,) * nd)


def _const_spec(shape):
    nd = len(shape)
    return pl.BlockSpec(tuple(shape), lambda n: (0,) * nd)


_PARALLEL = pltpu.CompilerParams(dimension_semantics=("parallel",))


def _stem(zp, w, b, H, W):
    N, Hp, Wp, Ce = zp.shape
    nh = w.shape[-1]
    M = H * W
    return pl.pallas_call(
        _make_stem_kernel(H, W),
        out_shape=jax.ShapeDtypeStruct((N, M, nh), jnp.float32),
        grid=(N,),
        in_specs=[_batch_spec((Hp, Wp, Ce)),
                  _const_spec(w.shape), _const_spec(b.shape)],
        out_specs=_batch_spec((M, nh)),
        compiler_params=_PARALLEL,
    )(zp, w, b)


def _resblock(xp, w1, b1, w2, b2, H, W):
    N, Hp, Wp, C = xp.shape
    nh = b2.shape[-1]
    M = H * W
    return pl.pallas_call(
        _make_resblock_kernel(H, W),
        out_shape=jax.ShapeDtypeStruct((N, M, nh), jnp.float32),
        grid=(N,),
        in_specs=[_batch_spec((Hp, Wp, C)),
                  _const_spec(w1.shape), _const_spec(b1.shape),
                  _const_spec(w2.shape), _const_spec(b2.shape)],
        out_specs=_batch_spec((M, nh)),
        compiler_params=_PARALLEL,
    )(xp, w1, b1, w2, b2)


def _convt(xp, w, b, Hi, Wi, *, relu_in, relu_out, transpose_out):
    N, Hp, Wp, Ci = xp.shape
    M = Hi * Wi
    if transpose_out:
        Co = w.shape[2]
        per_img = (2, 2, Co, M)
    else:
        Co = w.shape[3]
        per_img = (2, 2, M, Co)
    return pl.pallas_call(
        _make_convt_kernel(Hi, Wi, relu_in, relu_out, transpose_out),
        out_shape=jax.ShapeDtypeStruct((N,) + per_img, jnp.float32),
        grid=(N,),
        in_specs=[_batch_spec((Hp, Wp, Ci)),
                  _const_spec(w.shape), _const_spec(b.shape)],
        out_specs=_batch_spec(per_img),
        compiler_params=_PARALLEL,
    )(xp, w, b)


# ----------------------------------------------------------------------------
# Decoder forward (Pallas kernels + thin XLA glue for pads / phase interleave)
# ----------------------------------------------------------------------------
def decoder_forward(params, z_nchw):
    z = jnp.transpose(z_nchw, (0, 2, 3, 1)).astype(jnp.float32)   # NCHW -> NHWC
    N, H, W, _ = z.shape
    assert W % 8 == 0, "latent width must be a multiple of 8 (VQ-VAE latents are)"
    nh = params["b0"].shape[-1]

    def pad1(x):
        return jnp.pad(x, ((0, 0), (1, 1), (1, 1), (0, 0)))

    # initial 3x3 "same" conv
    h = _stem(pad1(z), params["w0"], params["b0"], H, W).reshape(N, H, W, nh)

    # two fused ResBlocks
    for r in ("r1", "r2"):
        h = _resblock(pad1(h), params[f"{r}_w1"], params[f"{r}_b1"],
                      params[f"{r}_w2"], params[f"{r}_b2"], H, W)
        h = h.reshape(N, H, W, nh)

    # ReLU + ConvTranspose2d(nh, nh//2, 4, 2, 1) + ReLU  (both relus fused)
    nh2 = params["t1_b"].shape[-1]
    t1 = _convt(pad1(h), params["t1_w"], params["t1_b"], H, W,
                relu_in=True, relu_out=True, transpose_out=False)
    H2, W2 = 2 * H, 2 * W
    h = (t1.reshape(N, 2, 2, H, W, nh2)
           .transpose(0, 3, 1, 4, 2, 5)          # interleave polyphase outputs
           .reshape(N, H2, W2, nh2))

    # ConvTranspose2d(nh//2, 3, 4, 2, 1): lane-dense (Cout, M) output -> NCHW
    co = params["t2_b"].shape[0]
    t2 = _convt(pad1(h), params["t2_w"], params["t2_b"], H2, W2,
                relu_in=False, relu_out=False, transpose_out=True)
    H4, W4 = 2 * H2, 2 * W2
    out = (t2.reshape(N, 2, 2, co, H2, W2)
             .transpose(0, 3, 4, 1, 5, 2)
             .reshape(N, co, H4, W4))            # already NCHW
    return out


# ----------------------------------------------------------------------------
# Deterministic parameter init (PyTorch tensor layouts) + kernel-layout convert
# ----------------------------------------------------------------------------
def init_raw_params(key, embed_dim=4, n_hidden=32, res_hidden=8, output_dim=3):
    ks = jax.random.split(key, 16)

    def cw(k, cout, cin, kh, kw):
        fan_in = cin * kh * kw
        return jax.random.normal(k, (cout, cin, kh, kw), jnp.float32) / jnp.sqrt(fan_in)

    def ctw(k, cin, cout, kh, kw):
        fan_in = cin * kh * kw
        return jax.random.normal(k, (cin, cout, kh, kw), jnp.float32) / jnp.sqrt(fan_in)

    def bias(k, c):
        return 0.1 * jax.random.normal(k, (c,), jnp.float32)

    return dict(
        w0=cw(ks[0], n_hidden, embed_dim, 3, 3), b0=bias(ks[1], n_hidden),
        r1_w1=cw(ks[2], res_hidden, n_hidden, 3, 3), r1_b1=bias(ks[3], res_hidden),
        r1_w2=cw(ks[4], n_hidden, res_hidden, 1, 1), r1_b2=bias(ks[5], n_hidden),
        r2_w1=cw(ks[6], res_hidden, n_hidden, 3, 3), r2_b1=bias(ks[7], res_hidden),
        r2_w2=cw(ks[8], n_hidden, res_hidden, 1, 1), r2_b2=bias(ks[9], n_hidden),
        t1_w=ctw(ks[10], n_hidden, n_hidden // 2, 4, 4), t1_b=bias(ks[11], n_hidden // 2),
        t2_w=ctw(ks[12], n_hidden // 2, output_dim, 4, 4), t2_b=bias(ks[13], output_dim),
    )


def to_kernel_params(raw):
    def conv_taps(w):   # Conv2d (Co, Ci, kh, kw) -> (kh, kw, Ci, Co)
        return jnp.transpose(w, (2, 3, 1, 0))

    p = {
        "w0": conv_taps(raw["w0"]), "b0": raw["b0"].reshape(1, -1),
        # ConvTranspose2d weight (Ci, Co, kh, kw):
        "t1_w": jnp.transpose(raw["t1_w"], (2, 3, 0, 1)),   # (kh, kw, Ci, Co)
        "t1_b": raw["t1_b"].reshape(1, -1),
        "t2_w": jnp.transpose(raw["t2_w"], (2, 3, 1, 0)),   # (kh, kw, Co, Ci)
        "t2_b": raw["t2_b"].reshape(-1, 1),
    }
    for r in ("r1", "r2"):
        p[f"{r}_w1"] = conv_taps(raw[f"{r}_w1"])
        p[f"{r}_b1"] = raw[f"{r}_b1"].reshape(1, -1)
        p[f"{r}_w2"] = jnp.transpose(raw[f"{r}_w2"][:, :, 0, 0], (1, 0))  # (Ci, Co)
        p[f"{r}_b2"] = raw[f"{r}_b2"].reshape(1, -1)
    return p


# ----------------------------------------------------------------------------
# Pure-JAX reference (lax convs) for the correctness check
# ----------------------------------------------------------------------------
def decoder_ref(raw, z_nchw):
    x = jnp.transpose(z_nchw, (0, 2, 3, 1)).astype(jnp.float32)

    def conv(x, w, b, pad):
        w_hwio = jnp.transpose(w, (2, 3, 1, 0))
        y = lax.conv_general_dilated(x, w_hwio, (1, 1), [(pad, pad), (pad, pad)],
                                     dimension_numbers=("NHWC", "HWIO", "NHWC"))
        return y + b.reshape(1, 1, 1, -1)

    def convT(x, w, b):
        w_hwio = jnp.transpose(jnp.flip(w, (2, 3)), (2, 3, 0, 1))
        y = lax.conv_general_dilated(x, w_hwio, (1, 1), [(2, 2), (2, 2)],
                                     lhs_dilation=(2, 2),
                                     dimension_numbers=("NHWC", "HWIO", "NHWC"))
        return y + b.reshape(1, 1, 1, -1)

    def resblock(h, w1, b1, w2, b2):
        r = jax.nn.relu(conv(jax.nn.relu(h), w1, b1, 1))
        return conv(r, w2, b2, 0) + h

    h = conv(x, raw["w0"], raw["b0"], 1)
    h = resblock(h, raw["r1_w1"], raw["r1_b1"], raw["r1_w2"], raw["r1_b2"])
    h = resblock(h, raw["r2_w1"], raw["r2_b1"], raw["r2_w2"], raw["r2_b2"])
    h = jax.nn.relu(h)
    h = jax.nn.relu(convT(h, raw["t1_w"], raw["t1_b"]))
    out = convT(h, raw["t2_w"], raw["t2_b"])
    return jnp.transpose(out, (0, 3, 1, 2))


if __name__ == "__main__":
    key = jax.random.PRNGKey(0)
    kp, kz = jax.random.split(key)

    # embed_dim=4, n_hidden=32, res_hidden=8, loss_type='mse' -> output_dim=3
    raw = init_raw_params(kp, embed_dim=4, n_hidden=32, res_hidden=8, output_dim=3)
    params = to_kernel_params(raw)

    z = jax.random.normal(kz, (2, 4, 8, 8), jnp.float32)   # NCHW latent

    fwd = jax.jit(decoder_forward)
    out = jax.block_until_ready(fwd(params, z))
    assert out.shape == (2, 3, 32, 32), out.shape

    ref = decoder_ref(raw, z)
    err = float(jnp.max(jnp.abs(out - ref)))
    assert jnp.allclose(out, ref, atol=1e-3, rtol=1e-3), f"max abs err {err}"

    print("KERNEL_OK")
</pallas_src>

<mosaic_0001>
module attributes {stable_mosaic.version = 11 : i64} {
  func.func @kernel(%arg0: i32, %arg1: memref<1x10x10x4xf32, #tpu.memory_space<vmem>>, %arg2: memref<3x3x4x32xf32, #tpu.memory_space<vmem>>, %arg3: memref<1x32xf32, #tpu.memory_space<vmem>>, %arg4: memref<1x64x32xf32, #tpu.memory_space<vmem>>) attributes {dimension_semantics = [#tpu.dimension_semantics<parallel>], iteration_bounds = array<i64: 2>, scalar_prefetch = 0 : i64, scratch_operands = 0 : i64, tpu.core_type = #tpu.core_type<tc>, window_params = [{transform_indices = @transform_0, window_bounds = array<i64: 1, 10, 10, 4>}, {pipeline_mode = #tpu.pipeline_mode<synchronous>, transform_indices = @transform_1, window_bounds = array<i64: 3, 3, 4, 32>}, {pipeline_mode = #tpu.pipeline_mode<synchronous>, transform_indices = @transform_2, window_bounds = array<i64: 1, 32>}, {transform_indices = @transform_3, window_bounds = array<i64: 1, 64, 32>}]} {
    %c0 = arith.constant 0 : index
    %c0_0 = arith.constant 0 : index
    %c0_1 = arith.constant 0 : index
    %c0_2 = arith.constant 0 : index
    %0 = vector.load %arg1[%c0, %c0_0, %c0_1, %c0_2] : memref<1x10x10x4xf32, #tpu.memory_space<vmem>>, vector<1x10x8x4xf32>
    %1 = vector.shape_cast %0 : vector<1x10x8x4xf32> to vector<10x8x4xf32>
    %2 = vector.shape_cast %1 : vector<10x8x4xf32> to vector<80x4xf32>
    %c0_3 = arith.constant 0 : index
    %c0_4 = arith.constant 0 : index
    %c1 = arith.constant 1 : index
    %c0_5 = arith.constant 0 : index
    %3 = vector.load %arg1[%c0_3, %c0_4, %c1, %c0_5] : memref<1x10x10x4xf32, #tpu.memory_space<vmem>>, vector<1x10x8x4xf32>
    %4 = vector.shape_cast %3 : vector<1x10x8x4xf32> to vector<10x8x4xf32>
    %5 = vector.shape_cast %4 : vector<10x8x4xf32> to vector<80x4xf32>
    %c0_6 = arith.constant 0 : index
    %c0_7 = arith.constant 0 : index
    %c2 = arith.constant 2 : index
    %c0_8 = arith.constant 0 : index
    %6 = vector.load %arg1[%c0_6, %c0_7, %c2, %c0_8] : memref<1x10x10x4xf32, #tpu.memory_space<vmem>>, vector<1x10x8x4xf32>
    %7 = vector.shape_cast %6 : vector<1x10x8x4xf32> to vector<10x8x4xf32>
    %8 = vector.shape_cast %7 : vector<10x8x4xf32> to vector<80x4xf32>
    %cst = arith.constant 0.000000e+00 : f32
    %9 = vector.broadcast %cst : f32 to vector<64x32xf32>
    %10 = vector.extract_strided_slice %2 {offsets = [0, 0], sizes = [64, 4], strides = [1, 1]} : vector<80x4xf32> to vector<64x4xf32>
    %c0_9 = arith.constant 0 : index
    %c0_10 = arith.constant 0 : index
    %c0_11 = arith.constant 0 : index
    %c0_12 = arith.constant 0 : index
    %11 = vector.load %arg2[%c0_9, %c0_10, %c0_11, %c0_12] : memref<3x3x4x32xf32, #tpu.memory_space<vmem>>, vector<1x1x4x32xf32>
    %12 = vector.shape_cast %11 : vector<1x1x4x32xf32> to vector<4x32xf32>
    %cst_13 = arith.constant dense<0.000000e+00> : vector<64x32xf32>
    %13 = tpu.matmul %10, %12, %cst_13 {dimension_numbers = #tpu.dot_dimension_numbers<[1], [0], [0], [1], [0, 0, 1, 1], [], []>} : vector<64x4xf32>, vector<4x32xf32>, vector<64x32xf32> -> vector<64x32xf32>
    %14 = arith.addf %9, %13 : vector<64x32xf32>
    %15 = vector.extract_strided_slice %5 {offsets = [0, 0], sizes = [64, 4], strides = [1, 1]} : vector<80x4xf32> to vector<64x4xf32>
    %c0_14 = arith.constant 0 : index
    %c1_15 = arith.constant 1 : index
    %c0_16 = arith.constant 0 : index
    %c0_17 = arith.constant 0 : index
    %16 = vector.load %arg2[%c0_14, %c1_15, %c0_16, %c0_17] : memref<3x3x4x32xf32, #tpu.memory_space<vmem>>, vector<1x1x4x32xf32>
    %17 = vector.shape_cast %16 : vector<1x1x4x32xf32> to vector<4x32xf32>
    %cst_18 = arith.constant dense<0.000000e+00> : vector<64x32xf32>
    %18 = tpu.matmul %15, %17, %cst_18 {dimension_numbers = #tpu.dot_dimension_numbers<[1], [0], [0], [1], [0, 0, 1, 1], [], []>} : vector<64x4xf32>, vector<4x32xf32>, vector<64x32xf32> -> vector<64x32xf32>
    %19 = arith.addf %14, %18 : vector<64x32xf32>
    %20 = vector.extract_strided_slice %8 {offsets = [0, 0], sizes = [64, 4], strides = [1, 1]} : vector<80x4xf32> to vector<64x4xf32>
    %c0_19 = arith.constant 0 : index
    %c2_20 = arith.constant 2 : index
    %c0_21 = arith.constant 0 : index
    %c0_22 = arith.constant 0 : index
    %21 = vector.load %arg2[%c0_19, %c2_20, %c0_21, %c0_22] : memref<3x3x4x32xf32, #tpu.memory_space<vmem>>, vector<1x1x4x32xf32>
    %22 = vector.shape_cast %21 : vector<1x1x4x32xf32> to vector<4x32xf32>
    %cst_23 = arith.constant dense<0.000000e+00> : vector<64x32xf32>
    %23 = tpu.matmul %20, %22, %cst_23 {dimension_numbers = #tpu.dot_dimension_numbers<[1], [0], [0], [1], [0, 0, 1, 1], [], []>} : vector<64x4xf32>, vector<4x32xf32>, vector<64x32xf32> -> vector<64x32xf32>
    %24 = arith.addf %19, %23 : vector<64x32xf32>
    %25 = vector.extract_strided_slice %2 {offsets = [8, 0], sizes = [64, 4], strides = [1, 1]} : vector<80x4xf32> to vector<64x4xf32>
    %c1_24 = arith.constant 1 : index
    %c0_25 = arith.constant 0 : index
    %c0_26 = arith.constant 0 : index
    %c0_27 = arith.constant 0 : index
    %26 = vector.load %arg2[%c1_24, %c0_25, %c0_26, %c0_27] : memref<3x3x4x32xf32, #tpu.memory_space<vmem>>, vector<1x1x4x32xf32>
    %27 = vector.shape_cast %26 : vector<1x1x4x32xf32> to vector<4x32xf32>
    %cst_28 = arith.constant dense<0.000000e+00> : vector<64x32xf32>
    %28 = tpu.matmul %25, %27, %cst_28 {dimension_numbers = #tpu.dot_dimension_numbers<[1], [0], [0], [1], [0, 0, 1, 1], [], []>} : vector<64x4xf32>, vector<4x32xf32>, vector<64x32xf32> -> vector<64x32xf32>
    %29 = arith.addf %24, %28 : vector<64x32xf32>
    %30 = vector.extract_strided_slice %5 {offsets = [8, 0], sizes = [64, 4], strides = [1, 1]} : vector<80x4xf32> to vector<64x4xf32>
    %c1_29 = arith.constant 1 : index
    %c1_30 = arith.constant 1 : index
    %c0_31 = arith.constant 0 : index
    %c0_32 = arith.constant 0 : index
    %31 = vector.load %arg2[%c1_29, %c1_30, %c0_31, %c0_32] : memref<3x3x4x32xf32, #tpu.memory_space<vmem>>, vector<1x1x4x32xf32>
    %32 = vector.shape_cast %31 : vector<1x1x4x32xf32> to vector<4x32xf32>
    %cst_33 = arith.constant dense<0.000000e+00> : vector<64x32xf32>
    %33 = tpu.matmul %30, %32, %cst_33 {dimension_numbers = #tpu.dot_dimension_numbers<[1], [0], [0], [1], [0, 0, 1, 1], [], []>} : vector<64x4xf32>, vector<4x32xf32>, vector<64x32xf32> -> vector<64x32xf32>
    %34 = arith.addf %29, %33 : vector<64x32xf32>
    %35 = vector.extract_strided_slice %8 {offsets = [8, 0], sizes = [64, 4], strides = [1, 1]} : vector<80x4xf32> to vector<64x4xf32>
    %c1_34 = arith.constant 1 : index
    %c2_35 = arith.constant 2 : index
    %c0_36 = arith.constant 0 : index
    %c0_37 = arith.constant 0 : index
    %36 = vector.load %arg2[%c1_34, %c2_35, %c0_36, %c0_37] : memref<3x3x4x32xf32, #tpu.memory_space<vmem>>, vector<1x1x4x32xf32>
    %37 = vector.shape_cast %36 : vector<1x1x4x32xf32> to vector<4x32xf32>
    %cst_38 = arith.constant dense<0.000000e+00> : vector<64x32xf32>
    %38 = tpu.matmul %35, %37, %cst_38 {dimension_numbers = #tpu.dot_dimension_numbers<[1], [0], [0], [1], [0, 0, 1, 1], [], []>} : vector<64x4xf32>, vector<4x32xf32>, vector<64x32xf32> -> vector<64x32xf32>
    %39 = arith.addf %34, %38 : vector<64x32xf32>
    %40 = vector.extract_strided_slice %2 {offsets = [16, 0], sizes = [64, 4], strides = [1, 1]} : vector<80x4xf32> to vector<64x4xf32>
    %c2_39 = arith.constant 2 : index
    %c0_40 = arith.constant 0 : index
    %c0_41 = arith.constant 0 : index
    %c0_42 = arith.constant 0 : index
    %41 = vector.load %arg2[%c2_39, %c0_40, %c0_41, %c0_42] : memref<3x3x4x32xf32, #tpu.memory_space<vmem>>, vector<1x1x4x32xf32>
    %42 = vector.shape_cast %41 : vector<1x1x4x32xf32> to vector<4x32xf32>
    %cst_43 = arith.constant dense<0.000000e+00> : vector<64x32xf32>
    %43 = tpu.matmul %40, %42, %cst_43 {dimension_numbers = #tpu.dot_dimension_numbers<[1], [0], [0], [1], [0, 0, 1, 1], [], []>} : vector<64x4xf32>, vector<4x32xf32>, vector<64x32xf32> -> vector<64x32xf32>
    %44 = arith.addf %39, %43 : vector<64x32xf32>
    %45 = vector.extract_strided_slice %5 {offsets = [16, 0], sizes = [64, 4], strides = [1, 1]} : vector<80x4xf32> to vector<64x4xf32>
    %c2_44 = arith.constant 2 : index
    %c1_45 = arith.constant 1 : index
    %c0_46 = arith.constant 0 : index
    %c0_47 = arith.constant 0 : index
    %46 = vector.load %arg2[%c2_44, %c1_45, %c0_46, %c0_47] : memref<3x3x4x32xf32, #tpu.memory_space<vmem>>, vector<1x1x4x32xf32>
    %47 = vector.shape_cast %46 : vector<1x1x4x32xf32> to vector<4x32xf32>
    %cst_48 = arith.constant dense<0.000000e+00> : vector<64x32xf32>
    %48 = tpu.matmul %45, %47, %cst_48 {dimension_numbers = #tpu.dot_dimension_numbers<[1], [0], [0], [1], [0, 0, 1, 1], [], []>} : vector<64x4xf32>, vector<4x32xf32>, vector<64x32xf32> -> vector<64x32xf32>
    %49 = arith.addf %44, %48 : vector<64x32xf32>
    %50 = vector.extract_strided_slice %8 {offsets = [16, 0], sizes = [64, 4], strides = [1, 1]} : vector<80x4xf32> to vector<64x4xf32>
    %c2_49 = arith.constant 2 : index
    %c2_50 = arith.constant 2 : index
    %c0_51 = arith.constant 0 : index
    %c0_52 = arith.constant 0 : index
    %51 = vector.load %arg2[%c2_49, %c2_50, %c0_51, %c0_52] : memref<3x3x4x32xf32, #tpu.memory_space<vmem>>, vector<1x1x4x32xf32>
    %52 = vector.shape_cast %51 : vector<1x1x4x32xf32> to vector<4x32xf32>
    %cst_53 = arith.constant dense<0.000000e+00> : vector<64x32xf32>
    %53 = tpu.matmul %50, %52, %cst_53 {dimension_numbers = #tpu.dot_dimension_numbers<[1], [0], [0], [1], [0, 0, 1, 1], [], []>} : vector<64x4xf32>, vector<4x32xf32>, vector<64x32xf32> -> vector<64x32xf32>
    %54 = arith.addf %49, %53 : vector<64x32xf32>
    %c0_54 = arith.constant 0 : index
    %c0_55 = arith.constant 0 : index
    %55 = vector.load %arg3[%c0_54, %c0_55] : memref<1x32xf32, #tpu.memory_space<vmem>>, vector<1x32xf32>
    %56 = vector.broadcast %55 : vector<1x32xf32> to vector<64x32xf32>
    %57 = arith.addf %54, %56 : vector<64x32xf32>
    %c0_56 = arith.constant 0 : index
    %c0_57 = arith.constant 0 : index
    %c0_58 = arith.constant 0 : index
    %58 = vector.load %arg4[%c0_56, %c0_57, %c0_58] : memref<1x64x32xf32, #tpu.memory_space<vmem>>, vector<1x64x32xf32>
    %59 = vector.shape_cast %58 : vector<1x64x32xf32> to vector<64x32xf32>
    %60 = vector.shape_cast %57 : vector<64x32xf32> to vector<1x64x32xf32>
    tpu.vector_store %arg4[%c0_56, %c0_57, %c0_58], %60 {strides = array<i32>} : memref<1x64x32xf32, #tpu.memory_space<vmem>>, vector<1x64x32xf32>,
    return
  }
  func.func @transform_0(%arg0: i32) -> (i32, i32, i32, i32) {
    %c0_i32 = arith.constant 0 : i32
    %c0_i32_0 = arith.constant 0 : i32
    %c0_i32_1 = arith.constant 0 : i32
    %c0_i32_2 = arith.constant 0 : i32
    return %arg0, %c0_i32, %c0_i32_0, %c0_i32_1 : i32, i32, i32, i32
  }
  func.func @transform_1(%arg0: i32) -> (i32, i32, i32, i32) {
    %c0_i32 = arith.constant 0 : i32
    %c0_i32_0 = arith.constant 0 : i32
    %c0_i32_1 = arith.constant 0 : i32
    %c0_i32_2 = arith.constant 0 : i32
    %c0_i32_3 = arith.constant 0 : i32
    return %c0_i32, %c0_i32_0, %c0_i32_1, %c0_i32_2 : i32, i32, i32, i32
  }
  func.func @transform_2(%arg0: i32) -> (i32, i32) {
    %c0_i32 = arith.constant 0 : i32
    %c0_i32_0 = arith.constant 0 : i32
    %c0_i32_1 = arith.constant 0 : i32
    return %c0_i32, %c0_i32_0 : i32, i32
  }
  func.func @transform_3(%arg0: i32) -> (i32, i32, i32) {
    %c0_i32 = arith.constant 0 : i32
    %c0_i32_0 = arith.constant 0 : i32
    %c0_i32_1 = arith.constant 0 : i32
    return %arg0, %c0_i32, %c0_i32_0 : i32, i32, i32
  }
}

module attributes {stable_mosaic.version = 11 : i64} {
  func.func @kernel(%arg0: i32, %arg1: memref<1x10x10x32xf32, #tpu.memory_space<vmem>>, %arg2: memref<3x3x32x8xf32, #tpu.memory_space<vmem>>, %arg3: memref<1x8xf32, #tpu.memory_space<vmem>>, %arg4: memref<8x32xf32, #tpu.memory_space<vmem>>, %arg5: memref<1x32xf32, #tpu.memory_space<vmem>>, %arg6: memref<1x64x32xf32, #tpu.memory_space<vmem>>) attributes {dimension_semantics = [#tpu.dimension_semantics<parallel>], iteration_bounds = array<i64: 2>, scalar_prefetch = 0 : i64, scratch_operands = 0 : i64, tpu.core_type = #tpu.core_type<tc>, window_params = [{transform_indices = @transform_0, window_bounds = array<i64: 1, 10, 10, 32>}, {pipeline_mode = #tpu.pipeline_mode<synchronous>, transform_indices = @transform_1, window_bounds = array<i64: 3, 3, 32, 8>}, {pipeline_mode = #tpu.pipeline_mode<synchronous>, transform_indices = @transform_2, window_bounds = array<i64: 1, 8>}, {pipeline_mode = #tpu.pipeline_mode<synchronous>, transform_indices = @transform_3, window_bounds = array<i64: 8, 32>}, {pipeline_mode = #tpu.pipeline_mode<synchronous>, transform_indices = @transform_4, window_bounds = array<i64: 1, 32>}, {transform_indices = @transform_5, window_bounds = array<i64: 1, 64, 32>}]} {
    %c0 = arith.constant 0 : index
    %c0_0 = arith.constant 0 : index
    %c0_1 = arith.constant 0 : index
    %c0_2 = arith.constant 0 : index
    %0 = vector.load %arg1[%c0, %c0_0, %c0_1, %c0_2] : memref<1x10x10x32xf32, #tpu.memory_space<vmem>>, vector<1x10x8x32xf32>
    %1 = vector.shape_cast %0 : vector<1x10x8x32xf32> to vector<10x8x32xf32>
    %2 = vector.shape_cast %1 : vector<10x8x32xf32> to vector<80x32xf32>
    %c0_3 = arith.constant 0 : index
    %c0_4 = arith.constant 0 : index
    %c1 = arith.constant 1 : index
    %c0_5 = arith.constant 0 : index
    %3 = vector.load %arg1[%c0_3, %c0_4, %c1, %c0_5] : memref<1x10x10x32xf32, #tpu.memory_space<vmem>>, vector<1x10x8x32xf32>
    %4 = vector.shape_cast %3 : vector<1x10x8x32xf32> to vector<10x8x32xf32>
    %5 = vector.shape_cast %4 : vector<10x8x32xf32> to vector<80x32xf32>
    %c0_6 = arith.constant 0 : index
    %c0_7 = arith.constant 0 : index
    %c2 = arith.constant 2 : index
    %c0_8 = arith.constant 0 : index
    %6 = vector.load %arg1[%c0_6, %c0_7, %c2, %c0_8] : memref<1x10x10x32xf32, #tpu.memory_space<vmem>>, vector<1x10x8x32xf32>
    %7 = vector.shape_cast %6 : vector<1x10x8x32xf32> to vector<10x8x32xf32>
    %8 = vector.shape_cast %7 : vector<10x8x32xf32> to vector<80x32xf32>
    %9 = vector.extract_strided_slice %5 {offsets = [8, 0], sizes = [64, 32], strides = [1, 1]} : vector<80x32xf32> to vector<64x32xf32>
    %cst = arith.constant 0.000000e+00 : f32
    %10 = vector.broadcast %cst : f32 to vector<80x32xf32>
    %11 = arith.maximumf %2, %10 : vector<80x32xf32>
    %cst_9 = arith.constant 0.000000e+00 : f32
    %12 = vector.broadcast %cst_9 : f32 to vector<80x32xf32>
    %13 = arith.maximumf %5, %12 : vector<80x32xf32>
    %cst_10 = arith.constant 0.000000e+00 : f32
    %14 = vector.broadcast %cst_10 : f32 to vector<80x32xf32>
    %15 = arith.maximumf %8, %14 : vector<80x32xf32>
    %cst_11 = arith.constant 0.000000e+00 : f32
    %16 = vector.broadcast %cst_11 : f32 to vector<64x8xf32>
    %17 = vector.extract_strided_slice %11 {offsets = [0, 0], sizes = [64, 32], strides = [1, 1]} : vector<80x32xf32> to vector<64x32xf32>
    %c0_12 = arith.constant 0 : index
    %c0_13 = arith.constant 0 : index
    %c0_14 = arith.constant 0 : index
    %c0_15 = arith.constant 0 : index
    %18 = vector.load %arg2[%c0_12, %c0_13, %c0_14, %c0_15] : memref<3x3x32x8xf32, #tpu.memory_space<vmem>>, vector<1x1x32x8xf32>
    %19 = vector.shape_cast %18 : vector<1x1x32x8xf32> to vector<32x8xf32>
    %cst_16 = arith.constant dense<0.000000e+00> : vector<64x8xf32>
    %20 = tpu.matmul %17, %19, %cst_16 {dimension_numbers = #tpu.dot_dimension_numbers<[1], [0], [0], [1], [0, 0, 1, 1], [], []>} : vector<64x32xf32>, vector<32x8xf32>, vector<64x8xf32> -> vector<64x8xf32>
    %21 = arith.addf %16, %20 : vector<64x8xf32>
    %22 = vector.extract_strided_slice %13 {offsets = [0, 0], sizes = [64, 32], strides = [1, 1]} : vector<80x32xf32> to vector<64x32xf32>
    %c0_17 = arith.constant 0 : index
    %c1_18 = arith.constant 1 : index
    %c0_19 = arith.constant 0 : index
    %c0_20 = arith.constant 0 : index
    %23 = vector.load %arg2[%c0_17, %c1_18, %c0_19, %c0_20] : memref<3x3x32x8xf32, #tpu.memory_space<vmem>>, vector<1x1x32x8xf32>
    %24 = vector.shape_cast %23 : vector<1x1x32x8xf32> to vector<32x8xf32>
    %cst_21 = arith.constant dense<0.000000e+00> : vector<64x8xf32>
    %25 = tpu.matmul %22, %24, %cst_21 {dimension_numbers = #tpu.dot_dimension_numbers<[1], [0], [0], [1], [0, 0, 1, 1], [], []>} : vector<64x32xf32>, vector<32x8xf32>, vector<64x8xf32> -> vector<64x8xf32>
    %26 = arith.addf %21, %25 : vector<64x8xf32>
    %27 = vector.extract_strided_slice %15 {offsets = [0, 0], sizes = [64, 32], strides = [1, 1]} : vector<80x32xf32> to vector<64x32xf32>
    %c0_22 = arith.constant 0 : index
    %c2_23 = arith.constant 2 : index
    %c0_24 = arith.constant 0 : index
    %c0_25 = arith.constant 0 : index
    %28 = vector.load %arg2[%c0_22, %c2_23, %c0_24, %c0_25] : memref<3x3x32x8xf32, #tpu.memory_space<vmem>>, vector<1x1x32x8xf32>
    %29 = vector.shape_cast %28 : vector<1x1x32x8xf32> to vector<32x8xf32>
    %cst_26 = arith.constant dense<0.000000e+00> : vector<64x8xf32>
    %30 = tpu.matmul %27, %29, %cst_26 {dimension_numbers = #tpu.dot_dimension_numbers<[1], [0], [0], [1], [0, 0, 1, 1], [], []>} : vector<64x32xf32>, vector<32x8xf32>, vector<64x8xf32> -> vector<64x8xf32>
    %31 = arith.addf %26, %30 : vector<64x8xf32>
    %32 = vector.extract_strided_slice %11 {offsets = [8, 0], sizes = [64, 32], strides = [1, 1]} : vector<80x32xf32> to vector<64x32xf32>
    %c1_27 = arith.constant 1 : index
    %c0_28 = arith.constant 0 : index
    %c0_29 = arith.constant 0 : index
    %c0_30 = arith.constant 0 : index
    %33 = vector.load %arg2[%c1_27, %c0_28, %c0_29, %c0_30] : memref<3x3x32x8xf32, #tpu.memory_space<vmem>>, vector<1x1x32x8xf32>
    %34 = vector.shape_cast %33 : vector<1x1x32x8xf32> to vector<32x8xf32>
    %cst_31 = arith.constant dense<0.000000e+00> : vector<64x8xf32>
    %35 = tpu.matmul %32, %34, %cst_31 {dimension_numbers = #tpu.dot_dimension_numbers<[1], [0], [0], [1], [0, 0, 1, 1], [], []>} : vector<64x32xf32>, vector<32x8xf32>, vector<64x8xf32> -> vector<64x8xf32>
    %36 = arith.addf %31, %35 : vector<64x8xf32>
    %37 = vector.extract_strided_slice %13 {offsets = [8, 0], sizes = [64, 32], strides = [1, 1]} : vector<80x32xf32> to vector<64x32xf32>
    %c1_32 = arith.constant 1 : index
    %c1_33 = arith.constant 1 : index
    %c0_34 = arith.constant 0 : index
    %c0_35 = arith.constant 0 : index
    %38 = vector.load %arg2[%c1_32, %c1_33, %c0_34, %c0_35] : memref<3x3x32x8xf32, #tpu.memory_space<vmem>>, vector<1x1x32x8xf32>
    %39 = vector.shape_cast %38 : vector<1x1x32x8xf32> to vector<32x8xf32>
    %cst_36 = arith.constant dense<0.000000e+00> : vector<64x8xf32>
    %40 = tpu.matmul %37, %39, %cst_36 {dimension_numbers = #tpu.dot_dimension_numbers<[1], [0], [0], [1], [0, 0, 1, 1], [], []>} : vector<64x32xf32>, vector<32x8xf32>, vector<64x8xf32> -> vector<64x8xf32>
    %41 = arith.addf %36, %40 : vector<64x8xf32>
    %42 = vector.extract_strided_slice %15 {offsets = [8, 0], sizes = [64, 32], strides = [1, 1]} : vector<80x32xf32> to vector<64x32xf32>
    %c1_37 = arith.constant 1 : index
    %c2_38 = arith.constant 2 : index
    %c0_39 = arith.constant 0 : index
    %c0_40 = arith.constant 0 : index
    %43 = vector.load %arg2[%c1_37, %c2_38, %c0_39, %c0_40] : memref<3x3x32x8xf32, #tpu.memory_space<vmem>>, vector<1x1x32x8xf32>
    %44 = vector.shape_cast %43 : vector<1x1x32x8xf32> to vector<32x8xf32>
    %cst_41 = arith.constant dense<0.000000e+00> : vector<64x8xf32>
    %45 = tpu.matmul %42, %44, %cst_41 {dimension_numbers = #tpu.dot_dimension_numbers<[1], [0], [0], [1], [0, 0, 1, 1], [], []>} : vector<64x32xf32>, vector<32x8xf32>, vector<64x8xf32> -> vector<64x8xf32>
    %46 = arith.addf %41, %45 : vector<64x8xf32>
    %47 = vector.extract_strided_slice %11 {offsets = [16, 0], sizes = [64, 32], strides = [1, 1]} : vector<80x32xf32> to vector<64x32xf32>
    %c2_42 = arith.constant 2 : index
    %c0_43 = arith.constant 0 : index
    %c0_44 = arith.constant 0 : index
    %c0_45 = arith.constant 0 : index
    %48 = vector.load %arg2[%c2_42, %c0_43, %c0_44, %c0_45] : memref<3x3x32x8xf32, #tpu.memory_space<vmem>>, vector<1x1x32x8xf32>
    %49 = vector.shape_cast %48 : vector<1x1x32x8xf32> to vector<32x8xf32>
    %cst_46 = arith.constant dense<0.000000e+00> : vector<64x8xf32>
    %50 = tpu.matmul %47, %49, %cst_46 {dimension_numbers = #tpu.dot_dimension_numbers<[1], [0], [0], [1], [0, 0, 1, 1], [], []>} : vector<64x32xf32>, vector<32x8xf32>, vector<64x8xf32> -> vector<64x8xf32>
    %51 = arith.addf %46, %50 : vector<64x8xf32>
    %52 = vector.extract_strided_slice %13 {offsets = [16, 0], sizes = [64, 32], strides = [1, 1]} : vector<80x32xf32> to vector<64x32xf32>
    %c2_47 = arith.constant 2 : index
    %c1_48 = arith.constant 1 : index
    %c0_49 = arith.constant 0 : index
    %c0_50 = arith.constant 0 : index
    %53 = vector.load %arg2[%c2_47, %c1_48, %c0_49, %c0_50] : memref<3x3x32x8xf32, #tpu.memory_space<vmem>>, vector<1x1x32x8xf32>
    %54 = vector.shape_cast %53 : vector<1x1x32x8xf32> to vector<32x8xf32>
    %cst_51 = arith.constant dense<0.000000e+00> : vector<64x8xf32>
    %55 = tpu.matmul %52, %54, %cst_51 {dimension_numbers = #tpu.dot_dimension_numbers<[1], [0], [0], [1], [0, 0, 1, 1], [], []>} : vector<64x32xf32>, vector<32x8xf32>, vector<64x8xf32> -> vector<64x8xf32>
    %56 = arith.addf %51, %55 : vector<64x8xf32>
    %57 = vector.extract_strided_slice %15 {offsets = [16, 0], sizes = [64, 32], strides = [1, 1]} : vector<80x32xf32> to vector<64x32xf32>
    %c2_52 = arith.constant 2 : index
    %c2_53 = arith.constant 2 : index
    %c0_54 = arith.constant 0 : index
    %c0_55 = arith.constant 0 : index
    %58 = vector.load %arg2[%c2_52, %c2_53, %c0_54, %c0_55] : memref<3x3x32x8xf32, #tpu.memory_space<vmem>>, vector<1x1x32x8xf32>
    %59 = vector.shape_cast %58 : vector<1x1x32x8xf32> to vector<32x8xf32>
    %cst_56 = arith.constant dense<0.000000e+00> : vector<64x8xf32>
    %60 = tpu.matmul %57, %59, %cst_56 {dimension_numbers = #tpu.dot_dimension_numbers<[1], [0], [0], [1], [0, 0, 1, 1], [], []>} : vector<64x32xf32>, vector<32x8xf32>, vector<64x8xf32> -> vector<64x8xf32>
    %61 = arith.addf %56, %60 : vector<64x8xf32>
    %c0_57 = arith.constant 0 : index
    %c0_58 = arith.constant 0 : index
    %62 = vector.load %arg3[%c0_57, %c0_58] : memref<1x8xf32, #tpu.memory_space<vmem>>, vector<1x8xf32>
    %63 = vector.broadcast %62 : vector<1x8xf32> to vector<64x8xf32>
    %64 = arith.addf %61, %63 : vector<64x8xf32>
    %cst_59 = arith.constant 0.000000e+00 : f32
    %65 = vector.broadcast %cst_59 : f32 to vector<64x8xf32>
    %66 = arith.maximumf %64, %65 : vector<64x8xf32>
    %c0_60 = arith.constant 0 : index
    %c0_61 = arith.constant 0 : index
    %67 = vector.load %arg4[%c0_60, %c0_61] : memref<8x32xf32, #tpu.memory_space<vmem>>, vector<8x32xf32>
    %cst_62 = arith.constant dense<0.000000e+00> : vector<64x32xf32>
    %68 = tpu.matmul %66, %67, %cst_62 {dimension_numbers = #tpu.dot_dimension_numbers<[1], [0], [0], [1], [0, 0, 1, 1], [], []>} : vector<64x8xf32>, vector<8x32xf32>, vector<64x32xf32> -> vector<64x32xf32>
    %c0_63 = arith.constant 0 : index
    %c0_64 = arith.constant 0 : index
    %69 = vector.load %arg5[%c0_63, %c0_64] : memref<1x32xf32, #tpu.memory_space<vmem>>, vector<1x32xf32>
    %70 = vector.broadcast %69 : vector<1x32xf32> to vector<64x32xf32>
    %71 = arith.addf %68, %70 : vector<64x32xf32>
    %72 = arith.addf %71, %9 : vector<64x32xf32>
    %c0_65 = arith.constant 0 : index
    %c0_66 = arith.constant 0 : index
    %c0_67 = arith.constant 0 : index
    %73 = vector.load %arg6[%c0_65, %c0_66, %c0_67] : memref<1x64x32xf32, #tpu.memory_space<vmem>>, vector<1x64x32xf32>
    %74 = vector.shape_cast %73 : vector<1x64x32xf32> to vector<64x32xf32>
    %75 = vector.shape_cast %72 : vector<64x32xf32> to vector<1x64x32xf32>
    tpu.vector_store %arg6[%c0_65, %c0_66, %c0_67], %75 {strides = array<i32>} : memref<1x64x32xf32, #tpu.memory_space<vmem>>, vector<1x64x32xf32>,
    return
  }
  func.func @transform_0(%arg0: i32) -> (i32, i32, i32, i32) {
    %c0_i32 = arith.constant 0 : i32
    %c0_i32_0 = arith.constant 0 : i32
    %c0_i32_1 = arith.constant 0 : i32
    %c0_i32_2 = arith.constant 0 : i32
    return %arg0, %c0_i32, %c0_i32_0, %c0_i32_1 : i32, i32, i32, i32
  }
  func.func @transform_1(%arg0: i32) -> (i32, i32, i32, i32) {
    %c0_i32 = arith.constant 0 : i32
    %c0_i32_0 = arith.constant 0 : i32
    %c0_i32_1 = arith.constant 0 : i32
    %c0_i32_2 = arith.constant 0 : i32
    %c0_i32_3 = arith.constant 0 : i32
    return %c0_i32, %c0_i32_0, %c0_i32_1, %c0_i32_2 : i32, i32, i32, i32
  }
  func.func @transform_2(%arg0: i32) -> (i32, i32) {
    %c0_i32 = arith.constant 0 : i32
    %c0_i32_0 = arith.constant 0 : i32
    %c0_i32_1 = arith.constant 0 : i32
    return %c0_i32, %c0_i32_0 : i32, i32
  }
  func.func @transform_3(%arg0: i32) -> (i32, i32) {
    %c0_i32 = arith.constant 0 : i32
    %c0_i32_0 = arith.constant 0 : i32
    %c0_i32_1 = arith.constant 0 : i32
    return %c0_i32, %c0_i32_0 : i32, i32
  }
  func.func @transform_4(%arg0: i32) -> (i32, i32) {
    %c0_i32 = arith.constant 0 : i32
    %c0_i32_0 = arith.constant 0 : i32
    %c0_i32_1 = arith.constant 0 : i32
    return %c0_i32, %c0_i32_0 : i32, i32
  }
  func.func @transform_5(%arg0: i32) -> (i32, i32, i32) {
    %c0_i32 = arith.constant 0 : i32
    %c0_i32_0 = arith.constant 0 : i32
    %c0_i32_1 = arith.constant 0 : i32
    return %arg0, %c0_i32, %c0_i32_0 : i32, i32, i32
  }
}

module attributes {stable_mosaic.version = 11 : i64} {
  func.func @kernel(%arg0: i32, %arg1: memref<1x10x10x32xf32, #tpu.memory_space<vmem>>, %arg2: memref<3x3x32x8xf32, #tpu.memory_space<vmem>>, %arg3: memref<1x8xf32, #tpu.memory_space<vmem>>, %arg4: memref<8x32xf32, #tpu.memory_space<vmem>>, %arg5: memref<1x32xf32, #tpu.memory_space<vmem>>, %arg6: memref<1x64x32xf32, #tpu.memory_space<vmem>>) attributes {dimension_semantics = [#tpu.dimension_semantics<parallel>], iteration_bounds = array<i64: 2>, scalar_prefetch = 0 : i64, scratch_operands = 0 : i64, tpu.core_type = #tpu.core_type<tc>, window_params = [{transform_indices = @transform_0, window_bounds = array<i64: 1, 10, 10, 32>}, {pipeline_mode = #tpu.pipeline_mode<synchronous>, transform_indices = @transform_1, window_bounds = array<i64: 3, 3, 32, 8>}, {pipeline_mode = #tpu.pipeline_mode<synchronous>, transform_indices = @transform_2, window_bounds = array<i64: 1, 8>}, {pipeline_mode = #tpu.pipeline_mode<synchronous>, transform_indices = @transform_3, window_bounds = array<i64: 8, 32>}, {pipeline_mode = #tpu.pipeline_mode<synchronous>, transform_indices = @transform_4, window_bounds = array<i64: 1, 32>}, {transform_indices = @transform_5, window_bounds = array<i64: 1, 64, 32>}]} {
    %c0 = arith.constant 0 : index
    %c0_0 = arith.constant 0 : index
    %c0_1 = arith.constant 0 : index
    %c0_2 = arith.constant 0 : index
    %0 = vector.load %arg1[%c0, %c0_0, %c0_1, %c0_2] : memref<1x10x10x32xf32, #tpu.memory_space<vmem>>, vector<1x10x8x32xf32>
    %1 = vector.shape_cast %0 : vector<1x10x8x32xf32> to vector<10x8x32xf32>
    %2 = vector.shape_cast %1 : vector<10x8x32xf32> to vector<80x32xf32>
    %c0_3 = arith.constant 0 : index
    %c0_4 = arith.constant 0 : index
    %c1 = arith.constant 1 : index
    %c0_5 = arith.constant 0 : index
    %3 = vector.load %arg1[%c0_3, %c0_4, %c1, %c0_5] : memref<1x10x10x32xf32, #tpu.memory_space<vmem>>, vector<1x10x8x32xf32>
    %4 = vector.shape_cast %3 : vector<1x10x8x32xf32> to vector<10x8x32xf32>
    %5 = vector.shape_cast %4 : vector<10x8x32xf32> to vector<80x32xf32>
    %c0_6 = arith.constant 0 : index
    %c0_7 = arith.constant 0 : index
    %c2 = arith.constant 2 : index
    %c0_8 = arith.constant 0 : index
    %6 = vector.load %arg1[%c0_6, %c0_7, %c2, %c0_8] : memref<1x10x10x32xf32, #tpu.memory_space<vmem>>, vector<1x10x8x32xf32>
    %7 = vector.shape_cast %6 : vector<1x10x8x32xf32> to vector<10x8x32xf32>
    %8 = vector.shape_cast %7 : vector<10x8x32xf32> to vector<80x32xf32>
    %9 = vector.extract_strided_slice %5 {offsets = [8, 0], sizes = [64, 32], strides = [1, 1]} : vector<80x32xf32> to vector<64x32xf32>
    %cst = arith.constant 0.000000e+00 : f32
    %10 = vector.broadcast %cst : f32 to vector<80x32xf32>
    %11 = arith.maximumf %2, %10 : vector<80x32xf32>
    %cst_9 = arith.constant 0.000000e+00 : f32
    %12 = vector.broadcast %cst_9 : f32 to vector<80x32xf32>
    %13 = arith.maximumf %5, %12 : vector<80x32xf32>
    %cst_10 = arith.constant 0.000000e+00 : f32
    %14 = vector.broadcast %cst_10 : f32 to vector<80x32xf32>
    %15 = arith.maximumf %8, %14 : vector<80x32xf32>
    %cst_11 = arith.constant 0.000000e+00 : f32
    %16 = vector.broadcast %cst_11 : f32 to vector<64x8xf32>
    %17 = vector.extract_strided_slice %11 {offsets = [0, 0], sizes = [64, 32], strides = [1, 1]} : vector<80x32xf32> to vector<64x32xf32>
    %c0_12 = arith.constant 0 : index
    %c0_13 = arith.constant 0 : index
    %c0_14 = arith.constant 0 : index
    %c0_15 = arith.constant 0 : index
    %18 = vector.load %arg2[%c0_12, %c0_13, %c0_14, %c0_15] : memref<3x3x32x8xf32, #tpu.memory_space<vmem>>, vector<1x1x32x8xf32>
    %19 = vector.shape_cast %18 : vector<1x1x32x8xf32> to vector<32x8xf32>
    %cst_16 = arith.constant dense<0.000000e+00> : vector<64x8xf32>
    %20 = tpu.matmul %17, %19, %cst_16 {dimension_numbers = #tpu.dot_dimension_numbers<[1], [0], [0], [1], [0, 0, 1, 1], [], []>} : vector<64x32xf32>, vector<32x8xf32>, vector<64x8xf32> -> vector<64x8xf32>
    %21 = arith.addf %16, %20 : vector<64x8xf32>
    %22 = vector.extract_strided_slice %13 {offsets = [0, 0], sizes = [64, 32], strides = [1, 1]} : vector<80x32xf32> to vector<64x32xf32>
    %c0_17 = arith.constant 0 : index
    %c1_18 = arith.constant 1 : index
    %c0_19 = arith.constant 0 : index
    %c0_20 = arith.constant 0 : index
    %23 = vector.load %arg2[%c0_17, %c1_18, %c0_19, %c0_20] : memref<3x3x32x8xf32, #tpu.memory_space<vmem>>, vector<1x1x32x8xf32>
    %24 = vector.shape_cast %23 : vector<1x1x32x8xf32> to vector<32x8xf32>
    %cst_21 = arith.constant dense<0.000000e+00> : vector<64x8xf32>
    %25 = tpu.matmul %22, %24, %cst_21 {dimension_numbers = #tpu.dot_dimension_numbers<[1], [0], [0], [1], [0, 0, 1, 1], [], []>} : vector<64x32xf32>, vector<32x8xf32>, vector<64x8xf32> -> vector<64x8xf32>
    %26 = arith.addf %21, %25 : vector<64x8xf32>
    %27 = vector.extract_strided_slice %15 {offsets = [0, 0], sizes = [64, 32], strides = [1, 1]} : vector<80x32xf32> to vector<64x32xf32>
    %c0_22 = arith.constant 0 : index
    %c2_23 = arith.constant 2 : index
    %c0_24 = arith.constant 0 : index
    %c0_25 = arith.constant 0 : index
    %28 = vector.load %arg2[%c0_22, %c2_23, %c0_24, %c0_25] : memref<3x3x32x8xf32, #tpu.memory_space<vmem>>, vector<1x1x32x8xf32>
    %29 = vector.shape_cast %28 : vector<1x1x32x8xf32> to vector<32x8xf32>
    %cst_26 = arith.constant dense<0.000000e+00> : vector<64x8xf32>
    %30 = tpu.matmul %27, %29, %cst_26 {dimension_numbers = #tpu.dot_dimension_numbers<[1], [0], [0], [1], [0, 0, 1, 1], [], []>} : vector<64x32xf32>, vector<32x8xf32>, vector<64x8xf32> -> vector<64x8xf32>
    %31 = arith.addf %26, %30 : vector<64x8xf32>
    %32 = vector.extract_strided_slice %11 {offsets = [8, 0], sizes = [64, 32], strides = [1, 1]} : vector<80x32xf32> to vector<64x32xf32>
    %c1_27 = arith.constant 1 : index
    %c0_28 = arith.constant 0 : index
    %c0_29 = arith.constant 0 : index
    %c0_30 = arith.constant 0 : index
    %33 = vector.load %arg2[%c1_27, %c0_28, %c0_29, %c0_30] : memref<3x3x32x8xf32, #tpu.memory_space<vmem>>, vector<1x1x32x8xf32>
    %34 = vector.shape_cast %33 : vector<1x1x32x8xf32> to vector<32x8xf32>
    %cst_31 = arith.constant dense<0.000000e+00> : vector<64x8xf32>
    %35 = tpu.matmul %32, %34, %cst_31 {dimension_numbers = #tpu.dot_dimension_numbers<[1], [0], [0], [1], [0, 0, 1, 1], [], []>} : vector<64x32xf32>, vector<32x8xf32>, vector<64x8xf32> -> vector<64x8xf32>
    %36 = arith.addf %31, %35 : vector<64x8xf32>
    %37 = vector.extract_strided_slice %13 {offsets = [8, 0], sizes = [64, 32], strides = [1, 1]} : vector<80x32xf32> to vector<64x32xf32>
    %c1_32 = arith.constant 1 : index
    %c1_33 = arith.constant 1 : index
    %c0_34 = arith.constant 0 : index
    %c0_35 = arith.constant 0 : index
    %38 = vector.load %arg2[%c1_32, %c1_33, %c0_34, %c0_35] : memref<3x3x32x8xf32, #tpu.memory_space<vmem>>, vector<1x1x32x8xf32>
    %39 = vector.shape_cast %38 : vector<1x1x32x8xf32> to vector<32x8xf32>
    %cst_36 = arith.constant dense<0.000000e+00> : vector<64x8xf32>
    %40 = tpu.matmul %37, %39, %cst_36 {dimension_numbers = #tpu.dot_dimension_numbers<[1], [0], [0], [1], [0, 0, 1, 1], [], []>} : vector<64x32xf32>, vector<32x8xf32>, vector<64x8xf32> -> vector<64x8xf32>
    %41 = arith.addf %36, %40 : vector<64x8xf32>
    %42 = vector.extract_strided_slice %15 {offsets = [8, 0], sizes = [64, 32], strides = [1, 1]} : vector<80x32xf32> to vector<64x32xf32>
    %c1_37 = arith.constant 1 : index
    %c2_38 = arith.constant 2 : index
    %c0_39 = arith.constant 0 : index
    %c0_40 = arith.constant 0 : index
    %43 = vector.load %arg2[%c1_37, %c2_38, %c0_39, %c0_40] : memref<3x3x32x8xf32, #tpu.memory_space<vmem>>, vector<1x1x32x8xf32>
    %44 = vector.shape_cast %43 : vector<1x1x32x8xf32> to vector<32x8xf32>
    %cst_41 = arith.constant dense<0.000000e+00> : vector<64x8xf32>
    %45 = tpu.matmul %42, %44, %cst_41 {dimension_numbers = #tpu.dot_dimension_numbers<[1], [0], [0], [1], [0, 0, 1, 1], [], []>} : vector<64x32xf32>, vector<32x8xf32>, vector<64x8xf32> -> vector<64x8xf32>
    %46 = arith.addf %41, %45 : vector<64x8xf32>
    %47 = vector.extract_strided_slice %11 {offsets = [16, 0], sizes = [64, 32], strides = [1, 1]} : vector<80x32xf32> to vector<64x32xf32>
    %c2_42 = arith.constant 2 : index
    %c0_43 = arith.constant 0 : index
    %c0_44 = arith.constant 0 : index
    %c0_45 = arith.constant 0 : index
    %48 = vector.load %arg2[%c2_42, %c0_43, %c0_44, %c0_45] : memref<3x3x32x8xf32, #tpu.memory_space<vmem>>, vector<1x1x32x8xf32>
    %49 = vector.shape_cast %48 : vector<1x1x32x8xf32> to vector<32x8xf32>
    %cst_46 = arith.constant dense<0.000000e+00> : vector<64x8xf32>
    %50 = tpu.matmul %47, %49, %cst_46 {dimension_numbers = #tpu.dot_dimension_numbers<[1], [0], [0], [1], [0, 0, 1, 1], [], []>} : vector<64x32xf32>, vector<32x8xf32>, vector<64x8xf32> -> vector<64x8xf32>
    %51 = arith.addf %46, %50 : vector<64x8xf32>
    %52 = vector.extract_strided_slice %13 {offsets = [16, 0], sizes = [64, 32], strides = [1, 1]} : vector<80x32xf32> to vector<64x32xf32>
    %c2_47 = arith.constant 2 : index
    %c1_48 = arith.constant 1 : index
    %c0_49 = arith.constant 0 : index
    %c0_50 = arith.constant 0 : index
    %53 = vector.load %arg2[%c2_47, %c1_48, %c0_49, %c0_50] : memref<3x3x32x8xf32, #tpu.memory_space<vmem>>, vector<1x1x32x8xf32>
    %54 = vector.shape_cast %53 : vector<1x1x32x8xf32> to vector<32x8xf32>
    %cst_51 = arith.constant dense<0.000000e+00> : vector<64x8xf32>
    %55 = tpu.matmul %52, %54, %cst_51 {dimension_numbers = #tpu.dot_dimension_numbers<[1], [0], [0], [1], [0, 0, 1, 1], [], []>} : vector<64x32xf32>, vector<32x8xf32>, vector<64x8xf32> -> vector<64x8xf32>
    %56 = arith.addf %51, %55 : vector<64x8xf32>
    %57 = vector.extract_strided_slice %15 {offsets = [16, 0], sizes = [64, 32], strides = [1, 1]} : vector<80x32xf32> to vector<64x32xf32>
    %c2_52 = arith.constant 2 : index
    %c2_53 = arith.constant 2 : index
    %c0_54 = arith.constant 0 : index
    %c0_55 = arith.constant 0 : index
    %58 = vector.load %arg2[%c2_52, %c2_53, %c0_54, %c0_55] : memref<3x3x32x8xf32, #tpu.memory_space<vmem>>, vector<1x1x32x8xf32>
    %59 = vector.shape_cast %58 : vector<1x1x32x8xf32> to vector<32x8xf32>
    %cst_56 = arith.constant dense<0.000000e+00> : vector<64x8xf32>
    %60 = tpu.matmul %57, %59, %cst_56 {dimension_numbers = #tpu.dot_dimension_numbers<[1], [0], [0], [1], [0, 0, 1, 1], [], []>} : vector<64x32xf32>, vector<32x8xf32>, vector<64x8xf32> -> vector<64x8xf32>
    %61 = arith.addf %56, %60 : vector<64x8xf32>
    %c0_57 = arith.constant 0 : index
    %c0_58 = arith.constant 0 : index
    %62 = vector.load %arg3[%c0_57, %c0_58] : memref<1x8xf32, #tpu.memory_space<vmem>>, vector<1x8xf32>
    %63 = vector.broadcast %62 : vector<1x8xf32> to vector<64x8xf32>
    %64 = arith.addf %61, %63 : vector<64x8xf32>
    %cst_59 = arith.constant 0.000000e+00 : f32
    %65 = vector.broadcast %cst_59 : f32 to vector<64x8xf32>
    %66 = arith.maximumf %64, %65 : vector<64x8xf32>
    %c0_60 = arith.constant 0 : index
    %c0_61 = arith.constant 0 : index
    %67 = vector.load %arg4[%c0_60, %c0_61] : memref<8x32xf32, #tpu.memory_space<vmem>>, vector<8x32xf32>
    %cst_62 = arith.constant dense<0.000000e+00> : vector<64x32xf32>
    %68 = tpu.matmul %66, %67, %cst_62 {dimension_numbers = #tpu.dot_dimension_numbers<[1], [0], [0], [1], [0, 0, 1, 1], [], []>} : vector<64x8xf32>, vector<8x32xf32>, vector<64x32xf32> -> vector<64x32xf32>
    %c0_63 = arith.constant 0 : index
    %c0_64 = arith.constant 0 : index
    %69 = vector.load %arg5[%c0_63, %c0_64] : memref<1x32xf32, #tpu.memory_space<vmem>>, vector<1x32xf32>
    %70 = vector.broadcast %69 : vector<1x32xf32> to vector<64x32xf32>
    %71 = arith.addf %68, %70 : vector<64x32xf32>
    %72 = arith.addf %71, %9 : vector<64x32xf32>
    %c0_65 = arith.constant 0 : index
    %c0_66 = arith.constant 0 : index
    %c0_67 = arith.constant 0 : index
    %73 = vector.load %arg6[%c0_65, %c0_66, %c0_67] : memref<1x64x32xf32, #tpu.memory_space<vmem>>, vector<1x64x32xf32>
    %74 = vector.shape_cast %73 : vector<1x64x32xf32> to vector<64x32xf32>
    %75 = vector.shape_cast %72 : vector<64x32xf32> to vector<1x64x32xf32>
    tpu.vector_store %arg6[%c0_65, %c0_66, %c0_67], %75 {strides = array<i32>} : memref<1x64x32xf32, #tpu.memory_space<vmem>>, vector<1x64x32xf32>,
    return
  }
  func.func @transform_0(%arg0: i32) -> (i32, i32, i32, i32) {
    %c0_i32 = arith.constant 0 : i32
    %c0_i32_0 = arith.constant 0 : i32
    %c0_i32_1 = arith.constant 0 : i32
    %c0_i32_2 = arith.constant 0 : i32
    return %arg0, %c0_i32, %c0_i32_0, %c0_i32_1 : i32, i32, i32, i32
  }
  func.func @transform_1(%arg0: i32) -> (i32, i32, i32, i32) {
    %c0_i32 = arith.constant 0 : i32
    %c0_i32_0 = arith.constant 0 : i32
    %c0_i32_1 = arith.constant 0 : i32
    %c0_i32_2 = arith.constant 0 : i32
    %c0_i32_3 = arith.constant 0 : i32
    return %c0_i32, %c0_i32_0, %c0_i32_1, %c0_i32_2 : i32, i32, i32, i32
  }
  func.func @transform_2(%arg0: i32) -> (i32, i32) {
    %c0_i32 = arith.constant 0 : i32
    %c0_i32_0 = arith.constant 0 : i32
    %c0_i32_1 = arith.constant 0 : i32
    return %c0_i32, %c0_i32_0 : i32, i32
  }
  func.func @transform_3(%arg0: i32) -> (i32, i32) {
    %c0_i32 = arith.constant 0 : i32
    %c0_i32_0 = arith.constant 0 : i32
    %c0_i32_1 = arith.constant 0 : i32
    return %c0_i32, %c0_i32_0 : i32, i32
  }
  func.func @transform_4(%arg0: i32) -> (i32, i32) {
    %c0_i32 = arith.constant 0 : i32
    %c0_i32_0 = arith.constant 0 : i32
    %c0_i32_1 = arith.constant 0 : i32
    return %c0_i32, %c0_i32_0 : i32, i32
  }
  func.func @transform_5(%arg0: i32) -> (i32, i32, i32) {
    %c0_i32 = arith.constant 0 : i32
    %c0_i32_0 = arith.constant 0 : i32
    %c0_i32_1 = arith.constant 0 : i32
    return %arg0, %c0_i32, %c0_i32_0 : i32, i32, i32
  }
}

module attributes {stable_mosaic.version = 11 : i64} {
  func.func @kernel(%arg0: i32, %arg1: memref<1x10x10x32xf32, #tpu.memory_space<vmem>>, %arg2: memref<4x4x32x16xf32, #tpu.memory_space<vmem>>, %arg3: memref<1x16xf32, #tpu.memory_space<vmem>>, %arg4: memref<1x2x2x64x16xf32, #tpu.memory_space<vmem>>) attributes {dimension_semantics = [#tpu.dimension_semantics<parallel>], iteration_bounds = array<i64: 2>, scalar_prefetch = 0 : i64, scratch_operands = 0 : i64, tpu.core_type = #tpu.core_type<tc>, window_params = [{transform_indices = @transform_0, window_bounds = array<i64: 1, 10, 10, 32>}, {pipeline_mode = #tpu.pipeline_mode<synchronous>, transform_indices = @transform_1, window_bounds = array<i64: 4, 4, 32, 16>}, {pipeline_mode = #tpu.pipeline_mode<synchronous>, transform_indices = @transform_2, window_bounds = array<i64: 1, 16>}, {transform_indices = @transform_3, window_bounds = array<i64: 1, 2, 2, 64, 16>}]} {
    %c0 = arith.constant 0 : index
    %c0_0 = arith.constant 0 : index
    %c0_1 = arith.constant 0 : index
    %c0_2 = arith.constant 0 : index
    %0 = vector.load %arg1[%c0, %c0_0, %c0_1, %c0_2] : memref<1x10x10x32xf32, #tpu.memory_space<vmem>>, vector<1x10x8x32xf32>
    %1 = vector.shape_cast %0 : vector<1x10x8x32xf32> to vector<10x8x32xf32>
    %2 = vector.shape_cast %1 : vector<10x8x32xf32> to vector<80x32xf32>
    %c0_3 = arith.constant 0 : index
    %c0_4 = arith.constant 0 : index
    %c1 = arith.constant 1 : index
    %c0_5 = arith.constant 0 : index
    %3 = vector.load %arg1[%c0_3, %c0_4, %c1, %c0_5] : memref<1x10x10x32xf32, #tpu.memory_space<vmem>>, vector<1x10x8x32xf32>
    %4 = vector.shape_cast %3 : vector<1x10x8x32xf32> to vector<10x8x32xf32>
    %5 = vector.shape_cast %4 : vector<10x8x32xf32> to vector<80x32xf32>
    %c0_6 = arith.constant 0 : index
    %c0_7 = arith.constant 0 : index
    %c2 = arith.constant 2 : index
    %c0_8 = arith.constant 0 : index
    %6 = vector.load %arg1[%c0_6, %c0_7, %c2, %c0_8] : memref<1x10x10x32xf32, #tpu.memory_space<vmem>>, vector<1x10x8x32xf32>
    %7 = vector.shape_cast %6 : vector<1x10x8x32xf32> to vector<10x8x32xf32>
    %8 = vector.shape_cast %7 : vector<10x8x32xf32> to vector<80x32xf32>
    %cst = arith.constant 0.000000e+00 : f32
    %9 = vector.broadcast %cst : f32 to vector<80x32xf32>
    %10 = arith.maximumf %2, %9 : vector<80x32xf32>
    %cst_9 = arith.constant 0.000000e+00 : f32
    %11 = vector.broadcast %cst_9 : f32 to vector<80x32xf32>
    %12 = arith.maximumf %5, %11 : vector<80x32xf32>
    %cst_10 = arith.constant 0.000000e+00 : f32
    %13 = vector.broadcast %cst_10 : f32 to vector<80x32xf32>
    %14 = arith.maximumf %8, %13 : vector<80x32xf32>
    %cst_11 = arith.constant 0.000000e+00 : f32
    %15 = vector.broadcast %cst_11 : f32 to vector<64x16xf32>
    %16 = vector.extract_strided_slice %10 {offsets = [0, 0], sizes = [64, 32], strides = [1, 1]} : vector<80x32xf32> to vector<64x32xf32>
    %c3 = arith.constant 3 : index
    %c3_12 = arith.constant 3 : index
    %c0_13 = arith.constant 0 : index
    %c0_14 = arith.constant 0 : index
    %17 = vector.load %arg2[%c3, %c3_12, %c0_13, %c0_14] : memref<4x4x32x16xf32, #tpu.memory_space<vmem>>, vector<1x1x32x16xf32>
    %18 = vector.shape_cast %17 : vector<1x1x32x16xf32> to vector<32x16xf32>
    %cst_15 = arith.constant dense<0.000000e+00> : vector<64x16xf32>
    %19 = tpu.matmul %16, %18, %cst_15 {dimension_numbers = #tpu.dot_dimension_numbers<[1], [0], [0], [1], [0, 0, 1, 1], [], []>} : vector<64x32xf32>, vector<32x16xf32>, vector<64x16xf32> -> vector<64x16xf32>
    %20 = arith.addf %15, %19 : vector<64x16xf32>
    %21 = vector.extract_strided_slice %12 {offsets = [0, 0], sizes = [64, 32], strides = [1, 1]} : vector<80x32xf32> to vector<64x32xf32>
    %c3_16 = arith.constant 3 : index
    %c1_17 = arith.constant 1 : index
    %c0_18 = arith.constant 0 : index
    %c0_19 = arith.constant 0 : index
    %22 = vector.load %arg2[%c3_16, %c1_17, %c0_18, %c0_19] : memref<4x4x32x16xf32, #tpu.memory_space<vmem>>, vector<1x1x32x16xf32>
    %23 = vector.shape_cast %22 : vector<1x1x32x16xf32> to vector<32x16xf32>
    %cst_20 = arith.constant dense<0.000000e+00> : vector<64x16xf32>
    %24 = tpu.matmul %21, %23, %cst_20 {dimension_numbers = #tpu.dot_dimension_numbers<[1], [0], [0], [1], [0, 0, 1, 1], [], []>} : vector<64x32xf32>, vector<32x16xf32>, vector<64x16xf32> -> vector<64x16xf32>
    %25 = arith.addf %20, %24 : vector<64x16xf32>
    %26 = vector.extract_strided_slice %10 {offsets = [8, 0], sizes = [64, 32], strides = [1, 1]} : vector<80x32xf32> to vector<64x32xf32>
    %c1_21 = arith.constant 1 : index
    %c3_22 = arith.constant 3 : index
    %c0_23 = arith.constant 0 : index
    %c0_24 = arith.constant 0 : index
    %27 = vector.load %arg2[%c1_21, %c3_22, %c0_23, %c0_24] : memref<4x4x32x16xf32, #tpu.memory_space<vmem>>, vector<1x1x32x16xf32>
    %28 = vector.shape_cast %27 : vector<1x1x32x16xf32> to vector<32x16xf32>
    %cst_25 = arith.constant dense<0.000000e+00> : vector<64x16xf32>
    %29 = tpu.matmul %26, %28, %cst_25 {dimension_numbers = #tpu.dot_dimension_numbers<[1], [0], [0], [1], [0, 0, 1, 1], [], []>} : vector<64x32xf32>, vector<32x16xf32>, vector<64x16xf32> -> vector<64x16xf32>
    %30 = arith.addf %25, %29 : vector<64x16xf32>
    %31 = vector.extract_strided_slice %12 {offsets = [8, 0], sizes = [64, 32], strides = [1, 1]} : vector<80x32xf32> to vector<64x32xf32>
    %c1_26 = arith.constant 1 : index
    %c1_27 = arith.constant 1 : index
    %c0_28 = arith.constant 0 : index
    %c0_29 = arith.constant 0 : index
    %32 = vector.load %arg2[%c1_26, %c1_27, %c0_28, %c0_29] : memref<4x4x32x16xf32, #tpu.memory_space<vmem>>, vector<1x1x32x16xf32>
    %33 = vector.shape_cast %32 : vector<1x1x32x16xf32> to vector<32x16xf32>
    %cst_30 = arith.constant dense<0.000000e+00> : vector<64x16xf32>
    %34 = tpu.matmul %31, %33, %cst_30 {dimension_numbers = #tpu.dot_dimension_numbers<[1], [0], [0], [1], [0, 0, 1, 1], [], []>} : vector<64x32xf32>, vector<32x16xf32>, vector<64x16xf32> -> vector<64x16xf32>
    %35 = arith.addf %30, %34 : vector<64x16xf32>
    %c0_31 = arith.constant 0 : index
    %c0_32 = arith.constant 0 : index
    %36 = vector.load %arg3[%c0_31, %c0_32] : memref<1x16xf32, #tpu.memory_space<vmem>>, vector<1x16xf32>
    %37 = vector.broadcast %36 : vector<1x16xf32> to vector<64x16xf32>
    %38 = arith.addf %35, %37 : vector<64x16xf32>
    %cst_33 = arith.constant 0.000000e+00 : f32
    %39 = vector.broadcast %cst_33 : f32 to vector<64x16xf32>
    %40 = arith.maximumf %38, %39 : vector<64x16xf32>
    %c0_34 = arith.constant 0 : index
    %c0_35 = arith.constant 0 : index
    %c0_36 = arith.constant 0 : index
    %c0_37 = arith.constant 0 : index
    %c0_38 = arith.constant 0 : index
    %41 = vector.load %arg4[%c0_34, %c0_35, %c0_36, %c0_37, %c0_38] : memref<1x2x2x64x16xf32, #tpu.memory_space<vmem>>, vector<1x1x1x64x16xf32>
    %42 = vector.shape_cast %41 : vector<1x1x1x64x16xf32> to vector<64x16xf32>
    %43 = vector.shape_cast %40 : vector<64x16xf32> to vector<1x1x1x64x16xf32>
    tpu.vector_store %arg4[%c0_34, %c0_35, %c0_36, %c0_37, %c0_38], %43 {strides = array<i32>} : memref<1x2x2x64x16xf32, #tpu.memory_space<vmem>>, vector<1x1x1x64x16xf32>,
    %cst_39 = arith.constant 0.000000e+00 : f32
    %44 = vector.broadcast %cst_39 : f32 to vector<64x16xf32>
    %45 = vector.extract_strided_slice %12 {offsets = [0, 0], sizes = [64, 32], strides = [1, 1]} : vector<80x32xf32> to vector<64x32xf32>
    %c3_40 = arith.constant 3 : index
    %c2_41 = arith.constant 2 : index
    %c0_42 = arith.constant 0 : index
    %c0_43 = arith.constant 0 : index
    %46 = vector.load %arg2[%c3_40, %c2_41, %c0_42, %c0_43] : memref<4x4x32x16xf32, #tpu.memory_space<vmem>>, vector<1x1x32x16xf32>
    %47 = vector.shape_cast %46 : vector<1x1x32x16xf32> to vector<32x16xf32>
    %cst_44 = arith.constant dense<0.000000e+00> : vector<64x16xf32>
    %48 = tpu.matmul %45, %47, %cst_44 {dimension_numbers = #tpu.dot_dimension_numbers<[1], [0], [0], [1], [0, 0, 1, 1], [], []>} : vector<64x32xf32>, vector<32x16xf32>, vector<64x16xf32> -> vector<64x16xf32>
    %49 = arith.addf %44, %48 : vector<64x16xf32>
    %50 = vector.extract_strided_slice %14 {offsets = [0, 0], sizes = [64, 32], strides = [1, 1]} : vector<80x32xf32> to vector<64x32xf32>
    %c3_45 = arith.constant 3 : index
    %c0_46 = arith.constant 0 : index
    %c0_47 = arith.constant 0 : index
    %c0_48 = arith.constant 0 : index
    %51 = vector.load %arg2[%c3_45, %c0_46, %c0_47, %c0_48] : memref<4x4x32x16xf32, #tpu.memory_space<vmem>>, vector<1x1x32x16xf32>
    %52 = vector.shape_cast %51 : vector<1x1x32x16xf32> to vector<32x16xf32>
    %cst_49 = arith.constant dense<0.000000e+00> : vector<64x16xf32>
    %53 = tpu.matmul %50, %52, %cst_49 {dimension_numbers = #tpu.dot_dimension_numbers<[1], [0], [0], [1], [0, 0, 1, 1], [], []>} : vector<64x32xf32>, vector<32x16xf32>, vector<64x16xf32> -> vector<64x16xf32>
    %54 = arith.addf %49, %53 : vector<64x16xf32>
    %55 = vector.extract_strided_slice %12 {offsets = [8, 0], sizes = [64, 32], strides = [1, 1]} : vector<80x32xf32> to vector<64x32xf32>
    %c1_50 = arith.constant 1 : index
    %c2_51 = arith.constant 2 : index
    %c0_52 = arith.constant 0 : index
    %c0_53 = arith.constant 0 : index
    %56 = vector.load %arg2[%c1_50, %c2_51, %c0_52, %c0_53] : memref<4x4x32x16xf32, #tpu.memory_space<vmem>>, vector<1x1x32x16xf32>
    %57 = vector.shape_cast %56 : vector<1x1x32x16xf32> to vector<32x16xf32>
    %cst_54 = arith.constant dense<0.000000e+00> : vector<64x16xf32>
    %58 = tpu.matmul %55, %57, %cst_54 {dimension_numbers = #tpu.dot_dimension_numbers<[1], [0], [0], [1], [0, 0, 1, 1], [], []>} : vector<64x32xf32>, vector<32x16xf32>, vector<64x16xf32> -> vector<64x16xf32>
    %59 = arith.addf %54, %58 : vector<64x16xf32>
    %60 = vector.extract_strided_slice %14 {offsets = [8, 0], sizes = [64, 32], strides = [1, 1]} : vector<80x32xf32> to vector<64x32xf32>
    %c1_55 = arith.constant 1 : index
    %c0_56 = arith.constant 0 : index
    %c0_57 = arith.constant 0 : index
    %c0_58 = arith.constant 0 : index
    %61 = vector.load %arg2[%c1_55, %c0_56, %c0_57, %c0_58] : memref<4x4x32x16xf32, #tpu.memory_space<vmem>>, vector<1x1x32x16xf32>
    %62 = vector.shape_cast %61 : vector<1x1x32x16xf32> to vector<32x16xf32>
    %cst_59 = arith.constant dense<0.000000e+00> : vector<64x16xf32>
    %63 = tpu.matmul %60, %62, %cst_59 {dimension_numbers = #tpu.dot_dimension_numbers<[1], [0], [0], [1], [0, 0, 1, 1], [], []>} : vector<64x32xf32>, vector<32x16xf32>, vector<64x16xf32> -> vector<64x16xf32>
    %64 = arith.addf %59, %63 : vector<64x16xf32>
    %c0_60 = arith.constant 0 : index
    %c0_61 = arith.constant 0 : index
    %65 = vector.load %arg3[%c0_60, %c0_61] : memref<1x16xf32, #tpu.memory_space<vmem>>, vector<1x16xf32>
    %66 = vector.broadcast %65 : vector<1x16xf32> to vector<64x16xf32>
    %67 = arith.addf %64, %66 : vector<64x16xf32>
    %cst_62 = arith.constant 0.000000e+00 : f32
    %68 = vector.broadcast %cst_62 : f32 to vector<64x16xf32>
    %69 = arith.maximumf %67, %68 : vector<64x16xf32>
    %c0_63 = arith.constant 0 : index
    %c0_64 = arith.constant 0 : index
    %c1_65 = arith.constant 1 : index
    %c0_66 = arith.constant 0 : index
    %c0_67 = arith.constant 0 : index
    %70 = vector.load %arg4[%c0_63, %c0_64, %c1_65, %c0_66, %c0_67] : memref<1x2x2x64x16xf32, #tpu.memory_space<vmem>>, vector<1x1x1x64x16xf32>
    %71 = vector.shape_cast %70 : vector<1x1x1x64x16xf32> to vector<64x16xf32>
    %72 = vector.shape_cast %69 : vector<64x16xf32> to vector<1x1x1x64x16xf32>
    tpu.vector_store %arg4[%c0_63, %c0_64, %c1_65, %c0_66, %c0_67], %72 {strides = array<i32>} : memref<1x2x2x64x16xf32, #tpu.memory_space<vmem>>, vector<1x1x1x64x16xf32>,
    %cst_68 = arith.constant 0.000000e+00 : f32
    %73 = vector.broadcast %cst_68 : f32 to vector<64x16xf32>
    %74 = vector.extract_strided_slice %10 {offsets = [8, 0], sizes = [64, 32], strides = [1, 1]} : vector<80x32xf32> to vector<64x32xf32>
    %c2_69 = arith.constant 2 : index
    %c3_70 = arith.constant 3 : index
    %c0_71 = arith.constant 0 : index
    %c0_72 = arith.constant 0 : index
    %75 = vector.load %arg2[%c2_69, %c3_70, %c0_71, %c0_72] : memref<4x4x32x16xf32, #tpu.memory_space<vmem>>, vector<1x1x32x16xf32>
    %76 = vector.shape_cast %75 : vector<1x1x32x16xf32> to vector<32x16xf32>
    %cst_73 = arith.constant dense<0.000000e+00> : vector<64x16xf32>
    %77 = tpu.matmul %74, %76, %cst_73 {dimension_numbers = #tpu.dot_dimension_numbers<[1], [0], [0], [1], [0, 0, 1, 1], [], []>} : vector<64x32xf32>, vector<32x16xf32>, vector<64x16xf32> -> vector<64x16xf32>
    %78 = arith.addf %73, %77 : vector<64x16xf32>
    %79 = vector.extract_strided_slice %12 {offsets = [8, 0], sizes = [64, 32], strides = [1, 1]} : vector<80x32xf32> to vector<64x32xf32>
    %c2_74 = arith.constant 2 : index
    %c1_75 = arith.constant 1 : index
    %c0_76 = arith.constant 0 : index
    %c0_77 = arith.constant 0 : index
    %80 = vector.load %arg2[%c2_74, %c1_75, %c0_76, %c0_77] : memref<4x4x32x16xf32, #tpu.memory_space<vmem>>, vector<1x1x32x16xf32>
    %81 = vector.shape_cast %80 : vector<1x1x32x16xf32> to vector<32x16xf32>
    %cst_78 = arith.constant dense<0.000000e+00> : vector<64x16xf32>
    %82 = tpu.matmul %79, %81, %cst_78 {dimension_numbers = #tpu.dot_dimension_numbers<[1], [0], [0], [1], [0, 0, 1, 1], [], []>} : vector<64x32xf32>, vector<32x16xf32>, vector<64x16xf32> -> vector<64x16xf32>
    %83 = arith.addf %78, %82 : vector<64x16xf32>
    %84 = vector.extract_strided_slice %10 {offsets = [16, 0], sizes = [64, 32], strides = [1, 1]} : vector<80x32xf32> to vector<64x32xf32>
    %c0_79 = arith.constant 0 : index
    %c3_80 = arith.constant 3 : index
    %c0_81 = arith.constant 0 : index
    %c0_82 = arith.constant 0 : index
    %85 = vector.load %arg2[%c0_79, %c3_80, %c0_81, %c0_82] : memref<4x4x32x16xf32, #tpu.memory_space<vmem>>, vector<1x1x32x16xf32>
    %86 = vector.shape_cast %85 : vector<1x1x32x16xf32> to vector<32x16xf32>
    %cst_83 = arith.constant dense<0.000000e+00> : vector<64x16xf32>
    %87 = tpu.matmul %84, %86, %cst_83 {dimension_numbers = #tpu.dot_dimension_numbers<[1], [0], [0], [1], [0, 0, 1, 1], [], []>} : vector<64x32xf32>, vector<32x16xf32>, vector<64x16xf32> -> vector<64x16xf32>
    %88 = arith.addf %83, %87 : vector<64x16xf32>
    %89 = vector.extract_strided_slice %12 {offsets = [16, 0], sizes = [64, 32], strides = [1, 1]} : vector<80x32xf32> to vector<64x32xf32>
    %c0_84 = arith.constant 0 : index
    %c1_85 = arith.constant 1 : index
    %c0_86 = arith.constant 0 : index
    %c0_87 = arith.constant 0 : index
    %90 = vector.load %arg2[%c0_84, %c1_85, %c0_86, %c0_87] : memref<4x4x32x16xf32, #tpu.memory_space<vmem>>, vector<1x1x32x16xf32>
    %91 = vector.shape_cast %90 : vector<1x1x32x16xf32> to vector<32x16xf32>
    %cst_88 = arith.constant dense<0.000000e+00> : vector<64x16xf32>
    %92 = tpu.matmul %89, %91, %cst_88 {dimension_numbers = #tpu.dot_dimension_numbers<[1], [0], [0], [1], [0, 0, 1, 1], [], []>} : vector<64x32xf32>, vector<32x16xf32>, vector<64x16xf32> -> vector<64x16xf32>
    %93 = arith.addf %88, %92 : vector<64x16xf32>
    %c0_89 = arith.constant 0 : index
    %c0_90 = arith.constant 0 : index
    %94 = vector.load %arg3[%c0_89, %c0_90] : memref<1x16xf32, #tpu.memory_space<vmem>>, vector<1x16xf32>
    %95 = vector.broadcast %94 : vector<1x16xf32> to vector<64x16xf32>
    %96 = arith.addf %93, %95 : vector<64x16xf32>
    %cst_91 = arith.constant 0.000000e+00 : f32
    %97 = vector.broadcast %cst_91 : f32 to vector<64x16xf32>
    %98 = arith.maximumf %96, %97 : vector<64x16xf32>
    %c0_92 = arith.constant 0 : index
    %c1_93 = arith.constant 1 : index
    %c0_94 = arith.constant 0 : index
    %c0_95 = arith.constant 0 : index
    %c0_96 = arith.constant 0 : index
    %99 = vector.load %arg4[%c0_92, %c1_93, %c0_94, %c0_95, %c0_96] : memref<1x2x2x64x16xf32, #tpu.memory_space<vmem>>, vector<1x1x1x64x16xf32>
    %100 = vector.shape_cast %99 : vector<1x1x1x64x16xf32> to vector<64x16xf32>
    %101 = vector.shape_cast %98 : vector<64x16xf32> to vector<1x1x1x64x16xf32>
    tpu.vector_store %arg4[%c0_92, %c1_93, %c0_94, %c0_95, %c0_96], %101 {strides = array<i32>} : memref<1x2x2x64x16xf32, #tpu.memory_space<vmem>>, vector<1x1x1x64x16xf32>,
    %cst_97 = arith.constant 0.000000e+00 : f32
    %102 = vector.broadcast %cst_97 : f32 to vector<64x16xf32>
    %103 = vector.extract_strided_slice %12 {offsets = [8, 0], sizes = [64, 32], strides = [1, 1]} : vector<80x32xf32> to vector<64x32xf32>
    %c2_98 = arith.constant 2 : index
    %c2_99 = arith.constant 2 : index
    %c0_100 = arith.constant 0 : index
    %c0_101 = arith.constant 0 : index
    %104 = vector.load %arg2[%c2_98, %c2_99, %c0_100, %c0_101] : memref<4x4x32x16xf32, #tpu.memory_space<vmem>>, vector<1x1x32x16xf32>
    %105 = vector.shape_cast %104 : vector<1x1x32x16xf32> to vector<32x16xf32>
    %cst_102 = arith.constant dense<0.000000e+00> : vector<64x16xf32>
    %106 = tpu.matmul %103, %105, %cst_102 {dimension_numbers = #tpu.dot_dimension_numbers<[1], [0], [0], [1], [0, 0, 1, 1], [], []>} : vector<64x32xf32>, vector<32x16xf32>, vector<64x16xf32> -> vector<64x16xf32>
    %107 = arith.addf %102, %106 : vector<64x16xf32>
    %108 = vector.extract_strided_slice %14 {offsets = [8, 0], sizes = [64, 32], strides = [1, 1]} : vector<80x32xf32> to vector<64x32xf32>
    %c2_103 = arith.constant 2 : index
    %c0_104 = arith.constant 0 : index
    %c0_105 = arith.constant 0 : index
    %c0_106 = arith.constant 0 : index
    %109 = vector.load %arg2[%c2_103, %c0_104, %c0_105, %c0_106] : memref<4x4x32x16xf32, #tpu.memory_space<vmem>>, vector<1x1x32x16xf32>
    %110 = vector.shape_cast %109 : vector<1x1x32x16xf32> to vector<32x16xf32>
    %cst_107 = arith.constant dense<0.000000e+00> : vector<64x16xf32>
    %111 = tpu.matmul %108, %110, %cst_107 {dimension_numbers = #tpu.dot_dimension_numbers<[1], [0], [0], [1], [0, 0, 1, 1], [], []>} : vector<64x32xf32>, vector<32x16xf32>, vector<64x16xf32> -> vector<64x16xf32>
    %112 = arith.addf %107, %111 : vector<64x16xf32>
    %113 = vector.extract_strided_slice %12 {offsets = [16, 0], sizes = [64, 32], strides = [1, 1]} : vector<80x32xf32> to vector<64x32xf32>
    %c0_108 = arith.constant 0 : index
    %c2_109 = arith.constant 2 : index
    %c0_110 = arith.constant 0 : index
    %c0_111 = arith.constant 0 : index
    %114 = vector.load %arg2[%c0_108, %c2_109, %c0_110, %c0_111] : memref<4x4x32x16xf32, #tpu.memory_space<vmem>>, vector<1x1x32x16xf32>
    %115 = vector.shape_cast %114 : vector<1x1x32x16xf32> to vector<32x16xf32>
    %cst_112 = arith.constant dense<0.000000e+00> : vector<64x16xf32>
    %116 = tpu.matmul %113, %115, %cst_112 {dimension_numbers = #tpu.dot_dimension_numbers<[1], [0], [0], [1], [0, 0, 1, 1], [], []>} : vector<64x32xf32>, vector<32x16xf32>, vector<64x16xf32> -> vector<64x16xf32>
    %117 = arith.addf %112, %116 : vector<64x16xf32>
    %118 = vector.extract_strided_slice %14 {offsets = [16, 0], sizes = [64, 32], strides = [1, 1]} : vector<80x32xf32> to vector<64x32xf32>
    %c0_113 = arith.constant 0 : index
    %c0_114 = arith.constant 0 : index
    %c0_115 = arith.constant 0 : index
    %c0_116 = arith.constant 0 : index
    %119 = vector.load %arg2[%c0_113, %c0_114, %c0_115, %c0_116] : memref<4x4x32x16xf32, #tpu.memory_space<vmem>>, vector<1x1x32x16xf32>
    %120 = vector.shape_cast %119 : vector<1x1x32x16xf32> to vector<32x16xf32>
    %cst_117 = arith.constant dense<0.000000e+00> : vector<64x16xf32>
    %121 = tpu.matmul %118, %120, %cst_117 {dimension_numbers = #tpu.dot_dimension_numbers<[1], [0], [0], [1], [0, 0, 1, 1], [], []>} : vector<64x32xf32>, vector<32x16xf32>, vector<64x16xf32> -> vector<64x16xf32>
    %122 = arith.addf %117, %121 : vector<64x16xf32>
    %c0_118 = arith.constant 0 : index
    %c0_119 = arith.constant 0 : index
    %123 = vector.load %arg3[%c0_118, %c0_119] : memref<1x16xf32, #tpu.memory_space<vmem>>, vector<1x16xf32>
    %124 = vector.broadcast %123 : vector<1x16xf32> to vector<64x16xf32>
    %125 = arith.addf %122, %124 : vector<64x16xf32>
    %cst_120 = arith.constant 0.000000e+00 : f32
    %126 = vector.broadcast %cst_120 : f32 to vector<64x16xf32>
    %127 = arith.maximumf %125, %126 : vector<64x16xf32>
    %c0_121 = arith.constant 0 : index
    %c1_122 = arith.constant 1 : index
    %c1_123 = arith.constant 1 : index
    %c0_124 = arith.constant 0 : index
    %c0_125 = arith.constant 0 : index
    %128 = vector.load %arg4[%c0_121, %c1_122, %c1_123, %c0_124, %c0_125] : memref<1x2x2x64x16xf32, #tpu.memory_space<vmem>>, vector<1x1x1x64x16xf32>
    %129 = vector.shape_cast %128 : vector<1x1x1x64x16xf32> to vector<64x16xf32>
    %130 = vector.shape_cast %127 : vector<64x16xf32> to vector<1x1x1x64x16xf32>
    tpu.vector_store %arg4[%c0_121, %c1_122, %c1_123, %c0_124, %c0_125], %130 {strides = array<i32>} : memref<1x2x2x64x16xf32, #tpu.memory_space<vmem>>, vector<1x1x1x64x16xf32>,
    return
  }
  func.func @transform_0(%arg0: i32) -> (i32, i32, i32, i32) {
    %c0_i32 = arith.constant 0 : i32
    %c0_i32_0 = arith.constant 0 : i32
    %c0_i32_1 = arith.constant 0 : i32
    %c0_i32_2 = arith.constant 0 : i32
    return %arg0, %c0_i32, %c0_i32_0, %c0_i32_1 : i32, i32, i32, i32
  }
  func.func @transform_1(%arg0: i32) -> (i32, i32, i32, i32) {
    %c0_i32 = arith.constant 0 : i32
    %c0_i32_0 = arith.constant 0 : i32
    %c0_i32_1 = arith.constant 0 : i32
    %c0_i32_2 = arith.constant 0 : i32
    %c0_i32_3 = arith.constant 0 : i32
    return %c0_i32, %c0_i32_0, %c0_i32_1, %c0_i32_2 : i32, i32, i32, i32
  }
  func.func @transform_2(%arg0: i32) -> (i32, i32) {
    %c0_i32 = arith.constant 0 : i32
    %c0_i32_0 = arith.constant 0 : i32
    %c0_i32_1 = arith.constant 0 : i32
    return %c0_i32, %c0_i32_0 : i32, i32
  }
  func.func @transform_3(%arg0: i32) -> (i32, i32, i32, i32, i32) {
    %c0_i32 = arith.constant 0 : i32
    %c0_i32_0 = arith.constant 0 : i32
    %c0_i32_1 = arith.constant 0 : i32
    %c0_i32_2 = arith.constant 0 : i32
    %c0_i32_3 = arith.constant 0 : i32
    return %arg0, %c0_i32, %c0_i32_0, %c0_i32_1, %c0_i32_2 : i32, i32, i32, i32, i32
  }
}

module attributes {stable_mosaic.version = 11 : i64} {
  func.func @kernel(%arg0: i32, %arg1: memref<1x18x18x16xf32, #tpu.memory_space<vmem>>, %arg2: memref<4x4x3x16xf32, #tpu.memory_space<vmem>>, %arg3: memref<3x1xf32, #tpu.memory_space<vmem>>, %arg4: memref<1x2x2x3x256xf32, #tpu.memory_space<vmem>>) attributes {dimension_semantics = [#tpu.dimension_semantics<parallel>], iteration_bounds = array<i64: 2>, scalar_prefetch = 0 : i64, scratch_operands = 0 : i64, tpu.core_type = #tpu.core_type<tc>, window_params = [{transform_indices = @transform_0, window_bounds = array<i64: 1, 18, 18, 16>}, {pipeline_mode = #tpu.pipeline_mode<synchronous>, transform_indices = @transform_1, window_bounds = array<i64: 4, 4, 3, 16>}, {pipeline_mode = #tpu.pipeline_mode<synchronous>, transform_indices = @transform_2, window_bounds = array<i64: 3, 1>}, {transform_indices = @transform_3, window_bounds = array<i64: 1, 2, 2, 3, 256>}]} {
    %c0 = arith.constant 0 : index
    %c0_0 = arith.constant 0 : index
    %c0_1 = arith.constant 0 : index
    %c0_2 = arith.constant 0 : index
    %0 = vector.load %arg1[%c0, %c0_0, %c0_1, %c0_2] : memref<1x18x18x16xf32, #tpu.memory_space<vmem>>, vector<1x18x16x16xf32>
    %1 = vector.shape_cast %0 : vector<1x18x16x16xf32> to vector<18x16x16xf32>
    %2 = vector.shape_cast %1 : vector<18x16x16xf32> to vector<288x16xf32>
    %c0_3 = arith.constant 0 : index
    %c0_4 = arith.constant 0 : index
    %c1 = arith.constant 1 : index
    %c0_5 = arith.constant 0 : index
    %3 = vector.load %arg1[%c0_3, %c0_4, %c1, %c0_5] : memref<1x18x18x16xf32, #tpu.memory_space<vmem>>, vector<1x18x16x16xf32>
    %4 = vector.shape_cast %3 : vector<1x18x16x16xf32> to vector<18x16x16xf32>
    %5 = vector.shape_cast %4 : vector<18x16x16xf32> to vector<288x16xf32>
    %c0_6 = arith.constant 0 : index
    %c0_7 = arith.constant 0 : index
    %c2 = arith.constant 2 : index
    %c0_8 = arith.constant 0 : index
    %6 = vector.load %arg1[%c0_6, %c0_7, %c2, %c0_8] : memref<1x18x18x16xf32, #tpu.memory_space<vmem>>, vector<1x18x16x16xf32>
    %7 = vector.shape_cast %6 : vector<1x18x16x16xf32> to vector<18x16x16xf32>
    %8 = vector.shape_cast %7 : vector<18x16x16xf32> to vector<288x16xf32>
    %cst = arith.constant 0.000000e+00 : f32
    %9 = vector.broadcast %cst : f32 to vector<3x256xf32>
    %10 = vector.extract_strided_slice %2 {offsets = [0, 0], sizes = [256, 16], strides = [1, 1]} : vector<288x16xf32> to vector<256x16xf32>
    %c3 = arith.constant 3 : index
    %c3_9 = arith.constant 3 : index
    %c0_10 = arith.constant 0 : index
    %c0_11 = arith.constant 0 : index
    %11 = vector.load %arg2[%c3, %c3_9, %c0_10, %c0_11] : memref<4x4x3x16xf32, #tpu.memory_space<vmem>>, vector<1x1x3x16xf32>
    %12 = vector.shape_cast %11 : vector<1x1x3x16xf32> to vector<3x16xf32>
    %cst_12 = arith.constant dense<0.000000e+00> : vector<3x256xf32>
    %13 = tpu.matmul %12, %10, %cst_12 {dimension_numbers = #tpu.dot_dimension_numbers<[1], [1], [0], [0], [0, 0, 1, 0], [], []>} : vector<3x16xf32>, vector<256x16xf32>, vector<3x256xf32> -> vector<3x256xf32>
    %14 = arith.addf %9, %13 : vector<3x256xf32>
    %15 = vector.extract_strided_slice %5 {offsets = [0, 0], sizes = [256, 16], strides = [1, 1]} : vector<288x16xf32> to vector<256x16xf32>
    %c3_13 = arith.constant 3 : index
    %c1_14 = arith.constant 1 : index
    %c0_15 = arith.constant 0 : index
    %c0_16 = arith.constant 0 : index
    %16 = vector.load %arg2[%c3_13, %c1_14, %c0_15, %c0_16] : memref<4x4x3x16xf32, #tpu.memory_space<vmem>>, vector<1x1x3x16xf32>
    %17 = vector.shape_cast %16 : vector<1x1x3x16xf32> to vector<3x16xf32>
    %cst_17 = arith.constant dense<0.000000e+00> : vector<3x256xf32>
    %18 = tpu.matmul %17, %15, %cst_17 {dimension_numbers = #tpu.dot_dimension_numbers<[1], [1], [0], [0], [0, 0, 1, 0], [], []>} : vector<3x16xf32>, vector<256x16xf32>, vector<3x256xf32> -> vector<3x256xf32>
    %19 = arith.addf %14, %18 : vector<3x256xf32>
    %20 = vector.extract_strided_slice %2 {offsets = [16, 0], sizes = [256, 16], strides = [1, 1]} : vector<288x16xf32> to vector<256x16xf32>
    %c1_18 = arith.constant 1 : index
    %c3_19 = arith.constant 3 : index
    %c0_20 = arith.constant 0 : index
    %c0_21 = arith.constant 0 : index
    %21 = vector.load %arg2[%c1_18, %c3_19, %c0_20, %c0_21] : memref<4x4x3x16xf32, #tpu.memory_space<vmem>>, vector<1x1x3x16xf32>
    %22 = vector.shape_cast %21 : vector<1x1x3x16xf32> to vector<3x16xf32>
    %cst_22 = arith.constant dense<0.000000e+00> : vector<3x256xf32>
    %23 = tpu.matmul %22, %20, %cst_22 {dimension_numbers = #tpu.dot_dimension_numbers<[1], [1], [0], [0], [0, 0, 1, 0], [], []>} : vector<3x16xf32>, vector<256x16xf32>, vector<3x256xf32> -> vector<3x256xf32>
    %24 = arith.addf %19, %23 : vector<3x256xf32>
    %25 = vector.extract_strided_slice %5 {offsets = [16, 0], sizes = [256, 16], strides = [1, 1]} : vector<288x16xf32> to vector<256x16xf32>
    %c1_23 = arith.constant 1 : index
    %c1_24 = arith.constant 1 : index
    %c0_25 = arith.constant 0 : index
    %c0_26 = arith.constant 0 : index
    %26 = vector.load %arg2[%c1_23, %c1_24, %c0_25, %c0_26] : memref<4x4x3x16xf32, #tpu.memory_space<vmem>>, vector<1x1x3x16xf32>
    %27 = vector.shape_cast %26 : vector<1x1x3x16xf32> to vector<3x16xf32>
    %cst_27 = arith.constant dense<0.000000e+00> : vector<3x256xf32>
    %28 = tpu.matmul %27, %25, %cst_27 {dimension_numbers = #tpu.dot_dimension_numbers<[1], [1], [0], [0], [0, 0, 1, 0], [], []>} : vector<3x16xf32>, vector<256x16xf32>, vector<3x256xf32> -> vector<3x256xf32>
    %29 = arith.addf %24, %28 : vector<3x256xf32>
    %c0_28 = arith.constant 0 : index
    %c0_29 = arith.constant 0 : index
    %30 = vector.load %arg3[%c0_28, %c0_29] : memref<3x1xf32, #tpu.memory_space<vmem>>, vector<3x1xf32>
    %31 = vector.broadcast %30 : vector<3x1xf32> to vector<3x256xf32>
    %32 = arith.addf %29, %31 : vector<3x256xf32>
    %c0_30 = arith.constant 0 : index
    %c0_31 = arith.constant 0 : index
    %c0_32 = arith.constant 0 : index
    %c0_33 = arith.constant 0 : index
    %c0_34 = arith.constant 0 : index
    %33 = vector.load %arg4[%c0_30, %c0_31, %c0_32, %c0_33, %c0_34] : memref<1x2x2x3x256xf32, #tpu.memory_space<vmem>>, vector<1x1x1x3x256xf32>
    %34 = vector.shape_cast %33 : vector<1x1x1x3x256xf32> to vector<3x256xf32>
    %35 = vector.shape_cast %32 : vector<3x256xf32> to vector<1x1x1x3x256xf32>
    tpu.vector_store %arg4[%c0_30, %c0_31, %c0_32, %c0_33, %c0_34], %35 {strides = array<i32>} : memref<1x2x2x3x256xf32, #tpu.memory_space<vmem>>, vector<1x1x1x3x256xf32>,
    %cst_35 = arith.constant 0.000000e+00 : f32
    %36 = vector.broadcast %cst_35 : f32 to vector<3x256xf32>
    %37 = vector.extract_strided_slice %5 {offsets = [0, 0], sizes = [256, 16], strides = [1, 1]} : vector<288x16xf32> to vector<256x16xf32>
    %c3_36 = arith.constant 3 : index
    %c2_37 = arith.constant 2 : index
    %c0_38 = arith.constant 0 : index
    %c0_39 = arith.constant 0 : index
    %38 = vector.load %arg2[%c3_36, %c2_37, %c0_38, %c0_39] : memref<4x4x3x16xf32, #tpu.memory_space<vmem>>, vector<1x1x3x16xf32>
    %39 = vector.shape_cast %38 : vector<1x1x3x16xf32> to vector<3x16xf32>
    %cst_40 = arith.constant dense<0.000000e+00> : vector<3x256xf32>
    %40 = tpu.matmul %39, %37, %cst_40 {dimension_numbers = #tpu.dot_dimension_numbers<[1], [1], [0], [0], [0, 0, 1, 0], [], []>} : vector<3x16xf32>, vector<256x16xf32>, vector<3x256xf32> -> vector<3x256xf32>
    %41 = arith.addf %36, %40 : vector<3x256xf32>
    %42 = vector.extract_strided_slice %8 {offsets = [0, 0], sizes = [256, 16], strides = [1, 1]} : vector<288x16xf32> to vector<256x16xf32>
    %c3_41 = arith.constant 3 : index
    %c0_42 = arith.constant 0 : index
    %c0_43 = arith.constant 0 : index
    %c0_44 = arith.constant 0 : index
    %43 = vector.load %arg2[%c3_41, %c0_42, %c0_43, %c0_44] : memref<4x4x3x16xf32, #tpu.memory_space<vmem>>, vector<1x1x3x16xf32>
    %44 = vector.shape_cast %43 : vector<1x1x3x16xf32> to vector<3x16xf32>
    %cst_45 = arith.constant dense<0.000000e+00> : vector<3x256xf32>
    %45 = tpu.matmul %44, %42, %cst_45 {dimension_numbers = #tpu.dot_dimension_numbers<[1], [1], [0], [0], [0, 0, 1, 0], [], []>} : vector<3x16xf32>, vector<256x16xf32>, vector<3x256xf32> -> vector<3x256xf32>
    %46 = arith.addf %41, %45 : vector<3x256xf32>
    %47 = vector.extract_strided_slice %5 {offsets = [16, 0], sizes = [256, 16], strides = [1, 1]} : vector<288x16xf32> to vector<256x16xf32>
    %c1_46 = arith.constant 1 : index
    %c2_47 = arith.constant 2 : index
    %c0_48 = arith.constant 0 : index
    %c0_49 = arith.constant 0 : index
    %48 = vector.load %arg2[%c1_46, %c2_47, %c0_48, %c0_49] : memref<4x4x3x16xf32, #tpu.memory_space<vmem>>, vector<1x1x3x16xf32>
    %49 = vector.shape_cast %48 : vector<1x1x3x16xf32> to vector<3x16xf32>
    %cst_50 = arith.constant dense<0.000000e+00> : vector<3x256xf32>
    %50 = tpu.matmul %49, %47, %cst_50 {dimension_numbers = #tpu.dot_dimension_numbers<[1], [1], [0], [0], [0, 0, 1, 0], [], []>} : vector<3x16xf32>, vector<256x16xf32>, vector<3x256xf32> -> vector<3x256xf32>
    %51 = arith.addf %46, %50 : vector<3x256xf32>
    %52 = vector.extract_strided_slice %8 {offsets = [16, 0], sizes = [256, 16], strides = [1, 1]} : vector<288x16xf32> to vector<256x16xf32>
    %c1_51 = arith.constant 1 : index
    %c0_52 = arith.constant 0 : index
    %c0_53 = arith.constant 0 : index
    %c0_54 = arith.constant 0 : index
    %53 = vector.load %arg2[%c1_51, %c0_52, %c0_53, %c0_54] : memref<4x4x3x16xf32, #tpu.memory_space<vmem>>, vector<1x1x3x16xf32>
    %54 = vector.shape_cast %53 : vector<1x1x3x16xf32> to vector<3x16xf32>
    %cst_55 = arith.constant dense<0.000000e+00> : vector<3x256xf32>
    %55 = tpu.matmul %54, %52, %cst_55 {dimension_numbers = #tpu.dot_dimension_numbers<[1], [1], [0], [0], [0, 0, 1, 0], [], []>} : vector<3x16xf32>, vector<256x16xf32>, vector<3x256xf32> -> vector<3x256xf32>
    %56 = arith.addf %51, %55 : vector<3x256xf32>
    %c0_56 = arith.constant 0 : index
    %c0_57 = arith.constant 0 : index
    %57 = vector.load %arg3[%c0_56, %c0_57] : memref<3x1xf32, #tpu.memory_space<vmem>>, vector<3x1xf32>
    %58 = vector.broadcast %57 : vector<3x1xf32> to vector<3x256xf32>
    %59 = arith.addf %56, %58 : vector<3x256xf32>
    %c0_58 = arith.constant 0 : index
    %c0_59 = arith.constant 0 : index
    %c1_60 = arith.constant 1 : index
    %c0_61 = arith.constant 0 : index
    %c0_62 = arith.constant 0 : index
    %60 = vector.load %arg4[%c0_58, %c0_59, %c1_60, %c0_61, %c0_62] : memref<1x2x2x3x256xf32, #tpu.memory_space<vmem>>, vector<1x1x1x3x256xf32>
    %61 = vector.shape_cast %60 : vector<1x1x1x3x256xf32> to vector<3x256xf32>
    %62 = vector.shape_cast %59 : vector<3x256xf32> to vector<1x1x1x3x256xf32>
    tpu.vector_store %arg4[%c0_58, %c0_59, %c1_60, %c0_61, %c0_62], %62 {strides = array<i32>} : memref<1x2x2x3x256xf32, #tpu.memory_space<vmem>>, vector<1x1x1x3x256xf32>,
    %cst_63 = arith.constant 0.000000e+00 : f32
    %63 = vector.broadcast %cst_63 : f32 to vector<3x256xf32>
    %64 = vector.extract_strided_slice %2 {offsets = [16, 0], sizes = [256, 16], strides = [1, 1]} : vector<288x16xf32> to vector<256x16xf32>
    %c2_64 = arith.constant 2 : index
    %c3_65 = arith.constant 3 : index
    %c0_66 = arith.constant 0 : index
    %c0_67 = arith.constant 0 : index
    %65 = vector.load %arg2[%c2_64, %c3_65, %c0_66, %c0_67] : memref<4x4x3x16xf32, #tpu.memory_space<vmem>>, vector<1x1x3x16xf32>
    %66 = vector.shape_cast %65 : vector<1x1x3x16xf32> to vector<3x16xf32>
    %cst_68 = arith.constant dense<0.000000e+00> : vector<3x256xf32>
    %67 = tpu.matmul %66, %64, %cst_68 {dimension_numbers = #tpu.dot_dimension_numbers<[1], [1], [0], [0], [0, 0, 1, 0], [], []>} : vector<3x16xf32>, vector<256x16xf32>, vector<3x256xf32> -> vector<3x256xf32>
    %68 = arith.addf %63, %67 : vector<3x256xf32>
    %69 = vector.extract_strided_slice %5 {offsets = [16, 0], sizes = [256, 16], strides = [1, 1]} : vector<288x16xf32> to vector<256x16xf32>
    %c2_69 = arith.constant 2 : index
    %c1_70 = arith.constant 1 : index
    %c0_71 = arith.constant 0 : index
    %c0_72 = arith.constant 0 : index
    %70 = vector.load %arg2[%c2_69, %c1_70, %c0_71, %c0_72] : memref<4x4x3x16xf32, #tpu.memory_space<vmem>>, vector<1x1x3x16xf32>
    %71 = vector.shape_cast %70 : vector<1x1x3x16xf32> to vector<3x16xf32>
    %cst_73 = arith.constant dense<0.000000e+00> : vector<3x256xf32>
    %72 = tpu.matmul %71, %69, %cst_73 {dimension_numbers = #tpu.dot_dimension_numbers<[1], [1], [0], [0], [0, 0, 1, 0], [], []>} : vector<3x16xf32>, vector<256x16xf32>, vector<3x256xf32> -> vector<3x256xf32>
    %73 = arith.addf %68, %72 : vector<3x256xf32>
    %74 = vector.extract_strided_slice %2 {offsets = [32, 0], sizes = [256, 16], strides = [1, 1]} : vector<288x16xf32> to vector<256x16xf32>
    %c0_74 = arith.constant 0 : index
    %c3_75 = arith.constant 3 : index
    %c0_76 = arith.constant 0 : index
    %c0_77 = arith.constant 0 : index
    %75 = vector.load %arg2[%c0_74, %c3_75, %c0_76, %c0_77] : memref<4x4x3x16xf32, #tpu.memory_space<vmem>>, vector<1x1x3x16xf32>
    %76 = vector.shape_cast %75 : vector<1x1x3x16xf32> to vector<3x16xf32>
    %cst_78 = arith.constant dense<0.000000e+00> : vector<3x256xf32>
    %77 = tpu.matmul %76, %74, %cst_78 {dimension_numbers = #tpu.dot_dimension_numbers<[1], [1], [0], [0], [0, 0, 1, 0], [], []>} : vector<3x16xf32>, vector<256x16xf32>, vector<3x256xf32> -> vector<3x256xf32>
    %78 = arith.addf %73, %77 : vector<3x256xf32>
    %79 = vector.extract_strided_slice %5 {offsets = [32, 0], sizes = [256, 16], strides = [1, 1]} : vector<288x16xf32> to vector<256x16xf32>
    %c0_79 = arith.constant 0 : index
    %c1_80 = arith.constant 1 : index
    %c0_81 = arith.constant 0 : index
    %c0_82 = arith.constant 0 : index
    %80 = vector.load %arg2[%c0_79, %c1_80, %c0_81, %c0_82] : memref<4x4x3x16xf32, #tpu.memory_space<vmem>>, vector<1x1x3x16xf32>
    %81 = vector.shape_cast %80 : vector<1x1x3x16xf32> to vector<3x16xf32>
    %cst_83 = arith.constant dense<0.000000e+00> : vector<3x256xf32>
    %82 = tpu.matmul %81, %79, %cst_83 {dimension_numbers = #tpu.dot_dimension_numbers<[1], [1], [0], [0], [0, 0, 1, 0], [], []>} : vector<3x16xf32>, vector<256x16xf32>, vector<3x256xf32> -> vector<3x256xf32>
    %83 = arith.addf %78, %82 : vector<3x256xf32>
    %c0_84 = arith.constant 0 : index
    %c0_85 = arith.constant 0 : index
    %84 = vector.load %arg3[%c0_84, %c0_85] : memref<3x1xf32, #tpu.memory_space<vmem>>, vector<3x1xf32>
    %85 = vector.broadcast %84 : vector<3x1xf32> to vector<3x256xf32>
    %86 = arith.addf %83, %85 : vector<3x256xf32>
    %c0_86 = arith.constant 0 : index
    %c1_87 = arith.constant 1 : index
    %c0_88 = arith.constant 0 : index
    %c0_89 = arith.constant 0 : index
    %c0_90 = arith.constant 0 : index
    %87 = vector.load %arg4[%c0_86, %c1_87, %c0_88, %c0_89, %c0_90] : memref<1x2x2x3x256xf32, #tpu.memory_space<vmem>>, vector<1x1x1x3x256xf32>
    %88 = vector.shape_cast %87 : vector<1x1x1x3x256xf32> to vector<3x256xf32>
    %89 = vector.shape_cast %86 : vector<3x256xf32> to vector<1x1x1x3x256xf32>
    tpu.vector_store %arg4[%c0_86, %c1_87, %c0_88, %c0_89, %c0_90], %89 {strides = array<i32>} : memref<1x2x2x3x256xf32, #tpu.memory_space<vmem>>, vector<1x1x1x3x256xf32>,
    %cst_91 = arith.constant 0.000000e+00 : f32
    %90 = vector.broadcast %cst_91 : f32 to vector<3x256xf32>
    %91 = vector.extract_strided_slice %5 {offsets = [16, 0], sizes = [256, 16], strides = [1, 1]} : vector<288x16xf32> to vector<256x16xf32>
    %c2_92 = arith.constant 2 : index
    %c2_93 = arith.constant 2 : index
    %c0_94 = arith.constant 0 : index
    %c0_95 = arith.constant 0 : index
    %92 = vector.load %arg2[%c2_92, %c2_93, %c0_94, %c0_95] : memref<4x4x3x16xf32, #tpu.memory_space<vmem>>, vector<1x1x3x16xf32>
    %93 = vector.shape_cast %92 : vector<1x1x3x16xf32> to vector<3x16xf32>
    %cst_96 = arith.constant dense<0.000000e+00> : vector<3x256xf32>
    %94 = tpu.matmul %93, %91, %cst_96 {dimension_numbers = #tpu.dot_dimension_numbers<[1], [1], [0], [0], [0, 0, 1, 0], [], []>} : vector<3x16xf32>, vector<256x16xf32>, vector<3x256xf32> -> vector<3x256xf32>
    %95 = arith.addf %90, %94 : vector<3x256xf32>
    %96 = vector.extract_strided_slice %8 {offsets = [16, 0], sizes = [256, 16], strides = [1, 1]} : vector<288x16xf32> to vector<256x16xf32>
    %c2_97 = arith.constant 2 : index
    %c0_98 = arith.constant 0 : index
    %c0_99 = arith.constant 0 : index
    %c0_100 = arith.constant 0 : index
    %97 = vector.load %arg2[%c2_97, %c0_98, %c0_99, %c0_100] : memref<4x4x3x16xf32, #tpu.memory_space<vmem>>, vector<1x1x3x16xf32>
    %98 = vector.shape_cast %97 : vector<1x1x3x16xf32> to vector<3x16xf32>
    %cst_101 = arith.constant dense<0.000000e+00> : vector<3x256xf32>
    %99 = tpu.matmul %98, %96, %cst_101 {dimension_numbers = #tpu.dot_dimension_numbers<[1], [1], [0], [0], [0, 0, 1, 0], [], []>} : vector<3x16xf32>, vector<256x16xf32>, vector<3x256xf32> -> vector<3x256xf32>
    %100 = arith.addf %95, %99 : vector<3x256xf32>
    %101 = vector.extract_strided_slice %5 {offsets = [32, 0], sizes = [256, 16], strides = [1, 1]} : vector<288x16xf32> to vector<256x16xf32>
    %c0_102 = arith.constant 0 : index
    %c2_103 = arith.constant 2 : index
    %c0_104 = arith.constant 0 : index
    %c0_105 = arith.constant 0 : index
    %102 = vector.load %arg2[%c0_102, %c2_103, %c0_104, %c0_105] : memref<4x4x3x16xf32, #tpu.memory_space<vmem>>, vector<1x1x3x16xf32>
    %103 = vector.shape_cast %102 : vector<1x1x3x16xf32> to vector<3x16xf32>
    %cst_106 = arith.constant dense<0.000000e+00> : vector<3x256xf32>
    %104 = tpu.matmul %103, %101, %cst_106 {dimension_numbers = #tpu.dot_dimension_numbers<[1], [1], [0], [0], [0, 0, 1, 0], [], []>} : vector<3x16xf32>, vector<256x16xf32>, vector<3x256xf32> -> vector<3x256xf32>
    %105 = arith.addf %100, %104 : vector<3x256xf32>
    %106 = vector.extract_strided_slice %8 {offsets = [32, 0], sizes = [256, 16], strides = [1, 1]} : vector<288x16xf32> to vector<256x16xf32>
    %c0_107 = arith.constant 0 : index
    %c0_108 = arith.constant 0 : index
    %c0_109 = arith.constant 0 : index
    %c0_110 = arith.constant 0 : index
    %107 = vector.load %arg2[%c0_107, %c0_108, %c0_109, %c0_110] : memref<4x4x3x16xf32, #tpu.memory_space<vmem>>, vector<1x1x3x16xf32>
    %108 = vector.shape_cast %107 : vector<1x1x3x16xf32> to vector<3x16xf32>
    %cst_111 = arith.constant dense<0.000000e+00> : vector<3x256xf32>
    %109 = tpu.matmul %108, %106, %cst_111 {dimension_numbers = #tpu.dot_dimension_numbers<[1], [1], [0], [0], [0, 0, 1, 0], [], []>} : vector<3x16xf32>, vector<256x16xf32>, vector<3x256xf32> -> vector<3x256xf32>
    %110 = arith.addf %105, %109 : vector<3x256xf32>
    %c0_112 = arith.constant 0 : index
    %c0_113 = arith.constant 0 : index
    %111 = vector.load %arg3[%c0_112, %c0_113] : memref<3x1xf32, #tpu.memory_space<vmem>>, vector<3x1xf32>
    %112 = vector.broadcast %111 : vector<3x1xf32> to vector<3x256xf32>
    %113 = arith.addf %110, %112 : vector<3x256xf32>
    %c0_114 = arith.constant 0 : index
    %c1_115 = arith.constant 1 : index
    %c1_116 = arith.constant 1 : index
    %c0_117 = arith.constant 0 : index
    %c0_118 = arith.constant 0 : index
    %114 = vector.load %arg4[%c0_114, %c1_115, %c1_116, %c0_117, %c0_118] : memref<1x2x2x3x256xf32, #tpu.memory_space<vmem>>, vector<1x1x1x3x256xf32>
    %115 = vector.shape_cast %114 : vector<1x1x1x3x256xf32> to vector<3x256xf32>
    %116 = vector.shape_cast %113 : vector<3x256xf32> to vector<1x1x1x3x256xf32>
    tpu.vector_store %arg4[%c0_114, %c1_115, %c1_116, %c0_117, %c0_118], %116 {strides = array<i32>} : memref<1x2x2x3x256xf32, #tpu.memory_space<vmem>>, vector<1x1x1x3x256xf32>,
    return
  }
  func.func @transform_0(%arg0: i32) -> (i32, i32, i32, i32) {
    %c0_i32 = arith.constant 0 : i32
    %c0_i32_0 = arith.constant 0 : i32
    %c0_i32_1 = arith.constant 0 : i32
    %c0_i32_2 = arith.constant 0 : i32
    return %arg0, %c0_i32, %c0_i32_0, %c0_i32_1 : i32, i32, i32, i32
  }
  func.func @transform_1(%arg0: i32) -> (i32, i32, i32, i32) {
    %c0_i32 = arith.constant 0 : i32
    %c0_i32_0 = arith.constant 0 : i32
    %c0_i32_1 = arith.constant 0 : i32
    %c0_i32_2 = arith.constant 0 : i32
    %c0_i32_3 = arith.constant 0 : i32
    return %c0_i32, %c0_i32_0, %c0_i32_1, %c0_i32_2 : i32, i32, i32, i32
  }
  func.func @transform_2(%arg0: i32) -> (i32, i32) {
    %c0_i32 = arith.constant 0 : i32
    %c0_i32_0 = arith.constant 0 : i32
    %c0_i32_1 = arith.constant 0 : i32
    return %c0_i32, %c0_i32_0 : i32, i32
  }
  func.func @transform_3(%arg0: i32) -> (i32, i32, i32, i32, i32) {
    %c0_i32 = arith.constant 0 : i32
    %c0_i32_0 = arith.constant 0 : i32
    %c0_i32_1 = arith.constant 0 : i32
    %c0_i32_2 = arith.constant 0 : i32
    %c0_i32_3 = arith.constant 0 : i32
    return %arg0, %c0_i32, %c0_i32_0, %c0_i32_1, %c0_i32_2 : i32, i32, i32, i32, i32
  }
}

</mosaic_0001>

<llo_original>
// kernel: decoder_forward.5
$region0: #{decoder_forward.5}
  #allocation0 [shape = 'u32[]', space=smem, size = 0x4, offset = 0x4, fixed_abs, tag = 'smem constant byte address 0x4 - core index']
  #allocation1 [shape = 'u32[144,128]{1,0:T(1,128)}', space=vmem, size = 0x12000, scoped, tag = 'internal scratch']
  %s0 = inlined_call_operand.vmem [shape: f32[2,10,10,4], index: 0, kind: input, shape index: {}]
  %s1 = inlined_call_operand.hbm [shape: f32[3,3,4,32], index: 1, kind: input, shape index: {}]
  %s2 = inlined_call_operand.hbm [shape: f32[1,32], index: 2, kind: input, shape index: {}]
  %s3 = inlined_call_operand.vmem [shape: f32[2,64,32], index: 3, kind: output, shape index: {}]
  %s4 = sld [smem:[#allocation0]]
  $region53: #{decoder_forward.5} parent=0
    _
  %s6 = ssub.s32 1, %s4
  %s7 = scalar_select 0, %s6, %s4
  $region1: #{decoder_forward.5} parent=0
    #allocation2 [shape = 'u8[18432]{0}', space=vmem, size = 0x4800, scoped, tag = 'input window, operand 1, single buffered']
    #allocation3 [shape = 's32[2]{0}', space=sflag, size = 0x8, scoped, tag = 'scoped memory for decoder_forward.5']
    #allocation4 [shape = 'u8[512]{0}', space=vmem, size = 0x400, scoped, tag = 'input window, operand 2, single buffered']
    #allocation5 [shape = 's32[1]{0}', space=sflag, size = 0x4, scoped, tag = 'scoped memory for decoder_forward.5']
    %8 = vsyncpa [#allocation3], 0
    %9 = vsyncpa [#allocation5], 0
    loop: start=0, step=1, limit=4
    $region2: #{decoder_forward.5} parent=1 // loop_pre_header
      _
    $region3: #{decoder_forward.5} parent=1 // loop_header
      %s11 = sphi 0, %s15
      %p12 = scmp.ge.s32.totalorder %s11, 4
      %s21 = sphi 0, %s23
      %s24 = sphi 0, %s21
      %s25 = sphi 0, %s24
      %s41 = sphi 0, %s25
      %s45 = sphi 0, %s45
      %s47 = sphi 0, %s45
      %s48 = sphi 0, %s47
      %s62 = sphi 0, %s48
      %s66 = sphi 0, %s66
      %s68 = sphi 0, %s66
      %s69 = sphi 0, %s68
      %s83 = sphi 0, %s69
      %s89 = sphi 0, %s91
      %s92 = sphi 0, %s89
      %s93 = sphi 0, %s92
      %s109 = sphi 0, %s93
    $region4: #{decoder_forward.5} parent=1 // loop_header_branch
      %14 = sbr.rel (%p12) target = $region8
    $region5: #{decoder_forward.5} parent=1 // loop_body
      %s16 = ssub.s32 %s11, 1
      %s17 = ssub.s32 %s11, 2
      %s18 = sadd.s32 %s11, 1
      %s19 = ssub.s32 %s11, %s18
      %p20 = scmp.eq.s32.totalorder %s19, 0
      %s22 = sadd.s32 %s21, 1
      %s23 = scalar_select %p20, %s21, %s22
      %p26 = pneg %p20
      %p27 = scmp.eq.s32.totalorder %s11, 1
      %p28 = por %p26, %p27
      %p29 = scmp.ne.s32.totalorder %s21, %s24
      %p30 = scmp.eq.s32.totalorder %s11, 0
      %p31 = por %p29, %p30
      %p32 = scmp.ne.s32.totalorder %s21, %s24
      %p33 = scmp.eq.s32.totalorder %s16, 1
      %p34 = por %p32, %p33
      %p35 = scmp.ne.s32.totalorder %s24, %s25
      %p36 = scmp.eq.s32.totalorder %s16, 0
      %p37 = por %p35, %p36
      %p38 = scmp.ne.s32.totalorder %s24, %s25
      %p39 = scmp.eq.s32.totalorder %s17, 1
      %p40 = por %p38, %p39
      %p42 = scmp.ne.s32.totalorder %s25, %s41
      %p43 = scmp.eq.s32.totalorder %s17, 0
      %p44 = por %p42, %p43
      %s46 = sadd.s32 %s45, 1
      %p49 = scmp.eq.s32.totalorder %s11, 1
      %p50 = scmp.ne.s32.totalorder %s45, %s47
      %p51 = scmp.eq.s32.totalorder %s11, 0
      %p52 = por %p50, %p51
      %p53 = scmp.ne.s32.totalorder %s45, %s47
      %p54 = scmp.eq.s32.totalorder %s16, 1
      %p55 = por %p53, %p54
      %p56 = scmp.ne.s32.totalorder %s47, %s48
      %p57 = scmp.eq.s32.totalorder %s16, 0
      %p58 = por %p56, %p57
      %p59 = scmp.ne.s32.totalorder %s47, %s48
      %p60 = scmp.eq.s32.totalorder %s17, 1
      %p61 = por %p59, %p60
      %p63 = scmp.ne.s32.totalorder %s48, %s62
      %p64 = scmp.eq.s32.totalorder %s17, 0
      %p65 = por %p63, %p64
      %s67 = sadd.s32 %s66, 1
      %p70 = scmp.eq.s32.totalorder %s11, 1
      %p71 = scmp.ne.s32.totalorder %s66, %s68
      %p72 = scmp.eq.s32.totalorder %s11, 0
      %p73 = por %p71, %p72
      %p74 = scmp.ne.s32.totalorder %s66, %s68
      %p75 = scmp.eq.s32.totalorder %s16, 1
      %p76 = por %p74, %p75
      %p77 = scmp.ne.s32.totalorder %s68, %s69
      %p78 = scmp.eq.s32.totalorder %s16, 0
      %p79 = por %p77, %p78
      %p80 = scmp.ne.s32.totalorder %s68, %s69
      %p81 = scmp.eq.s32.totalorder %s17, 1
      %p82 = por %p80, %p81
      %p84 = scmp.ne.s32.totalorder %s69, %s83
      %p85 = scmp.eq.s32.totalorder %s17, 0
      %p86 = por %p84, %p85
      %s87 = ssub.s32 %s11, %s18
      %p88 = scmp.eq.s32.totalorder %s87, 0
      %s90 = sadd.s32 %s89, 1
      %s91 = scalar_select %p88, %s89, %s90
      %p94 = pneg %p88
      %p95 = scmp.eq.s32.totalorder %s11, 1
      %p96 = por %p94, %p95
      %p97 = scmp.ne.s32.totalorder %s89, %s92
      %p98 = scmp.eq.s32.totalorder %s11, 0
      %p99 = por %p97, %p98
      %p100 = scmp.ne.s32.totalorder %s89, %s92
      %p101 = scmp.eq.s32.totalorder %s16, 1
      %p102 = por %p100, %p101
      %p103 = scmp.ne.s32.totalorder %s92, %s93
      %p104 = scmp.eq.s32.totalorder %s16, 0
      %p105 = por %p103, %p104
      %p106 = scmp.ne.s32.totalorder %s92, %s93
      %p107 = scmp.eq.s32.totalorder %s17, 1
      %p108 = por %p106, %p107
      %p110 = scmp.ne.s32.totalorder %s93, %s109
      %p111 = scmp.eq.s32.totalorder %s17, 0
      %p112 = por %p110, %p111
      %p113 = scmp.le.s32.totalorder 1, %s11
      %p114 = scmp.lt.s32.totalorder %s11, 3
      %p115 = pnand %p113, %p114
      %p116 = pneg %p115
      // Predicated region
      $region9: #{decoder_forward.5} parent=5 // pred_check
        _
      $region10: #{decoder_forward.5} parent=5 // pred_check_branch
        %118 = sbr.rel (%p115) target = $region12
      $region11: #{decoder_forward.5} parent=5 // pred_region
        %s119 = ssub.s32 %s11, 1
        // Predicated region
        $region13: #{decoder_forward.5} parent=11 // pred_check
          %p120 = pneg %p58
        $region14: #{decoder_forward.5} parent=11 // pred_check_branch
          %122 = sbr.rel (%p120) target = $region16
        $region15: #{decoder_forward.5} parent=11 // pred_region
          %s124 = ssub.s32 576, 576
          %125 = vsyncadd [#allocation3], %s124
          %s126 = sshll.u32 [#allocation2], 4
          %s127 = int_to_ptr.vmem [resolvable:$true] %s126
          %132 = dma.hbm_to_vmem [thread:$0]  %s1, 576, %s127, [#allocation3], 64, 64, 4
        $region16: #{decoder_forward.5} parent=11 // pred_fallthru
          _
        // Predicated region
        $region17: #{decoder_forward.5} parent=11 // pred_check
          %p133 = pneg %p79
        $region18: #{decoder_forward.5} parent=11 // pred_check_branch
          %135 = sbr.rel (%p133) target = $region20
        $region19: #{decoder_forward.5} parent=11 // pred_region
          %s137 = ssub.s32 16, 16
          %138 = vsyncadd [#allocation5], %s137
          %s140 = sshll.u32 [#allocation4], 4
          %s141 = int_to_ptr.vmem [resolvable:$true] %s140
          %143 = dma.hbm_to_vmem [thread:$0]  %s2, 16, %s141, [#allocation5]
        $region20: #{decoder_forward.5} parent=11 // pred_fallthru
          _
      $region12: #{decoder_forward.5} parent=5 // pred_fallthru
        _
      %p144 = scmp.lt.s32.totalorder %s11, 2
      // Predicated region
      $region21: #{decoder_forward.5} parent=5 // pred_check
        %p145 = pneg %p144
      $region22: #{decoder_forward.5} parent=5 // pred_check_branch
        %147 = sbr.rel (%p145) target = $region24
      $region23: #{decoder_forward.5} parent=5 // pred_region
        // Predicated region
        $region25: #{decoder_forward.5} parent=23 // pred_check
          %p148 = pneg %p31
        $region26: #{decoder_forward.5} parent=23 // pred_check_branch
          %150 = sbr.rel (%p148) target = $region28
        $region27: #{decoder_forward.5} parent=23 // pred_region
          %p151 = scmp.lt.s32.totalorder %s11, 1
          %s152 = scalar_select %p151, %s11, 1
          %s153 = smul.addr %s152, 20
          %s154 = smul.addr %s153, 8
          %s155 = scalar_lea.vmem %s0, %s154
        $region28: #{decoder_forward.5} parent=23 // pred_fallthru
          _
      $region24: #{decoder_forward.5} parent=5 // pred_fallthru
        _
      %p156 = scmp.le.s32.totalorder 1, %s11
      %p157 = scmp.lt.s32.totalorder %s11, 3
      %p158 = pnand %p156, %p157
      %p159 = pneg %p158
      // Predicated region
      $region29: #{decoder_forward.5} parent=5 // pred_check
        _
      $region30: #{decoder_forward.5} parent=5 // pred_check_branch
        %161 = sbr.rel (%p158) target = $region32
      $region31: #{decoder_forward.5} parent=5 // pred_region
        %s162 = ssub.s32 %s11, 1
        // Predicated region
        $region33: #{decoder_forward.5} parent=31 // pred_check
          %p163 = pneg %p58
        $region34: #{decoder_forward.5} parent=31 // pred_check_branch
          %165 = sbr.rel (%p163) target = $region36
        $region35: #{decoder_forward.5} parent=31 // pred_region
          %166 = dma.done [#allocation3], 576
        $region36: #{decoder_forward.5} parent=31 // pred_fallthru
          _
        // Predicated region
        $region37: #{decoder_forward.5} parent=31 // pred_check
          %p167 = pneg %p79
        $region38: #{decoder_forward.5} parent=31 // pred_check_branch
          %169 = sbr.rel (%p167) target = $region40
        $region39: #{decoder_forward.5} parent=31 // pred_region
          %170 = dma.done [#allocation5], 16
        $region40: #{decoder_forward.5} parent=31 // pred_fallthru
          _
        %p171 = scmp.lt.s32.totalorder %s16, 1
        %s172 = scalar_select %p171, %s16, 1
        %s173 = smul.addr %s172, 20
        %s174 = smul.addr %s173, 8
        %s175 = scalar_lea.vmem %s0, %s174
        %p176 = pneg %p37
        %p177 = pneg %p34
        %p178 = pneg %p58
        %p179 = pneg %p55
        %p180 = pneg %p79
        %p181 = pneg %p76
        %p182 = pneg %p105
        %p183 = pneg %p102
        %p184 = scmp.lt.s32.totalorder %s16, 1
        %s185 = scalar_select %p184, %s16, 1
        %s186 = smul.addr %s185, 8
        %s187 = smul.addr %s186, 8
        %s188 = scalar_lea.vmem %s3, %s187
        %p189 = scmp.lt.s32.totalorder %s16, 1
        %s190 = scalar_select %p189, %s16, 1
        %s191 = smul.addr %s190, 20
        %s192 = smul.addr %s191, 8
        %s193 = scalar_lea.vmem %s0, %s192
        %p194 = scmp.lt.s32.totalorder %s16, 1
        %s195 = scalar_select %p194, %s16, 1
        %s196 = smul.addr %s195, 8
        %s197 = smul.addr %s196, 8
        %s198 = scalar_lea.vmem %s3, %s197
        %v199 = vld [vmem:[%s193] sm:$0xff]
        %v200 = vld [vmem:[%s193 + $0x10] sm:$0xff]
        %v201 = vld [vmem:[%s193 + $0x20] sm:$0xff]
        %v202 = vld [vmem:[%s193 + $0x30] sm:$0xff]
        %v203 = vld [vmem:[%s193 + $0x40] sm:$0xff]
        %v204 = vld [vmem:[%s193 + $0x50] sm:$0xff]
        %v205 = vld [vmem:[%s193 + $0x60] sm:$0xff]
        %v206 = vld [vmem:[%s193 + $0x70] sm:$0xff]
        %v207 = vld [vmem:[%s193 + $0x80] sm:$0xff]
        %v208 = vld [vmem:[%s193 + $0x90] sm:$0xff]
        %v209 = vld [vmem:[%s193 + $0x1] sm:$0xff]
        %v210 = vld [vmem:[%s193 + $0x11] sm:$0xff]
        %v211 = vld [vmem:[%s193 + $0x21] sm:$0xff]
        %v212 = vld [vmem:[%s193 + $0x31] sm:$0xff]
        %v213 = vld [vmem:[%s193 + $0x41] sm:$0xff]
        %v214 = vld [vmem:[%s193 + $0x51] sm:$0xff]
        %v215 = vld [vmem:[%s193 + $0x61] sm:$0xff]
        %v216 = vld [vmem:[%s193 + $0x71] sm:$0xff]
        %v217 = vld [vmem:[%s193 + $0x81] sm:$0xff]
        %v218 = vld [vmem:[%s193 + $0x91] sm:$0xff]
        %v219 = vld [vmem:[%s193 + $0x2] sm:$0xff]
        %v220 = vld [vmem:[%s193 + $0x12] sm:$0xff]
        %v221 = vld [vmem:[%s193 + $0x22] sm:$0xff]
        %v222 = vld [vmem:[%s193 + $0x32] sm:$0xff]
        %v223 = vld [vmem:[%s193 + $0x42] sm:$0xff]
        %v224 = vld [vmem:[%s193 + $0x52] sm:$0xff]
        %v225 = vld [vmem:[%s193 + $0x62] sm:$0xff]
        %v226 = vld [vmem:[%s193 + $0x72] sm:$0xff]
        %v227 = vld [vmem:[%s193 + $0x82] sm:$0xff]
        %v228 = vld [vmem:[%s193 + $0x92] sm:$0xff]
        %v229 = vld [vmem:[#allocation2] sm:$0xf]
        %s230 = scalar_lea.vmem [#allocation2], 4
        %v231 = vld [vmem:[%s230] sm:$0xf]
        %vm232 = vcmask 31744
        %v234 = vsel %vm232, %v209, 0
        %v237 = vsel %vm232, %v210, 0
        %v240 = vsel %vm232, %v211, 0
        %v243 = vsel %vm232, %v212, 0
        %v246 = vsel %vm232, %v213, 0
        %v249 = vsel %vm232, %v214, 0
        %v252 = vsel %vm232, %v215, 0
        %v255 = vsel %vm232, %v216, 0
        %vm257 = vcmask 1043456
        %v259 = vsel %vm257, %v231, 0
        %261 = vmatprep.subr.mxu0 0.0
        %262 = vmatpush1.msra.mxu0 0.0
        %263 = vmatprep.subr.mxu0 0.0
        %264 = vmatpush1.msra.mxu0 0.0
        %265 = vmatprep.subr.mxu0 0.0
        %266 = vmatpush1.msra.mxu0 0.0
        %267 = vmatprep.subr.mxu0 0.0
        %268 = vmatpush1.msra.mxu0 0.0
        %269 = vmatprep.subr.mxu0 0.0
        %270 = vmatpush1.msra.mxu0 0.0
        %271 = vmatprep.subr.mxu0 0.0
        %272 = vmatpush1.msra.mxu0 0.0
        %273 = vmatprep.subr.mxu0 0.0
        %274 = vmatpush1.msra.mxu0 0.0
        %275 = vmatprep.subr.mxu0 0.0
        %276 = vmatpush1.msra.mxu0 0.0
        %277 = vmatprep.subr.mxu0 0.0
        %278 = vmatpush1.msra.mxu0 0.0
        %279 = vmatprep.subr.mxu0 0.0
        %280 = vmatpush1.msra.mxu0 0.0
        %281 = vmatprep.subr.mxu0 0.0
        %282 = vmatpush1.msra.mxu0 0.0
        %283 = vmatprep.subr.mxu0 0.0
        %284 = vmatpush1.msra.mxu0 0.0
        %285 = vmatprep.subr.mxu0 0.0
        %286 = vmatpush1.msra.mxu0 0.0
        %287 = vmatprep.subr.mxu0 0.0
        %288 = vmatpush1.msra.mxu0 0.0
        %289 = vmatprep.subr.mxu0 0.0
        %290 = vmatpush1.msra.mxu0 0.0
        %291 = vmatprep.subr.mxu0 0.0
        %292 = vmatpush1.msra.mxu0 %v259
        %293 = vmatprep.subr.mxu0 0.0
        %294 = vmatpush2.msra.mxu0 0.0
        %295 = vmatprep.subr.mxu0 0.0
        %296 = vmatpush2.msra.mxu0 0.0
        %297 = vmatprep.subr.mxu0 0.0
        %298 = vmatpush2.msra.mxu0 0.0
        %299 = vmatprep.subr.mxu0 0.0
        %300 = vmatpush2.msra.mxu0 0.0
        %301 = vmatprep.subr.mxu0 0.0
        %302 = vmatpush2.msra.mxu0 0.0
        %303 = vmatprep.subr.mxu0 0.0
        %304 = vmatpush2.msra.mxu0 0.0
        %305 = vmatprep.subr.mxu0 0.0
        %306 = vmatpush2.msra.mxu0 0.0
        %307 = vmatprep.subr.mxu0 0.0
        %308 = vmatpush2.msra.mxu0 0.0
        %309 = vmatprep.subr.mxu0 0.0
        %310 = vmatpush2.msra.mxu0 0.0
        %311 = vmatprep.subr.mxu0 0.0
        %312 = vmatpush2.msra.mxu0 0.0
        %313 = vmatprep.subr.mxu0 0.0
        %314 = vmatpush2.msra.mxu0 0.0
        %315 = vmatprep.subr.mxu0 0.0
        %316 = vmatpush2.msra.mxu0 0.0
        %317 = vmatprep.subr.mxu0 0.0
        %318 = vmatpush2.msra.mxu0 0.0
        %319 = vmatprep.subr.mxu0 0.0
        %320 = vmatpush2.msra.mxu0 0.0
        %321 = vmatprep.subr.mxu0 0.0
        %322 = vmatpush2.msra.mxu0 0.0
        %323 = vmatprep.subr.mxu0 0.0
        %324 = vmatpush2.msra.mxu0 0.0
        %325 = vmatprep.mubr.f32.mxu0 0.0
        %326 = vmatmul.mubr.f32.gmra.mxu0 %v234
        %v327 = vpop.f32.mrf.mxu0
        %v328 = vadd.f32 0.0, %v327
        %v329 = vpop.f32.mrf.mxu0
        %330 = vmatprep.mubr.f32.mxu0 0.0
        %331 = vmatmul.mubr.f32.gmra.mxu0 %v237
        %v332 = vpop.f32.mrf.mxu0
        %v333 = vadd.f32 0.0, %v332
        %v334 = vpop.f32.mrf.mxu0
        %335 = vmatprep.mubr.f32.mxu0 0.0
        %336 = vmatmul.mubr.f32.gmra.mxu0 %v240
        %v337 = vpop.f32.mrf.mxu0
        %v338 = vadd.f32 0.0, %v337
        %v339 = vpop.f32.mrf.mxu0
        %340 = vmatprep.mubr.f32.mxu0 0.0
        %341 = vmatmul.mubr.f32.gmra.mxu0 %v243
        %v342 = vpop.f32.mrf.mxu0
        %v343 = vadd.f32 0.0, %v342
        %v344 = vpop.f32.mrf.mxu0
        %345 = vmatprep.mubr.f32.mxu0 0.0
        %346 = vmatmul.mubr.f32.gmra.mxu0 %v246
        %v347 = vpop.f32.mrf.mxu0
        %v348 = vadd.f32 0.0, %v347
        %v349 = vpop.f32.mrf.mxu0
        %350 = vmatprep.mubr.f32.mxu0 0.0
        %351 = vmatmul.mubr.f32.gmra.mxu0 %v249
        %v352 = vpop.f32.mrf.mxu0
        %v353 = vadd.f32 0.0, %v352
        %v354 = vpop.f32.mrf.mxu0
        %355 = vmatprep.mubr.f32.mxu0 0.0
        %356 = vmatmul.mubr.f32.gmra.mxu0 %v252
        %v357 = vpop.f32.mrf.mxu0
        %v358 = vadd.f32 0.0, %v357
        %v359 = vpop.f32.mrf.mxu0
        %360 = vmatprep.mubr.f32.mxu0 0.0
        %361 = vmatmul.mubr.f32.gmra.mxu0 %v255
        %v362 = vpop.f32.mrf.mxu0
        %v363 = vadd.f32 0.0, %v362
        %v364 = vpop.f32.mrf.mxu0
        %365 = vdwg.mxu0
        %v367 = vsel %vm232, %v199, 0
        %v370 = vsel %vm232, %v200, 0
        %v373 = vsel %vm232, %v201, 0
        %v376 = vsel %vm232, %v202, 0
        %v379 = vsel %vm232, %v203, 0
        %v382 = vsel %vm232, %v204, 0
        %v385 = vsel %vm232, %v205, 0
        %v388 = vsel %vm232, %v206, 0
        %v391 = vsel %vm257, %v229, 0
        %393 = vmatprep.subr.mxu0 0.0
        %394 = vmatpush1.msra.mxu0 0.0
        %395 = vmatprep.subr.mxu0 0.0
        %396 = vmatpush1.msra.mxu0 0.0
        %397 = vmatprep.subr.mxu0 0.0
        %398 = vmatpush1.msra.mxu0 0.0
        %399 = vmatprep.subr.mxu0 0.0
        %400 = vmatpush1.msra.mxu0 0.0
        %401 = vmatprep.subr.mxu0 0.0
        %402 = vmatpush1.msra.mxu0 0.0
        %403 = vmatprep.subr.mxu0 0.0
        %404 = vmatpush1.msra.mxu0 0.0
        %405 = vmatprep.subr.mxu0 0.0
        %406 = vmatpush1.msra.mxu0 0.0
        %407 = vmatprep.subr.mxu0 0.0
        %408 = vmatpush1.msra.mxu0 0.0
        %409 = vmatprep.subr.mxu0 0.0
        %410 = vmatpush1.msra.mxu0 0.0
        %411 = vmatprep.subr.mxu0 0.0
        %412 = vmatpush1.msra.mxu0 0.0
        %413 = vmatprep.subr.mxu0 0.0
        %414 = vmatpush1.msra.mxu0 0.0
        %415 = vmatprep.subr.mxu0 0.0
        %416 = vmatpush1.msra.mxu0 0.0
        %417 = vmatprep.subr.mxu0 0.0
        %418 = vmatpush1.msra.mxu0 0.0
        %419 = vmatprep.subr.mxu0 0.0
        %420 = vmatpush1.msra.mxu0 0.0
        %421 = vmatprep.subr.mxu0 0.0
        %422 = vmatpush1.msra.mxu0 0.0
        %423 = vmatprep.subr.mxu0 0.0
        %424 = vmatpush1.msra.mxu0 %v391
        %425 = vmatprep.subr.mxu0 0.0
        %426 = vmatpush2.msra.mxu0 0.0
        %427 = vmatprep.subr.mxu0 0.0
        %428 = vmatpush2.msra.mxu0 0.0
        %429 = vmatprep.subr.mxu0 0.0
        %430 = vmatpush2.msra.mxu0 0.0
        %431 = vmatprep.subr.mxu0 0.0
        %432 = vmatpush2.msra.mxu0 0.0
        %433 = vmatprep.subr.mxu0 0.0
        %434 = vmatpush2.msra.mxu0 0.0
        %435 = vmatprep.subr.mxu0 0.0
        %436 = vmatpush2.msra.mxu0 0.0
        %437 = vmatprep.subr.mxu0 0.0
        %438 = vmatpush2.msra.mxu0 0.0
        %439 = vmatprep.subr.mxu0 0.0
        %440 = vmatpush2.msra.mxu0 0.0
        %441 = vmatprep.subr.mxu0 0.0
        %442 = vmatpush2.msra.mxu0 0.0
        %443 = vmatprep.subr.mxu0 0.0
        %444 = vmatpush2.msra.mxu0 0.0
        %445 = vmatprep.subr.mxu0 0.0
        %446 = vmatpush2.msra.mxu0 0.0
        %447 = vmatprep.subr.mxu0 0.0
        %448 = vmatpush2.msra.mxu0 0.0
        %449 = vmatprep.subr.mxu0 0.0
        %450 = vmatpush2.msra.mxu0 0.0
        %451 = vmatprep.subr.mxu0 0.0
        %452 = vmatpush2.msra.mxu0 0.0
        %453 = vmatprep.subr.mxu0 0.0
        %454 = vmatpush2.msra.mxu0 0.0
        %455 = vmatprep.subr.mxu0 0.0
        %456 = vmatpush2.msra.mxu0 0.0
        %457 = vmatprep.mubr.f32.mxu0 0.0
        %458 = vmatmul.mubr.f32.gmra.mxu0 %v367
        %v459 = vpop.f32.mrf.mxu0
        %v460 = vadd.f32 %v328, %v459
        %v461 = vpop.f32.mrf.mxu0
        %462 = vmatprep.mubr.f32.mxu0 0.0
        %463 = vmatmul.mubr.f32.gmra.mxu0 %v370
        %v464 = vpop.f32.mrf.mxu0
        %v465 = vadd.f32 %v333, %v464
        %v466 = vpop.f32.mrf.mxu0
        %467 = vmatprep.mubr.f32.mxu0 0.0
        %468 = vmatmul.mubr.f32.gmra.mxu0 %v373
        %v469 = vpop.f32.mrf.mxu0
        %v470 = vadd.f32 %v338, %v469
        %v471 = vpop.f32.mrf.mxu0
        %472 = vmatprep.mubr.f32.mxu0 0.0
        %473 = vmatmul.mubr.f32.gmra.mxu0 %v376
        %v474 = vpop.f32.mrf.mxu0
        %v475 = vadd.f32 %v343, %v474
        %v476 = vpop.f32.mrf.mxu0
        %477 = vmatprep.mubr.f32.mxu0 0.0
        %478 = vmatmul.mubr.f32.gmra.mxu0 %v379
        %v479 = vpop.f32.mrf.mxu0
        %v480 = vadd.f32 %v348, %v479
        %v481 = vpop.f32.mrf.mxu0
        %482 = vmatprep.mubr.f32.mxu0 0.0
        %483 = vmatmul.mubr.f32.gmra.mxu0 %v382
        %v484 = vpop.f32.mrf.mxu0
        %v485 = vadd.f32 %v353, %v484
        %v486 = vpop.f32.mrf.mxu0
        %487 = vmatprep.mubr.f32.mxu0 0.0
        %488 = vmatmul.mubr.f32.gmra.mxu0 %v385
        %v489 = vpop.f32.mrf.mxu0
        %v490 = vadd.f32 %v358, %v489
        %v491 = vpop.f32.mrf.mxu0
        %492 = vmatprep.mubr.f32.mxu0 0.0
        %493 = vmatmul.mubr.f32.gmra.mxu0 %v388
        %v494 = vpop.f32.mrf.mxu0
        %v495 = vadd.f32 %v363, %v494
        %v496 = vpop.f32.mrf.mxu0
        %497 = vdwg.mxu0
        %s498 = scalar_lea.vmem [#allocation2], 8
        %v499 = vld [vmem:[%s498] sm:$0xf]
        %v501 = vsel %vm232, %v219, 0
        %v504 = vsel %vm232, %v220, 0
        %v507 = vsel %vm232, %v221, 0
        %v510 = vsel %vm232, %v222, 0
        %v513 = vsel %vm232, %v223, 0
        %v516 = vsel %vm232, %v224, 0
        %v519 = vsel %vm232, %v225, 0
        %v522 = vsel %vm232, %v226, 0
        %v525 = vsel %vm257, %v499, 0
        %527 = vmatprep.subr.mxu0 0.0
        %528 = vmatpush1.msra.mxu0 0.0
        %529 = vmatprep.subr.mxu0 0.0
        %530 = vmatpush1.msra.mxu0 0.0
        %531 = vmatprep.subr.mxu0 0.0
        %532 = vmatpush1.msra.mxu0 0.0
        %533 = vmatprep.subr.mxu0 0.0
        %534 = vmatpush1.msra.mxu0 0.0
        %535 = vmatprep.subr.mxu0 0.0
        %536 = vmatpush1.msra.mxu0 0.0
        %537 = vmatprep.subr.mxu0 0.0
        %538 = vmatpush1.msra.mxu0 0.0
        %539 = vmatprep.subr.mxu0 0.0
        %540 = vmatpush1.msra.mxu0 0.0
        %541 = vmatprep.subr.mxu0 0.0
        %542 = vmatpush1.msra.mxu0 0.0
        %543 = vmatprep.subr.mxu0 0.0
        %544 = vmatpush1.msra.mxu0 0.0
        %545 = vmatprep.subr.mxu0 0.0
        %546 = vmatpush1.msra.mxu0 0.0
        %547 = vmatprep.subr.mxu0 0.0
        %548 = vmatpush1.msra.mxu0 0.0
        %549 = vmatprep.subr.mxu0 0.0
        %550 = vmatpush1.msra.mxu0 0.0
        %551 = vmatprep.subr.mxu0 0.0
        %552 = vmatpush1.msra.mxu0 0.0
        %553 = vmatprep.subr.mxu0 0.0
        %554 = vmatpush1.msra.mxu0 0.0
        %555 = vmatprep.subr.mxu0 0.0
        %556 = vmatpush1.msra.mxu0 0.0
        %557 = vmatprep.subr.mxu0 0.0
        %558 = vmatpush1.msra.mxu0 %v525
        %559 = vmatprep.subr.mxu0 0.0
        %560 = vmatpush2.msra.mxu0 0.0
        %561 = vmatprep.subr.mxu0 0.0
        %562 = vmatpush2.msra.mxu0 0.0
        %563 = vmatprep.subr.mxu0 0.0
        %564 = vmatpush2.msra.mxu0 0.0
        %565 = vmatprep.subr.mxu0 0.0
        %566 = vmatpush2.msra.mxu0 0.0
        %567 = vmatprep.subr.mxu0 0.0
        %568 = vmatpush2.msra.mxu0 0.0
        %569 = vmatprep.subr.mxu0 0.0
        %570 = vmatpush2.msra.mxu0 0.0
        %571 = vmatprep.subr.mxu0 0.0
        %572 = vmatpush2.msra.mxu0 0.0
        %573 = vmatprep.subr.mxu0 0.0
        %574 = vmatpush2.msra.mxu0 0.0
        %575 = vmatprep.subr.mxu0 0.0
        %576 = vmatpush2.msra.mxu0 0.0
        %577 = vmatprep.subr.mxu0 0.0
        %578 = vmatpush2.msra.mxu0 0.0
        %579 = vmatprep.subr.mxu0 0.0
        %580 = vmatpush2.msra.mxu0 0.0
        %581 = vmatprep.subr.mxu0 0.0
        %582 = vmatpush2.msra.mxu0 0.0
        %583 = vmatprep.subr.mxu0 0.0
        %584 = vmatpush2.msra.mxu0 0.0
        %585 = vmatprep.subr.mxu0 0.0
        %586 = vmatpush2.msra.mxu0 0.0
        %587 = vmatprep.subr.mxu0 0.0
        %588 = vmatpush2.msra.mxu0 0.0
        %589 = vmatprep.subr.mxu0 0.0
        %590 = vmatpush2.msra.mxu0 0.0
        %591 = vmatprep.mubr.f32.mxu0 0.0
        %592 = vmatmul.mubr.f32.gmra.mxu0 %v501
        %v593 = vpop.f32.mrf.mxu0
        %v594 = vadd.f32 0.0, %v593
        %v595 = vpop.f32.mrf.mxu0
        %596 = vmatprep.mubr.f32.mxu0 0.0
        %597 = vmatmul.mubr.f32.gmra.mxu0 %v504
        %v598 = vpop.f32.mrf.mxu0
        %v599 = vadd.f32 0.0, %v598
        %v600 = vpop.f32.mrf.mxu0
        %601 = vmatprep.mubr.f32.mxu0 0.0
        %602 = vmatmul.mubr.f32.gmra.mxu0 %v507
        %v603 = vpop.f32.mrf.mxu0
        %v604 = vadd.f32 0.0, %v603
        %v605 = vpop.f32.mrf.mxu0
        %606 = vmatprep.mubr.f32.mxu0 0.0
        %607 = vmatmul.mubr.f32.gmra.mxu0 %v510
        %v608 = vpop.f32.mrf.mxu0
        %v609 = vadd.f32 0.0, %v608
        %v610 = vpop.f32.mrf.mxu0
        %611 = vmatprep.mubr.f32.mxu0 0.0
        %612 = vmatmul.mubr.f32.gmra.mxu0 %v513
        %v613 = vpop.f32.mrf.mxu0
        %v614 = vadd.f32 0.0, %v613
        %v615 = vpop.f32.mrf.mxu0
        %616 = vmatprep.mubr.f32.mxu0 0.0
        %617 = vmatmul.mubr.f32.gmra.mxu0 %v516
        %v618 = vpop.f32.mrf.mxu0
        %v619 = vadd.f32 0.0, %v618
        %v620 = vpop.f32.mrf.mxu0
        %621 = vmatprep.mubr.f32.mxu0 0.0
        %622 = vmatmul.mubr.f32.gmra.mxu0 %v519
        %v623 = vpop.f32.mrf.mxu0
        %v624 = vadd.f32 0.0, %v623
        %v625 = vpop.f32.mrf.mxu0
        %626 = vmatprep.mubr.f32.mxu0 0.0
        %627 = vmatmul.mubr.f32.gmra.mxu0 %v522
        %v628 = vpop.f32.mrf.mxu0
        %v629 = vadd.f32 0.0, %v628
        %v630 = vpop.f32.mrf.mxu0
        %631 = vdwg.mxu0
        %v632 = vadd.f32 %v460, %v594
        %v633 = vadd.f32 %v465, %v599
        %v634 = vadd.f32 %v470, %v604
        %v635 = vadd.f32 %v475, %v609
        %v636 = vadd.f32 %v480, %v614
        %v637 = vadd.f32 %v485, %v619
        %v638 = vadd.f32 %v490, %v624
        %v639 = vadd.f32 %v495, %v629
        %s640 = scalar_lea.vmem [#allocation2], 12
        %v641 = vld [vmem:[%s640] sm:$0xf]
        %v643 = vsel %vm232, %v207, 0
        %v646 = vsel %vm257, %v641, 0
        %648 = vmatprep.subr.mxu0 0.0
        %649 = vmatpush1.msra.mxu0 0.0
        %650 = vmatprep.subr.mxu0 0.0
        %651 = vmatpush1.msra.mxu0 0.0
        %652 = vmatprep.subr.mxu0 0.0
        %653 = vmatpush1.msra.mxu0 0.0
        %654 = vmatprep.subr.mxu0 0.0
        %655 = vmatpush1.msra.mxu0 0.0
        %656 = vmatprep.subr.mxu0 0.0
        %657 = vmatpush1.msra.mxu0 0.0
        %658 = vmatprep.subr.mxu0 0.0
        %659 = vmatpush1.msra.mxu0 0.0
        %660 = vmatprep.subr.mxu0 0.0
        %661 = vmatpush1.msra.mxu0 0.0
        %662 = vmatprep.subr.mxu0 0.0
        %663 = vmatpush1.msra.mxu0 0.0
        %664 = vmatprep.subr.mxu0 0.0
        %665 = vmatpush1.msra.mxu0 0.0
        %666 = vmatprep.subr.mxu0 0.0
        %667 = vmatpush1.msra.mxu0 0.0
        %668 = vmatprep.subr.mxu0 0.0
        %669 = vmatpush1.msra.mxu0 0.0
        %670 = vmatprep.subr.mxu0 0.0
        %671 = vmatpush1.msra.mxu0 0.0
        %672 = vmatprep.subr.mxu0 0.0
        %673 = vmatpush1.msra.mxu0 0.0
        %674 = vmatprep.subr.mxu0 0.0
        %675 = vmatpush1.msra.mxu0 0.0
        %676 = vmatprep.subr.mxu0 0.0
        %677 = vmatpush1.msra.mxu0 0.0
        %678 = vmatprep.subr.mxu0 0.0
        %679 = vmatpush1.msra.mxu0 %v646
        %680 = vmatprep.subr.mxu0 0.0
        %681 = vmatpush2.msra.mxu0 0.0
        %682 = vmatprep.subr.mxu0 0.0
        %683 = vmatpush2.msra.mxu0 0.0
        %684 = vmatprep.subr.mxu0 0.0
        %685 = vmatpush2.msra.mxu0 0.0
        %686 = vmatprep.subr.mxu0 0.0
        %687 = vmatpush2.msra.mxu0 0.0
        %688 = vmatprep.subr.mxu0 0.0
        %689 = vmatpush2.msra.mxu0 0.0
        %690 = vmatprep.subr.mxu0 0.0
        %691 = vmatpush2.msra.mxu0 0.0
        %692 = vmatprep.subr.mxu0 0.0
        %693 = vmatpush2.msra.mxu0 0.0
        %694 = vmatprep.subr.mxu0 0.0
        %695 = vmatpush2.msra.mxu0 0.0
        %696 = vmatprep.subr.mxu0 0.0
        %697 = vmatpush2.msra.mxu0 0.0
        %698 = vmatprep.subr.mxu0 0.0
        %699 = vmatpush2.msra.mxu0 0.0
        %700 = vmatprep.subr.mxu0 0.0
        %701 = vmatpush2.msra.mxu0 0.0
        %702 = vmatprep.subr.mxu0 0.0
        %703 = vmatpush2.msra.mxu0 0.0
        %704 = vmatprep.subr.mxu0 0.0
        %705 = vmatpush2.msra.mxu0 0.0
        %706 = vmatprep.subr.mxu0 0.0
        %707 = vmatpush2.msra.mxu0 0.0
        %708 = vmatprep.subr.mxu0 0.0
        %709 = vmatpush2.msra.mxu0 0.0
        %710 = vmatprep.subr.mxu0 0.0
        %711 = vmatpush2.msra.mxu0 0.0
        %712 = vmatprep.mubr.f32.mxu0 0.0
        %713 = vmatmul.mubr.f32.gmra.mxu0 %v370
        %v714 = vpop.f32.mrf.mxu0
        %v715 = vadd.f32 0.0, %v714
        %v716 = vpop.f32.mrf.mxu0
        %717 = vmatprep.mubr.f32.mxu0 0.0
        %718 = vmatmul.mubr.f32.gmra.mxu0 %v373
        %v719 = vpop.f32.mrf.mxu0
        %v720 = vadd.f32 0.0, %v719
        %v721 = vpop.f32.mrf.mxu0
        %722 = vmatprep.mubr.f32.mxu0 0.0
        %723 = vmatmul.mubr.f32.gmra.mxu0 %v376
        %v724 = vpop.f32.mrf.mxu0
        %v725 = vadd.f32 0.0, %v724
        %v726 = vpop.f32.mrf.mxu0
        %727 = vmatprep.mubr.f32.mxu0 0.0
        %728 = vmatmul.mubr.f32.gmra.mxu0 %v379
        %v729 = vpop.f32.mrf.mxu0
        %v730 = vadd.f32 0.0, %v729
        %v731 = vpop.f32.mrf.mxu0
        %732 = vmatprep.mubr.f32.mxu0 0.0
        %733 = vmatmul.mubr.f32.gmra.mxu0 %v382
        %v734 = vpop.f32.mrf.mxu0
        %v735 = vadd.f32 0.0, %v734
        %v736 = vpop.f32.mrf.mxu0
        %737 = vmatprep.mubr.f32.mxu0 0.0
        %738 = vmatmul.mubr.f32.gmra.mxu0 %v385
        %v739 = vpop.f32.mrf.mxu0
        %v740 = vadd.f32 0.0, %v739
        %v741 = vpop.f32.mrf.mxu0
        %742 = vmatprep.mubr.f32.mxu0 0.0
        %743 = vmatmul.mubr.f32.gmra.mxu0 %v388
        %v744 = vpop.f32.mrf.mxu0
        %v745 = vadd.f32 0.0, %v744
        %v746 = vpop.f32.mrf.mxu0
        %747 = vmatprep.mubr.f32.mxu0 0.0
        %748 = vmatmul.mubr.f32.gmra.mxu0 %v643
        %v749 = vpop.f32.mrf.mxu0
        %v750 = vadd.f32 0.0, %v749
        %v751 = vpop.f32.mrf.mxu0
        %752 = vdwg.mxu0
        %v753 = vadd.f32 %v632, %v715
        %v754 = vadd.f32 %v633, %v720
        %v755 = vadd.f32 %v634, %v725
        %v756 = vadd.f32 %v635, %v730
        %v757 = vadd.f32 %v636, %v735
        %v758 = vadd.f32 %v637, %v740
        %v759 = vadd.f32 %v638, %v745
        %v760 = vadd.f32 %v639, %v750
        %s761 = scalar_lea.vmem [#allocation2], 16
        %v762 = vld [vmem:[%s761] sm:$0xf]
        %v764 = vsel %vm232, %v217, 0
        %v767 = vsel %vm257, %v762, 0
        %769 = vmatprep.subr.mxu0 0.0
        %770 = vmatpush1.msra.mxu0 0.0
        %771 = vmatprep.subr.mxu0 0.0
        %772 = vmatpush1.msra.mxu0 0.0
        %773 = vmatprep.subr.mxu0 0.0
        %774 = vmatpush1.msra.mxu0 0.0
        %775 = vmatprep.subr.mxu0 0.0
        %776 = vmatpush1.msra.mxu0 0.0
        %777 = vmatprep.subr.mxu0 0.0
        %778 = vmatpush1.msra.mxu0 0.0
        %779 = vmatprep.subr.mxu0 0.0
        %780 = vmatpush1.msra.mxu0 0.0
        %781 = vmatprep.subr.mxu0 0.0
        %782 = vmatpush1.msra.mxu0 0.0
        %783 = vmatprep.subr.mxu0 0.0
        %784 = vmatpush1.msra.mxu0 0.0
        %785 = vmatprep.subr.mxu0 0.0
        %786 = vmatpush1.msra.mxu0 0.0
        %787 = vmatprep.subr.mxu0 0.0
        %788 = vmatpush1.msra.mxu0 0.0
        %789 = vmatprep.subr.mxu0 0.0
        %790 = vmatpush1.msra.mxu0 0.0
        %791 = vmatprep.subr.mxu0 0.0
        %792 = vmatpush1.msra.mxu0 0.0
        %793 = vmatprep.subr.mxu0 0.0
        %794 = vmatpush1.msra.mxu0 0.0
        %795 = vmatprep.subr.mxu0 0.0
        %796 = vmatpush1.msra.mxu0 0.0
        %797 = vmatprep.subr.mxu0 0.0
        %798 = vmatpush1.msra.mxu0 0.0
        %799 = vmatprep.subr.mxu0 0.0
        %800 = vmatpush1.msra.mxu0 %v767
        %801 = vmatprep.subr.mxu0 0.0
        %802 = vmatpush2.msra.mxu0 0.0
        %803 = vmatprep.subr.mxu0 0.0
        %804 = vmatpush2.msra.mxu0 0.0
        %805 = vmatprep.subr.mxu0 0.0
        %806 = vmatpush2.msra.mxu0 0.0
        %807 = vmatprep.subr.mxu0 0.0
        %808 = vmatpush2.msra.mxu0 0.0
        %809 = vmatprep.subr.mxu0 0.0
        %810 = vmatpush2.msra.mxu0 0.0
        %811 = vmatprep.subr.mxu0 0.0
        %812 = vmatpush2.msra.mxu0 0.0
        %813 = vmatprep.subr.mxu0 0.0
        %814 = vmatpush2.msra.mxu0 0.0
        %815 = vmatprep.subr.mxu0 0.0
        %816 = vmatpush2.msra.mxu0 0.0
        %817 = vmatprep.subr.mxu0 0.0
        %818 = vmatpush2.msra.mxu0 0.0
        %819 = vmatprep.subr.mxu0 0.0
        %820 = vmatpush2.msra.mxu0 0.0
        %821 = vmatprep.subr.mxu0 0.0
        %822 = vmatpush2.msra.mxu0 0.0
        %823 = vmatprep.subr.mxu0 0.0
        %824 = vmatpush2.msra.mxu0 0.0
        %825 = vmatprep.subr.mxu0 0.0
        %826 = vmatpush2.msra.mxu0 0.0
        %827 = vmatprep.subr.mxu0 0.0
        %828 = vmatpush2.msra.mxu0 0.0
        %829 = vmatprep.subr.mxu0 0.0
        %830 = vmatpush2.msra.mxu0 0.0
        %831 = vmatprep.subr.mxu0 0.0
        %832 = vmatpush2.msra.mxu0 0.0
        %833 = vmatprep.mubr.f32.mxu0 0.0
        %834 = vmatmul.mubr.f32.gmra.mxu0 %v237
        %v835 = vpop.f32.mrf.mxu0
        %v836 = vadd.f32 0.0, %v835
        %v837 = vpop.f32.mrf.mxu0
        %838 = vmatprep.mubr.f32.mxu0 0.0
        %839 = vmatmul.mubr.f32.gmra.mxu0 %v240
        %v840 = vpop.f32.mrf.mxu0
        %v841 = vadd.f32 0.0, %v840
        %v842 = vpop.f32.mrf.mxu0
        %843 = vmatprep.mubr.f32.mxu0 0.0
        %844 = vmatmul.mubr.f32.gmra.mxu0 %v243
        %v845 = vpop.f32.mrf.mxu0
        %v846 = vadd.f32 0.0, %v845
        %v847 = vpop.f32.mrf.mxu0
        %848 = vmatprep.mubr.f32.mxu0 0.0
        %849 = vmatmul.mubr.f32.gmra.mxu0 %v246
        %v850 = vpop.f32.mrf.mxu0
        %v851 = vadd.f32 0.0, %v850
        %v852 = vpop.f32.mrf.mxu0
        %853 = vmatprep.mubr.f32.mxu0 0.0
        %854 = vmatmul.mubr.f32.gmra.mxu0 %v249
        %v855 = vpop.f32.mrf.mxu0
        %v856 = vadd.f32 0.0, %v855
        %v857 = vpop.f32.mrf.mxu0
        %858 = vmatprep.mubr.f32.mxu0 0.0
        %859 = vmatmul.mubr.f32.gmra.mxu0 %v252
        %v860 = vpop.f32.mrf.mxu0
        %v861 = vadd.f32 0.0, %v860
        %v862 = vpop.f32.mrf.mxu0
        %863 = vmatprep.mubr.f32.mxu0 0.0
        %864 = vmatmul.mubr.f32.gmra.mxu0 %v255
        %v865 = vpop.f32.mrf.mxu0
        %v866 = vadd.f32 0.0, %v865
        %v867 = vpop.f32.mrf.mxu0
        %868 = vmatprep.mubr.f32.mxu0 0.0
        %869 = vmatmul.mubr.f32.gmra.mxu0 %v764
        %v870 = vpop.f32.mrf.mxu0
        %v871 = vadd.f32 0.0, %v870
        %v872 = vpop.f32.mrf.mxu0
        %873 = vdwg.mxu0
        %v874 = vadd.f32 %v753, %v836
        %v875 = vadd.f32 %v754, %v841
        %v876 = vadd.f32 %v755, %v846
        %v877 = vadd.f32 %v756, %v851
        %v878 = vadd.f32 %v757, %v856
        %v879 = vadd.f32 %v758, %v861
        %v880 = vadd.f32 %v759, %v866
        %v881 = vadd.f32 %v760, %v871
        %s882 = scalar_lea.vmem [#allocation2], 20
        %v883 = vld [vmem:[%s882] sm:$0xf]
        %v885 = vsel %vm232, %v227, 0
        %v888 = vsel %vm257, %v883, 0
        %890 = vmatprep.subr.mxu0 0.0
        %891 = vmatpush1.msra.mxu0 0.0
        %892 = vmatprep.subr.mxu0 0.0
        %893 = vmatpush1.msra.mxu0 0.0
        %894 = vmatprep.subr.mxu0 0.0
        %895 = vmatpush1.msra.mxu0 0.0
        %896 = vmatprep.subr.mxu0 0.0
        %897 = vmatpush1.msra.mxu0 0.0
        %898 = vmatprep.subr.mxu0 0.0
        %899 = vmatpush1.msra.mxu0 0.0
        %900 = vmatprep.subr.mxu0 0.0
        %901 = vmatpush1.msra.mxu0 0.0
        %902 = vmatprep.subr.mxu0 0.0
        %903 = vmatpush1.msra.mxu0 0.0
        %904 = vmatprep.subr.mxu0 0.0
        %905 = vmatpush1.msra.mxu0 0.0
        %906 = vmatprep.subr.mxu0 0.0
        %907 = vmatpush1.msra.mxu0 0.0
        %908 = vmatprep.subr.mxu0 0.0
        %909 = vmatpush1.msra.mxu0 0.0
        %910 = vmatprep.subr.mxu0 0.0
        %911 = vmatpush1.msra.mxu0 0.0
        %912 = vmatprep.subr.mxu0 0.0
        %913 = vmatpush1.msra.mxu0 0.0
        %914 = vmatprep.subr.mxu0 0.0
        %915 = vmatpush1.msra.mxu0 0.0
        %916 = vmatprep.subr.mxu0 0.0
        %917 = vmatpush1.msra.mxu0 0.0
        %918 = vmatprep.subr.mxu0 0.0
        %919 = vmatpush1.msra.mxu0 0.0
        %920 = vmatprep.subr.mxu0 0.0
        %921 = vmatpush1.msra.mxu0 %v888
        %922 = vmatprep.subr.mxu0 0.0
        %923 = vmatpush2.msra.mxu0 0.0
        %924 = vmatprep.subr.mxu0 0.0
        %925 = vmatpush2.msra.mxu0 0.0
        %926 = vmatprep.subr.mxu0 0.0
        %927 = vmatpush2.msra.mxu0 0.0
        %928 = vmatprep.subr.mxu0 0.0
        %929 = vmatpush2.msra.mxu0 0.0
        %930 = vmatprep.subr.mxu0 0.0
        %931 = vmatpush2.msra.mxu0 0.0
        %932 = vmatprep.subr.mxu0 0.0
        %933 = vmatpush2.msra.mxu0 0.0
        %934 = vmatprep.subr.mxu0 0.0
        %935 = vmatpush2.msra.mxu0 0.0
        %936 = vmatprep.subr.mxu0 0.0
        %937 = vmatpush2.msra.mxu0 0.0
        %938 = vmatprep.subr.mxu0 0.0
        %939 = vmatpush2.msra.mxu0 0.0
        %940 = vmatprep.subr.mxu0 0.0
        %941 = vmatpush2.msra.mxu0 0.0
        %942 = vmatprep.subr.mxu0 0.0
        %943 = vmatpush2.msra.mxu0 0.0
        %944 = vmatprep.subr.mxu0 0.0
        %945 = vmatpush2.msra.mxu0 0.0
        %946 = vmatprep.subr.mxu0 0.0
        %947 = vmatpush2.msra.mxu0 0.0
        %948 = vmatprep.subr.mxu0 0.0
        %949 = vmatpush2.msra.mxu0 0.0
        %950 = vmatprep.subr.mxu0 0.0
        %951 = vmatpush2.msra.mxu0 0.0
        %952 = vmatprep.subr.mxu0 0.0
        %953 = vmatpush2.msra.mxu0 0.0
        %954 = vmatprep.mubr.f32.mxu0 0.0
        %955 = vmatmul.mubr.f32.gmra.mxu0 %v504
        %v956 = vpop.f32.mrf.mxu0
        %v957 = vadd.f32 0.0, %v956
        %v958 = vpop.f32.mrf.mxu0
        %959 = vmatprep.mubr.f32.mxu0 0.0
        %960 = vmatmul.mubr.f32.gmra.mxu0 %v507
        %v961 = vpop.f32.mrf.mxu0
        %v962 = vadd.f32 0.0, %v961
        %v963 = vpop.f32.mrf.mxu0
        %964 = vmatprep.mubr.f32.mxu0 0.0
        %965 = vmatmul.mubr.f32.gmra.mxu0 %v510
        %v966 = vpop.f32.mrf.mxu0
        %v967 = vadd.f32 0.0, %v966
        %v968 = vpop.f32.mrf.mxu0
        %969 = vmatprep.mubr.f32.mxu0 0.0
        %970 = vmatmul.mubr.f32.gmra.mxu0 %v513
        %v971 = vpop.f32.mrf.mxu0
        %v972 = vadd.f32 0.0, %v971
        %v973 = vpop.f32.mrf.mxu0
        %974 = vmatprep.mubr.f32.mxu0 0.0
        %975 = vmatmul.mubr.f32.gmra.mxu0 %v516
        %v976 = vpop.f32.mrf.mxu0
        %v977 = vadd.f32 0.0, %v976
        %v978 = vpop.f32.mrf.mxu0
        %979 = vmatprep.mubr.f32.mxu0 0.0
        %980 = vmatmul.mubr.f32.gmra.mxu0 %v519
        %v981 = vpop.f32.mrf.mxu0
        %v982 = vadd.f32 0.0, %v981
        %v983 = vpop.f32.mrf.mxu0
        %984 = vmatprep.mubr.f32.mxu0 0.0
        %985 = vmatmul.mubr.f32.gmra.mxu0 %v522
        %v986 = vpop.f32.mrf.mxu0
        %v987 = vadd.f32 0.0, %v986
        %v988 = vpop.f32.mrf.mxu0
        %989 = vmatprep.mubr.f32.mxu0 0.0
        %990 = vmatmul.mubr.f32.gmra.mxu0 %v885
        %v991 = vpop.f32.mrf.mxu0
        %v992 = vadd.f32 0.0, %v991
        %v993 = vpop.f32.mrf.mxu0
        %994 = vdwg.mxu0
        %v995 = vadd.f32 %v874, %v957
        %v996 = vadd.f32 %v875, %v962
        %v997 = vadd.f32 %v876, %v967
        %v998 = vadd.f32 %v877, %v972
        %v999 = vadd.f32 %v878, %v977
        %v1000 = vadd.f32 %v879, %v982
        %v1001 = vadd.f32 %v880, %v987
        %v1002 = vadd.f32 %v881, %v992
        %s1003 = scalar_lea.vmem [#allocation2], 24
        %v1004 = vld [vmem:[%s1003] sm:$0xf]
        %v1006 = vsel %vm232, %v208, 0
        %v1009 = vsel %vm257, %v1004, 0
        %1011 = vmatprep.subr.mxu0 0.0
        %1012 = vmatpush1.msra.mxu0 0.0
        %1013 = vmatprep.subr.mxu0 0.0
        %1014 = vmatpush1.msra.mxu0 0.0
        %1015 = vmatprep.subr.mxu0 0.0
        %1016 = vmatpush1.msra.mxu0 0.0
        %1017 = vmatprep.subr.mxu0 0.0
        %1018 = vmatpush1.msra.mxu0 0.0
        %1019 = vmatprep.subr.mxu0 0.0
        %1020 = vmatpush1.msra.mxu0 0.0
        %1021 = vmatprep.subr.mxu0 0.0
        %1022 = vmatpush1.msra.mxu0 0.0
        %1023 = vmatprep.subr.mxu0 0.0
        %1024 = vmatpush1.msra.mxu0 0.0
        %1025 = vmatprep.subr.mxu0 0.0
        %1026 = vmatpush1.msra.mxu0 0.0
        %1027 = vmatprep.subr.mxu0 0.0
        %1028 = vmatpush1.msra.mxu0 0.0
        %1029 = vmatprep.subr.mxu0 0.0
        %1030 = vmatpush1.msra.mxu0 0.0
        %1031 = vmatprep.subr.mxu0 0.0
        %1032 = vmatpush1.msra.mxu0 0.0
        %1033 = vmatprep.subr.mxu0 0.0
        %1034 = vmatpush1.msra.mxu0 0.0
        %1035 = vmatprep.subr.mxu0 0.0
        %1036 = vmatpush1.msra.mxu0 0.0
        %1037 = vmatprep.subr.mxu0 0.0
        %1038 = vmatpush1.msra.mxu0 0.0
        %1039 = vmatprep.subr.mxu0 0.0
        %1040 = vmatpush1.msra.mxu0 0.0
        %1041 = vmatprep.subr.mxu0 0.0
        %1042 = vmatpush1.msra.mxu0 %v1009
        %1043 = vmatprep.subr.mxu0 0.0
        %1044 = vmatpush2.msra.mxu0 0.0
        %1045 = vmatprep.subr.mxu0 0.0
        %1046 = vmatpush2.msra.mxu0 0.0
        %1047 = vmatprep.subr.mxu0 0.0
        %1048 = vmatpush2.msra.mxu0 0.0
        %1049 = vmatprep.subr.mxu0 0.0
        %1050 = vmatpush2.msra.mxu0 0.0
        %1051 = vmatprep.subr.mxu0 0.0
        %1052 = vmatpush2.msra.mxu0 0.0
        %1053 = vmatprep.subr.mxu0 0.0
        %1054 = vmatpush2.msra.mxu0 0.0
        %1055 = vmatprep.subr.mxu0 0.0
        %1056 = vmatpush2.msra.mxu0 0.0
        %1057 = vmatprep.subr.mxu0 0.0
        %1058 = vmatpush2.msra.mxu0 0.0
        %1059 = vmatprep.subr.mxu0 0.0
        %1060 = vmatpush2.msra.mxu0 0.0
        %1061 = vmatprep.subr.mxu0 0.0
        %1062 = vmatpush2.msra.mxu0 0.0
        %1063 = vmatprep.subr.mxu0 0.0
        %1064 = vmatpush2.msra.mxu0 0.0
        %1065 = vmatprep.subr.mxu0 0.0
        %1066 = vmatpush2.msra.mxu0 0.0
        %1067 = vmatprep.subr.mxu0 0.0
        %1068 = vmatpush2.msra.mxu0 0.0
        %1069 = vmatprep.subr.mxu0 0.0
        %1070 = vmatpush2.msra.mxu0 0.0
        %1071 = vmatprep.subr.mxu0 0.0
        %1072 = vmatpush2.msra.mxu0 0.0
        %1073 = vmatprep.subr.mxu0 0.0
        %1074 = vmatpush2.msra.mxu0 0.0
        %1075 = vmatprep.mubr.f32.mxu0 0.0
        %1076 = vmatmul.mubr.f32.gmra.mxu0 %v373
        %v1077 = vpop.f32.mrf.mxu0
        %v1078 = vadd.f32 0.0, %v1077
        %v1079 = vpop.f32.mrf.mxu0
        %1080 = vmatprep.mubr.f32.mxu0 0.0
        %1081 = vmatmul.mubr.f32.gmra.mxu0 %v376
        %v1082 = vpop.f32.mrf.mxu0
        %v1083 = vadd.f32 0.0, %v1082
        %v1084 = vpop.f32.mrf.mxu0
        %1085 = vmatprep.mubr.f32.mxu0 0.0
        %1086 = vmatmul.mubr.f32.gmra.mxu0 %v379
        %v1087 = vpop.f32.mrf.mxu0
        %v1088 = vadd.f32 0.0, %v1087
        %v1089 = vpop.f32.mrf.mxu0
        %1090 = vmatprep.mubr.f32.mxu0 0.0
        %1091 = vmatmul.mubr.f32.gmra.mxu0 %v382
        %v1092 = vpop.f32.mrf.mxu0
        %v1093 = vadd.f32 0.0, %v1092
        %v1094 = vpop.f32.mrf.mxu0
        %1095 = vmatprep.mubr.f32.mxu0 0.0
        %1096 = vmatmul.mubr.f32.gmra.mxu0 %v385
        %v1097 = vpop.f32.mrf.mxu0
        %v1098 = vadd.f32 0.0, %v1097
        %v1099 = vpop.f32.mrf.mxu0
        %1100 = vmatprep.mubr.f32.mxu0 0.0
        %1101 = vmatmul.mubr.f32.gmra.mxu0 %v388
        %v1102 = vpop.f32.mrf.mxu0
        %v1103 = vadd.f32 0.0, %v1102
        %v1104 = vpop.f32.mrf.mxu0
        %1105 = vmatprep.mubr.f32.mxu0 0.0
        %1106 = vmatmul.mubr.f32.gmra.mxu0 %v643
        %v1107 = vpop.f32.mrf.mxu0
        %v1108 = vadd.f32 0.0, %v1107
        %v1109 = vpop.f32.mrf.mxu0
        %1110 = vmatprep.mubr.f32.mxu0 0.0
        %1111 = vmatmul.mubr.f32.gmra.mxu0 %v1006
        %v1112 = vpop.f32.mrf.mxu0
        %v1113 = vadd.f32 0.0, %v1112
        %v1114 = vpop.f32.mrf.mxu0
        %1115 = vdwg.mxu0
        %v1116 = vadd.f32 %v995, %v1078
        %v1117 = vadd.f32 %v996, %v1083
        %v1118 = vadd.f32 %v997, %v1088
        %v1119 = vadd.f32 %v998, %v1093
        %v1120 = vadd.f32 %v999, %v1098
        %v1121 = vadd.f32 %v1000, %v1103
        %v1122 = vadd.f32 %v1001, %v1108
        %v1123 = vadd.f32 %v1002, %v1113
        %s1124 = scalar_lea.vmem [#allocation2], 28
        %v1125 = vld [vmem:[%s1124] sm:$0xf]
        %v1127 = vsel %vm232, %v218, 0
        %v1130 = vsel %vm257, %v1125, 0
        %1132 = vmatprep.subr.mxu0 0.0
        %1133 = vmatpush1.msra.mxu0 0.0
        %1134 = vmatprep.subr.mxu0 0.0
        %1135 = vmatpush1.msra.mxu0 0.0
        %1136 = vmatprep.subr.mxu0 0.0
        %1137 = vmatpush1.msra.mxu0 0.0
        %1138 = vmatprep.subr.mxu0 0.0
        %1139 = vmatpush1.msra.mxu0 0.0
        %1140 = vmatprep.subr.mxu0 0.0
        %1141 = vmatpush1.msra.mxu0 0.0
        %1142 = vmatprep.subr.mxu0 0.0
        %1143 = vmatpush1.msra.mxu0 0.0
        %1144 = vmatprep.subr.mxu0 0.0
        %1145 = vmatpush1.msra.mxu0 0.0
        %1146 = vmatprep.subr.mxu0 0.0
        %1147 = vmatpush1.msra.mxu0 0.0
        %1148 = vmatprep.subr.mxu0 0.0
        %1149 = vmatpush1.msra.mxu0 0.0
        %1150 = vmatprep.subr.mxu0 0.0
        %1151 = vmatpush1.msra.mxu0 0.0
        %1152 = vmatprep.subr.mxu0 0.0
        %1153 = vmatpush1.msra.mxu0 0.0
        %1154 = vmatprep.subr.mxu0 0.0
        %1155 = vmatpush1.msra.mxu0 0.0
        %1156 = vmatprep.subr.mxu0 0.0
        %1157 = vmatpush1.msra.mxu0 0.0
        %1158 = vmatprep.subr.mxu0 0.0
        %1159 = vmatpush1.msra.mxu0 0.0
        %1160 = vmatprep.subr.mxu0 0.0
        %1161 = vmatpush1.msra.mxu0 0.0
        %1162 = vmatprep.subr.mxu0 0.0
        %1163 = vmatpush1.msra.mxu0 %v1130
        %1164 = vmatprep.subr.mxu0 0.0
        %1165 = vmatpush2.msra.mxu0 0.0
        %1166 = vmatprep.subr.mxu0 0.0
        %1167 = vmatpush2.msra.mxu0 0.0
        %1168 = vmatprep.subr.mxu0 0.0
        %1169 = vmatpush2.msra.mxu0 0.0
        %1170 = vmatprep.subr.mxu0 0.0
        %1171 = vmatpush2.msra.mxu0 0.0
        %1172 = vmatprep.subr.mxu0 0.0
        %1173 = vmatpush2.msra.mxu0 0.0
        %1174 = vmatprep.subr.mxu0 0.0
        %1175 = vmatpush2.msra.mxu0 0.0
        %1176 = vmatprep.subr.mxu0 0.0
        %1177 = vmatpush2.msra.mxu0 0.0
        %1178 = vmatprep.subr.mxu0 0.0
        %1179 = vmatpush2.msra.mxu0 0.0
        %1180 = vmatprep.subr.mxu0 0.0
        %1181 = vmatpush2.msra.mxu0 0.0
        %1182 = vmatprep.subr.mxu0 0.0
        %1183 = vmatpush2.msra.mxu0 0.0
        %1184 = vmatprep.subr.mxu0 0.0
        %1185 = vmatpush2.msra.mxu0 0.0
        %1186 = vmatprep.subr.mxu0 0.0
        %1187 = vmatpush2.msra.mxu0 0.0
        %1188 = vmatprep.subr.mxu0 0.0
        %1189 = vmatpush2.msra.mxu0 0.0
        %1190 = vmatprep.subr.mxu0 0.0
        %1191 = vmatpush2.msra.mxu0 0.0
        %1192 = vmatprep.subr.mxu0 0.0
        %1193 = vmatpush2.msra.mxu0 0.0
        %1194 = vmatprep.subr.mxu0 0.0
        %1195 = vmatpush2.msra.mxu0 0.0
        %1196 = vmatprep.mubr.f32.mxu0 0.0
        %1197 = vmatmul.mubr.f32.gmra.mxu0 %v240
        %v1198 = vpop.f32.mrf.mxu0
        %v1199 = vadd.f32 0.0, %v1198
        %v1200 = vpop.f32.mrf.mxu0
        %1201 = vmatprep.mubr.f32.mxu0 0.0
        %1202 = vmatmul.mubr.f32.gmra.mxu0 %v243
        %v1203 = vpop.f32.mrf.mxu0
        %v1204 = vadd.f32 0.0, %v1203
        %v1205 = vpop.f32.mrf.mxu0
        %1206 = vmatprep.mubr.f32.mxu0 0.0
        %1207 = vmatmul.mubr.f32.gmra.mxu0 %v246
        %v1208 = vpop.f32.mrf.mxu0
        %v1209 = vadd.f32 0.0, %v1208
        %v1210 = vpop.f32.mrf.mxu0
        %1211 = vmatprep.mubr.f32.mxu0 0.0
        %1212 = vmatmul.mubr.f32.gmra.mxu0 %v249
        %v1213 = vpop.f32.mrf.mxu0
        %v1214 = vadd.f32 0.0, %v1213
        %v1215 = vpop.f32.mrf.mxu0
        %1216 = vmatprep.mubr.f32.mxu0 0.0
        %1217 = vmatmul.mubr.f32.gmra.mxu0 %v252
        %v1218 = vpop.f32.mrf.mxu0
        %v1219 = vadd.f32 0.0, %v1218
        %v1220 = vpop.f32.mrf.mxu0
        %1221 = vmatprep.mubr.f32.mxu0 0.0
        %1222 = vmatmul.mubr.f32.gmra.mxu0 %v255
        %v1223 = vpop.f32.mrf.mxu0
        %v1224 = vadd.f32 0.0, %v1223
        %v1225 = vpop.f32.mrf.mxu0
        %1226 = vmatprep.mubr.f32.mxu0 0.0
        %1227 = vmatmul.mubr.f32.gmra.mxu0 %v764
        %v1228 = vpop.f32.mrf.mxu0
        %v1229 = vadd.f32 0.0, %v1228
        %v1230 = vpop.f32.mrf.mxu0
        %1231 = vmatprep.mubr.f32.mxu0 0.0
        %1232 = vmatmul.mubr.f32.gmra.mxu0 %v1127
        %v1233 = vpop.f32.mrf.mxu0
        %v1234 = vadd.f32 0.0, %v1233
        %v1235 = vpop.f32.mrf.mxu0
        %1236 = vdwg.mxu0
        %v1237 = vadd.f32 %v1116, %v1199
        %v1238 = vadd.f32 %v1117, %v1204
        %v1239 = vadd.f32 %v1118, %v1209
        %v1240 = vadd.f32 %v1119, %v1214
        %v1241 = vadd.f32 %v1120, %v1219
        %v1242 = vadd.f32 %v1121, %v1224
        %v1243 = vadd.f32 %v1122, %v1229
        %v1244 = vadd.f32 %v1123, %v1234
        %s1245 = scalar_lea.vmem [#allocation2], 32
        %v1246 = vld [vmem:[%s1245] sm:$0xf]
        %v1248 = vsel %vm232, %v228, 0
        %v1251 = vsel %vm257, %v1246, 0
        %1253 = vmatprep.subr.mxu0 0.0
        %1254 = vmatpush1.msra.mxu0 0.0
        %1255 = vmatprep.subr.mxu0 0.0
        %1256 = vmatpush1.msra.mxu0 0.0
        %1257 = vmatprep.subr.mxu0 0.0
        %1258 = vmatpush1.msra.mxu0 0.0
        %1259 = vmatprep.subr.mxu0 0.0
        %1260 = vmatpush1.msra.mxu0 0.0
        %1261 = vmatprep.subr.mxu0 0.0
        %1262 = vmatpush1.msra.mxu0 0.0
        %1263 = vmatprep.subr.mxu0 0.0
        %1264 = vmatpush1.msra.mxu0 0.0
        %1265 = vmatprep.subr.mxu0 0.0
        %1266 = vmatpush1.msra.mxu0 0.0
        %1267 = vmatprep.subr.mxu0 0.0
        %1268 = vmatpush1.msra.mxu0 0.0
        %1269 = vmatprep.subr.mxu0 0.0
        %1270 = vmatpush1.msra.mxu0 0.0
        %1271 = vmatprep.subr.mxu0 0.0
        %1272 = vmatpush1.msra.mxu0 0.0
        %1273 = vmatprep.subr.mxu0 0.0
        %1274 = vmatpush1.msra.mxu0 0.0
        %1275 = vmatprep.subr.mxu0 0.0
        %1276 = vmatpush1.msra.mxu0 0.0
        %1277 = vmatprep.subr.mxu0 0.0
        %1278 = vmatpush1.msra.mxu0 0.0
        %1279 = vmatprep.subr.mxu0 0.0
        %1280 = vmatpush1.msra.mxu0 0.0
        %1281 = vmatprep.subr.mxu0 0.0
        %1282 = vmatpush1.msra.mxu0 0.0
        %1283 = vmatprep.subr.mxu0 0.0
        %1284 = vmatpush1.msra.mxu0 %v1251
        %1285 = vmatprep.subr.mxu0 0.0
        %1286 = vmatpush2.msra.mxu0 0.0
        %1287 = vmatprep.subr.mxu0 0.0
        %1288 = vmatpush2.msra.mxu0 0.0
        %1289 = vmatprep.subr.mxu0 0.0
        %1290 = vmatpush2.msra.mxu0 0.0
        %1291 = vmatprep.subr.mxu0 0.0
        %1292 = vmatpush2.msra.mxu0 0.0
        %1293 = vmatprep.subr.mxu0 0.0
        %1294 = vmatpush2.msra.mxu0 0.0
        %1295 = vmatprep.subr.mxu0 0.0
        %1296 = vmatpush2.msra.mxu0 0.0
        %1297 = vmatprep.subr.mxu0 0.0
        %1298 = vmatpush2.msra.mxu0 0.0
        %1299 = vmatprep.subr.mxu0 0.0
        %1300 = vmatpush2.msra.mxu0 0.0
        %1301 = vmatprep.subr.mxu0 0.0
        %1302 = vmatpush2.msra.mxu0 0.0
        %1303 = vmatprep.subr.mxu0 0.0
        %1304 = vmatpush2.msra.mxu0 0.0
        %1305 = vmatprep.subr.mxu0 0.0
        %1306 = vmatpush2.msra.mxu0 0.0
        %1307 = vmatprep.subr.mxu0 0.0
        %1308 = vmatpush2.msra.mxu0 0.0
        %1309 = vmatprep.subr.mxu0 0.0
        %1310 = vmatpush2.msra.mxu0 0.0
        %1311 = vmatprep.subr.mxu0 0.0
        %1312 = vmatpush2.msra.mxu0 0.0
        %1313 = vmatprep.subr.mxu0 0.0
        %1314 = vmatpush2.msra.mxu0 0.0
        %1315 = vmatprep.subr.mxu0 0.0
        %1316 = vmatpush2.msra.mxu0 0.0
        %1317 = vmatprep.mubr.f32.mxu0 0.0
        %1318 = vmatmul.mubr.f32.gmra.mxu0 %v507
        %v1319 = vpop.f32.mrf.mxu0
        %v1320 = vadd.f32 0.0, %v1319
        %v1321 = vpop.f32.mrf.mxu0
        %1322 = vmatprep.mubr.f32.mxu0 0.0
        %1323 = vmatmul.mubr.f32.gmra.mxu0 %v510
        %v1324 = vpop.f32.mrf.mxu0
        %v1325 = vadd.f32 0.0, %v1324
        %v1326 = vpop.f32.mrf.mxu0
        %1327 = vmatprep.mubr.f32.mxu0 0.0
        %1328 = vmatmul.mubr.f32.gmra.mxu0 %v513
        %v1329 = vpop.f32.mrf.mxu0
        %v1330 = vadd.f32 0.0, %v1329
        %v1331 = vpop.f32.mrf.mxu0
        %1332 = vmatprep.mubr.f32.mxu0 0.0
        %1333 = vmatmul.mubr.f32.gmra.mxu0 %v516
        %v1334 = vpop.f32.mrf.mxu0
        %v1335 = vadd.f32 0.0, %v1334
        %v1336 = vpop.f32.mrf.mxu0
        %1337 = vmatprep.mubr.f32.mxu0 0.0
        %1338 = vmatmul.mubr.f32.gmra.mxu0 %v519
        %v1339 = vpop.f32.mrf.mxu0
        %v1340 = vadd.f32 0.0, %v1339
        %v1341 = vpop.f32.mrf.mxu0
        %1342 = vmatprep.mubr.f32.mxu0 0.0
        %1343 = vmatmul.mubr.f32.gmra.mxu0 %v522
        %v1344 = vpop.f32.mrf.mxu0
        %v1345 = vadd.f32 0.0, %v1344
        %v1346 = vpop.f32.mrf.mxu0
        %1347 = vmatprep.mubr.f32.mxu0 0.0
        %1348 = vmatmul.mubr.f32.gmra.mxu0 %v885
        %v1349 = vpop.f32.mrf.mxu0
        %v1350 = vadd.f32 0.0, %v1349
        %v1351 = vpop.f32.mrf.mxu0
        %1352 = vmatprep.mubr.f32.mxu0 0.0
        %1353 = vmatmul.mubr.f32.gmra.mxu0 %v1248
        %v1354 = vpop.f32.mrf.mxu0
        %v1355 = vadd.f32 0.0, %v1354
        %v1356 = vpop.f32.mrf.mxu0
        %1357 = vdwg.mxu0
        %v1358 = vadd.f32 %v1237, %v1320
        %v1359 = vadd.f32 %v1238, %v1325
        %v1360 = vadd.f32 %v1239, %v1330
        %v1361 = vadd.f32 %v1240, %v1335
        %v1362 = vadd.f32 %v1241, %v1340
        %v1363 = vadd.f32 %v1242, %v1345
        %v1364 = vadd.f32 %v1243, %v1350
        %v1365 = vadd.f32 %v1244, %v1355
        %v1366 = vld [vmem:[#allocation4] sm:$0x1]
        %v1368 = vlaneseq
        %v1369 = vshrl.u32 %v1368, 7
        %v1370 = vsub.s32 0, %v1369
        %v1371 = vrot.slane %v1366, %v1370
        %v1373 = vadd.f32 %v1358, %v1371
        %v1374 = vadd.f32 %v1359, %v1371
        %v1375 = vadd.f32 %v1360, %v1371
        %v1376 = vadd.f32 %v1361, %v1371
        %v1377 = vadd.f32 %v1362, %v1371
        %v1378 = vadd.f32 %v1363, %v1371
        %v1379 = vadd.f32 %v1364, %v1371
        %v1380 = vadd.f32 %v1365, %v1371
        %vm1381 = vcmask 261120
        %1382 = vst.msk [vmem:[%s198] sm:$0xff] %vm1381, %v1373
        %1383 = vst.msk [vmem:[%s198 + $0x8] sm:$0xff] %vm1381, %v1374
        %1384 = vst.msk [vmem:[%s198 + $0x10] sm:$0xff] %vm1381, %v1375
        %1385 = vst.msk [vmem:[%s198 + $0x18] sm:$0xff] %vm1381, %v1376
        %1386 = vst.msk [vmem:[%s198 + $0x20] sm:$0xff] %vm1381, %v1377
        %1387 = vst.msk [vmem:[%s198 + $0x28] sm:$0xff] %vm1381, %v1378
        %1388 = vst.msk [vmem:[%s198 + $0x30] sm:$0xff] %vm1381, %v1379
        %1389 = vst.msk [vmem:[%s198 + $0x38] sm:$0xff] %vm1381, %v1380
        %p1390 = scmp.lt.s32.totalorder %s16, 1
        %s1391 = scalar_select %p1390, %s16, 1
        %s1392 = smul.addr %s1391, 8
        %s1393 = smul.addr %s1392, 8
        %s1394 = scalar_lea.vmem %s3, %s1393
        // Predicated region
        $region41: #{decoder_forward.5} parent=31 // pred_check
          %p1395 = pneg %p102
        $region42: #{decoder_forward.5} parent=31 // pred_check_branch
          %1397 = sbr.rel (%p1395) target = $region44
        $region43: #{decoder_forward.5} parent=31 // pred_region
          _
        $region44: #{decoder_forward.5} parent=31 // pred_fallthru
          _
      $region32: #{decoder_forward.5} parent=5 // pred_fallthru
        _
      %p1398 = scmp.le.s32.totalorder 2, %s11
      // Predicated region
      $region45: #{decoder_forward.5} parent=5 // pred_check
        %p1399 = pneg %p1398
      $region46: #{decoder_forward.5} parent=5 // pred_check_branch
        %1401 = sbr.rel (%p1399) target = $region48
      $region47: #{decoder_forward.5} parent=5 // pred_region
        %s1402 = ssub.s32 %s11, 2
        // Predicated region
        $region49: #{decoder_forward.5} parent=47 // pred_check
          %p1403 = pneg %p108
        $region50: #{decoder_forward.5} parent=47 // pred_check_branch
          %1405 = sbr.rel (%p1403) target = $region52
        $region51: #{decoder_forward.5} parent=47 // pred_region
          %p1406 = scmp.lt.s32.totalorder %s17, 1
          %s1407 = scalar_select %p1406, %s17, 1
          %s1408 = smul.addr %s1407, 8
          %s1409 = smul.addr %s1408, 8
          %s1410 = scalar_lea.vmem %s3, %s1409
        $region52: #{decoder_forward.5} parent=47 // pred_fallthru
          _
      $region48: #{decoder_forward.5} parent=5 // pred_fallthru
        _
    $region6: #{decoder_forward.5} parent=1 // loop_footer
      %s15 = sadd.s32 1, %s11
    $region7: #{decoder_forward.5} parent=1 // loop_footer_branch
      %10 = sbr.rel target = $region3
    $region8: #{decoder_forward.5} parent=1 // loop_exit
      _
    %1411 = vsyncpa [#allocation3], 1
    %s1412 = scalar_lea.sflag [#allocation3], 1
    %1413 = vsyncpa %s1412, 1
    %1414 = vsyncpa [#allocation5], 1

// kernel: decoder_forward.6
$region0: #{decoder_forward.6}
  #allocation0 [shape = 'u32[]', space=smem, size = 0x4, offset = 0x4, fixed_abs, tag = 'smem constant byte address 0x4 - core index']
  #allocation1 [shape = 'u32[144,128]{1,0:T(1,128)}', space=vmem, size = 0x12000, scoped, tag = 'internal scratch']
  %s0 = inlined_call_operand.vmem [shape: f32[2,10,10,32], index: 0, kind: input, shape index: {}]
  %s1 = inlined_call_operand.vmem [shape: f32[3,3,32,8], index: 1, kind: input, shape index: {}]
  %s2 = inlined_call_operand.hbm [shape: f32[1,8], index: 2, kind: input, shape index: {}]
  %s3 = inlined_call_operand.hbm [shape: f32[8,32], index: 3, kind: input, shape index: {}]
  %s4 = inlined_call_operand.hbm [shape: f32[1,32], index: 4, kind: input, shape index: {}]
  %s5 = inlined_call_operand.vmem [shape: f32[2,64,32], index: 5, kind: output, shape index: {}]
  %s6 = sld [smem:[#allocation0]]
  $region65: #{decoder_forward.6} parent=0
    _
  %s8 = ssub.s32 1, %s6
  %s9 = scalar_select 0, %s8, %s6
  $region1: #{decoder_forward.6} parent=0
    #allocation2 [shape = 'u8[512]{0}', space=vmem, size = 0x400, scoped, tag = 'input window, operand 2, single buffered']
    #allocation3 [shape = 's32[2]{0}', space=sflag, size = 0x8, scoped, tag = 'scoped memory for decoder_forward.6']
    #allocation4 [shape = 'u8[4096]{0}', space=vmem, size = 0x1000, scoped, tag = 'input window, operand 3, single buffered']
    #allocation5 [shape = 's32[1]{0}', space=sflag, size = 0x4, scoped, tag = 'scoped memory for decoder_forward.6']
    #allocation6 [shape = 'u8[512]{0}', space=vmem, size = 0x400, scoped, tag = 'input window, operand 4, single buffered']
    %10 = vsyncpa [#allocation3], 0
    %11 = vsyncpa [#allocation5], 0
    loop: start=0, step=1, limit=4
    $region2: #{decoder_forward.6} parent=1 // loop_pre_header
      _
    $region3: #{decoder_forward.6} parent=1 // loop_header
      %s13 = sphi 0, %s17
      %p14 = scmp.ge.s32.totalorder %s13, 4
      %s23 = sphi 0, %s25
      %s26 = sphi 0, %s23
      %s27 = sphi 0, %s26
      %s43 = sphi 0, %s27
      %s47 = sphi 0, %s47
      %s49 = sphi 0, %s47
      %s50 = sphi 0, %s49
      %s64 = sphi 0, %s50
      %s68 = sphi 0, %s68
      %s70 = sphi 0, %s68
      %s71 = sphi 0, %s70
      %s85 = sphi 0, %s71
      %s89 = sphi 0, %s89
      %s91 = sphi 0, %s89
      %s92 = sphi 0, %s91
      %s106 = sphi 0, %s92
      %s110 = sphi 0, %s110
      %s112 = sphi 0, %s110
      %s113 = sphi 0, %s112
      %s127 = sphi 0, %s113
      %s133 = sphi 0, %s135
      %s136 = sphi 0, %s133
      %s137 = sphi 0, %s136
      %s153 = sphi 0, %s137
    $region4: #{decoder_forward.6} parent=1 // loop_header_branch
      %16 = sbr.rel (%p14) target = $region8
    $region5: #{decoder_forward.6} parent=1 // loop_body
      %s18 = ssub.s32 %s13, 1
      %s19 = ssub.s32 %s13, 2
      %s20 = sadd.s32 %s13, 1
      %s21 = ssub.s32 %s13, %s20
      %p22 = scmp.eq.s32.totalorder %s21, 0
      %s24 = sadd.s32 %s23, 1
      %s25 = scalar_select %p22, %s23, %s24
      %p28 = pneg %p22
      %p29 = scmp.eq.s32.totalorder %s13, 1
      %p30 = por %p28, %p29
      %p31 = scmp.ne.s32.totalorder %s23, %s26
      %p32 = scmp.eq.s32.totalorder %s13, 0
      %p33 = por %p31, %p32
      %p34 = scmp.ne.s32.totalorder %s23, %s26
      %p35 = scmp.eq.s32.totalorder %s18, 1
      %p36 = por %p34, %p35
      %p37 = scmp.ne.s32.totalorder %s26, %s27
      %p38 = scmp.eq.s32.totalorder %s18, 0
      %p39 = por %p37, %p38
      %p40 = scmp.ne.s32.totalorder %s26, %s27
      %p41 = scmp.eq.s32.totalorder %s19, 1
      %p42 = por %p40, %p41
      %p44 = scmp.ne.s32.totalorder %s27, %s43
      %p45 = scmp.eq.s32.totalorder %s19, 0
      %p46 = por %p44, %p45
      %s48 = sadd.s32 %s47, 1
      %p51 = scmp.eq.s32.totalorder %s13, 1
      %p52 = scmp.ne.s32.totalorder %s47, %s49
      %p53 = scmp.eq.s32.totalorder %s13, 0
      %p54 = por %p52, %p53
      %p55 = scmp.ne.s32.totalorder %s47, %s49
      %p56 = scmp.eq.s32.totalorder %s18, 1
      %p57 = por %p55, %p56
      %p58 = scmp.ne.s32.totalorder %s49, %s50
      %p59 = scmp.eq.s32.totalorder %s18, 0
      %p60 = por %p58, %p59
      %p61 = scmp.ne.s32.totalorder %s49, %s50
      %p62 = scmp.eq.s32.totalorder %s19, 1
      %p63 = por %p61, %p62
      %p65 = scmp.ne.s32.totalorder %s50, %s64
      %p66 = scmp.eq.s32.totalorder %s19, 0
      %p67 = por %p65, %p66
      %s69 = sadd.s32 %s68, 1
      %p72 = scmp.eq.s32.totalorder %s13, 1
      %p73 = scmp.ne.s32.totalorder %s68, %s70
      %p74 = scmp.eq.s32.totalorder %s13, 0
      %p75 = por %p73, %p74
      %p76 = scmp.ne.s32.totalorder %s68, %s70
      %p77 = scmp.eq.s32.totalorder %s18, 1
      %p78 = por %p76, %p77
      %p79 = scmp.ne.s32.totalorder %s70, %s71
      %p80 = scmp.eq.s32.totalorder %s18, 0
      %p81 = por %p79, %p80
      %p82 = scmp.ne.s32.totalorder %s70, %s71
      %p83 = scmp.eq.s32.totalorder %s19, 1
      %p84 = por %p82, %p83
      %p86 = scmp.ne.s32.totalorder %s71, %s85
      %p87 = scmp.eq.s32.totalorder %s19, 0
      %p88 = por %p86, %p87
      %s90 = sadd.s32 %s89, 1
      %p93 = scmp.eq.s32.totalorder %s13, 1
      %p94 = scmp.ne.s32.totalorder %s89, %s91
      %p95 = scmp.eq.s32.totalorder %s13, 0
      %p96 = por %p94, %p95
      %p97 = scmp.ne.s32.totalorder %s89, %s91
      %p98 = scmp.eq.s32.totalorder %s18, 1
      %p99 = por %p97, %p98
      %p100 = scmp.ne.s32.totalorder %s91, %s92
      %p101 = scmp.eq.s32.totalorder %s18, 0
      %p102 = por %p100, %p101
      %p103 = scmp.ne.s32.totalorder %s91, %s92
      %p104 = scmp.eq.s32.totalorder %s19, 1
      %p105 = por %p103, %p104
      %p107 = scmp.ne.s32.totalorder %s92, %s106
      %p108 = scmp.eq.s32.totalorder %s19, 0
      %p109 = por %p107, %p108
      %s111 = sadd.s32 %s110, 1
      %p114 = scmp.eq.s32.totalorder %s13, 1
      %p115 = scmp.ne.s32.totalorder %s110, %s112
      %p116 = scmp.eq.s32.totalorder %s13, 0
      %p117 = por %p115, %p116
      %p118 = scmp.ne.s32.totalorder %s110, %s112
      %p119 = scmp.eq.s32.totalorder %s18, 1
      %p120 = por %p118, %p119
      %p121 = scmp.ne.s32.totalorder %s112, %s113
      %p122 = scmp.eq.s32.totalorder %s18, 0
      %p123 = por %p121, %p122
      %p124 = scmp.ne.s32.totalorder %s112, %s113
      %p125 = scmp.eq.s32.totalorder %s19, 1
      %p126 = por %p124, %p125
      %p128 = scmp.ne.s32.totalorder %s113, %s127
      %p129 = scmp.eq.s32.totalorder %s19, 0
      %p130 = por %p128, %p129
      %s131 = ssub.s32 %s13, %s20
      %p132 = scmp.eq.s32.totalorder %s131, 0
      %s134 = sadd.s32 %s133, 1
      %s135 = scalar_select %p132, %s133, %s134
      %p138 = pneg %p132
      %p139 = scmp.eq.s32.totalorder %s13, 1
      %p140 = por %p138, %p139
      %p141 = scmp.ne.s32.totalorder %s133, %s136
      %p142 = scmp.eq.s32.totalorder %s13, 0
      %p143 = por %p141, %p142
      %p144 = scmp.ne.s32.totalorder %s133, %s136
      %p145 = scmp.eq.s32.totalorder %s18, 1
      %p146 = por %p144, %p145
      %p147 = scmp.ne.s32.totalorder %s136, %s137
      %p148 = scmp.eq.s32.totalorder %s18, 0
      %p149 = por %p147, %p148
      %p150 = scmp.ne.s32.totalorder %s136, %s137
      %p151 = scmp.eq.s32.totalorder %s19, 1
      %p152 = por %p150, %p151
      %p154 = scmp.ne.s32.totalorder %s137, %s153
      %p155 = scmp.eq.s32.totalorder %s19, 0
      %p156 = por %p154, %p155
      %p157 = scmp.le.s32.totalorder 1, %s13
      %p158 = scmp.lt.s32.totalorder %s13, 3
      %p159 = pnand %p157, %p158
      %p160 = pneg %p159
      // Predicated region
      $region9: #{decoder_forward.6} parent=5 // pred_check
        _
      $region10: #{decoder_forward.6} parent=5 // pred_check_branch
        %162 = sbr.rel (%p159) target = $region12
      $region11: #{decoder_forward.6} parent=5 // pred_region
        %s163 = ssub.s32 %s13, 1
        // Predicated region
        $region13: #{decoder_forward.6} parent=11 // pred_check
          %p164 = pneg %p60
        $region14: #{decoder_forward.6} parent=11 // pred_check_branch
          %166 = sbr.rel (%p164) target = $region16
        $region15: #{decoder_forward.6} parent=11 // pred_region
          _
        $region16: #{decoder_forward.6} parent=11 // pred_fallthru
          _
        // Predicated region
        $region17: #{decoder_forward.6} parent=11 // pred_check
          %p167 = pneg %p81
        $region18: #{decoder_forward.6} parent=11 // pred_check_branch
          %169 = sbr.rel (%p167) target = $region20
        $region19: #{decoder_forward.6} parent=11 // pred_region
          %s171 = ssub.s32 16, 16
          %172 = vsyncadd [#allocation3], %s171
          %s174 = sshll.u32 [#allocation2], 4
          %s175 = int_to_ptr.vmem [resolvable:$true] %s174
          %177 = dma.hbm_to_vmem [thread:$0]  %s2, 16, %s175, [#allocation3]
        $region20: #{decoder_forward.6} parent=11 // pred_fallthru
          _
        // Predicated region
        $region21: #{decoder_forward.6} parent=11 // pred_check
          %p178 = pneg %p102
        $region22: #{decoder_forward.6} parent=11 // pred_check_branch
          %180 = sbr.rel (%p178) target = $region24
        $region23: #{decoder_forward.6} parent=11 // pred_region
          %s182 = ssub.s32 128, 128
          %183 = vsyncadd [#allocation5], %s182
          %s185 = sshll.u32 [#allocation4], 4
          %s186 = int_to_ptr.vmem [resolvable:$true] %s185
          %188 = dma.hbm_to_vmem [thread:$0]  %s3, 128, %s186, [#allocation5]
        $region24: #{decoder_forward.6} parent=11 // pred_fallthru
          _
        // Predicated region
        $region25: #{decoder_forward.6} parent=11 // pred_check
          %p189 = pneg %p123
        $region26: #{decoder_forward.6} parent=11 // pred_check_branch
          %191 = sbr.rel (%p189) target = $region28
        $region27: #{decoder_forward.6} parent=11 // pred_region
          %s193 = ssub.s32 16, 16
          %194 = vsyncadd [#allocation5], %s193
          %s196 = sshll.u32 [#allocation6], 4
          %s197 = int_to_ptr.vmem [resolvable:$true] %s196
          %199 = dma.hbm_to_vmem [thread:$0]  %s4, 16, %s197, [#allocation5]
        $region28: #{decoder_forward.6} parent=11 // pred_fallthru
          _
      $region12: #{decoder_forward.6} parent=5 // pred_fallthru
        _
      %p200 = scmp.lt.s32.totalorder %s13, 2
      // Predicated region
      $region29: #{decoder_forward.6} parent=5 // pred_check
        %p201 = pneg %p200
      $region30: #{decoder_forward.6} parent=5 // pred_check_branch
        %203 = sbr.rel (%p201) target = $region32
      $region31: #{decoder_forward.6} parent=5 // pred_region
        // Predicated region
        $region33: #{decoder_forward.6} parent=31 // pred_check
          %p204 = pneg %p33
        $region34: #{decoder_forward.6} parent=31 // pred_check_branch
          %206 = sbr.rel (%p204) target = $region36
        $region35: #{decoder_forward.6} parent=31 // pred_region
          %p207 = scmp.lt.s32.totalorder %s13, 1
          %s208 = scalar_select %p207, %s13, 1
          %s209 = smul.addr %s208, 20
          %s210 = smul.addr %s209, 8
          %s211 = scalar_lea.vmem %s0, %s210
        $region36: #{decoder_forward.6} parent=31 // pred_fallthru
          _
      $region32: #{decoder_forward.6} parent=5 // pred_fallthru
        _
      %p212 = scmp.le.s32.totalorder 1, %s13
      %p213 = scmp.lt.s32.totalorder %s13, 3
      %p214 = pnand %p212, %p213
      %p215 = pneg %p214
      // Predicated region
      $region37: #{decoder_forward.6} parent=5 // pred_check
        _
      $region38: #{decoder_forward.6} parent=5 // pred_check_branch
        %217 = sbr.rel (%p214) target = $region40
      $region39: #{decoder_forward.6} parent=5 // pred_region
        %s218 = ssub.s32 %s13, 1
        // Predicated region
        $region41: #{decoder_forward.6} parent=39 // pred_check
          %p219 = pneg %p81
        $region42: #{decoder_forward.6} parent=39 // pred_check_branch
          %221 = sbr.rel (%p219) target = $region44
        $region43: #{decoder_forward.6} parent=39 // pred_region
          %222 = dma.done [#allocation3], 16
        $region44: #{decoder_forward.6} parent=39 // pred_fallthru
          _
        // Predicated region
        $region45: #{decoder_forward.6} parent=39 // pred_check
          %p223 = pneg %p102
        $region46: #{decoder_forward.6} parent=39 // pred_check_branch
          %225 = sbr.rel (%p223) target = $region48
        $region47: #{decoder_forward.6} parent=39 // pred_region
          %226 = dma.done [#allocation5], 128
        $region48: #{decoder_forward.6} parent=39 // pred_fallthru
          _
        // Predicated region
        $region49: #{decoder_forward.6} parent=39 // pred_check
          %p227 = pneg %p123
        $region50: #{decoder_forward.6} parent=39 // pred_check_branch
          %229 = sbr.rel (%p227) target = $region52
        $region51: #{decoder_forward.6} parent=39 // pred_region
          %230 = dma.done [#allocation5], 16
        $region52: #{decoder_forward.6} parent=39 // pred_fallthru
          _
        %p231 = scmp.lt.s32.totalorder %s18, 1
        %s232 = scalar_select %p231, %s18, 1
        %s233 = smul.addr %s232, 20
        %s234 = smul.addr %s233, 8
        %s235 = scalar_lea.vmem %s0, %s234
        %p236 = pneg %p39
        %p237 = pneg %p36
        %p238 = pneg %p60
        %p239 = pneg %p57
        %p240 = pneg %p81
        %p241 = pneg %p78
        %p242 = pneg %p102
        %p243 = pneg %p99
        %p244 = pneg %p123
        %p245 = pneg %p120
        %p246 = pneg %p149
        %p247 = pneg %p146
        %p248 = scmp.lt.s32.totalorder %s18, 1
        %s249 = scalar_select %p248, %s18, 1
        %s250 = smul.addr %s249, 8
        %s251 = smul.addr %s250, 8
        %s252 = scalar_lea.vmem %s5, %s251
        %p253 = scmp.lt.s32.totalorder %s18, 1
        %s254 = scalar_select %p253, %s18, 1
        %s255 = smul.addr %s254, 20
        %s256 = smul.addr %s255, 8
        %s257 = scalar_lea.vmem %s0, %s256
        %p258 = scmp.lt.s32.totalorder %s18, 1
        %s259 = scalar_select %p258, %s18, 1
        %s260 = smul.addr %s259, 8
        %s261 = smul.addr %s260, 8
        %s262 = scalar_lea.vmem %s5, %s261
        %v263 = vld [vmem:[%s257] sm:$0xff]
        %v264 = vld [vmem:[%s257 + $0x10] sm:$0xff]
        %v265 = vld [vmem:[%s257 + $0x20] sm:$0xff]
        %v266 = vld [vmem:[%s257 + $0x30] sm:$0xff]
        %v267 = vld [vmem:[%s257 + $0x40] sm:$0xff]
        %v268 = vld [vmem:[%s257 + $0x50] sm:$0xff]
        %v269 = vld [vmem:[%s257 + $0x60] sm:$0xff]
        %v270 = vld [vmem:[%s257 + $0x70] sm:$0xff]
        %v271 = vld [vmem:[%s257 + $0x80] sm:$0xff]
        %v272 = vld [vmem:[%s257 + $0x90] sm:$0xff]
        %v273 = vld [vmem:[%s257 + $0x1] sm:$0xff]
        %v274 = vld [vmem:[%s257 + $0x11] sm:$0xff]
        %v275 = vld [vmem:[%s257 + $0x21] sm:$0xff]
        %v276 = vld [vmem:[%s257 + $0x31] sm:$0xff]
        %v277 = vld [vmem:[%s257 + $0x41] sm:$0xff]
        %v278 = vld [vmem:[%s257 + $0x51] sm:$0xff]
        %v279 = vld [vmem:[%s257 + $0x61] sm:$0xff]
        %v280 = vld [vmem:[%s257 + $0x71] sm:$0xff]
        %v281 = vld [vmem:[%s257 + $0x81] sm:$0xff]
        %v282 = vld [vmem:[%s257 + $0x91] sm:$0xff]
        %v283 = vld [vmem:[%s257 + $0x2] sm:$0xff]
        %v284 = vld [vmem:[%s257 + $0x12] sm:$0xff]
        %v285 = vld [vmem:[%s257 + $0x22] sm:$0xff]
        %v286 = vld [vmem:[%s257 + $0x32] sm:$0xff]
        %v287 = vld [vmem:[%s257 + $0x42] sm:$0xff]
        %v288 = vld [vmem:[%s257 + $0x52] sm:$0xff]
        %v289 = vld [vmem:[%s257 + $0x62] sm:$0xff]
        %v290 = vld [vmem:[%s257 + $0x72] sm:$0xff]
        %v291 = vld [vmem:[%s257 + $0x82] sm:$0xff]
        %v292 = vld [vmem:[%s257 + $0x92] sm:$0xff]
        %v293 = vmax.f32 %v263, 0.0
        %v294 = vmax.f32 %v264, 0.0
        %v295 = vmax.f32 %v265, 0.0
        %v296 = vmax.f32 %v266, 0.0
        %v297 = vmax.f32 %v267, 0.0
        %v298 = vmax.f32 %v268, 0.0
        %v299 = vmax.f32 %v269, 0.0
        %v300 = vmax.f32 %v270, 0.0
        %v301 = vmax.f32 %v271, 0.0
        %v302 = vmax.f32 %v272, 0.0
        %v303 = vmax.f32 %v273, 0.0
        %v304 = vmax.f32 %v274, 0.0
        %v305 = vmax.f32 %v275, 0.0
        %v306 = vmax.f32 %v276, 0.0
        %v307 = vmax.f32 %v277, 0.0
        %v308 = vmax.f32 %v278, 0.0
        %v309 = vmax.f32 %v279, 0.0
        %v310 = vmax.f32 %v280, 0.0
        %v311 = vmax.f32 %v281, 0.0
        %v312 = vmax.f32 %v282, 0.0
        %v313 = vmax.f32 %v283, 0.0
        %v314 = vmax.f32 %v284, 0.0
        %v315 = vmax.f32 %v285, 0.0
        %v316 = vmax.f32 %v286, 0.0
        %v317 = vmax.f32 %v287, 0.0
        %v318 = vmax.f32 %v288, 0.0
        %v319 = vmax.f32 %v289, 0.0
        %v320 = vmax.f32 %v290, 0.0
        %v321 = vmax.f32 %v291, 0.0
        %v322 = vmax.f32 %v292, 0.0
        %v323 = vld [vmem:[%s1] sm:$0xff]
        %v324 = vld [vmem:[%s1 + $0x8] sm:$0xff]
        %v325 = vld [vmem:[%s1 + $0x10] sm:$0xff]
        %v326 = vld [vmem:[%s1 + $0x18] sm:$0xff]
        %s327 = scalar_lea.vmem %s1, 32
        %v328 = vld [vmem:[%s327] sm:$0xff]
        %v329 = vld [vmem:[%s327 + $0x8] sm:$0xff]
        %v330 = vld [vmem:[%s327 + $0x10] sm:$0xff]
        %v331 = vld [vmem:[%s327 + $0x18] sm:$0xff]
        %vm332 = vcmask 261120
        %v334 = vsel %vm332, %v303, 0
        %v337 = vsel %vm332, %v304, 0
        %v340 = vsel %vm332, %v305, 0
        %v343 = vsel %vm332, %v306, 0
        %v346 = vsel %vm332, %v307, 0
        %v349 = vsel %vm332, %v308, 0
        %v352 = vsel %vm332, %v309, 0
        %v355 = vsel %vm332, %v310, 0
        %357 = vmatprep.subr.mxu0 0.0
        %358 = vmatpush1.msra.mxu0 0.0
        %359 = vmatprep.subr.mxu0 0.0
        %360 = vmatpush1.msra.mxu0 0.0
        %361 = vmatprep.subr.mxu0 0.0
        %362 = vmatpush1.msra.mxu0 0.0
        %363 = vmatprep.subr.mxu0 0.0
        %364 = vmatpush1.msra.mxu0 0.0
        %365 = vmatprep.subr.mxu0 0.0
        %366 = vmatpush1.msra.mxu0 0.0
        %367 = vmatprep.subr.mxu0 0.0
        %368 = vmatpush1.msra.mxu0 0.0
        %369 = vmatprep.subr.mxu0 0.0
        %370 = vmatpush1.msra.mxu0 0.0
        %371 = vmatprep.subr.mxu0 0.0
        %372 = vmatpush1.msra.mxu0 0.0
        %373 = vmatprep.subr.mxu0 0.0
        %374 = vmatpush1.msra.mxu0 0.0
        %375 = vmatprep.subr.mxu0 0.0
        %376 = vmatpush1.msra.mxu0 0.0
        %377 = vmatprep.subr.mxu0 0.0
        %378 = vmatpush1.msra.mxu0 0.0
        %379 = vmatprep.subr.mxu0 0.0
        %380 = vmatpush1.msra.mxu0 0.0
        %381 = vmatprep.subr.mxu0 0.0
        %382 = vmatpush1.msra.mxu0 %v331
        %383 = vmatprep.subr.mxu0 0.0
        %384 = vmatpush1.msra.mxu0 %v330
        %385 = vmatprep.subr.mxu0 0.0
        %386 = vmatpush1.msra.mxu0 %v329
        %387 = vmatprep.subr.mxu0 0.0
        %388 = vmatpush1.msra.mxu0 %v328
        %389 = vmatprep.subr.mxu0 0.0
        %390 = vmatpush2.msra.mxu0 0.0
        %391 = vmatprep.subr.mxu0 0.0
        %392 = vmatpush2.msra.mxu0 0.0
        %393 = vmatprep.subr.mxu0 0.0
        %394 = vmatpush2.msra.mxu0 0.0
        %395 = vmatprep.subr.mxu0 0.0
        %396 = vmatpush2.msra.mxu0 0.0
        %397 = vmatprep.subr.mxu0 0.0
        %398 = vmatpush2.msra.mxu0 0.0
        %399 = vmatprep.subr.mxu0 0.0
        %400 = vmatpush2.msra.mxu0 0.0
        %401 = vmatprep.subr.mxu0 0.0
        %402 = vmatpush2.msra.mxu0 0.0
        %403 = vmatprep.subr.mxu0 0.0
        %404 = vmatpush2.msra.mxu0 0.0
        %405 = vmatprep.subr.mxu0 0.0
        %406 = vmatpush2.msra.mxu0 0.0
        %407 = vmatprep.subr.mxu0 0.0
        %408 = vmatpush2.msra.mxu0 0.0
        %409 = vmatprep.subr.mxu0 0.0
        %410 = vmatpush2.msra.mxu0 0.0
        %411 = vmatprep.subr.mxu0 0.0
        %412 = vmatpush2.msra.mxu0 0.0
        %413 = vmatprep.subr.mxu0 0.0
        %414 = vmatpush2.msra.mxu0 0.0
        %415 = vmatprep.subr.mxu0 0.0
        %416 = vmatpush2.msra.mxu0 0.0
        %417 = vmatprep.subr.mxu0 0.0
        %418 = vmatpush2.msra.mxu0 0.0
        %419 = vmatprep.subr.mxu0 0.0
        %420 = vmatpush2.msra.mxu0 0.0
        %421 = vmatprep.mubr.f32.mxu0 0.0
        %422 = vmatmul.mubr.f32.gmra.mxu0 %v334
        %v423 = vpop.f32.mrf.mxu0
        %v424 = vadd.f32 0.0, %v423
        %v425 = vpop.f32.mrf.mxu0
        %426 = vmatprep.mubr.f32.mxu0 0.0
        %427 = vmatmul.mubr.f32.gmra.mxu0 %v337
        %v428 = vpop.f32.mrf.mxu0
        %v429 = vadd.f32 0.0, %v428
        %v430 = vpop.f32.mrf.mxu0
        %431 = vmatprep.mubr.f32.mxu0 0.0
        %432 = vmatmul.mubr.f32.gmra.mxu0 %v340
        %v433 = vpop.f32.mrf.mxu0
        %v434 = vadd.f32 0.0, %v433
        %v435 = vpop.f32.mrf.mxu0
        %436 = vmatprep.mubr.f32.mxu0 0.0
        %437 = vmatmul.mubr.f32.gmra.mxu0 %v343
        %v438 = vpop.f32.mrf.mxu0
        %v439 = vadd.f32 0.0, %v438
        %v440 = vpop.f32.mrf.mxu0
        %441 = vmatprep.mubr.f32.mxu0 0.0
        %442 = vmatmul.mubr.f32.gmra.mxu0 %v346
        %v443 = vpop.f32.mrf.mxu0
        %v444 = vadd.f32 0.0, %v443
        %v445 = vpop.f32.mrf.mxu0
        %446 = vmatprep.mubr.f32.mxu0 0.0
        %447 = vmatmul.mubr.f32.gmra.mxu0 %v349
        %v448 = vpop.f32.mrf.mxu0
        %v449 = vadd.f32 0.0, %v448
        %v450 = vpop.f32.mrf.mxu0
        %451 = vmatprep.mubr.f32.mxu0 0.0
        %452 = vmatmul.mubr.f32.gmra.mxu0 %v352
        %v453 = vpop.f32.mrf.mxu0
        %v454 = vadd.f32 0.0, %v453
        %v455 = vpop.f32.mrf.mxu0
        %456 = vmatprep.mubr.f32.mxu0 0.0
        %457 = vmatmul.mubr.f32.gmra.mxu0 %v355
        %v458 = vpop.f32.mrf.mxu0
        %v459 = vadd.f32 0.0, %v458
        %v460 = vpop.f32.mrf.mxu0
        %461 = vdwg.mxu0
        %v463 = vsel %vm332, %v293, 0
        %v466 = vsel %vm332, %v294, 0
        %v469 = vsel %vm332, %v295, 0
        %v472 = vsel %vm332, %v296, 0
        %v475 = vsel %vm332, %v297, 0
        %v478 = vsel %vm332, %v298, 0
        %v481 = vsel %vm332, %v299, 0
        %v484 = vsel %vm332, %v300, 0
        %486 = vmatprep.subr.mxu0 0.0
        %487 = vmatpush1.msra.mxu0 0.0
        %488 = vmatprep.subr.mxu0 0.0
        %489 = vmatpush1.msra.mxu0 0.0
        %490 = vmatprep.subr.mxu0 0.0
        %491 = vmatpush1.msra.mxu0 0.0
        %492 = vmatprep.subr.mxu0 0.0
        %493 = vmatpush1.msra.mxu0 0.0
        %494 = vmatprep.subr.mxu0 0.0
        %495 = vmatpush1.msra.mxu0 0.0
        %496 = vmatprep.subr.mxu0 0.0
        %497 = vmatpush1.msra.mxu0 0.0
        %498 = vmatprep.subr.mxu0 0.0
        %499 = vmatpush1.msra.mxu0 0.0
        %500 = vmatprep.subr.mxu0 0.0
        %501 = vmatpush1.msra.mxu0 0.0
        %502 = vmatprep.subr.mxu0 0.0
        %503 = vmatpush1.msra.mxu0 0.0
        %504 = vmatprep.subr.mxu0 0.0
        %505 = vmatpush1.msra.mxu0 0.0
        %506 = vmatprep.subr.mxu0 0.0
        %507 = vmatpush1.msra.mxu0 0.0
        %508 = vmatprep.subr.mxu0 0.0
        %509 = vmatpush1.msra.mxu0 0.0
        %510 = vmatprep.subr.mxu0 0.0
        %511 = vmatpush1.msra.mxu0 %v326
        %512 = vmatprep.subr.mxu0 0.0
        %513 = vmatpush1.msra.mxu0 %v325
        %514 = vmatprep.subr.mxu0 0.0
        %515 = vmatpush1.msra.mxu0 %v324
        %516 = vmatprep.subr.mxu0 0.0
        %517 = vmatpush1.msra.mxu0 %v323
        %518 = vmatprep.subr.mxu0 0.0
        %519 = vmatpush2.msra.mxu0 0.0
        %520 = vmatprep.subr.mxu0 0.0
        %521 = vmatpush2.msra.mxu0 0.0
        %522 = vmatprep.subr.mxu0 0.0
        %523 = vmatpush2.msra.mxu0 0.0
        %524 = vmatprep.subr.mxu0 0.0
        %525 = vmatpush2.msra.mxu0 0.0
        %526 = vmatprep.subr.mxu0 0.0
        %527 = vmatpush2.msra.mxu0 0.0
        %528 = vmatprep.subr.mxu0 0.0
        %529 = vmatpush2.msra.mxu0 0.0
        %530 = vmatprep.subr.mxu0 0.0
        %531 = vmatpush2.msra.mxu0 0.0
        %532 = vmatprep.subr.mxu0 0.0
        %533 = vmatpush2.msra.mxu0 0.0
        %534 = vmatprep.subr.mxu0 0.0
        %535 = vmatpush2.msra.mxu0 0.0
        %536 = vmatprep.subr.mxu0 0.0
        %537 = vmatpush2.msra.mxu0 0.0
        %538 = vmatprep.subr.mxu0 0.0
        %539 = vmatpush2.msra.mxu0 0.0
        %540 = vmatprep.subr.mxu0 0.0
        %541 = vmatpush2.msra.mxu0 0.0
        %542 = vmatprep.subr.mxu0 0.0
        %543 = vmatpush2.msra.mxu0 0.0
        %544 = vmatprep.subr.mxu0 0.0
        %545 = vmatpush2.msra.mxu0 0.0
        %546 = vmatprep.subr.mxu0 0.0
        %547 = vmatpush2.msra.mxu0 0.0
        %548 = vmatprep.subr.mxu0 0.0
        %549 = vmatpush2.msra.mxu0 0.0
        %550 = vmatprep.mubr.f32.mxu0 0.0
        %551 = vmatmul.mubr.f32.gmra.mxu0 %v463
        %v552 = vpop.f32.mrf.mxu0
        %v553 = vadd.f32 %v424, %v552
        %v554 = vpop.f32.mrf.mxu0
        %555 = vmatprep.mubr.f32.mxu0 0.0
        %556 = vmatmul.mubr.f32.gmra.mxu0 %v466
        %v557 = vpop.f32.mrf.mxu0
        %v558 = vadd.f32 %v429, %v557
        %v559 = vpop.f32.mrf.mxu0
        %560 = vmatprep.mubr.f32.mxu0 0.0
        %561 = vmatmul.mubr.f32.gmra.mxu0 %v469
        %v562 = vpop.f32.mrf.mxu0
        %v563 = vadd.f32 %v434, %v562
        %v564 = vpop.f32.mrf.mxu0
        %565 = vmatprep.mubr.f32.mxu0 0.0
        %566 = vmatmul.mubr.f32.gmra.mxu0 %v472
        %v567 = vpop.f32.mrf.mxu0
        %v568 = vadd.f32 %v439, %v567
        %v569 = vpop.f32.mrf.mxu0
        %570 = vmatprep.mubr.f32.mxu0 0.0
        %571 = vmatmul.mubr.f32.gmra.mxu0 %v475
        %v572 = vpop.f32.mrf.mxu0
        %v573 = vadd.f32 %v444, %v572
        %v574 = vpop.f32.mrf.mxu0
        %575 = vmatprep.mubr.f32.mxu0 0.0
        %576 = vmatmul.mubr.f32.gmra.mxu0 %v478
        %v577 = vpop.f32.mrf.mxu0
        %v578 = vadd.f32 %v449, %v577
        %v579 = vpop.f32.mrf.mxu0
        %580 = vmatprep.mubr.f32.mxu0 0.0
        %581 = vmatmul.mubr.f32.gmra.mxu0 %v481
        %v582 = vpop.f32.mrf.mxu0
        %v583 = vadd.f32 %v454, %v582
        %v584 = vpop.f32.mrf.mxu0
        %585 = vmatprep.mubr.f32.mxu0 0.0
        %586 = vmatmul.mubr.f32.gmra.mxu0 %v484
        %v587 = vpop.f32.mrf.mxu0
        %v588 = vadd.f32 %v459, %v587
        %v589 = vpop.f32.mrf.mxu0
        %590 = vdwg.mxu0
        %s591 = scalar_lea.vmem %s1, 64
        %v592 = vld [vmem:[%s591] sm:$0xff]
        %v593 = vld [vmem:[%s591 + $0x8] sm:$0xff]
        %v594 = vld [vmem:[%s591 + $0x10] sm:$0xff]
        %v595 = vld [vmem:[%s591 + $0x18] sm:$0xff]
        %v597 = vsel %vm332, %v313, 0
        %v600 = vsel %vm332, %v314, 0
        %v603 = vsel %vm332, %v315, 0
        %v606 = vsel %vm332, %v316, 0
        %v609 = vsel %vm332, %v317, 0
        %v612 = vsel %vm332, %v318, 0
        %v615 = vsel %vm332, %v319, 0
        %v618 = vsel %vm332, %v320, 0
        %620 = vmatprep.subr.mxu0 0.0
        %621 = vmatpush1.msra.mxu0 0.0
        %622 = vmatprep.subr.mxu0 0.0
        %623 = vmatpush1.msra.mxu0 0.0
        %624 = vmatprep.subr.mxu0 0.0
        %625 = vmatpush1.msra.mxu0 0.0
        %626 = vmatprep.subr.mxu0 0.0
        %627 = vmatpush1.msra.mxu0 0.0
        %628 = vmatprep.subr.mxu0 0.0
        %629 = vmatpush1.msra.mxu0 0.0
        %630 = vmatprep.subr.mxu0 0.0
        %631 = vmatpush1.msra.mxu0 0.0
        %632 = vmatprep.subr.mxu0 0.0
        %633 = vmatpush1.msra.mxu0 0.0
        %634 = vmatprep.subr.mxu0 0.0
        %635 = vmatpush1.msra.mxu0 0.0
        %636 = vmatprep.subr.mxu0 0.0
        %637 = vmatpush1.msra.mxu0 0.0
        %638 = vmatprep.subr.mxu0 0.0
        %639 = vmatpush1.msra.mxu0 0.0
        %640 = vmatprep.subr.mxu0 0.0
        %641 = vmatpush1.msra.mxu0 0.0
        %642 = vmatprep.subr.mxu0 0.0
        %643 = vmatpush1.msra.mxu0 0.0
        %644 = vmatprep.subr.mxu0 0.0
        %645 = vmatpush1.msra.mxu0 %v595
        %646 = vmatprep.subr.mxu0 0.0
        %647 = vmatpush1.msra.mxu0 %v594
        %648 = vmatprep.subr.mxu0 0.0
        %649 = vmatpush1.msra.mxu0 %v593
        %650 = vmatprep.subr.mxu0 0.0
        %651 = vmatpush1.msra.mxu0 %v592
        %652 = vmatprep.subr.mxu0 0.0
        %653 = vmatpush2.msra.mxu0 0.0
        %654 = vmatprep.subr.mxu0 0.0
        %655 = vmatpush2.msra.mxu0 0.0
        %656 = vmatprep.subr.mxu0 0.0
        %657 = vmatpush2.msra.mxu0 0.0
        %658 = vmatprep.subr.mxu0 0.0
        %659 = vmatpush2.msra.mxu0 0.0
        %660 = vmatprep.subr.mxu0 0.0
        %661 = vmatpush2.msra.mxu0 0.0
        %662 = vmatprep.subr.mxu0 0.0
        %663 = vmatpush2.msra.mxu0 0.0
        %664 = vmatprep.subr.mxu0 0.0
        %665 = vmatpush2.msra.mxu0 0.0
        %666 = vmatprep.subr.mxu0 0.0
        %667 = vmatpush2.msra.mxu0 0.0
        %668 = vmatprep.subr.mxu0 0.0
        %669 = vmatpush2.msra.mxu0 0.0
        %670 = vmatprep.subr.mxu0 0.0
        %671 = vmatpush2.msra.mxu0 0.0
        %672 = vmatprep.subr.mxu0 0.0
        %673 = vmatpush2.msra.mxu0 0.0
        %674 = vmatprep.subr.mxu0 0.0
        %675 = vmatpush2.msra.mxu0 0.0
        %676 = vmatprep.subr.mxu0 0.0
        %677 = vmatpush2.msra.mxu0 0.0
        %678 = vmatprep.subr.mxu0 0.0
        %679 = vmatpush2.msra.mxu0 0.0
        %680 = vmatprep.subr.mxu0 0.0
        %681 = vmatpush2.msra.mxu0 0.0
        %682 = vmatprep.subr.mxu0 0.0
        %683 = vmatpush2.msra.mxu0 0.0
        %684 = vmatprep.mubr.f32.mxu0 0.0
        %685 = vmatmul.mubr.f32.gmra.mxu0 %v597
        %v686 = vpop.f32.mrf.mxu0
        %v687 = vadd.f32 0.0, %v686
        %v688 = vpop.f32.mrf.mxu0
        %689 = vmatprep.mubr.f32.mxu0 0.0
        %690 = vmatmul.mubr.f32.gmra.mxu0 %v600
        %v691 = vpop.f32.mrf.mxu0
        %v692 = vadd.f32 0.0, %v691
        %v693 = vpop.f32.mrf.mxu0
        %694 = vmatprep.mubr.f32.mxu0 0.0
        %695 = vmatmul.mubr.f32.gmra.mxu0 %v603
        %v696 = vpop.f32.mrf.mxu0
        %v697 = vadd.f32 0.0, %v696
        %v698 = vpop.f32.mrf.mxu0
        %699 = vmatprep.mubr.f32.mxu0 0.0
        %700 = vmatmul.mubr.f32.gmra.mxu0 %v606
        %v701 = vpop.f32.mrf.mxu0
        %v702 = vadd.f32 0.0, %v701
        %v703 = vpop.f32.mrf.mxu0
        %704 = vmatprep.mubr.f32.mxu0 0.0
        %705 = vmatmul.mubr.f32.gmra.mxu0 %v609
        %v706 = vpop.f32.mrf.mxu0
        %v707 = vadd.f32 0.0, %v706
        %v708 = vpop.f32.mrf.mxu0
        %709 = vmatprep.mubr.f32.mxu0 0.0
        %710 = vmatmul.mubr.f32.gmra.mxu0 %v612
        %v711 = vpop.f32.mrf.mxu0
        %v712 = vadd.f32 0.0, %v711
        %v713 = vpop.f32.mrf.mxu0
        %714 = vmatprep.mubr.f32.mxu0 0.0
        %715 = vmatmul.mubr.f32.gmra.mxu0 %v615
        %v716 = vpop.f32.mrf.mxu0
        %v717 = vadd.f32 0.0, %v716
        %v718 = vpop.f32.mrf.mxu0
        %719 = vmatprep.mubr.f32.mxu0 0.0
        %720 = vmatmul.mubr.f32.gmra.mxu0 %v618
        %v721 = vpop.f32.mrf.mxu0
        %v722 = vadd.f32 0.0, %v721
        %v723 = vpop.f32.mrf.mxu0
        %724 = vdwg.mxu0
        %v725 = vadd.f32 %v553, %v687
        %v726 = vadd.f32 %v558, %v692
        %v727 = vadd.f32 %v563, %v697
        %v728 = vadd.f32 %v568, %v702
        %v729 = vadd.f32 %v573, %v707
        %v730 = vadd.f32 %v578, %v712
        %v731 = vadd.f32 %v583, %v717
        %v732 = vadd.f32 %v588, %v722
        %s733 = scalar_lea.vmem %s1, 96
        %v734 = vld [vmem:[%s733] sm:$0xff]
        %v735 = vld [vmem:[%s733 + $0x8] sm:$0xff]
        %v736 = vld [vmem:[%s733 + $0x10] sm:$0xff]
        %v737 = vld [vmem:[%s733 + $0x18] sm:$0xff]
        %v739 = vsel %vm332, %v301, 0
        %741 = vmatprep.subr.mxu0 0.0
        %742 = vmatpush1.msra.mxu0 0.0
        %743 = vmatprep.subr.mxu0 0.0
        %744 = vmatpush1.msra.mxu0 0.0
        %745 = vmatprep.subr.mxu0 0.0
        %746 = vmatpush1.msra.mxu0 0.0
        %747 = vmatprep.subr.mxu0 0.0
        %748 = vmatpush1.msra.mxu0 0.0
        %749 = vmatprep.subr.mxu0 0.0
        %750 = vmatpush1.msra.mxu0 0.0
        %751 = vmatprep.subr.mxu0 0.0
        %752 = vmatpush1.msra.mxu0 0.0
        %753 = vmatprep.subr.mxu0 0.0
        %754 = vmatpush1.msra.mxu0 0.0
        %755 = vmatprep.subr.mxu0 0.0
        %756 = vmatpush1.msra.mxu0 0.0
        %757 = vmatprep.subr.mxu0 0.0
        %758 = vmatpush1.msra.mxu0 0.0
        %759 = vmatprep.subr.mxu0 0.0
        %760 = vmatpush1.msra.mxu0 0.0
        %761 = vmatprep.subr.mxu0 0.0
        %762 = vmatpush1.msra.mxu0 0.0
        %763 = vmatprep.subr.mxu0 0.0
        %764 = vmatpush1.msra.mxu0 0.0
        %765 = vmatprep.subr.mxu0 0.0
        %766 = vmatpush1.msra.mxu0 %v737
        %767 = vmatprep.subr.mxu0 0.0
        %768 = vmatpush1.msra.mxu0 %v736
        %769 = vmatprep.subr.mxu0 0.0
        %770 = vmatpush1.msra.mxu0 %v735
        %771 = vmatprep.subr.mxu0 0.0
        %772 = vmatpush1.msra.mxu0 %v734
        %773 = vmatprep.subr.mxu0 0.0
        %774 = vmatpush2.msra.mxu0 0.0
        %775 = vmatprep.subr.mxu0 0.0
        %776 = vmatpush2.msra.mxu0 0.0
        %777 = vmatprep.subr.mxu0 0.0
        %778 = vmatpush2.msra.mxu0 0.0
        %779 = vmatprep.subr.mxu0 0.0
        %780 = vmatpush2.msra.mxu0 0.0
        %781 = vmatprep.subr.mxu0 0.0
        %782 = vmatpush2.msra.mxu0 0.0
        %783 = vmatprep.subr.mxu0 0.0
        %784 = vmatpush2.msra.mxu0 0.0
        %785 = vmatprep.subr.mxu0 0.0
        %786 = vmatpush2.msra.mxu0 0.0
        %787 = vmatprep.subr.mxu0 0.0
        %788 = vmatpush2.msra.mxu0 0.0
        %789 = vmatprep.subr.mxu0 0.0
        %790 = vmatpush2.msra.mxu0 0.0
        %791 = vmatprep.subr.mxu0 0.0
        %792 = vmatpush2.msra.mxu0 0.0
        %793 = vmatprep.subr.mxu0 0.0
        %794 = vmatpush2.msra.mxu0 0.0
        %795 = vmatprep.subr.mxu0 0.0
        %796 = vmatpush2.msra.mxu0 0.0
        %797 = vmatprep.subr.mxu0 0.0
        %798 = vmatpush2.msra.mxu0 0.0
        %799 = vmatprep.subr.mxu0 0.0
        %800 = vmatpush2.msra.mxu0 0.0
        %801 = vmatprep.subr.mxu0 0.0
        %802 = vmatpush2.msra.mxu0 0.0
        %803 = vmatprep.subr.mxu0 0.0
        %804 = vmatpush2.msra.mxu0 0.0
        %805 = vmatprep.mubr.f32.mxu0 0.0
        %806 = vmatmul.mubr.f32.gmra.mxu0 %v466
        %v807 = vpop.f32.mrf.mxu0
        %v808 = vadd.f32 0.0, %v807
        %v809 = vpop.f32.mrf.mxu0
        %810 = vmatprep.mubr.f32.mxu0 0.0
        %811 = vmatmul.mubr.f32.gmra.mxu0 %v469
        %v812 = vpop.f32.mrf.mxu0
        %v813 = vadd.f32 0.0, %v812
        %v814 = vpop.f32.mrf.mxu0
        %815 = vmatprep.mubr.f32.mxu0 0.0
        %816 = vmatmul.mubr.f32.gmra.mxu0 %v472
        %v817 = vpop.f32.mrf.mxu0
        %v818 = vadd.f32 0.0, %v817
        %v819 = vpop.f32.mrf.mxu0
        %820 = vmatprep.mubr.f32.mxu0 0.0
        %821 = vmatmul.mubr.f32.gmra.mxu0 %v475
        %v822 = vpop.f32.mrf.mxu0
        %v823 = vadd.f32 0.0, %v822
        %v824 = vpop.f32.mrf.mxu0
        %825 = vmatprep.mubr.f32.mxu0 0.0
        %826 = vmatmul.mubr.f32.gmra.mxu0 %v478
        %v827 = vpop.f32.mrf.mxu0
        %v828 = vadd.f32 0.0, %v827
        %v829 = vpop.f32.mrf.mxu0
        %830 = vmatprep.mubr.f32.mxu0 0.0
        %831 = vmatmul.mubr.f32.gmra.mxu0 %v481
        %v832 = vpop.f32.mrf.mxu0
        %v833 = vadd.f32 0.0, %v832
        %v834 = vpop.f32.mrf.mxu0
        %835 = vmatprep.mubr.f32.mxu0 0.0
        %836 = vmatmul.mubr.f32.gmra.mxu0 %v484
        %v837 = vpop.f32.mrf.mxu0
        %v838 = vadd.f32 0.0, %v837
        %v839 = vpop.f32.mrf.mxu0
        %840 = vmatprep.mubr.f32.mxu0 0.0
        %841 = vmatmul.mubr.f32.gmra.mxu0 %v739
        %v842 = vpop.f32.mrf.mxu0
        %v843 = vadd.f32 0.0, %v842
        %v844 = vpop.f32.mrf.mxu0
        %845 = vdwg.mxu0
        %v846 = vadd.f32 %v725, %v808
        %v847 = vadd.f32 %v726, %v813
        %v848 = vadd.f32 %v727, %v818
        %v849 = vadd.f32 %v728, %v823
        %v850 = vadd.f32 %v729, %v828
        %v851 = vadd.f32 %v730, %v833
        %v852 = vadd.f32 %v731, %v838
        %v853 = vadd.f32 %v732, %v843
        %s854 = scalar_lea.vmem %s1, 128
        %v855 = vld [vmem:[%s854] sm:$0xff]
        %v856 = vld [vmem:[%s854 + $0x8] sm:$0xff]
        %v857 = vld [vmem:[%s854 + $0x10] sm:$0xff]
        %v858 = vld [vmem:[%s854 + $0x18] sm:$0xff]
        %v860 = vsel %vm332, %v311, 0
        %862 = vmatprep.subr.mxu0 0.0
        %863 = vmatpush1.msra.mxu0 0.0
        %864 = vmatprep.subr.mxu0 0.0
        %865 = vmatpush1.msra.mxu0 0.0
        %866 = vmatprep.subr.mxu0 0.0
        %867 = vmatpush1.msra.mxu0 0.0
        %868 = vmatprep.subr.mxu0 0.0
        %869 = vmatpush1.msra.mxu0 0.0
        %870 = vmatprep.subr.mxu0 0.0
        %871 = vmatpush1.msra.mxu0 0.0
        %872 = vmatprep.subr.mxu0 0.0
        %873 = vmatpush1.msra.mxu0 0.0
        %874 = vmatprep.subr.mxu0 0.0
        %875 = vmatpush1.msra.mxu0 0.0
        %876 = vmatprep.subr.mxu0 0.0
        %877 = vmatpush1.msra.mxu0 0.0
        %878 = vmatprep.subr.mxu0 0.0
        %879 = vmatpush1.msra.mxu0 0.0
        %880 = vmatprep.subr.mxu0 0.0
        %881 = vmatpush1.msra.mxu0 0.0
        %882 = vmatprep.subr.mxu0 0.0
        %883 = vmatpush1.msra.mxu0 0.0
        %884 = vmatprep.subr.mxu0 0.0
        %885 = vmatpush1.msra.mxu0 0.0
        %886 = vmatprep.subr.mxu0 0.0
        %887 = vmatpush1.msra.mxu0 %v858
        %888 = vmatprep.subr.mxu0 0.0
        %889 = vmatpush1.msra.mxu0 %v857
        %890 = vmatprep.subr.mxu0 0.0
        %891 = vmatpush1.msra.mxu0 %v856
        %892 = vmatprep.subr.mxu0 0.0
        %893 = vmatpush1.msra.mxu0 %v855
        %894 = vmatprep.subr.mxu0 0.0
        %895 = vmatpush2.msra.mxu0 0.0
        %896 = vmatprep.subr.mxu0 0.0
        %897 = vmatpush2.msra.mxu0 0.0
        %898 = vmatprep.subr.mxu0 0.0
        %899 = vmatpush2.msra.mxu0 0.0
        %900 = vmatprep.subr.mxu0 0.0
        %901 = vmatpush2.msra.mxu0 0.0
        %902 = vmatprep.subr.mxu0 0.0
        %903 = vmatpush2.msra.mxu0 0.0
        %904 = vmatprep.subr.mxu0 0.0
        %905 = vmatpush2.msra.mxu0 0.0
        %906 = vmatprep.subr.mxu0 0.0
        %907 = vmatpush2.msra.mxu0 0.0
        %908 = vmatprep.subr.mxu0 0.0
        %909 = vmatpush2.msra.mxu0 0.0
        %910 = vmatprep.subr.mxu0 0.0
        %911 = vmatpush2.msra.mxu0 0.0
        %912 = vmatprep.subr.mxu0 0.0
        %913 = vmatpush2.msra.mxu0 0.0
        %914 = vmatprep.subr.mxu0 0.0
        %915 = vmatpush2.msra.mxu0 0.0
        %916 = vmatprep.subr.mxu0 0.0
        %917 = vmatpush2.msra.mxu0 0.0
        %918 = vmatprep.subr.mxu0 0.0
        %919 = vmatpush2.msra.mxu0 0.0
        %920 = vmatprep.subr.mxu0 0.0
        %921 = vmatpush2.msra.mxu0 0.0
        %922 = vmatprep.subr.mxu0 0.0
        %923 = vmatpush2.msra.mxu0 0.0
        %924 = vmatprep.subr.mxu0 0.0
        %925 = vmatpush2.msra.mxu0 0.0
        %926 = vmatprep.mubr.f32.mxu0 0.0
        %927 = vmatmul.mubr.f32.gmra.mxu0 %v337
        %v928 = vpop.f32.mrf.mxu0
        %v929 = vadd.f32 0.0, %v928
        %v930 = vpop.f32.mrf.mxu0
        %931 = vmatprep.mubr.f32.mxu0 0.0
        %932 = vmatmul.mubr.f32.gmra.mxu0 %v340
        %v933 = vpop.f32.mrf.mxu0
        %v934 = vadd.f32 0.0, %v933
        %v935 = vpop.f32.mrf.mxu0
        %936 = vmatprep.mubr.f32.mxu0 0.0
        %937 = vmatmul.mubr.f32.gmra.mxu0 %v343
        %v938 = vpop.f32.mrf.mxu0
        %v939 = vadd.f32 0.0, %v938
        %v940 = vpop.f32.mrf.mxu0
        %941 = vmatprep.mubr.f32.mxu0 0.0
        %942 = vmatmul.mubr.f32.gmra.mxu0 %v346
        %v943 = vpop.f32.mrf.mxu0
        %v944 = vadd.f32 0.0, %v943
        %v945 = vpop.f32.mrf.mxu0
        %946 = vmatprep.mubr.f32.mxu0 0.0
        %947 = vmatmul.mubr.f32.gmra.mxu0 %v349
        %v948 = vpop.f32.mrf.mxu0
        %v949 = vadd.f32 0.0, %v948
        %v950 = vpop.f32.mrf.mxu0
        %951 = vmatprep.mubr.f32.mxu0 0.0
        %952 = vmatmul.mubr.f32.gmra.mxu0 %v352
        %v953 = vpop.f32.mrf.mxu0
        %v954 = vadd.f32 0.0, %v953
        %v955 = vpop.f32.mrf.mxu0
        %956 = vmatprep.mubr.f32.mxu0 0.0
        %957 = vmatmul.mubr.f32.gmra.mxu0 %v355
        %v958 = vpop.f32.mrf.mxu0
        %v959 = vadd.f32 0.0, %v958
        %v960 = vpop.f32.mrf.mxu0
        %961 = vmatprep.mubr.f32.mxu0 0.0
        %962 = vmatmul.mubr.f32.gmra.mxu0 %v860
        %v963 = vpop.f32.mrf.mxu0
        %v964 = vadd.f32 0.0, %v963
        %v965 = vpop.f32.mrf.mxu0
        %966 = vdwg.mxu0
        %v967 = vadd.f32 %v846, %v929
        %v968 = vadd.f32 %v847, %v934
        %v969 = vadd.f32 %v848, %v939
        %v970 = vadd.f32 %v849, %v944
        %v971 = vadd.f32 %v850, %v949
        %v972 = vadd.f32 %v851, %v954
        %v973 = vadd.f32 %v852, %v959
        %v974 = vadd.f32 %v853, %v964
        %s975 = scalar_lea.vmem %s1, 160
        %v976 = vld [vmem:[%s975] sm:$0xff]
        %v977 = vld [vmem:[%s975 + $0x8] sm:$0xff]
        %v978 = vld [vmem:[%s975 + $0x10] sm:$0xff]
        %v979 = vld [vmem:[%s975 + $0x18] sm:$0xff]
        %v981 = vsel %vm332, %v321, 0
        %983 = vmatprep.subr.mxu0 0.0
        %984 = vmatpush1.msra.mxu0 0.0
        %985 = vmatprep.subr.mxu0 0.0
        %986 = vmatpush1.msra.mxu0 0.0
        %987 = vmatprep.subr.mxu0 0.0
        %988 = vmatpush1.msra.mxu0 0.0
        %989 = vmatprep.subr.mxu0 0.0
        %990 = vmatpush1.msra.mxu0 0.0
        %991 = vmatprep.subr.mxu0 0.0
        %992 = vmatpush1.msra.mxu0 0.0
        %993 = vmatprep.subr.mxu0 0.0
        %994 = vmatpush1.msra.mxu0 0.0
        %995 = vmatprep.subr.mxu0 0.0
        %996 = vmatpush1.msra.mxu0 0.0
        %997 = vmatprep.subr.mxu0 0.0
        %998 = vmatpush1.msra.mxu0 0.0
        %999 = vmatprep.subr.mxu0 0.0
        %1000 = vmatpush1.msra.mxu0 0.0
        %1001 = vmatprep.subr.mxu0 0.0
        %1002 = vmatpush1.msra.mxu0 0.0
        %1003 = vmatprep.subr.mxu0 0.0
        %1004 = vmatpush1.msra.mxu0 0.0
        %1005 = vmatprep.subr.mxu0 0.0
        %1006 = vmatpush1.msra.mxu0 0.0
        %1007 = vmatprep.subr.mxu0 0.0
        %1008 = vmatpush1.msra.mxu0 %v979
        %1009 = vmatprep.subr.mxu0 0.0
        %1010 = vmatpush1.msra.mxu0 %v978
        %1011 = vmatprep.subr.mxu0 0.0
        %1012 = vmatpush1.msra.mxu0 %v977
        %1013 = vmatprep.subr.mxu0 0.0
        %1014 = vmatpush1.msra.mxu0 %v976
        %1015 = vmatprep.subr.mxu0 0.0
        %1016 = vmatpush2.msra.mxu0 0.0
        %1017 = vmatprep.subr.mxu0 0.0
        %1018 = vmatpush2.msra.mxu0 0.0
        %1019 = vmatprep.subr.mxu0 0.0
        %1020 = vmatpush2.msra.mxu0 0.0
        %1021 = vmatprep.subr.mxu0 0.0
        %1022 = vmatpush2.msra.mxu0 0.0
        %1023 = vmatprep.subr.mxu0 0.0
        %1024 = vmatpush2.msra.mxu0 0.0
        %1025 = vmatprep.subr.mxu0 0.0
        %1026 = vmatpush2.msra.mxu0 0.0
        %1027 = vmatprep.subr.mxu0 0.0
        %1028 = vmatpush2.msra.mxu0 0.0
        %1029 = vmatprep.subr.mxu0 0.0
        %1030 = vmatpush2.msra.mxu0 0.0
        %1031 = vmatprep.subr.mxu0 0.0
        %1032 = vmatpush2.msra.mxu0 0.0
        %1033 = vmatprep.subr.mxu0 0.0
        %1034 = vmatpush2.msra.mxu0 0.0
        %1035 = vmatprep.subr.mxu0 0.0
        %1036 = vmatpush2.msra.mxu0 0.0
        %1037 = vmatprep.subr.mxu0 0.0
        %1038 = vmatpush2.msra.mxu0 0.0
        %1039 = vmatprep.subr.mxu0 0.0
        %1040 = vmatpush2.msra.mxu0 0.0
        %1041 = vmatprep.subr.mxu0 0.0
        %1042 = vmatpush2.msra.mxu0 0.0
        %1043 = vmatprep.subr.mxu0 0.0
        %1044 = vmatpush2.msra.mxu0 0.0
        %1045 = vmatprep.subr.mxu0 0.0
        %1046 = vmatpush2.msra.mxu0 0.0
        %1047 = vmatprep.mubr.f32.mxu0 0.0
        %1048 = vmatmul.mubr.f32.gmra.mxu0 %v600
        %v1049 = vpop.f32.mrf.mxu0
        %v1050 = vadd.f32 0.0, %v1049
        %v1051 = vpop.f32.mrf.mxu0
        %1052 = vmatprep.mubr.f32.mxu0 0.0
        %1053 = vmatmul.mubr.f32.gmra.mxu0 %v603
        %v1054 = vpop.f32.mrf.mxu0
        %v1055 = vadd.f32 0.0, %v1054
        %v1056 = vpop.f32.mrf.mxu0
        %1057 = vmatprep.mubr.f32.mxu0 0.0
        %1058 = vmatmul.mubr.f32.gmra.mxu0 %v606
        %v1059 = vpop.f32.mrf.mxu0
        %v1060 = vadd.f32 0.0, %v1059
        %v1061 = vpop.f32.mrf.mxu0
        %1062 = vmatprep.mubr.f32.mxu0 0.0
        %1063 = vmatmul.mubr.f32.gmra.mxu0 %v609
        %v1064 = vpop.f32.mrf.mxu0
        %v1065 = vadd.f32 0.0, %v1064
        %v1066 = vpop.f32.mrf.mxu0
        %1067 = vmatprep.mubr.f32.mxu0 0.0
        %1068 = vmatmul.mubr.f32.gmra.mxu0 %v612
        %v1069 = vpop.f32.mrf.mxu0
        %v1070 = vadd.f32 0.0, %v1069
        %v1071 = vpop.f32.mrf.mxu0
        %1072 = vmatprep.mubr.f32.mxu0 0.0
        %1073 = vmatmul.mubr.f32.gmra.mxu0 %v615
        %v1074 = vpop.f32.mrf.mxu0
        %v1075 = vadd.f32 0.0, %v1074
        %v1076 = vpop.f32.mrf.mxu0
        %1077 = vmatprep.mubr.f32.mxu0 0.0
        %1078 = vmatmul.mubr.f32.gmra.mxu0 %v618
        %v1079 = vpop.f32.mrf.mxu0
        %v1080 = vadd.f32 0.0, %v1079
        %v1081 = vpop.f32.mrf.mxu0
        %1082 = vmatprep.mubr.f32.mxu0 0.0
        %1083 = vmatmul.mubr.f32.gmra.mxu0 %v981
        %v1084 = vpop.f32.mrf.mxu0
        %v1085 = vadd.f32 0.0, %v1084
        %v1086 = vpop.f32.mrf.mxu0
        %1087 = vdwg.mxu0
        %v1088 = vadd.f32 %v967, %v1050
        %v1089 = vadd.f32 %v968, %v1055
        %v1090 = vadd.f32 %v969, %v1060
        %v1091 = vadd.f32 %v970, %v1065
        %v1092 = vadd.f32 %v971, %v1070
        %v1093 = vadd.f32 %v972, %v1075
        %v1094 = vadd.f32 %v973, %v1080
        %v1095 = vadd.f32 %v974, %v1085
        %s1096 = scalar_lea.vmem %s1, 192
        %v1097 = vld [vmem:[%s1096] sm:$0xff]
        %v1098 = vld [vmem:[%s1096 + $0x8] sm:$0xff]
        %v1099 = vld [vmem:[%s1096 + $0x10] sm:$0xff]
        %v1100 = vld [vmem:[%s1096 + $0x18] sm:$0xff]
        %v1102 = vsel %vm332, %v302, 0
        %1104 = vmatprep.subr.mxu0 0.0
        %1105 = vmatpush1.msra.mxu0 0.0
        %1106 = vmatprep.subr.mxu0 0.0
        %1107 = vmatpush1.msra.mxu0 0.0
        %1108 = vmatprep.subr.mxu0 0.0
        %1109 = vmatpush1.msra.mxu0 0.0
        %1110 = vmatprep.subr.mxu0 0.0
        %1111 = vmatpush1.msra.mxu0 0.0
        %1112 = vmatprep.subr.mxu0 0.0
        %1113 = vmatpush1.msra.mxu0 0.0
        %1114 = vmatprep.subr.mxu0 0.0
        %1115 = vmatpush1.msra.mxu0 0.0
        %1116 = vmatprep.subr.mxu0 0.0
        %1117 = vmatpush1.msra.mxu0 0.0
        %1118 = vmatprep.subr.mxu0 0.0
        %1119 = vmatpush1.msra.mxu0 0.0
        %1120 = vmatprep.subr.mxu0 0.0
        %1121 = vmatpush1.msra.mxu0 0.0
        %1122 = vmatprep.subr.mxu0 0.0
        %1123 = vmatpush1.msra.mxu0 0.0
        %1124 = vmatprep.subr.mxu0 0.0
        %1125 = vmatpush1.msra.mxu0 0.0
        %1126 = vmatprep.subr.mxu0 0.0
        %1127 = vmatpush1.msra.mxu0 0.0
        %1128 = vmatprep.subr.mxu0 0.0
        %1129 = vmatpush1.msra.mxu0 %v1100
        %1130 = vmatprep.subr.mxu0 0.0
        %1131 = vmatpush1.msra.mxu0 %v1099
        %1132 = vmatprep.subr.mxu0 0.0
        %1133 = vmatpush1.msra.mxu0 %v1098
        %1134 = vmatprep.subr.mxu0 0.0
        %1135 = vmatpush1.msra.mxu0 %v1097
        %1136 = vmatprep.subr.mxu0 0.0
        %1137 = vmatpush2.msra.mxu0 0.0
        %1138 = vmatprep.subr.mxu0 0.0
        %1139 = vmatpush2.msra.mxu0 0.0
        %1140 = vmatprep.subr.mxu0 0.0
        %1141 = vmatpush2.msra.mxu0 0.0
        %1142 = vmatprep.subr.mxu0 0.0
        %1143 = vmatpush2.msra.mxu0 0.0
        %1144 = vmatprep.subr.mxu0 0.0
        %1145 = vmatpush2.msra.mxu0 0.0
        %1146 = vmatprep.subr.mxu0 0.0
        %1147 = vmatpush2.msra.mxu0 0.0
        %1148 = vmatprep.subr.mxu0 0.0
        %1149 = vmatpush2.msra.mxu0 0.0
        %1150 = vmatprep.subr.mxu0 0.0
        %1151 = vmatpush2.msra.mxu0 0.0
        %1152 = vmatprep.subr.mxu0 0.0
        %1153 = vmatpush2.msra.mxu0 0.0
        %1154 = vmatprep.subr.mxu0 0.0
        %1155 = vmatpush2.msra.mxu0 0.0
        %1156 = vmatprep.subr.mxu0 0.0
        %1157 = vmatpush2.msra.mxu0 0.0
        %1158 = vmatprep.subr.mxu0 0.0
        %1159 = vmatpush2.msra.mxu0 0.0
        %1160 = vmatprep.subr.mxu0 0.0
        %1161 = vmatpush2.msra.mxu0 0.0
        %1162 = vmatprep.subr.mxu0 0.0
        %1163 = vmatpush2.msra.mxu0 0.0
        %1164 = vmatprep.subr.mxu0 0.0
        %1165 = vmatpush2.msra.mxu0 0.0
        %1166 = vmatprep.subr.mxu0 0.0
        %1167 = vmatpush2.msra.mxu0 0.0
        %1168 = vmatprep.mubr.f32.mxu0 0.0
        %1169 = vmatmul.mubr.f32.gmra.mxu0 %v469
        %v1170 = vpop.f32.mrf.mxu0
        %v1171 = vadd.f32 0.0, %v1170
        %v1172 = vpop.f32.mrf.mxu0
        %1173 = vmatprep.mubr.f32.mxu0 0.0
        %1174 = vmatmul.mubr.f32.gmra.mxu0 %v472
        %v1175 = vpop.f32.mrf.mxu0
        %v1176 = vadd.f32 0.0, %v1175
        %v1177 = vpop.f32.mrf.mxu0
        %1178 = vmatprep.mubr.f32.mxu0 0.0
        %1179 = vmatmul.mubr.f32.gmra.mxu0 %v475
        %v1180 = vpop.f32.mrf.mxu0
        %v1181 = vadd.f32 0.0, %v1180
        %v1182 = vpop.f32.mrf.mxu0
        %1183 = vmatprep.mubr.f32.mxu0 0.0
        %1184 = vmatmul.mubr.f32.gmra.mxu0 %v478
        %v1185 = vpop.f32.mrf.mxu0
        %v1186 = vadd.f32 0.0, %v1185
        %v1187 = vpop.f32.mrf.mxu0
        %1188 = vmatprep.mubr.f32.mxu0 0.0
        %1189 = vmatmul.mubr.f32.gmra.mxu0 %v481
        %v1190 = vpop.f32.mrf.mxu0
        %v1191 = vadd.f32 0.0, %v1190
        %v1192 = vpop.f32.mrf.mxu0
        %1193 = vmatprep.mubr.f32.mxu0 0.0
        %1194 = vmatmul.mubr.f32.gmra.mxu0 %v484
        %v1195 = vpop.f32.mrf.mxu0
        %v1196 = vadd.f32 0.0, %v1195
        %v1197 = vpop.f32.mrf.mxu0
        %1198 = vmatprep.mubr.f32.mxu0 0.0
        %1199 = vmatmul.mubr.f32.gmra.mxu0 %v739
        %v1200 = vpop.f32.mrf.mxu0
        %v1201 = vadd.f32 0.0, %v1200
        %v1202 = vpop.f32.mrf.mxu0
        %1203 = vmatprep.mubr.f32.mxu0 0.0
        %1204 = vmatmul.mubr.f32.gmra.mxu0 %v1102
        %v1205 = vpop.f32.mrf.mxu0
        %v1206 = vadd.f32 0.0, %v1205
        %v1207 = vpop.f32.mrf.mxu0
        %1208 = vdwg.mxu0
        %v1209 = vadd.f32 %v1088, %v1171
        %v1210 = vadd.f32 %v1089, %v1176
        %v1211 = vadd.f32 %v1090, %v1181
        %v1212 = vadd.f32 %v1091, %v1186
        %v1213 = vadd.f32 %v1092, %v1191
        %v1214 = vadd.f32 %v1093, %v1196
        %v1215 = vadd.f32 %v1094, %v1201
        %v1216 = vadd.f32 %v1095, %v1206
        %s1217 = scalar_lea.vmem %s1, 224
        %v1218 = vld [vmem:[%s1217] sm:$0xff]
        %v1219 = vld [vmem:[%s1217 + $0x8] sm:$0xff]
        %v1220 = vld [vmem:[%s1217 + $0x10] sm:$0xff]
        %v1221 = vld [vmem:[%s1217 + $0x18] sm:$0xff]
        %v1223 = vsel %vm332, %v312, 0
        %1225 = vmatprep.subr.mxu0 0.0
        %1226 = vmatpush1.msra.mxu0 0.0
        %1227 = vmatprep.subr.mxu0 0.0
        %1228 = vmatpush1.msra.mxu0 0.0
        %1229 = vmatprep.subr.mxu0 0.0
        %1230 = vmatpush1.msra.mxu0 0.0
        %1231 = vmatprep.subr.mxu0 0.0
        %1232 = vmatpush1.msra.mxu0 0.0
        %1233 = vmatprep.subr.mxu0 0.0
        %1234 = vmatpush1.msra.mxu0 0.0
        %1235 = vmatprep.subr.mxu0 0.0
        %1236 = vmatpush1.msra.mxu0 0.0
        %1237 = vmatprep.subr.mxu0 0.0
        %1238 = vmatpush1.msra.mxu0 0.0
        %1239 = vmatprep.subr.mxu0 0.0
        %1240 = vmatpush1.msra.mxu0 0.0
        %1241 = vmatprep.subr.mxu0 0.0
        %1242 = vmatpush1.msra.mxu0 0.0
        %1243 = vmatprep.subr.mxu0 0.0
        %1244 = vmatpush1.msra.mxu0 0.0
        %1245 = vmatprep.subr.mxu0 0.0
        %1246 = vmatpush1.msra.mxu0 0.0
        %1247 = vmatprep.subr.mxu0 0.0
        %1248 = vmatpush1.msra.mxu0 0.0
        %1249 = vmatprep.subr.mxu0 0.0
        %1250 = vmatpush1.msra.mxu0 %v1221
        %1251 = vmatprep.subr.mxu0 0.0
        %1252 = vmatpush1.msra.mxu0 %v1220
        %1253 = vmatprep.subr.mxu0 0.0
        %1254 = vmatpush1.msra.mxu0 %v1219
        %1255 = vmatprep.subr.mxu0 0.0
        %1256 = vmatpush1.msra.mxu0 %v1218
        %1257 = vmatprep.subr.mxu0 0.0
        %1258 = vmatpush2.msra.mxu0 0.0
        %1259 = vmatprep.subr.mxu0 0.0
        %1260 = vmatpush2.msra.mxu0 0.0
        %1261 = vmatprep.subr.mxu0 0.0
        %1262 = vmatpush2.msra.mxu0 0.0
        %1263 = vmatprep.subr.mxu0 0.0
        %1264 = vmatpush2.msra.mxu0 0.0
        %1265 = vmatprep.subr.mxu0 0.0
        %1266 = vmatpush2.msra.mxu0 0.0
        %1267 = vmatprep.subr.mxu0 0.0
        %1268 = vmatpush2.msra.mxu0 0.0
        %1269 = vmatprep.subr.mxu0 0.0
        %1270 = vmatpush2.msra.mxu0 0.0
        %1271 = vmatprep.subr.mxu0 0.0
        %1272 = vmatpush2.msra.mxu0 0.0
        %1273 = vmatprep.subr.mxu0 0.0
        %1274 = vmatpush2.msra.mxu0 0.0
        %1275 = vmatprep.subr.mxu0 0.0
        %1276 = vmatpush2.msra.mxu0 0.0
        %1277 = vmatprep.subr.mxu0 0.0
        %1278 = vmatpush2.msra.mxu0 0.0
        %1279 = vmatprep.subr.mxu0 0.0
        %1280 = vmatpush2.msra.mxu0 0.0
        %1281 = vmatprep.subr.mxu0 0.0
        %1282 = vmatpush2.msra.mxu0 0.0
        %1283 = vmatprep.subr.mxu0 0.0
        %1284 = vmatpush2.msra.mxu0 0.0
        %1285 = vmatprep.subr.mxu0 0.0
        %1286 = vmatpush2.msra.mxu0 0.0
        %1287 = vmatprep.subr.mxu0 0.0
        %1288 = vmatpush2.msra.mxu0 0.0
        %1289 = vmatprep.mubr.f32.mxu0 0.0
        %1290 = vmatmul.mubr.f32.gmra.mxu0 %v340
        %v1291 = vpop.f32.mrf.mxu0
        %v1292 = vadd.f32 0.0, %v1291
        %v1293 = vpop.f32.mrf.mxu0
        %1294 = vmatprep.mubr.f32.mxu0 0.0
        %1295 = vmatmul.mubr.f32.gmra.mxu0 %v343
        %v1296 = vpop.f32.mrf.mxu0
        %v1297 = vadd.f32 0.0, %v1296
        %v1298 = vpop.f32.mrf.mxu0
        %1299 = vmatprep.mubr.f32.mxu0 0.0
        %1300 = vmatmul.mubr.f32.gmra.mxu0 %v346
        %v1301 = vpop.f32.mrf.mxu0
        %v1302 = vadd.f32 0.0, %v1301
        %v1303 = vpop.f32.mrf.mxu0
        %1304 = vmatprep.mubr.f32.mxu0 0.0
        %1305 = vmatmul.mubr.f32.gmra.mxu0 %v349
        %v1306 = vpop.f32.mrf.mxu0
        %v1307 = vadd.f32 0.0, %v1306
        %v1308 = vpop.f32.mrf.mxu0
        %1309 = vmatprep.mubr.f32.mxu0 0.0
        %1310 = vmatmul.mubr.f32.gmra.mxu0 %v352
        %v1311 = vpop.f32.mrf.mxu0
        %v1312 = vadd.f32 0.0, %v1311
        %v1313 = vpop.f32.mrf.mxu0
        %1314 = vmatprep.mubr.f32.mxu0 0.0
        %1315 = vmatmul.mubr.f32.gmra.mxu0 %v355
        %v1316 = vpop.f32.mrf.mxu0
        %v1317 = vadd.f32 0.0, %v1316
        %v1318 = vpop.f32.mrf.mxu0
        %1319 = vmatprep.mubr.f32.mxu0 0.0
        %1320 = vmatmul.mubr.f32.gmra.mxu0 %v860
        %v1321 = vpop.f32.mrf.mxu0
        %v1322 = vadd.f32 0.0, %v1321
        %v1323 = vpop.f32.mrf.mxu0
        %1324 = vmatprep.mubr.f32.mxu0 0.0
        %1325 = vmatmul.mubr.f32.gmra.mxu0 %v1223
        %v1326 = vpop.f32.mrf.mxu0
        %v1327 = vadd.f32 0.0, %v1326
        %v1328 = vpop.f32.mrf.mxu0
        %1329 = vdwg.mxu0
        %v1330 = vadd.f32 %v1209, %v1292
        %v1331 = vadd.f32 %v1210, %v1297
        %v1332 = vadd.f32 %v1211, %v1302
        %v1333 = vadd.f32 %v1212, %v1307
        %v1334 = vadd.f32 %v1213, %v1312
        %v1335 = vadd.f32 %v1214, %v1317
        %v1336 = vadd.f32 %v1215, %v1322
        %v1337 = vadd.f32 %v1216, %v1327
        %s1338 = scalar_lea.vmem %s1, 256
        %v1339 = vld [vmem:[%s1338] sm:$0xff]
        %v1340 = vld [vmem:[%s1338 + $0x8] sm:$0xff]
        %v1341 = vld [vmem:[%s1338 + $0x10] sm:$0xff]
        %v1342 = vld [vmem:[%s1338 + $0x18] sm:$0xff]
        %v1344 = vsel %vm332, %v322, 0
        %1346 = vmatprep.subr.mxu0 0.0
        %1347 = vmatpush1.msra.mxu0 0.0
        %1348 = vmatprep.subr.mxu0 0.0
        %1349 = vmatpush1.msra.mxu0 0.0
        %1350 = vmatprep.subr.mxu0 0.0
        %1351 = vmatpush1.msra.mxu0 0.0
        %1352 = vmatprep.subr.mxu0 0.0
        %1353 = vmatpush1.msra.mxu0 0.0
        %1354 = vmatprep.subr.mxu0 0.0
        %1355 = vmatpush1.msra.mxu0 0.0
        %1356 = vmatprep.subr.mxu0 0.0
        %1357 = vmatpush1.msra.mxu0 0.0
        %1358 = vmatprep.subr.mxu0 0.0
        %1359 = vmatpush1.msra.mxu0 0.0
        %1360 = vmatprep.subr.mxu0 0.0
        %1361 = vmatpush1.msra.mxu0 0.0
        %1362 = vmatprep.subr.mxu0 0.0
        %1363 = vmatpush1.msra.mxu0 0.0
        %1364 = vmatprep.subr.mxu0 0.0
        %1365 = vmatpush1.msra.mxu0 0.0
        %1366 = vmatprep.subr.mxu0 0.0
        %1367 = vmatpush1.msra.mxu0 0.0
        %1368 = vmatprep.subr.mxu0 0.0
        %1369 = vmatpush1.msra.mxu0 0.0
        %1370 = vmatprep.subr.mxu0 0.0
        %1371 = vmatpush1.msra.mxu0 %v1342
        %1372 = vmatprep.subr.mxu0 0.0
        %1373 = vmatpush1.msra.mxu0 %v1341
        %1374 = vmatprep.subr.mxu0 0.0
        %1375 = vmatpush1.msra.mxu0 %v1340
        %1376 = vmatprep.subr.mxu0 0.0
        %1377 = vmatpush1.msra.mxu0 %v1339
        %1378 = vmatprep.subr.mxu0 0.0
        %1379 = vmatpush2.msra.mxu0 0.0
        %1380 = vmatprep.subr.mxu0 0.0
        %1381 = vmatpush2.msra.mxu0 0.0
        %1382 = vmatprep.subr.mxu0 0.0
        %1383 = vmatpush2.msra.mxu0 0.0
        %1384 = vmatprep.subr.mxu0 0.0
        %1385 = vmatpush2.msra.mxu0 0.0
        %1386 = vmatprep.subr.mxu0 0.0
        %1387 = vmatpush2.msra.mxu0 0.0
        %1388 = vmatprep.subr.mxu0 0.0
        %1389 = vmatpush2.msra.mxu0 0.0
        %1390 = vmatprep.subr.mxu0 0.0
        %1391 = vmatpush2.msra.mxu0 0.0
        %1392 = vmatprep.subr.mxu0 0.0
        %1393 = vmatpush2.msra.mxu0 0.0
        %1394 = vmatprep.subr.mxu0 0.0
        %1395 = vmatpush2.msra.mxu0 0.0
        %1396 = vmatprep.subr.mxu0 0.0
        %1397 = vmatpush2.msra.mxu0 0.0
        %1398 = vmatprep.subr.mxu0 0.0
        %1399 = vmatpush2.msra.mxu0 0.0
        %1400 = vmatprep.subr.mxu0 0.0
        %1401 = vmatpush2.msra.mxu0 0.0
        %1402 = vmatprep.subr.mxu0 0.0
        %1403 = vmatpush2.msra.mxu0 0.0
        %1404 = vmatprep.subr.mxu0 0.0
        %1405 = vmatpush2.msra.mxu0 0.0
        %1406 = vmatprep.subr.mxu0 0.0
        %1407 = vmatpush2.msra.mxu0 0.0
        %1408 = vmatprep.subr.mxu0 0.0
        %1409 = vmatpush2.msra.mxu0 0.0
        %1410 = vmatprep.mubr.f32.mxu0 0.0
        %1411 = vmatmul.mubr.f32.gmra.mxu0 %v603
        %v1412 = vpop.f32.mrf.mxu0
        %v1413 = vadd.f32 0.0, %v1412
        %v1414 = vpop.f32.mrf.mxu0
        %1415 = vmatprep.mubr.f32.mxu0 0.0
        %1416 = vmatmul.mubr.f32.gmra.mxu0 %v606
        %v1417 = vpop.f32.mrf.mxu0
        %v1418 = vadd.f32 0.0, %v1417
        %v1419 = vpop.f32.mrf.mxu0
        %1420 = vmatprep.mubr.f32.mxu0 0.0
        %1421 = vmatmul.mubr.f32.gmra.mxu0 %v609
        %v1422 = vpop.f32.mrf.mxu0
        %v1423 = vadd.f32 0.0, %v1422
        %v1424 = vpop.f32.mrf.mxu0
        %1425 = vmatprep.mubr.f32.mxu0 0.0
        %1426 = vmatmul.mubr.f32.gmra.mxu0 %v612
        %v1427 = vpop.f32.mrf.mxu0
        %v1428 = vadd.f32 0.0, %v1427
        %v1429 = vpop.f32.mrf.mxu0
        %1430 = vmatprep.mubr.f32.mxu0 0.0
        %1431 = vmatmul.mubr.f32.gmra.mxu0 %v615
        %v1432 = vpop.f32.mrf.mxu0
        %v1433 = vadd.f32 0.0, %v1432
        %v1434 = vpop.f32.mrf.mxu0
        %1435 = vmatprep.mubr.f32.mxu0 0.0
        %1436 = vmatmul.mubr.f32.gmra.mxu0 %v618
        %v1437 = vpop.f32.mrf.mxu0
        %v1438 = vadd.f32 0.0, %v1437
        %v1439 = vpop.f32.mrf.mxu0
        %1440 = vmatprep.mubr.f32.mxu0 0.0
        %1441 = vmatmul.mubr.f32.gmra.mxu0 %v981
        %v1442 = vpop.f32.mrf.mxu0
        %v1443 = vadd.f32 0.0, %v1442
        %v1444 = vpop.f32.mrf.mxu0
        %1445 = vmatprep.mubr.f32.mxu0 0.0
        %1446 = vmatmul.mubr.f32.gmra.mxu0 %v1344
        %v1447 = vpop.f32.mrf.mxu0
        %v1448 = vadd.f32 0.0, %v1447
        %v1449 = vpop.f32.mrf.mxu0
        %1450 = vdwg.mxu0
        %v1451 = vadd.f32 %v1330, %v1413
        %v1452 = vadd.f32 %v1331, %v1418
        %v1453 = vadd.f32 %v1332, %v1423
        %v1454 = vadd.f32 %v1333, %v1428
        %v1455 = vadd.f32 %v1334, %v1433
        %v1456 = vadd.f32 %v1335, %v1438
        %v1457 = vadd.f32 %v1336, %v1443
        %v1458 = vadd.f32 %v1337, %v1448
        %v1459 = vld [vmem:[#allocation2] sm:$0x1]
        %v1461 = vlaneseq
        %v1462 = vshrl.u32 %v1461, 7
        %v1463 = vsub.s32 0, %v1462
        %v1464 = vrot.slane %v1459, %v1463
        %v1466 = vadd.f32 %v1451, %v1464
        %v1467 = vadd.f32 %v1452, %v1464
        %v1468 = vadd.f32 %v1453, %v1464
        %v1469 = vadd.f32 %v1454, %v1464
        %v1470 = vadd.f32 %v1455, %v1464
        %v1471 = vadd.f32 %v1456, %v1464
        %v1472 = vadd.f32 %v1457, %v1464
        %v1473 = vadd.f32 %v1458, %v1464
        %v1474 = vmax.f32 %v1466, 0.0
        %v1475 = vmax.f32 %v1467, 0.0
        %v1476 = vmax.f32 %v1468, 0.0
        %v1477 = vmax.f32 %v1469, 0.0
        %v1478 = vmax.f32 %v1470, 0.0
        %v1479 = vmax.f32 %v1471, 0.0
        %v1480 = vmax.f32 %v1472, 0.0
        %v1481 = vmax.f32 %v1473, 0.0
        %v1482 = vld [vmem:[#allocation4] sm:$0xff]
        %v1483 = vld [vmem:[#allocation6] sm:$0x1]
        %v1485 = vlaneseq
        %v1486 = vshrl.u32 %v1485, 7
        %v1487 = vsub.s32 0, %v1486
        %v1488 = vrot.slane %v1483, %v1487
        %vm1490 = vcmask 64512
        %v1492 = vsel %vm1490, %v1474, 0
        %v1495 = vsel %vm1490, %v1475, 0
        %v1498 = vsel %vm1490, %v1476, 0
        %v1501 = vsel %vm1490, %v1477, 0
        %v1504 = vsel %vm1490, %v1478, 0
        %v1507 = vsel %vm1490, %v1479, 0
        %v1510 = vsel %vm1490, %v1480, 0
        %v1513 = vsel %vm1490, %v1481, 0
        %1515 = vmatprep.subr.mxu0 0.0
        %1516 = vmatpush1.msra.mxu0 0.0
        %1517 = vmatprep.subr.mxu0 0.0
        %1518 = vmatpush1.msra.mxu0 0.0
        %1519 = vmatprep.subr.mxu0 0.0
        %1520 = vmatpush1.msra.mxu0 0.0
        %1521 = vmatprep.subr.mxu0 0.0
        %1522 = vmatpush1.msra.mxu0 0.0
        %1523 = vmatprep.subr.mxu0 0.0
        %1524 = vmatpush1.msra.mxu0 0.0
        %1525 = vmatprep.subr.mxu0 0.0
        %1526 = vmatpush1.msra.mxu0 0.0
        %1527 = vmatprep.subr.mxu0 0.0
        %1528 = vmatpush1.msra.mxu0 0.0
        %1529 = vmatprep.subr.mxu0 0.0
        %1530 = vmatpush1.msra.mxu0 0.0
        %1531 = vmatprep.subr.mxu0 0.0
        %1532 = vmatpush1.msra.mxu0 0.0
        %1533 = vmatprep.subr.mxu0 0.0
        %1534 = vmatpush1.msra.mxu0 0.0
        %1535 = vmatprep.subr.mxu0 0.0
        %1536 = vmatpush1.msra.mxu0 0.0
        %1537 = vmatprep.subr.mxu0 0.0
        %1538 = vmatpush1.msra.mxu0 0.0
        %1539 = vmatprep.subr.mxu0 0.0
        %1540 = vmatpush1.msra.mxu0 0.0
        %1541 = vmatprep.subr.mxu0 0.0
        %1542 = vmatpush1.msra.mxu0 0.0
        %1543 = vmatprep.subr.mxu0 0.0
        %1544 = vmatpush1.msra.mxu0 0.0
        %1545 = vmatprep.subr.mxu0 0.0
        %1546 = vmatpush1.msra.mxu0 %v1482
        %1547 = vmatprep.subr.mxu0 0.0
        %1548 = vmatpush2.msra.mxu0 0.0
        %1549 = vmatprep.subr.mxu0 0.0
        %1550 = vmatpush2.msra.mxu0 0.0
        %1551 = vmatprep.subr.mxu0 0.0
        %1552 = vmatpush2.msra.mxu0 0.0
        %1553 = vmatprep.subr.mxu0 0.0
        %1554 = vmatpush2.msra.mxu0 0.0
        %1555 = vmatprep.subr.mxu0 0.0
        %1556 = vmatpush2.msra.mxu0 0.0
        %1557 = vmatprep.subr.mxu0 0.0
        %1558 = vmatpush2.msra.mxu0 0.0
        %1559 = vmatprep.subr.mxu0 0.0
        %1560 = vmatpush2.msra.mxu0 0.0
        %1561 = vmatprep.subr.mxu0 0.0
        %1562 = vmatpush2.msra.mxu0 0.0
        %1563 = vmatprep.subr.mxu0 0.0
        %1564 = vmatpush2.msra.mxu0 0.0
        %1565 = vmatprep.subr.mxu0 0.0
        %1566 = vmatpush2.msra.mxu0 0.0
        %1567 = vmatprep.subr.mxu0 0.0
        %1568 = vmatpush2.msra.mxu0 0.0
        %1569 = vmatprep.subr.mxu0 0.0
        %1570 = vmatpush2.msra.mxu0 0.0
        %1571 = vmatprep.subr.mxu0 0.0
        %1572 = vmatpush2.msra.mxu0 0.0
        %1573 = vmatprep.subr.mxu0 0.0
        %1574 = vmatpush2.msra.mxu0 0.0
        %1575 = vmatprep.subr.mxu0 0.0
        %1576 = vmatpush2.msra.mxu0 0.0
        %1577 = vmatprep.subr.mxu0 0.0
        %1578 = vmatpush2.msra.mxu0 0.0
        %1579 = vmatprep.mubr.f32.mxu0 0.0
        %1580 = vmatmul.mubr.f32.gmra.mxu0 %v1492
        %v1581 = vpop.f32.mrf.mxu0
        %v1582 = vadd.f32 %v1488, %v1581
        %v1583 = vpop.f32.mrf.mxu0
        %1584 = vmatprep.mubr.f32.mxu0 0.0
        %1585 = vmatmul.mubr.f32.gmra.mxu0 %v1495
        %v1586 = vpop.f32.mrf.mxu0
        %v1587 = vadd.f32 %v1488, %v1586
        %v1588 = vpop.f32.mrf.mxu0
        %1589 = vmatprep.mubr.f32.mxu0 0.0
        %1590 = vmatmul.mubr.f32.gmra.mxu0 %v1498
        %v1591 = vpop.f32.mrf.mxu0
        %v1592 = vadd.f32 %v1488, %v1591
        %v1593 = vpop.f32.mrf.mxu0
        %1594 = vmatprep.mubr.f32.mxu0 0.0
        %1595 = vmatmul.mubr.f32.gmra.mxu0 %v1501
        %v1596 = vpop.f32.mrf.mxu0
        %v1597 = vadd.f32 %v1488, %v1596
        %v1598 = vpop.f32.mrf.mxu0
        %1599 = vmatprep.mubr.f32.mxu0 0.0
        %1600 = vmatmul.mubr.f32.gmra.mxu0 %v1504
        %v1601 = vpop.f32.mrf.mxu0
        %v1602 = vadd.f32 %v1488, %v1601
        %v1603 = vpop.f32.mrf.mxu0
        %1604 = vmatprep.mubr.f32.mxu0 0.0
        %1605 = vmatmul.mubr.f32.gmra.mxu0 %v1507
        %v1606 = vpop.f32.mrf.mxu0
        %v1607 = vadd.f32 %v1488, %v1606
        %v1608 = vpop.f32.mrf.mxu0
        %1609 = vmatprep.mubr.f32.mxu0 0.0
        %1610 = vmatmul.mubr.f32.gmra.mxu0 %v1510
        %v1611 = vpop.f32.mrf.mxu0
        %v1612 = vadd.f32 %v1488, %v1611
        %v1613 = vpop.f32.mrf.mxu0
        %1614 = vmatprep.mubr.f32.mxu0 0.0
        %1615 = vmatmul.mubr.f32.gmra.mxu0 %v1513
        %v1616 = vpop.f32.mrf.mxu0
        %v1617 = vadd.f32 %v1488, %v1616
        %v1618 = vpop.f32.mrf.mxu0
        %1619 = vdwg.mxu0
        %v1620 = vadd.f32 %v1582, %v274
        %v1621 = vadd.f32 %v1587, %v275
        %v1622 = vadd.f32 %v1592, %v276
        %v1623 = vadd.f32 %v1597, %v277
        %v1624 = vadd.f32 %v1602, %v278
        %v1625 = vadd.f32 %v1607, %v279
        %v1626 = vadd.f32 %v1612, %v280
        %v1627 = vadd.f32 %v1617, %v281
        %1628 = vst.msk [vmem:[%s262] sm:$0xff] %vm332, %v1620
        %1629 = vst.msk [vmem:[%s262 + $0x8] sm:$0xff] %vm332, %v1621
        %1630 = vst.msk [vmem:[%s262 + $0x10] sm:$0xff] %vm332, %v1622
        %1631 = vst.msk [vmem:[%s262 + $0x18] sm:$0xff] %vm332, %v1623
        %1632 = vst.msk [vmem:[%s262 + $0x20] sm:$0xff] %vm332, %v1624
        %1633 = vst.msk [vmem:[%s262 + $0x28] sm:$0xff] %vm332, %v1625
        %1634 = vst.msk [vmem:[%s262 + $0x30] sm:$0xff] %vm332, %v1626
        %1635 = vst.msk [vmem:[%s262 + $0x38] sm:$0xff] %vm332, %v1627
        %p1636 = scmp.lt.s32.totalorder %s18, 1
        %s1637 = scalar_select %p1636, %s18, 1
        %s1638 = smul.addr %s1637, 8
        %s1639 = smul.addr %s1638, 8
        %s1640 = scalar_lea.vmem %s5, %s1639
        // Predicated region
        $region53: #{decoder_forward.6} parent=39 // pred_check
          %p1641 = pneg %p146
        $region54: #{decoder_forward.6} parent=39 // pred_check_branch
          %1643 = sbr.rel (%p1641) target = $region56
        $region55: #{decoder_forward.6} parent=39 // pred_region
          _
        $region56: #{decoder_forward.6} parent=39 // pred_fallthru
          _
      $region40: #{decoder_forward.6} parent=5 // pred_fallthru
        _
      %p1644 = scmp.le.s32.totalorder 2, %s13
      // Predicated region
      $region57: #{decoder_forward.6} parent=5 // pred_check
        %p1645 = pneg %p1644
      $region58: #{decoder_forward.6} parent=5 // pred_check_branch
        %1647 = sbr.rel (%p1645) target = $region60
      $region59: #{decoder_forward.6} parent=5 // pred_region
        %s1648 = ssub.s32 %s13, 2
        // Predicated region
        $region61: #{decoder_forward.6} parent=59 // pred_check
          %p1649 = pneg %p152
        $region62: #{decoder_forward.6} parent=59 // pred_check_branch
          %1651 = sbr.rel (%p1649) target = $region64
        $region63: #{decoder_forward.6} parent=59 // pred_region
          %p1652 = scmp.lt.s32.totalorder %s19, 1
          %s1653 = scalar_select %p1652, %s19, 1
          %s1654 = smul.addr %s1653, 8
          %s1655 = smul.addr %s1654, 8
          %s1656 = scalar_lea.vmem %s5, %s1655
        $region64: #{decoder_forward.6} parent=59 // pred_fallthru
          _
      $region60: #{decoder_forward.6} parent=5 // pred_fallthru
        _
    $region6: #{decoder_forward.6} parent=1 // loop_footer
      %s17 = sadd.s32 1, %s13
    $region7: #{decoder_forward.6} parent=1 // loop_footer_branch
      %12 = sbr.rel target = $region3
    $region8: #{decoder_forward.6} parent=1 // loop_exit
      _
    %1657 = vsyncpa [#allocation3], 1
    %s1658 = scalar_lea.sflag [#allocation3], 1
    %1659 = vsyncpa %s1658, 1
    %1660 = vsyncpa [#allocation5], 1

// kernel: decoder_forward.7
$region0: #{decoder_forward.7}
  #allocation0 [shape = 'u32[]', space=smem, size = 0x4, offset = 0x4, fixed_abs, tag = 'smem constant byte address 0x4 - core index']
  #allocation1 [shape = 'u32[144,128]{1,0:T(1,128)}', space=vmem, size = 0x12000, scoped, tag = 'internal scratch']
  %s0 = inlined_call_operand.vmem [shape: f32[2,10,10,32], index: 0, kind: input, shape index: {}]
  %s1 = inlined_call_operand.vmem [shape: f32[3,3,32,8], index: 1, kind: input, shape index: {}]
  %s2 = inlined_call_operand.vmem [shape: f32[1,8], index: 2, kind: input, shape index: {}]
  %s3 = inlined_call_operand.vmem [shape: f32[8,32], index: 3, kind: input, shape index: {}]
  %s4 = inlined_call_operand.vmem [shape: f32[1,32], index: 4, kind: input, shape index: {}]
  %s5 = inlined_call_operand.vmem [shape: f32[2,64,32], index: 5, kind: output, shape index: {}]
  %s6 = sld [smem:[#allocation0]]
  $region53: #{decoder_forward.7} parent=0
    _
  %s8 = ssub.s32 1, %s6
  %s9 = scalar_select 0, %s8, %s6
  loop: start=0, step=1, limit=4
  $region2: #{decoder_forward.7} parent=0 // loop_pre_header
    _
  $region3: #{decoder_forward.7} parent=0 // loop_header
    %s11 = sphi 0, %s15
    %p12 = scmp.ge.s32.totalorder %s11, 4
    %s21 = sphi 0, %s23
    %s24 = sphi 0, %s21
    %s25 = sphi 0, %s24
    %s41 = sphi 0, %s25
    %s45 = sphi 0, %s45
    %s47 = sphi 0, %s45
    %s48 = sphi 0, %s47
    %s62 = sphi 0, %s48
    %s66 = sphi 0, %s66
    %s68 = sphi 0, %s66
    %s69 = sphi 0, %s68
    %s83 = sphi 0, %s69
    %s87 = sphi 0, %s87
    %s89 = sphi 0, %s87
    %s90 = sphi 0, %s89
    %s104 = sphi 0, %s90
    %s108 = sphi 0, %s108
    %s110 = sphi 0, %s108
    %s111 = sphi 0, %s110
    %s125 = sphi 0, %s111
    %s131 = sphi 0, %s133
    %s134 = sphi 0, %s131
    %s135 = sphi 0, %s134
    %s151 = sphi 0, %s135
  $region4: #{decoder_forward.7} parent=0 // loop_header_branch
    %14 = sbr.rel (%p12) target = $region8
  $region5: #{decoder_forward.7} parent=0 // loop_body
    %s16 = ssub.s32 %s11, 1
    %s17 = ssub.s32 %s11, 2
    %s18 = sadd.s32 %s11, 1
    %s19 = ssub.s32 %s11, %s18
    %p20 = scmp.eq.s32.totalorder %s19, 0
    %s22 = sadd.s32 %s21, 1
    %s23 = scalar_select %p20, %s21, %s22
    %p26 = pneg %p20
    %p27 = scmp.eq.s32.totalorder %s11, 1
    %p28 = por %p26, %p27
    %p29 = scmp.ne.s32.totalorder %s21, %s24
    %p30 = scmp.eq.s32.totalorder %s11, 0
    %p31 = por %p29, %p30
    %p32 = scmp.ne.s32.totalorder %s21, %s24
    %p33 = scmp.eq.s32.totalorder %s16, 1
    %p34 = por %p32, %p33
    %p35 = scmp.ne.s32.totalorder %s24, %s25
    %p36 = scmp.eq.s32.totalorder %s16, 0
    %p37 = por %p35, %p36
    %p38 = scmp.ne.s32.totalorder %s24, %s25
    %p39 = scmp.eq.s32.totalorder %s17, 1
    %p40 = por %p38, %p39
    %p42 = scmp.ne.s32.totalorder %s25, %s41
    %p43 = scmp.eq.s32.totalorder %s17, 0
    %p44 = por %p42, %p43
    %s46 = sadd.s32 %s45, 1
    %p49 = scmp.eq.s32.totalorder %s11, 1
    %p50 = scmp.ne.s32.totalorder %s45, %s47
    %p51 = scmp.eq.s32.totalorder %s11, 0
    %p52 = por %p50, %p51
    %p53 = scmp.ne.s32.totalorder %s45, %s47
    %p54 = scmp.eq.s32.totalorder %s16, 1
    %p55 = por %p53, %p54
    %p56 = scmp.ne.s32.totalorder %s47, %s48
    %p57 = scmp.eq.s32.totalorder %s16, 0
    %p58 = por %p56, %p57
    %p59 = scmp.ne.s32.totalorder %s47, %s48
    %p60 = scmp.eq.s32.totalorder %s17, 1
    %p61 = por %p59, %p60
    %p63 = scmp.ne.s32.totalorder %s48, %s62
    %p64 = scmp.eq.s32.totalorder %s17, 0
    %p65 = por %p63, %p64
    %s67 = sadd.s32 %s66, 1
    %p70 = scmp.eq.s32.totalorder %s11, 1
    %p71 = scmp.ne.s32.totalorder %s66, %s68
    %p72 = scmp.eq.s32.totalorder %s11, 0
    %p73 = por %p71, %p72
    %p74 = scmp.ne.s32.totalorder %s66, %s68
    %p75 = scmp.eq.s32.totalorder %s16, 1
    %p76 = por %p74, %p75
    %p77 = scmp.ne.s32.totalorder %s68, %s69
    %p78 = scmp.eq.s32.totalorder %s16, 0
    %p79 = por %p77, %p78
    %p80 = scmp.ne.s32.totalorder %s68, %s69
    %p81 = scmp.eq.s32.totalorder %s17, 1
    %p82 = por %p80, %p81
    %p84 = scmp.ne.s32.totalorder %s69, %s83
    %p85 = scmp.eq.s32.totalorder %s17, 0
    %p86 = por %p84, %p85
    %s88 = sadd.s32 %s87, 1
    %p91 = scmp.eq.s32.totalorder %s11, 1
    %p92 = scmp.ne.s32.totalorder %s87, %s89
    %p93 = scmp.eq.s32.totalorder %s11, 0
    %p94 = por %p92, %p93
    %p95 = scmp.ne.s32.totalorder %s87, %s89
    %p96 = scmp.eq.s32.totalorder %s16, 1
    %p97 = por %p95, %p96
    %p98 = scmp.ne.s32.totalorder %s89, %s90
    %p99 = scmp.eq.s32.totalorder %s16, 0
    %p100 = por %p98, %p99
    %p101 = scmp.ne.s32.totalorder %s89, %s90
    %p102 = scmp.eq.s32.totalorder %s17, 1
    %p103 = por %p101, %p102
    %p105 = scmp.ne.s32.totalorder %s90, %s104
    %p106 = scmp.eq.s32.totalorder %s17, 0
    %p107 = por %p105, %p106
    %s109 = sadd.s32 %s108, 1
    %p112 = scmp.eq.s32.totalorder %s11, 1
    %p113 = scmp.ne.s32.totalorder %s108, %s110
    %p114 = scmp.eq.s32.totalorder %s11, 0
    %p115 = por %p113, %p114
    %p116 = scmp.ne.s32.totalorder %s108, %s110
    %p117 = scmp.eq.s32.totalorder %s16, 1
    %p118 = por %p116, %p117
    %p119 = scmp.ne.s32.totalorder %s110, %s111
    %p120 = scmp.eq.s32.totalorder %s16, 0
    %p121 = por %p119, %p120
    %p122 = scmp.ne.s32.totalorder %s110, %s111
    %p123 = scmp.eq.s32.totalorder %s17, 1
    %p124 = por %p122, %p123
    %p126 = scmp.ne.s32.totalorder %s111, %s125
    %p127 = scmp.eq.s32.totalorder %s17, 0
    %p128 = por %p126, %p127
    %s129 = ssub.s32 %s11, %s18
    %p130 = scmp.eq.s32.totalorder %s129, 0
    %s132 = sadd.s32 %s131, 1
    %s133 = scalar_select %p130, %s131, %s132
    %p136 = pneg %p130
    %p137 = scmp.eq.s32.totalorder %s11, 1
    %p138 = por %p136, %p137
    %p139 = scmp.ne.s32.totalorder %s131, %s134
    %p140 = scmp.eq.s32.totalorder %s11, 0
    %p141 = por %p139, %p140
    %p142 = scmp.ne.s32.totalorder %s131, %s134
    %p143 = scmp.eq.s32.totalorder %s16, 1
    %p144 = por %p142, %p143
    %p145 = scmp.ne.s32.totalorder %s134, %s135
    %p146 = scmp.eq.s32.totalorder %s16, 0
    %p147 = por %p145, %p146
    %p148 = scmp.ne.s32.totalorder %s134, %s135
    %p149 = scmp.eq.s32.totalorder %s17, 1
    %p150 = por %p148, %p149
    %p152 = scmp.ne.s32.totalorder %s135, %s151
    %p153 = scmp.eq.s32.totalorder %s17, 0
    %p154 = por %p152, %p153
    %p155 = scmp.le.s32.totalorder 1, %s11
    %p156 = scmp.lt.s32.totalorder %s11, 3
    %p157 = pnand %p155, %p156
    %p158 = pneg %p157
    // Predicated region
    $region9: #{decoder_forward.7} parent=5 // pred_check
      _
    $region10: #{decoder_forward.7} parent=5 // pred_check_branch
      %160 = sbr.rel (%p157) target = $region12
    $region11: #{decoder_forward.7} parent=5 // pred_region
      %s161 = ssub.s32 %s11, 1
      // Predicated region
      $region13: #{decoder_forward.7} parent=11 // pred_check
        %p162 = pneg %p58
      $region14: #{decoder_forward.7} parent=11 // pred_check_branch
        %164 = sbr.rel (%p162) target = $region16
      $region15: #{decoder_forward.7} parent=11 // pred_region
        _
      $region16: #{decoder_forward.7} parent=11 // pred_fallthru
        _
      // Predicated region
      $region17: #{decoder_forward.7} parent=11 // pred_check
        %p165 = pneg %p79
      $region18: #{decoder_forward.7} parent=11 // pred_check_branch
        %167 = sbr.rel (%p165) target = $region20
      $region19: #{decoder_forward.7} parent=11 // pred_region
        _
      $region20: #{decoder_forward.7} parent=11 // pred_fallthru
        _
      // Predicated region
      $region21: #{decoder_forward.7} parent=11 // pred_check
        %p168 = pneg %p100
      $region22: #{decoder_forward.7} parent=11 // pred_check_branch
        %170 = sbr.rel (%p168) target = $region24
      $region23: #{decoder_forward.7} parent=11 // pred_region
        _
      $region24: #{decoder_forward.7} parent=11 // pred_fallthru
        _
      // Predicated region
      $region25: #{decoder_forward.7} parent=11 // pred_check
        %p171 = pneg %p121
      $region26: #{decoder_forward.7} parent=11 // pred_check_branch
        %173 = sbr.rel (%p171) target = $region28
      $region27: #{decoder_forward.7} parent=11 // pred_region
        _
      $region28: #{decoder_forward.7} parent=11 // pred_fallthru
        _
    $region12: #{decoder_forward.7} parent=5 // pred_fallthru
      _
    %p174 = scmp.lt.s32.totalorder %s11, 2
    // Predicated region
    $region29: #{decoder_forward.7} parent=5 // pred_check
      %p175 = pneg %p174
    $region30: #{decoder_forward.7} parent=5 // pred_check_branch
      %177 = sbr.rel (%p175) target = $region32
    $region31: #{decoder_forward.7} parent=5 // pred_region
      // Predicated region
      $region33: #{decoder_forward.7} parent=31 // pred_check
        %p178 = pneg %p31
      $region34: #{decoder_forward.7} parent=31 // pred_check_branch
        %180 = sbr.rel (%p178) target = $region36
      $region35: #{decoder_forward.7} parent=31 // pred_region
        %p181 = scmp.lt.s32.totalorder %s11, 1
        %s182 = scalar_select %p181, %s11, 1
        %s183 = smul.addr %s182, 20
        %s184 = smul.addr %s183, 8
        %s185 = scalar_lea.vmem %s0, %s184
      $region36: #{decoder_forward.7} parent=31 // pred_fallthru
        _
    $region32: #{decoder_forward.7} parent=5 // pred_fallthru
      _
    %p186 = scmp.le.s32.totalorder 1, %s11
    %p187 = scmp.lt.s32.totalorder %s11, 3
    %p188 = pnand %p186, %p187
    %p189 = pneg %p188
    // Predicated region
    $region37: #{decoder_forward.7} parent=5 // pred_check
      _
    $region38: #{decoder_forward.7} parent=5 // pred_check_branch
      %191 = sbr.rel (%p188) target = $region40
    $region39: #{decoder_forward.7} parent=5 // pred_region
      %s192 = ssub.s32 %s11, 1
      %p193 = scmp.lt.s32.totalorder %s16, 1
      %s194 = scalar_select %p193, %s16, 1
      %s195 = smul.addr %s194, 20
      %s196 = smul.addr %s195, 8
      %s197 = scalar_lea.vmem %s0, %s196
      %p198 = pneg %p37
      %p199 = pneg %p34
      %p200 = pneg %p58
      %p201 = pneg %p55
      %p202 = pneg %p79
      %p203 = pneg %p76
      %p204 = pneg %p100
      %p205 = pneg %p97
      %p206 = pneg %p121
      %p207 = pneg %p118
      %p208 = pneg %p147
      %p209 = pneg %p144
      %p210 = scmp.lt.s32.totalorder %s16, 1
      %s211 = scalar_select %p210, %s16, 1
      %s212 = smul.addr %s211, 8
      %s213 = smul.addr %s212, 8
      %s214 = scalar_lea.vmem %s5, %s213
      %p215 = scmp.lt.s32.totalorder %s16, 1
      %s216 = scalar_select %p215, %s16, 1
      %s217 = smul.addr %s216, 20
      %s218 = smul.addr %s217, 8
      %s219 = scalar_lea.vmem %s0, %s218
      %p220 = scmp.lt.s32.totalorder %s16, 1
      %s221 = scalar_select %p220, %s16, 1
      %s222 = smul.addr %s221, 8
      %s223 = smul.addr %s222, 8
      %s224 = scalar_lea.vmem %s5, %s223
      %v225 = vld [vmem:[%s219] sm:$0xff]
      %v226 = vld [vmem:[%s219 + $0x10] sm:$0xff]
      %v227 = vld [vmem:[%s219 + $0x20] sm:$0xff]
      %v228 = vld [vmem:[%s219 + $0x30] sm:$0xff]
      %v229 = vld [vmem:[%s219 + $0x40] sm:$0xff]
      %v230 = vld [vmem:[%s219 + $0x50] sm:$0xff]
      %v231 = vld [vmem:[%s219 + $0x60] sm:$0xff]
      %v232 = vld [vmem:[%s219 + $0x70] sm:$0xff]
      %v233 = vld [vmem:[%s219 + $0x80] sm:$0xff]
      %v234 = vld [vmem:[%s219 + $0x90] sm:$0xff]
      %v235 = vld [vmem:[%s219 + $0x1] sm:$0xff]
      %v236 = vld [vmem:[%s219 + $0x11] sm:$0xff]
      %v237 = vld [vmem:[%s219 + $0x21] sm:$0xff]
      %v238 = vld [vmem:[%s219 + $0x31] sm:$0xff]
      %v239 = vld [vmem:[%s219 + $0x41] sm:$0xff]
      %v240 = vld [vmem:[%s219 + $0x51] sm:$0xff]
      %v241 = vld [vmem:[%s219 + $0x61] sm:$0xff]
      %v242 = vld [vmem:[%s219 + $0x71] sm:$0xff]
      %v243 = vld [vmem:[%s219 + $0x81] sm:$0xff]
      %v244 = vld [vmem:[%s219 + $0x91] sm:$0xff]
      %v245 = vld [vmem:[%s219 + $0x2] sm:$0xff]
      %v246 = vld [vmem:[%s219 + $0x12] sm:$0xff]
      %v247 = vld [vmem:[%s219 + $0x22] sm:$0xff]
      %v248 = vld [vmem:[%s219 + $0x32] sm:$0xff]
      %v249 = vld [vmem:[%s219 + $0x42] sm:$0xff]
      %v250 = vld [vmem:[%s219 + $0x52] sm:$0xff]
      %v251 = vld [vmem:[%s219 + $0x62] sm:$0xff]
      %v252 = vld [vmem:[%s219 + $0x72] sm:$0xff]
      %v253 = vld [vmem:[%s219 + $0x82] sm:$0xff]
      %v254 = vld [vmem:[%s219 + $0x92] sm:$0xff]
      %v255 = vmax.f32 %v225, 0.0
      %v256 = vmax.f32 %v226, 0.0
      %v257 = vmax.f32 %v227, 0.0
      %v258 = vmax.f32 %v228, 0.0
      %v259 = vmax.f32 %v229, 0.0
      %v260 = vmax.f32 %v230, 0.0
      %v261 = vmax.f32 %v231, 0.0
      %v262 = vmax.f32 %v232, 0.0
      %v263 = vmax.f32 %v233, 0.0
      %v264 = vmax.f32 %v234, 0.0
      %v265 = vmax.f32 %v235, 0.0
      %v266 = vmax.f32 %v236, 0.0
      %v267 = vmax.f32 %v237, 0.0
      %v268 = vmax.f32 %v238, 0.0
      %v269 = vmax.f32 %v239, 0.0
      %v270 = vmax.f32 %v240, 0.0
      %v271 = vmax.f32 %v241, 0.0
      %v272 = vmax.f32 %v242, 0.0
      %v273 = vmax.f32 %v243, 0.0
      %v274 = vmax.f32 %v244, 0.0
      %v275 = vmax.f32 %v245, 0.0
      %v276 = vmax.f32 %v246, 0.0
      %v277 = vmax.f32 %v247, 0.0
      %v278 = vmax.f32 %v248, 0.0
      %v279 = vmax.f32 %v249, 0.0
      %v280 = vmax.f32 %v250, 0.0
      %v281 = vmax.f32 %v251, 0.0
      %v282 = vmax.f32 %v252, 0.0
      %v283 = vmax.f32 %v253, 0.0
      %v284 = vmax.f32 %v254, 0.0
      %v285 = vld [vmem:[%s1] sm:$0xff]
      %v286 = vld [vmem:[%s1 + $0x8] sm:$0xff]
      %v287 = vld [vmem:[%s1 + $0x10] sm:$0xff]
      %v288 = vld [vmem:[%s1 + $0x18] sm:$0xff]
      %s289 = scalar_lea.vmem %s1, 32
      %v290 = vld [vmem:[%s289] sm:$0xff]
      %v291 = vld [vmem:[%s289 + $0x8] sm:$0xff]
      %v292 = vld [vmem:[%s289 + $0x10] sm:$0xff]
      %v293 = vld [vmem:[%s289 + $0x18] sm:$0xff]
      %vm294 = vcmask 261120
      %v296 = vsel %vm294, %v265, 0
      %v299 = vsel %vm294, %v266, 0
      %v302 = vsel %vm294, %v267, 0
      %v305 = vsel %vm294, %v268, 0
      %v308 = vsel %vm294, %v269, 0
      %v311 = vsel %vm294, %v270, 0
      %v314 = vsel %vm294, %v271, 0
      %v317 = vsel %vm294, %v272, 0
      %319 = vmatprep.subr.mxu0 0.0
      %320 = vmatpush1.msra.mxu0 0.0
      %321 = vmatprep.subr.mxu0 0.0
      %322 = vmatpush1.msra.mxu0 0.0
      %323 = vmatprep.subr.mxu0 0.0
      %324 = vmatpush1.msra.mxu0 0.0
      %325 = vmatprep.subr.mxu0 0.0
      %326 = vmatpush1.msra.mxu0 0.0
      %327 = vmatprep.subr.mxu0 0.0
      %328 = vmatpush1.msra.mxu0 0.0
      %329 = vmatprep.subr.mxu0 0.0
      %330 = vmatpush1.msra.mxu0 0.0
      %331 = vmatprep.subr.mxu0 0.0
      %332 = vmatpush1.msra.mxu0 0.0
      %333 = vmatprep.subr.mxu0 0.0
      %334 = vmatpush1.msra.mxu0 0.0
      %335 = vmatprep.subr.mxu0 0.0
      %336 = vmatpush1.msra.mxu0 0.0
      %337 = vmatprep.subr.mxu0 0.0
      %338 = vmatpush1.msra.mxu0 0.0
      %339 = vmatprep.subr.mxu0 0.0
      %340 = vmatpush1.msra.mxu0 0.0
      %341 = vmatprep.subr.mxu0 0.0
      %342 = vmatpush1.msra.mxu0 0.0
      %343 = vmatprep.subr.mxu0 0.0
      %344 = vmatpush1.msra.mxu0 %v293
      %345 = vmatprep.subr.mxu0 0.0
      %346 = vmatpush1.msra.mxu0 %v292
      %347 = vmatprep.subr.mxu0 0.0
      %348 = vmatpush1.msra.mxu0 %v291
      %349 = vmatprep.subr.mxu0 0.0
      %350 = vmatpush1.msra.mxu0 %v290
      %351 = vmatprep.subr.mxu0 0.0
      %352 = vmatpush2.msra.mxu0 0.0
      %353 = vmatprep.subr.mxu0 0.0
      %354 = vmatpush2.msra.mxu0 0.0
      %355 = vmatprep.subr.mxu0 0.0
      %356 = vmatpush2.msra.mxu0 0.0
      %357 = vmatprep.subr.mxu0 0.0
      %358 = vmatpush2.msra.mxu0 0.0
      %359 = vmatprep.subr.mxu0 0.0
      %360 = vmatpush2.msra.mxu0 0.0
      %361 = vmatprep.subr.mxu0 0.0
      %362 = vmatpush2.msra.mxu0 0.0
      %363 = vmatprep.subr.mxu0 0.0
      %364 = vmatpush2.msra.mxu0 0.0
      %365 = vmatprep.subr.mxu0 0.0
      %366 = vmatpush2.msra.mxu0 0.0
      %367 = vmatprep.subr.mxu0 0.0
      %368 = vmatpush2.msra.mxu0 0.0
      %369 = vmatprep.subr.mxu0 0.0
      %370 = vmatpush2.msra.mxu0 0.0
      %371 = vmatprep.subr.mxu0 0.0
      %372 = vmatpush2.msra.mxu0 0.0
      %373 = vmatprep.subr.mxu0 0.0
      %374 = vmatpush2.msra.mxu0 0.0
      %375 = vmatprep.subr.mxu0 0.0
      %376 = vmatpush2.msra.mxu0 0.0
      %377 = vmatprep.subr.mxu0 0.0
      %378 = vmatpush2.msra.mxu0 0.0
      %379 = vmatprep.subr.mxu0 0.0
      %380 = vmatpush2.msra.mxu0 0.0
      %381 = vmatprep.subr.mxu0 0.0
      %382 = vmatpush2.msra.mxu0 0.0
      %383 = vmatprep.mubr.f32.mxu0 0.0
      %384 = vmatmul.mubr.f32.gmra.mxu0 %v296
      %v385 = vpop.f32.mrf.mxu0
      %v386 = vadd.f32 0.0, %v385
      %v387 = vpop.f32.mrf.mxu0
      %388 = vmatprep.mubr.f32.mxu0 0.0
      %389 = vmatmul.mubr.f32.gmra.mxu0 %v299
      %v390 = vpop.f32.mrf.mxu0
      %v391 = vadd.f32 0.0, %v390
      %v392 = vpop.f32.mrf.mxu0
      %393 = vmatprep.mubr.f32.mxu0 0.0
      %394 = vmatmul.mubr.f32.gmra.mxu0 %v302
      %v395 = vpop.f32.mrf.mxu0
      %v396 = vadd.f32 0.0, %v395
      %v397 = vpop.f32.mrf.mxu0
      %398 = vmatprep.mubr.f32.mxu0 0.0
      %399 = vmatmul.mubr.f32.gmra.mxu0 %v305
      %v400 = vpop.f32.mrf.mxu0
      %v401 = vadd.f32 0.0, %v400
      %v402 = vpop.f32.mrf.mxu0
      %403 = vmatprep.mubr.f32.mxu0 0.0
      %404 = vmatmul.mubr.f32.gmra.mxu0 %v308
      %v405 = vpop.f32.mrf.mxu0
      %v406 = vadd.f32 0.0, %v405
      %v407 = vpop.f32.mrf.mxu0
      %408 = vmatprep.mubr.f32.mxu0 0.0
      %409 = vmatmul.mubr.f32.gmra.mxu0 %v311
      %v410 = vpop.f32.mrf.mxu0
      %v411 = vadd.f32 0.0, %v410
      %v412 = vpop.f32.mrf.mxu0
      %413 = vmatprep.mubr.f32.mxu0 0.0
      %414 = vmatmul.mubr.f32.gmra.mxu0 %v314
      %v415 = vpop.f32.mrf.mxu0
      %v416 = vadd.f32 0.0, %v415
      %v417 = vpop.f32.mrf.mxu0
      %418 = vmatprep.mubr.f32.mxu0 0.0
      %419 = vmatmul.mubr.f32.gmra.mxu0 %v317
      %v420 = vpop.f32.mrf.mxu0
      %v421 = vadd.f32 0.0, %v420
      %v422 = vpop.f32.mrf.mxu0
      %423 = vdwg.mxu0
      %v425 = vsel %vm294, %v255, 0
      %v428 = vsel %vm294, %v256, 0
      %v431 = vsel %vm294, %v257, 0
      %v434 = vsel %vm294, %v258, 0
      %v437 = vsel %vm294, %v259, 0
      %v440 = vsel %vm294, %v260, 0
      %v443 = vsel %vm294, %v261, 0
      %v446 = vsel %vm294, %v262, 0
      %448 = vmatprep.subr.mxu0 0.0
      %449 = vmatpush1.msra.mxu0 0.0
      %450 = vmatprep.subr.mxu0 0.0
      %451 = vmatpush1.msra.mxu0 0.0
      %452 = vmatprep.subr.mxu0 0.0
      %453 = vmatpush1.msra.mxu0 0.0
      %454 = vmatprep.subr.mxu0 0.0
      %455 = vmatpush1.msra.mxu0 0.0
      %456 = vmatprep.subr.mxu0 0.0
      %457 = vmatpush1.msra.mxu0 0.0
      %458 = vmatprep.subr.mxu0 0.0
      %459 = vmatpush1.msra.mxu0 0.0
      %460 = vmatprep.subr.mxu0 0.0
      %461 = vmatpush1.msra.mxu0 0.0
      %462 = vmatprep.subr.mxu0 0.0
      %463 = vmatpush1.msra.mxu0 0.0
      %464 = vmatprep.subr.mxu0 0.0
      %465 = vmatpush1.msra.mxu0 0.0
      %466 = vmatprep.subr.mxu0 0.0
      %467 = vmatpush1.msra.mxu0 0.0
      %468 = vmatprep.subr.mxu0 0.0
      %469 = vmatpush1.msra.mxu0 0.0
      %470 = vmatprep.subr.mxu0 0.0
      %471 = vmatpush1.msra.mxu0 0.0
      %472 = vmatprep.subr.mxu0 0.0
      %473 = vmatpush1.msra.mxu0 %v288
      %474 = vmatprep.subr.mxu0 0.0
      %475 = vmatpush1.msra.mxu0 %v287
      %476 = vmatprep.subr.mxu0 0.0
      %477 = vmatpush1.msra.mxu0 %v286
      %478 = vmatprep.subr.mxu0 0.0
      %479 = vmatpush1.msra.mxu0 %v285
      %480 = vmatprep.subr.mxu0 0.0
      %481 = vmatpush2.msra.mxu0 0.0
      %482 = vmatprep.subr.mxu0 0.0
      %483 = vmatpush2.msra.mxu0 0.0
      %484 = vmatprep.subr.mxu0 0.0
      %485 = vmatpush2.msra.mxu0 0.0
      %486 = vmatprep.subr.mxu0 0.0
      %487 = vmatpush2.msra.mxu0 0.0
      %488 = vmatprep.subr.mxu0 0.0
      %489 = vmatpush2.msra.mxu0 0.0
      %490 = vmatprep.subr.mxu0 0.0
      %491 = vmatpush2.msra.mxu0 0.0
      %492 = vmatprep.subr.mxu0 0.0
      %493 = vmatpush2.msra.mxu0 0.0
      %494 = vmatprep.subr.mxu0 0.0
      %495 = vmatpush2.msra.mxu0 0.0
      %496 = vmatprep.subr.mxu0 0.0
      %497 = vmatpush2.msra.mxu0 0.0
      %498 = vmatprep.subr.mxu0 0.0
      %499 = vmatpush2.msra.mxu0 0.0
      %500 = vmatprep.subr.mxu0 0.0
      %501 = vmatpush2.msra.mxu0 0.0
      %502 = vmatprep.subr.mxu0 0.0
      %503 = vmatpush2.msra.mxu0 0.0
      %504 = vmatprep.subr.mxu0 0.0
      %505 = vmatpush2.msra.mxu0 0.0
      %506 = vmatprep.subr.mxu0 0.0
      %507 = vmatpush2.msra.mxu0 0.0
      %508 = vmatprep.subr.mxu0 0.0
      %509 = vmatpush2.msra.mxu0 0.0
      %510 = vmatprep.subr.mxu0 0.0
      %511 = vmatpush2.msra.mxu0 0.0
      %512 = vmatprep.mubr.f32.mxu0 0.0
      %513 = vmatmul.mubr.f32.gmra.mxu0 %v425
      %v514 = vpop.f32.mrf.mxu0
      %v515 = vadd.f32 %v386, %v514
      %v516 = vpop.f32.mrf.mxu0
      %517 = vmatprep.mubr.f32.mxu0 0.0
      %518 = vmatmul.mubr.f32.gmra.mxu0 %v428
      %v519 = vpop.f32.mrf.mxu0
      %v520 = vadd.f32 %v391, %v519
      %v521 = vpop.f32.mrf.mxu0
      %522 = vmatprep.mubr.f32.mxu0 0.0
      %523 = vmatmul.mubr.f32.gmra.mxu0 %v431
      %v524 = vpop.f32.mrf.mxu0
      %v525 = vadd.f32 %v396, %v524
      %v526 = vpop.f32.mrf.mxu0
      %527 = vmatprep.mubr.f32.mxu0 0.0
      %528 = vmatmul.mubr.f32.gmra.mxu0 %v434
      %v529 = vpop.f32.mrf.mxu0
      %v530 = vadd.f32 %v401, %v529
      %v531 = vpop.f32.mrf.mxu0
      %532 = vmatprep.mubr.f32.mxu0 0.0
      %533 = vmatmul.mubr.f32.gmra.mxu0 %v437
      %v534 = vpop.f32.mrf.mxu0
      %v535 = vadd.f32 %v406, %v534
      %v536 = vpop.f32.mrf.mxu0
      %537 = vmatprep.mubr.f32.mxu0 0.0
      %538 = vmatmul.mubr.f32.gmra.mxu0 %v440
      %v539 = vpop.f32.mrf.mxu0
      %v540 = vadd.f32 %v411, %v539
      %v541 = vpop.f32.mrf.mxu0
      %542 = vmatprep.mubr.f32.mxu0 0.0
      %543 = vmatmul.mubr.f32.gmra.mxu0 %v443
      %v544 = vpop.f32.mrf.mxu0
      %v545 = vadd.f32 %v416, %v544
      %v546 = vpop.f32.mrf.mxu0
      %547 = vmatprep.mubr.f32.mxu0 0.0
      %548 = vmatmul.mubr.f32.gmra.mxu0 %v446
      %v549 = vpop.f32.mrf.mxu0
      %v550 = vadd.f32 %v421, %v549
      %v551 = vpop.f32.mrf.mxu0
      %552 = vdwg.mxu0
      %s553 = scalar_lea.vmem %s1, 64
      %v554 = vld [vmem:[%s553] sm:$0xff]
      %v555 = vld [vmem:[%s553 + $0x8] sm:$0xff]
      %v556 = vld [vmem:[%s553 + $0x10] sm:$0xff]
      %v557 = vld [vmem:[%s553 + $0x18] sm:$0xff]
      %v559 = vsel %vm294, %v275, 0
      %v562 = vsel %vm294, %v276, 0
      %v565 = vsel %vm294, %v277, 0
      %v568 = vsel %vm294, %v278, 0
      %v571 = vsel %vm294, %v279, 0
      %v574 = vsel %vm294, %v280, 0
      %v577 = vsel %vm294, %v281, 0
      %v580 = vsel %vm294, %v282, 0
      %582 = vmatprep.subr.mxu0 0.0
      %583 = vmatpush1.msra.mxu0 0.0
      %584 = vmatprep.subr.mxu0 0.0
      %585 = vmatpush1.msra.mxu0 0.0
      %586 = vmatprep.subr.mxu0 0.0
      %587 = vmatpush1.msra.mxu0 0.0
      %588 = vmatprep.subr.mxu0 0.0
      %589 = vmatpush1.msra.mxu0 0.0
      %590 = vmatprep.subr.mxu0 0.0
      %591 = vmatpush1.msra.mxu0 0.0
      %592 = vmatprep.subr.mxu0 0.0
      %593 = vmatpush1.msra.mxu0 0.0
      %594 = vmatprep.subr.mxu0 0.0
      %595 = vmatpush1.msra.mxu0 0.0
      %596 = vmatprep.subr.mxu0 0.0
      %597 = vmatpush1.msra.mxu0 0.0
      %598 = vmatprep.subr.mxu0 0.0
      %599 = vmatpush1.msra.mxu0 0.0
      %600 = vmatprep.subr.mxu0 0.0
      %601 = vmatpush1.msra.mxu0 0.0
      %602 = vmatprep.subr.mxu0 0.0
      %603 = vmatpush1.msra.mxu0 0.0
      %604 = vmatprep.subr.mxu0 0.0
      %605 = vmatpush1.msra.mxu0 0.0
      %606 = vmatprep.subr.mxu0 0.0
      %607 = vmatpush1.msra.mxu0 %v557
      %608 = vmatprep.subr.mxu0 0.0
      %609 = vmatpush1.msra.mxu0 %v556
      %610 = vmatprep.subr.mxu0 0.0
      %611 = vmatpush1.msra.mxu0 %v555
      %612 = vmatprep.subr.mxu0 0.0
      %613 = vmatpush1.msra.mxu0 %v554
      %614 = vmatprep.subr.mxu0 0.0
      %615 = vmatpush2.msra.mxu0 0.0
      %616 = vmatprep.subr.mxu0 0.0
      %617 = vmatpush2.msra.mxu0 0.0
      %618 = vmatprep.subr.mxu0 0.0
      %619 = vmatpush2.msra.mxu0 0.0
      %620 = vmatprep.subr.mxu0 0.0
      %621 = vmatpush2.msra.mxu0 0.0
      %622 = vmatprep.subr.mxu0 0.0
      %623 = vmatpush2.msra.mxu0 0.0
      %624 = vmatprep.subr.mxu0 0.0
      %625 = vmatpush2.msra.mxu0 0.0
      %626 = vmatprep.subr.mxu0 0.0
      %627 = vmatpush2.msra.mxu0 0.0
      %628 = vmatprep.subr.mxu0 0.0
      %629 = vmatpush2.msra.mxu0 0.0
      %630 = vmatprep.subr.mxu0 0.0
      %631 = vmatpush2.msra.mxu0 0.0
      %632 = vmatprep.subr.mxu0 0.0
      %633 = vmatpush2.msra.mxu0 0.0
      %634 = vmatprep.subr.mxu0 0.0
      %635 = vmatpush2.msra.mxu0 0.0
      %636 = vmatprep.subr.mxu0 0.0
      %637 = vmatpush2.msra.mxu0 0.0
      %638 = vmatprep.subr.mxu0 0.0
      %639 = vmatpush2.msra.mxu0 0.0
      %640 = vmatprep.subr.mxu0 0.0
      %641 = vmatpush2.msra.mxu0 0.0
      %642 = vmatprep.subr.mxu0 0.0
      %643 = vmatpush2.msra.mxu0 0.0
      %644 = vmatprep.subr.mxu0 0.0
      %645 = vmatpush2.msra.mxu0 0.0
      %646 = vmatprep.mubr.f32.mxu0 0.0
      %647 = vmatmul.mubr.f32.gmra.mxu0 %v559
      %v648 = vpop.f32.mrf.mxu0
      %v649 = vadd.f32 0.0, %v648
      %v650 = vpop.f32.mrf.mxu0
      %651 = vmatprep.mubr.f32.mxu0 0.0
      %652 = vmatmul.mubr.f32.gmra.mxu0 %v562
      %v653 = vpop.f32.mrf.mxu0
      %v654 = vadd.f32 0.0, %v653
      %v655 = vpop.f32.mrf.mxu0
      %656 = vmatprep.mubr.f32.mxu0 0.0
      %657 = vmatmul.mubr.f32.gmra.mxu0 %v565
      %v658 = vpop.f32.mrf.mxu0
      %v659 = vadd.f32 0.0, %v658
      %v660 = vpop.f32.mrf.mxu0
      %661 = vmatprep.mubr.f32.mxu0 0.0
      %662 = vmatmul.mubr.f32.gmra.mxu0 %v568
      %v663 = vpop.f32.mrf.mxu0
      %v664 = vadd.f32 0.0, %v663
      %v665 = vpop.f32.mrf.mxu0
      %666 = vmatprep.mubr.f32.mxu0 0.0
      %667 = vmatmul.mubr.f32.gmra.mxu0 %v571
      %v668 = vpop.f32.mrf.mxu0
      %v669 = vadd.f32 0.0, %v668
      %v670 = vpop.f32.mrf.mxu0
      %671 = vmatprep.mubr.f32.mxu0 0.0
      %672 = vmatmul.mubr.f32.gmra.mxu0 %v574
      %v673 = vpop.f32.mrf.mxu0
      %v674 = vadd.f32 0.0, %v673
      %v675 = vpop.f32.mrf.mxu0
      %676 = vmatprep.mubr.f32.mxu0 0.0
      %677 = vmatmul.mubr.f32.gmra.mxu0 %v577
      %v678 = vpop.f32.mrf.mxu0
      %v679 = vadd.f32 0.0, %v678
      %v680 = vpop.f32.mrf.mxu0
      %681 = vmatprep.mubr.f32.mxu0 0.0
      %682 = vmatmul.mubr.f32.gmra.mxu0 %v580
      %v683 = vpop.f32.mrf.mxu0
      %v684 = vadd.f32 0.0, %v683
      %v685 = vpop.f32.mrf.mxu0
      %686 = vdwg.mxu0
      %v687 = vadd.f32 %v515, %v649
      %v688 = vadd.f32 %v520, %v654
      %v689 = vadd.f32 %v525, %v659
      %v690 = vadd.f32 %v530, %v664
      %v691 = vadd.f32 %v535, %v669
      %v692 = vadd.f32 %v540, %v674
      %v693 = vadd.f32 %v545, %v679
      %v694 = vadd.f32 %v550, %v684
      %s695 = scalar_lea.vmem %s1, 96
      %v696 = vld [vmem:[%s695] sm:$0xff]
      %v697 = vld [vmem:[%s695 + $0x8] sm:$0xff]
      %v698 = vld [vmem:[%s695 + $0x10] sm:$0xff]
      %v699 = vld [vmem:[%s695 + $0x18] sm:$0xff]
      %v701 = vsel %vm294, %v263, 0
      %703 = vmatprep.subr.mxu0 0.0
      %704 = vmatpush1.msra.mxu0 0.0
      %705 = vmatprep.subr.mxu0 0.0
      %706 = vmatpush1.msra.mxu0 0.0
      %707 = vmatprep.subr.mxu0 0.0
      %708 = vmatpush1.msra.mxu0 0.0
      %709 = vmatprep.subr.mxu0 0.0
      %710 = vmatpush1.msra.mxu0 0.0
      %711 = vmatprep.subr.mxu0 0.0
      %712 = vmatpush1.msra.mxu0 0.0
      %713 = vmatprep.subr.mxu0 0.0
      %714 = vmatpush1.msra.mxu0 0.0
      %715 = vmatprep.subr.mxu0 0.0
      %716 = vmatpush1.msra.mxu0 0.0
      %717 = vmatprep.subr.mxu0 0.0
      %718 = vmatpush1.msra.mxu0 0.0
      %719 = vmatprep.subr.mxu0 0.0
      %720 = vmatpush1.msra.mxu0 0.0
      %721 = vmatprep.subr.mxu0 0.0
      %722 = vmatpush1.msra.mxu0 0.0
      %723 = vmatprep.subr.mxu0 0.0
      %724 = vmatpush1.msra.mxu0 0.0
      %725 = vmatprep.subr.mxu0 0.0
      %726 = vmatpush1.msra.mxu0 0.0
      %727 = vmatprep.subr.mxu0 0.0
      %728 = vmatpush1.msra.mxu0 %v699
      %729 = vmatprep.subr.mxu0 0.0
      %730 = vmatpush1.msra.mxu0 %v698
      %731 = vmatprep.subr.mxu0 0.0
      %732 = vmatpush1.msra.mxu0 %v697
      %733 = vmatprep.subr.mxu0 0.0
      %734 = vmatpush1.msra.mxu0 %v696
      %735 = vmatprep.subr.mxu0 0.0
      %736 = vmatpush2.msra.mxu0 0.0
      %737 = vmatprep.subr.mxu0 0.0
      %738 = vmatpush2.msra.mxu0 0.0
      %739 = vmatprep.subr.mxu0 0.0
      %740 = vmatpush2.msra.mxu0 0.0
      %741 = vmatprep.subr.mxu0 0.0
      %742 = vmatpush2.msra.mxu0 0.0
      %743 = vmatprep.subr.mxu0 0.0
      %744 = vmatpush2.msra.mxu0 0.0
      %745 = vmatprep.subr.mxu0 0.0
      %746 = vmatpush2.msra.mxu0 0.0
      %747 = vmatprep.subr.mxu0 0.0
      %748 = vmatpush2.msra.mxu0 0.0
      %749 = vmatprep.subr.mxu0 0.0
      %750 = vmatpush2.msra.mxu0 0.0
      %751 = vmatprep.subr.mxu0 0.0
      %752 = vmatpush2.msra.mxu0 0.0
      %753 = vmatprep.subr.mxu0 0.0
      %754 = vmatpush2.msra.mxu0 0.0
      %755 = vmatprep.subr.mxu0 0.0
      %756 = vmatpush2.msra.mxu0 0.0
      %757 = vmatprep.subr.mxu0 0.0
      %758 = vmatpush2.msra.mxu0 0.0
      %759 = vmatprep.subr.mxu0 0.0
      %760 = vmatpush2.msra.mxu0 0.0
      %761 = vmatprep.subr.mxu0 0.0
      %762 = vmatpush2.msra.mxu0 0.0
      %763 = vmatprep.subr.mxu0 0.0
      %764 = vmatpush2.msra.mxu0 0.0
      %765 = vmatprep.subr.mxu0 0.0
      %766 = vmatpush2.msra.mxu0 0.0
      %767 = vmatprep.mubr.f32.mxu0 0.0
      %768 = vmatmul.mubr.f32.gmra.mxu0 %v428
      %v769 = vpop.f32.mrf.mxu0
      %v770 = vadd.f32 0.0, %v769
      %v771 = vpop.f32.mrf.mxu0
      %772 = vmatprep.mubr.f32.mxu0 0.0
      %773 = vmatmul.mubr.f32.gmra.mxu0 %v431
      %v774 = vpop.f32.mrf.mxu0
      %v775 = vadd.f32 0.0, %v774
      %v776 = vpop.f32.mrf.mxu0
      %777 = vmatprep.mubr.f32.mxu0 0.0
      %778 = vmatmul.mubr.f32.gmra.mxu0 %v434
      %v779 = vpop.f32.mrf.mxu0
      %v780 = vadd.f32 0.0, %v779
      %v781 = vpop.f32.mrf.mxu0
      %782 = vmatprep.mubr.f32.mxu0 0.0
      %783 = vmatmul.mubr.f32.gmra.mxu0 %v437
      %v784 = vpop.f32.mrf.mxu0
      %v785 = vadd.f32 0.0, %v784
      %v786 = vpop.f32.mrf.mxu0
      %787 = vmatprep.mubr.f32.mxu0 0.0
      %788 = vmatmul.mubr.f32.gmra.mxu0 %v440
      %v789 = vpop.f32.mrf.mxu0
      %v790 = vadd.f32 0.0, %v789
      %v791 = vpop.f32.mrf.mxu0
      %792 = vmatprep.mubr.f32.mxu0 0.0
      %793 = vmatmul.mubr.f32.gmra.mxu0 %v443
      %v794 = vpop.f32.mrf.mxu0
      %v795 = vadd.f32 0.0, %v794
      %v796 = vpop.f32.mrf.mxu0
      %797 = vmatprep.mubr.f32.mxu0 0.0
      %798 = vmatmul.mubr.f32.gmra.mxu0 %v446
      %v799 = vpop.f32.mrf.mxu0
      %v800 = vadd.f32 0.0, %v799
      %v801 = vpop.f32.mrf.mxu0
      %802 = vmatprep.mubr.f32.mxu0 0.0
      %803 = vmatmul.mubr.f32.gmra.mxu0 %v701
      %v804 = vpop.f32.mrf.mxu0
      %v805 = vadd.f32 0.0, %v804
      %v806 = vpop.f32.mrf.mxu0
      %807 = vdwg.mxu0
      %v808 = vadd.f32 %v687, %v770
      %v809 = vadd.f32 %v688, %v775
      %v810 = vadd.f32 %v689, %v780
      %v811 = vadd.f32 %v690, %v785
      %v812 = vadd.f32 %v691, %v790
      %v813 = vadd.f32 %v692, %v795
      %v814 = vadd.f32 %v693, %v800
      %v815 = vadd.f32 %v694, %v805
      %s816 = scalar_lea.vmem %s1, 128
      %v817 = vld [vmem:[%s816] sm:$0xff]
      %v818 = vld [vmem:[%s816 + $0x8] sm:$0xff]
      %v819 = vld [vmem:[%s816 + $0x10] sm:$0xff]
      %v820 = vld [vmem:[%s816 + $0x18] sm:$0xff]
      %v822 = vsel %vm294, %v273, 0
      %824 = vmatprep.subr.mxu0 0.0
      %825 = vmatpush1.msra.mxu0 0.0
      %826 = vmatprep.subr.mxu0 0.0
      %827 = vmatpush1.msra.mxu0 0.0
      %828 = vmatprep.subr.mxu0 0.0
      %829 = vmatpush1.msra.mxu0 0.0
      %830 = vmatprep.subr.mxu0 0.0
      %831 = vmatpush1.msra.mxu0 0.0
      %832 = vmatprep.subr.mxu0 0.0
      %833 = vmatpush1.msra.mxu0 0.0
      %834 = vmatprep.subr.mxu0 0.0
      %835 = vmatpush1.msra.mxu0 0.0
      %836 = vmatprep.subr.mxu0 0.0
      %837 = vmatpush1.msra.mxu0 0.0
      %838 = vmatprep.subr.mxu0 0.0
      %839 = vmatpush1.msra.mxu0 0.0
      %840 = vmatprep.subr.mxu0 0.0
      %841 = vmatpush1.msra.mxu0 0.0
      %842 = vmatprep.subr.mxu0 0.0
      %843 = vmatpush1.msra.mxu0 0.0
      %844 = vmatprep.subr.mxu0 0.0
      %845 = vmatpush1.msra.mxu0 0.0
      %846 = vmatprep.subr.mxu0 0.0
      %847 = vmatpush1.msra.mxu0 0.0
      %848 = vmatprep.subr.mxu0 0.0
      %849 = vmatpush1.msra.mxu0 %v820
      %850 = vmatprep.subr.mxu0 0.0
      %851 = vmatpush1.msra.mxu0 %v819
      %852 = vmatprep.subr.mxu0 0.0
      %853 = vmatpush1.msra.mxu0 %v818
      %854 = vmatprep.subr.mxu0 0.0
      %855 = vmatpush1.msra.mxu0 %v817
      %856 = vmatprep.subr.mxu0 0.0
      %857 = vmatpush2.msra.mxu0 0.0
      %858 = vmatprep.subr.mxu0 0.0
      %859 = vmatpush2.msra.mxu0 0.0
      %860 = vmatprep.subr.mxu0 0.0
      %861 = vmatpush2.msra.mxu0 0.0
      %862 = vmatprep.subr.mxu0 0.0
      %863 = vmatpush2.msra.mxu0 0.0
      %864 = vmatprep.subr.mxu0 0.0
      %865 = vmatpush2.msra.mxu0 0.0
      %866 = vmatprep.subr.mxu0 0.0
      %867 = vmatpush2.msra.mxu0 0.0
      %868 = vmatprep.subr.mxu0 0.0
      %869 = vmatpush2.msra.mxu0 0.0
      %870 = vmatprep.subr.mxu0 0.0
      %871 = vmatpush2.msra.mxu0 0.0
      %872 = vmatprep.subr.mxu0 0.0
      %873 = vmatpush2.msra.mxu0 0.0
      %874 = vmatprep.subr.mxu0 0.0
      %875 = vmatpush2.msra.mxu0 0.0
      %876 = vmatprep.subr.mxu0 0.0
      %877 = vmatpush2.msra.mxu0 0.0
      %878 = vmatprep.subr.mxu0 0.0
      %879 = vmatpush2.msra.mxu0 0.0
      %880 = vmatprep.subr.mxu0 0.0
      %881 = vmatpush2.msra.mxu0 0.0
      %882 = vmatprep.subr.mxu0 0.0
      %883 = vmatpush2.msra.mxu0 0.0
      %884 = vmatprep.subr.mxu0 0.0
      %885 = vmatpush2.msra.mxu0 0.0
      %886 = vmatprep.subr.mxu0 0.0
      %887 = vmatpush2.msra.mxu0 0.0
      %888 = vmatprep.mubr.f32.mxu0 0.0
      %889 = vmatmul.mubr.f32.gmra.mxu0 %v299
      %v890 = vpop.f32.mrf.mxu0
      %v891 = vadd.f32 0.0, %v890
      %v892 = vpop.f32.mrf.mxu0
      %893 = vmatprep.mubr.f32.mxu0 0.0
      %894 = vmatmul.mubr.f32.gmra.mxu0 %v302
      %v895 = vpop.f32.mrf.mxu0
      %v896 = vadd.f32 0.0, %v895
      %v897 = vpop.f32.mrf.mxu0
      %898 = vmatprep.mubr.f32.mxu0 0.0
      %899 = vmatmul.mubr.f32.gmra.mxu0 %v305
      %v900 = vpop.f32.mrf.mxu0
      %v901 = vadd.f32 0.0, %v900
      %v902 = vpop.f32.mrf.mxu0
      %903 = vmatprep.mubr.f32.mxu0 0.0
      %904 = vmatmul.mubr.f32.gmra.mxu0 %v308
      %v905 = vpop.f32.mrf.mxu0
      %v906 = vadd.f32 0.0, %v905
      %v907 = vpop.f32.mrf.mxu0
      %908 = vmatprep.mubr.f32.mxu0 0.0
      %909 = vmatmul.mubr.f32.gmra.mxu0 %v311
      %v910 = vpop.f32.mrf.mxu0
      %v911 = vadd.f32 0.0, %v910
      %v912 = vpop.f32.mrf.mxu0
      %913 = vmatprep.mubr.f32.mxu0 0.0
      %914 = vmatmul.mubr.f32.gmra.mxu0 %v314
      %v915 = vpop.f32.mrf.mxu0
      %v916 = vadd.f32 0.0, %v915
      %v917 = vpop.f32.mrf.mxu0
      %918 = vmatprep.mubr.f32.mxu0 0.0
      %919 = vmatmul.mubr.f32.gmra.mxu0 %v317
      %v920 = vpop.f32.mrf.mxu0
      %v921 = vadd.f32 0.0, %v920
      %v922 = vpop.f32.mrf.mxu0
      %923 = vmatprep.mubr.f32.mxu0 0.0
      %924 = vmatmul.mubr.f32.gmra.mxu0 %v822
      %v925 = vpop.f32.mrf.mxu0
      %v926 = vadd.f32 0.0, %v925
      %v927 = vpop.f32.mrf.mxu0
      %928 = vdwg.mxu0
      %v929 = vadd.f32 %v808, %v891
      %v930 = vadd.f32 %v809, %v896
      %v931 = vadd.f32 %v810, %v901
      %v932 = vadd.f32 %v811, %v906
      %v933 = vadd.f32 %v812, %v911
      %v934 = vadd.f32 %v813, %v916
      %v935 = vadd.f32 %v814, %v921
      %v936 = vadd.f32 %v815, %v926
      %s937 = scalar_lea.vmem %s1, 160
      %v938 = vld [vmem:[%s937] sm:$0xff]
      %v939 = vld [vmem:[%s937 + $0x8] sm:$0xff]
      %v940 = vld [vmem:[%s937 + $0x10] sm:$0xff]
      %v941 = vld [vmem:[%s937 + $0x18] sm:$0xff]
      %v943 = vsel %vm294, %v283, 0
      %945 = vmatprep.subr.mxu0 0.0
      %946 = vmatpush1.msra.mxu0 0.0
      %947 = vmatprep.subr.mxu0 0.0
      %948 = vmatpush1.msra.mxu0 0.0
      %949 = vmatprep.subr.mxu0 0.0
      %950 = vmatpush1.msra.mxu0 0.0
      %951 = vmatprep.subr.mxu0 0.0
      %952 = vmatpush1.msra.mxu0 0.0
      %953 = vmatprep.subr.mxu0 0.0
      %954 = vmatpush1.msra.mxu0 0.0
      %955 = vmatprep.subr.mxu0 0.0
      %956 = vmatpush1.msra.mxu0 0.0
      %957 = vmatprep.subr.mxu0 0.0
      %958 = vmatpush1.msra.mxu0 0.0
      %959 = vmatprep.subr.mxu0 0.0
      %960 = vmatpush1.msra.mxu0 0.0
      %961 = vmatprep.subr.mxu0 0.0
      %962 = vmatpush1.msra.mxu0 0.0
      %963 = vmatprep.subr.mxu0 0.0
      %964 = vmatpush1.msra.mxu0 0.0
      %965 = vmatprep.subr.mxu0 0.0
      %966 = vmatpush1.msra.mxu0 0.0
      %967 = vmatprep.subr.mxu0 0.0
      %968 = vmatpush1.msra.mxu0 0.0
      %969 = vmatprep.subr.mxu0 0.0
      %970 = vmatpush1.msra.mxu0 %v941
      %971 = vmatprep.subr.mxu0 0.0
      %972 = vmatpush1.msra.mxu0 %v940
      %973 = vmatprep.subr.mxu0 0.0
      %974 = vmatpush1.msra.mxu0 %v939
      %975 = vmatprep.subr.mxu0 0.0
      %976 = vmatpush1.msra.mxu0 %v938
      %977 = vmatprep.subr.mxu0 0.0
      %978 = vmatpush2.msra.mxu0 0.0
      %979 = vmatprep.subr.mxu0 0.0
      %980 = vmatpush2.msra.mxu0 0.0
      %981 = vmatprep.subr.mxu0 0.0
      %982 = vmatpush2.msra.mxu0 0.0
      %983 = vmatprep.subr.mxu0 0.0
      %984 = vmatpush2.msra.mxu0 0.0
      %985 = vmatprep.subr.mxu0 0.0
      %986 = vmatpush2.msra.mxu0 0.0
      %987 = vmatprep.subr.mxu0 0.0
      %988 = vmatpush2.msra.mxu0 0.0
      %989 = vmatprep.subr.mxu0 0.0
      %990 = vmatpush2.msra.mxu0 0.0
      %991 = vmatprep.subr.mxu0 0.0
      %992 = vmatpush2.msra.mxu0 0.0
      %993 = vmatprep.subr.mxu0 0.0
      %994 = vmatpush2.msra.mxu0 0.0
      %995 = vmatprep.subr.mxu0 0.0
      %996 = vmatpush2.msra.mxu0 0.0
      %997 = vmatprep.subr.mxu0 0.0
      %998 = vmatpush2.msra.mxu0 0.0
      %999 = vmatprep.subr.mxu0 0.0
      %1000 = vmatpush2.msra.mxu0 0.0
      %1001 = vmatprep.subr.mxu0 0.0
      %1002 = vmatpush2.msra.mxu0 0.0
      %1003 = vmatprep.subr.mxu0 0.0
      %1004 = vmatpush2.msra.mxu0 0.0
      %1005 = vmatprep.subr.mxu0 0.0
      %1006 = vmatpush2.msra.mxu0 0.0
      %1007 = vmatprep.subr.mxu0 0.0
      %1008 = vmatpush2.msra.mxu0 0.0
      %1009 = vmatprep.mubr.f32.mxu0 0.0
      %1010 = vmatmul.mubr.f32.gmra.mxu0 %v562
      %v1011 = vpop.f32.mrf.mxu0
      %v1012 = vadd.f32 0.0, %v1011
      %v1013 = vpop.f32.mrf.mxu0
      %1014 = vmatprep.mubr.f32.mxu0 0.0
      %1015 = vmatmul.mubr.f32.gmra.mxu0 %v565
      %v1016 = vpop.f32.mrf.mxu0
      %v1017 = vadd.f32 0.0, %v1016
      %v1018 = vpop.f32.mrf.mxu0
      %1019 = vmatprep.mubr.f32.mxu0 0.0
      %1020 = vmatmul.mubr.f32.gmra.mxu0 %v568
      %v1021 = vpop.f32.mrf.mxu0
      %v1022 = vadd.f32 0.0, %v1021
      %v1023 = vpop.f32.mrf.mxu0
      %1024 = vmatprep.mubr.f32.mxu0 0.0
      %1025 = vmatmul.mubr.f32.gmra.mxu0 %v571
      %v1026 = vpop.f32.mrf.mxu0
      %v1027 = vadd.f32 0.0, %v1026
      %v1028 = vpop.f32.mrf.mxu0
      %1029 = vmatprep.mubr.f32.mxu0 0.0
      %1030 = vmatmul.mubr.f32.gmra.mxu0 %v574
      %v1031 = vpop.f32.mrf.mxu0
      %v1032 = vadd.f32 0.0, %v1031
      %v1033 = vpop.f32.mrf.mxu0
      %1034 = vmatprep.mubr.f32.mxu0 0.0
      %1035 = vmatmul.mubr.f32.gmra.mxu0 %v577
      %v1036 = vpop.f32.mrf.mxu0
      %v1037 = vadd.f32 0.0, %v1036
      %v1038 = vpop.f32.mrf.mxu0
      %1039 = vmatprep.mubr.f32.mxu0 0.0
      %1040 = vmatmul.mubr.f32.gmra.mxu0 %v580
      %v1041 = vpop.f32.mrf.mxu0
      %v1042 = vadd.f32 0.0, %v1041
      %v1043 = vpop.f32.mrf.mxu0
      %1044 = vmatprep.mubr.f32.mxu0 0.0
      %1045 = vmatmul.mubr.f32.gmra.mxu0 %v943
      %v1046 = vpop.f32.mrf.mxu0
      %v1047 = vadd.f32 0.0, %v1046
      %v1048 = vpop.f32.mrf.mxu0
      %1049 = vdwg.mxu0
      %v1050 = vadd.f32 %v929, %v1012
      %v1051 = vadd.f32 %v930, %v1017
      %v1052 = vadd.f32 %v931, %v1022
      %v1053 = vadd.f32 %v932, %v1027
      %v1054 = vadd.f32 %v933, %v1032
      %v1055 = vadd.f32 %v934, %v1037
      %v1056 = vadd.f32 %v935, %v1042
      %v1057 = vadd.f32 %v936, %v1047
      %s1058 = scalar_lea.vmem %s1, 192
      %v1059 = vld [vmem:[%s1058] sm:$0xff]
      %v1060 = vld [vmem:[%s1058 + $0x8] sm:$0xff]
      %v1061 = vld [vmem:[%s1058 + $0x10] sm:$0xff]
      %v1062 = vld [vmem:[%s1058 + $0x18] sm:$0xff]
      %v1064 = vsel %vm294, %v264, 0
      %1066 = vmatprep.subr.mxu0 0.0
      %1067 = vmatpush1.msra.mxu0 0.0
      %1068 = vmatprep.subr.mxu0 0.0
      %1069 = vmatpush1.msra.mxu0 0.0
      %1070 = vmatprep.subr.mxu0 0.0
      %1071 = vmatpush1.msra.mxu0 0.0
      %1072 = vmatprep.subr.mxu0 0.0
      %1073 = vmatpush1.msra.mxu0 0.0
      %1074 = vmatprep.subr.mxu0 0.0
      %1075 = vmatpush1.msra.mxu0 0.0
      %1076 = vmatprep.subr.mxu0 0.0
      %1077 = vmatpush1.msra.mxu0 0.0
      %1078 = vmatprep.subr.mxu0 0.0
      %1079 = vmatpush1.msra.mxu0 0.0
      %1080 = vmatprep.subr.mxu0 0.0
      %1081 = vmatpush1.msra.mxu0 0.0
      %1082 = vmatprep.subr.mxu0 0.0
      %1083 = vmatpush1.msra.mxu0 0.0
      %1084 = vmatprep.subr.mxu0 0.0
      %1085 = vmatpush1.msra.mxu0 0.0
      %1086 = vmatprep.subr.mxu0 0.0
      %1087 = vmatpush1.msra.mxu0 0.0
      %1088 = vmatprep.subr.mxu0 0.0
      %1089 = vmatpush1.msra.mxu0 0.0
      %1090 = vmatprep.subr.mxu0 0.0
      %1091 = vmatpush1.msra.mxu0 %v1062
      %1092 = vmatprep.subr.mxu0 0.0
      %1093 = vmatpush1.msra.mxu0 %v1061
      %1094 = vmatprep.subr.mxu0 0.0
      %1095 = vmatpush1.msra.mxu0 %v1060
      %1096 = vmatprep.subr.mxu0 0.0
      %1097 = vmatpush1.msra.mxu0 %v1059
      %1098 = vmatprep.subr.mxu0 0.0
      %1099 = vmatpush2.msra.mxu0 0.0
      %1100 = vmatprep.subr.mxu0 0.0
      %1101 = vmatpush2.msra.mxu0 0.0
      %1102 = vmatprep.subr.mxu0 0.0
      %1103 = vmatpush2.msra.mxu0 0.0
      %1104 = vmatprep.subr.mxu0 0.0
      %1105 = vmatpush2.msra.mxu0 0.0
      %1106 = vmatprep.subr.mxu0 0.0
      %1107 = vmatpush2.msra.mxu0 0.0
      %1108 = vmatprep.subr.mxu0 0.0
      %1109 = vmatpush2.msra.mxu0 0.0
      %1110 = vmatprep.subr.mxu0 0.0
      %1111 = vmatpush2.msra.mxu0 0.0
      %1112 = vmatprep.subr.mxu0 0.0
      %1113 = vmatpush2.msra.mxu0 0.0
      %1114 = vmatprep.subr.mxu0 0.0
      %1115 = vmatpush2.msra.mxu0 0.0
      %1116 = vmatprep.subr.mxu0 0.0
      %1117 = vmatpush2.msra.mxu0 0.0
      %1118 = vmatprep.subr.mxu0 0.0
      %1119 = vmatpush2.msra.mxu0 0.0
      %1120 = vmatprep.subr.mxu0 0.0
      %1121 = vmatpush2.msra.mxu0 0.0
      %1122 = vmatprep.subr.mxu0 0.0
      %1123 = vmatpush2.msra.mxu0 0.0
      %1124 = vmatprep.subr.mxu0 0.0
      %1125 = vmatpush2.msra.mxu0 0.0
      %1126 = vmatprep.subr.mxu0 0.0
      %1127 = vmatpush2.msra.mxu0 0.0
      %1128 = vmatprep.subr.mxu0 0.0
      %1129 = vmatpush2.msra.mxu0 0.0
      %1130 = vmatprep.mubr.f32.mxu0 0.0
      %1131 = vmatmul.mubr.f32.gmra.mxu0 %v431
      %v1132 = vpop.f32.mrf.mxu0
      %v1133 = vadd.f32 0.0, %v1132
      %v1134 = vpop.f32.mrf.mxu0
      %1135 = vmatprep.mubr.f32.mxu0 0.0
      %1136 = vmatmul.mubr.f32.gmra.mxu0 %v434
      %v1137 = vpop.f32.mrf.mxu0
      %v1138 = vadd.f32 0.0, %v1137
      %v1139 = vpop.f32.mrf.mxu0
      %1140 = vmatprep.mubr.f32.mxu0 0.0
      %1141 = vmatmul.mubr.f32.gmra.mxu0 %v437
      %v1142 = vpop.f32.mrf.mxu0
      %v1143 = vadd.f32 0.0, %v1142
      %v1144 = vpop.f32.mrf.mxu0
      %1145 = vmatprep.mubr.f32.mxu0 0.0
      %1146 = vmatmul.mubr.f32.gmra.mxu0 %v440
      %v1147 = vpop.f32.mrf.mxu0
      %v1148 = vadd.f32 0.0, %v1147
      %v1149 = vpop.f32.mrf.mxu0
      %1150 = vmatprep.mubr.f32.mxu0 0.0
      %1151 = vmatmul.mubr.f32.gmra.mxu0 %v443
      %v1152 = vpop.f32.mrf.mxu0
      %v1153 = vadd.f32 0.0, %v1152
      %v1154 = vpop.f32.mrf.mxu0
      %1155 = vmatprep.mubr.f32.mxu0 0.0
      %1156 = vmatmul.mubr.f32.gmra.mxu0 %v446
      %v1157 = vpop.f32.mrf.mxu0
      %v1158 = vadd.f32 0.0, %v1157
      %v1159 = vpop.f32.mrf.mxu0
      %1160 = vmatprep.mubr.f32.mxu0 0.0
      %1161 = vmatmul.mubr.f32.gmra.mxu0 %v701
      %v1162 = vpop.f32.mrf.mxu0
      %v1163 = vadd.f32 0.0, %v1162
      %v1164 = vpop.f32.mrf.mxu0
      %1165 = vmatprep.mubr.f32.mxu0 0.0
      %1166 = vmatmul.mubr.f32.gmra.mxu0 %v1064
      %v1167 = vpop.f32.mrf.mxu0
      %v1168 = vadd.f32 0.0, %v1167
      %v1169 = vpop.f32.mrf.mxu0
      %1170 = vdwg.mxu0
      %v1171 = vadd.f32 %v1050, %v1133
      %v1172 = vadd.f32 %v1051, %v1138
      %v1173 = vadd.f32 %v1052, %v1143
      %v1174 = vadd.f32 %v1053, %v1148
      %v1175 = vadd.f32 %v1054, %v1153
      %v1176 = vadd.f32 %v1055, %v1158
      %v1177 = vadd.f32 %v1056, %v1163
      %v1178 = vadd.f32 %v1057, %v1168
      %s1179 = scalar_lea.vmem %s1, 224
      %v1180 = vld [vmem:[%s1179] sm:$0xff]
      %v1181 = vld [vmem:[%s1179 + $0x8] sm:$0xff]
      %v1182 = vld [vmem:[%s1179 + $0x10] sm:$0xff]
      %v1183 = vld [vmem:[%s1179 + $0x18] sm:$0xff]
      %v1185 = vsel %vm294, %v274, 0
      %1187 = vmatprep.subr.mxu0 0.0
      %1188 = vmatpush1.msra.mxu0 0.0
      %1189 = vmatprep.subr.mxu0 0.0
      %1190 = vmatpush1.msra.mxu0 0.0
      %1191 = vmatprep.subr.mxu0 0.0
      %1192 = vmatpush1.msra.mxu0 0.0
      %1193 = vmatprep.subr.mxu0 0.0
      %1194 = vmatpush1.msra.mxu0 0.0
      %1195 = vmatprep.subr.mxu0 0.0
      %1196 = vmatpush1.msra.mxu0 0.0
      %1197 = vmatprep.subr.mxu0 0.0
      %1198 = vmatpush1.msra.mxu0 0.0
      %1199 = vmatprep.subr.mxu0 0.0
      %1200 = vmatpush1.msra.mxu0 0.0
      %1201 = vmatprep.subr.mxu0 0.0
      %1202 = vmatpush1.msra.mxu0 0.0
      %1203 = vmatprep.subr.mxu0 0.0
      %1204 = vmatpush1.msra.mxu0 0.0
      %1205 = vmatprep.subr.mxu0 0.0
      %1206 = vmatpush1.msra.mxu0 0.0
      %1207 = vmatprep.subr.mxu0 0.0
      %1208 = vmatpush1.msra.mxu0 0.0
      %1209 = vmatprep.subr.mxu0 0.0
      %1210 = vmatpush1.msra.mxu0 0.0
      %1211 = vmatprep.subr.mxu0 0.0
      %1212 = vmatpush1.msra.mxu0 %v1183
      %1213 = vmatprep.subr.mxu0 0.0
      %1214 = vmatpush1.msra.mxu0 %v1182
      %1215 = vmatprep.subr.mxu0 0.0
      %1216 = vmatpush1.msra.mxu0 %v1181
      %1217 = vmatprep.subr.mxu0 0.0
      %1218 = vmatpush1.msra.mxu0 %v1180
      %1219 = vmatprep.subr.mxu0 0.0
      %1220 = vmatpush2.msra.mxu0 0.0
      %1221 = vmatprep.subr.mxu0 0.0
      %1222 = vmatpush2.msra.mxu0 0.0
      %1223 = vmatprep.subr.mxu0 0.0
      %1224 = vmatpush2.msra.mxu0 0.0
      %1225 = vmatprep.subr.mxu0 0.0
      %1226 = vmatpush2.msra.mxu0 0.0
      %1227 = vmatprep.subr.mxu0 0.0
      %1228 = vmatpush2.msra.mxu0 0.0
      %1229 = vmatprep.subr.mxu0 0.0
      %1230 = vmatpush2.msra.mxu0 0.0
      %1231 = vmatprep.subr.mxu0 0.0
      %1232 = vmatpush2.msra.mxu0 0.0
      %1233 = vmatprep.subr.mxu0 0.0
      %1234 = vmatpush2.msra.mxu0 0.0
      %1235 = vmatprep.subr.mxu0 0.0
      %1236 = vmatpush2.msra.mxu0 0.0
      %1237 = vmatprep.subr.mxu0 0.0
      %1238 = vmatpush2.msra.mxu0 0.0
      %1239 = vmatprep.subr.mxu0 0.0
      %1240 = vmatpush2.msra.mxu0 0.0
      %1241 = vmatprep.subr.mxu0 0.0
      %1242 = vmatpush2.msra.mxu0 0.0
      %1243 = vmatprep.subr.mxu0 0.0
      %1244 = vmatpush2.msra.mxu0 0.0
      %1245 = vmatprep.subr.mxu0 0.0
      %1246 = vmatpush2.msra.mxu0 0.0
      %1247 = vmatprep.subr.mxu0 0.0
      %1248 = vmatpush2.msra.mxu0 0.0
      %1249 = vmatprep.subr.mxu0 0.0
      %1250 = vmatpush2.msra.mxu0 0.0
      %1251 = vmatprep.mubr.f32.mxu0 0.0
      %1252 = vmatmul.mubr.f32.gmra.mxu0 %v302
      %v1253 = vpop.f32.mrf.mxu0
      %v1254 = vadd.f32 0.0, %v1253
      %v1255 = vpop.f32.mrf.mxu0
      %1256 = vmatprep.mubr.f32.mxu0 0.0
      %1257 = vmatmul.mubr.f32.gmra.mxu0 %v305
      %v1258 = vpop.f32.mrf.mxu0
      %v1259 = vadd.f32 0.0, %v1258
      %v1260 = vpop.f32.mrf.mxu0
      %1261 = vmatprep.mubr.f32.mxu0 0.0
      %1262 = vmatmul.mubr.f32.gmra.mxu0 %v308
      %v1263 = vpop.f32.mrf.mxu0
      %v1264 = vadd.f32 0.0, %v1263
      %v1265 = vpop.f32.mrf.mxu0
      %1266 = vmatprep.mubr.f32.mxu0 0.0
      %1267 = vmatmul.mubr.f32.gmra.mxu0 %v311
      %v1268 = vpop.f32.mrf.mxu0
      %v1269 = vadd.f32 0.0, %v1268
      %v1270 = vpop.f32.mrf.mxu0
      %1271 = vmatprep.mubr.f32.mxu0 0.0
      %1272 = vmatmul.mubr.f32.gmra.mxu0 %v314
      %v1273 = vpop.f32.mrf.mxu0
      %v1274 = vadd.f32 0.0, %v1273
      %v1275 = vpop.f32.mrf.mxu0
      %1276 = vmatprep.mubr.f32.mxu0 0.0
      %1277 = vmatmul.mubr.f32.gmra.mxu0 %v317
      %v1278 = vpop.f32.mrf.mxu0
      %v1279 = vadd.f32 0.0, %v1278
      %v1280 = vpop.f32.mrf.mxu0
      %1281 = vmatprep.mubr.f32.mxu0 0.0
      %1282 = vmatmul.mubr.f32.gmra.mxu0 %v822
      %v1283 = vpop.f32.mrf.mxu0
      %v1284 = vadd.f32 0.0, %v1283
      %v1285 = vpop.f32.mrf.mxu0
      %1286 = vmatprep.mubr.f32.mxu0 0.0
      %1287 = vmatmul.mubr.f32.gmra.mxu0 %v1185
      %v1288 = vpop.f32.mrf.mxu0
      %v1289 = vadd.f32 0.0, %v1288
      %v1290 = vpop.f32.mrf.mxu0
      %1291 = vdwg.mxu0
      %v1292 = vadd.f32 %v1171, %v1254
      %v1293 = vadd.f32 %v1172, %v1259
      %v1294 = vadd.f32 %v1173, %v1264
      %v1295 = vadd.f32 %v1174, %v1269
      %v1296 = vadd.f32 %v1175, %v1274
      %v1297 = vadd.f32 %v1176, %v1279
      %v1298 = vadd.f32 %v1177, %v1284
      %v1299 = vadd.f32 %v1178, %v1289
      %s1300 = scalar_lea.vmem %s1, 256
      %v1301 = vld [vmem:[%s1300] sm:$0xff]
      %v1302 = vld [vmem:[%s1300 + $0x8] sm:$0xff]
      %v1303 = vld [vmem:[%s1300 + $0x10] sm:$0xff]
      %v1304 = vld [vmem:[%s1300 + $0x18] sm:$0xff]
      %v1306 = vsel %vm294, %v284, 0
      %1308 = vmatprep.subr.mxu0 0.0
      %1309 = vmatpush1.msra.mxu0 0.0
      %1310 = vmatprep.subr.mxu0 0.0
      %1311 = vmatpush1.msra.mxu0 0.0
      %1312 = vmatprep.subr.mxu0 0.0
      %1313 = vmatpush1.msra.mxu0 0.0
      %1314 = vmatprep.subr.mxu0 0.0
      %1315 = vmatpush1.msra.mxu0 0.0
      %1316 = vmatprep.subr.mxu0 0.0
      %1317 = vmatpush1.msra.mxu0 0.0
      %1318 = vmatprep.subr.mxu0 0.0
      %1319 = vmatpush1.msra.mxu0 0.0
      %1320 = vmatprep.subr.mxu0 0.0
      %1321 = vmatpush1.msra.mxu0 0.0
      %1322 = vmatprep.subr.mxu0 0.0
      %1323 = vmatpush1.msra.mxu0 0.0
      %1324 = vmatprep.subr.mxu0 0.0
      %1325 = vmatpush1.msra.mxu0 0.0
      %1326 = vmatprep.subr.mxu0 0.0
      %1327 = vmatpush1.msra.mxu0 0.0
      %1328 = vmatprep.subr.mxu0 0.0
      %1329 = vmatpush1.msra.mxu0 0.0
      %1330 = vmatprep.subr.mxu0 0.0
      %1331 = vmatpush1.msra.mxu0 0.0
      %1332 = vmatprep.subr.mxu0 0.0
      %1333 = vmatpush1.msra.mxu0 %v1304
      %1334 = vmatprep.subr.mxu0 0.0
      %1335 = vmatpush1.msra.mxu0 %v1303
      %1336 = vmatprep.subr.mxu0 0.0
      %1337 = vmatpush1.msra.mxu0 %v1302
      %1338 = vmatprep.subr.mxu0 0.0
      %1339 = vmatpush1.msra.mxu0 %v1301
      %1340 = vmatprep.subr.mxu0 0.0
      %1341 = vmatpush2.msra.mxu0 0.0
      %1342 = vmatprep.subr.mxu0 0.0
      %1343 = vmatpush2.msra.mxu0 0.0
      %1344 = vmatprep.subr.mxu0 0.0
      %1345 = vmatpush2.msra.mxu0 0.0
      %1346 = vmatprep.subr.mxu0 0.0
      %1347 = vmatpush2.msra.mxu0 0.0
      %1348 = vmatprep.subr.mxu0 0.0
      %1349 = vmatpush2.msra.mxu0 0.0
      %1350 = vmatprep.subr.mxu0 0.0
      %1351 = vmatpush2.msra.mxu0 0.0
      %1352 = vmatprep.subr.mxu0 0.0
      %1353 = vmatpush2.msra.mxu0 0.0
      %1354 = vmatprep.subr.mxu0 0.0
      %1355 = vmatpush2.msra.mxu0 0.0
      %1356 = vmatprep.subr.mxu0 0.0
      %1357 = vmatpush2.msra.mxu0 0.0
      %1358 = vmatprep.subr.mxu0 0.0
      %1359 = vmatpush2.msra.mxu0 0.0
      %1360 = vmatprep.subr.mxu0 0.0
      %1361 = vmatpush2.msra.mxu0 0.0
      %1362 = vmatprep.subr.mxu0 0.0
      %1363 = vmatpush2.msra.mxu0 0.0
      %1364 = vmatprep.subr.mxu0 0.0
      %1365 = vmatpush2.msra.mxu0 0.0
      %1366 = vmatprep.subr.mxu0 0.0
      %1367 = vmatpush2.msra.mxu0 0.0
      %1368 = vmatprep.subr.mxu0 0.0
      %1369 = vmatpush2.msra.mxu0 0.0
      %1370 = vmatprep.subr.mxu0 0.0
      %1371 = vmatpush2.msra.mxu0 0.0
      %1372 = vmatprep.mubr.f32.mxu0 0.0
      %1373 = vmatmul.mubr.f32.gmra.mxu0 %v565
      %v1374 = vpop.f32.mrf.mxu0
      %v1375 = vadd.f32 0.0, %v1374
      %v1376 = vpop.f32.mrf.mxu0
      %1377 = vmatprep.mubr.f32.mxu0 0.0
      %1378 = vmatmul.mubr.f32.gmra.mxu0 %v568
      %v1379 = vpop.f32.mrf.mxu0
      %v1380 = vadd.f32 0.0, %v1379
      %v1381 = vpop.f32.mrf.mxu0
      %1382 = vmatprep.mubr.f32.mxu0 0.0
      %1383 = vmatmul.mubr.f32.gmra.mxu0 %v571
      %v1384 = vpop.f32.mrf.mxu0
      %v1385 = vadd.f32 0.0, %v1384
      %v1386 = vpop.f32.mrf.mxu0
      %1387 = vmatprep.mubr.f32.mxu0 0.0
      %1388 = vmatmul.mubr.f32.gmra.mxu0 %v574
      %v1389 = vpop.f32.mrf.mxu0
      %v1390 = vadd.f32 0.0, %v1389
      %v1391 = vpop.f32.mrf.mxu0
      %1392 = vmatprep.mubr.f32.mxu0 0.0
      %1393 = vmatmul.mubr.f32.gmra.mxu0 %v577
      %v1394 = vpop.f32.mrf.mxu0
      %v1395 = vadd.f32 0.0, %v1394
      %v1396 = vpop.f32.mrf.mxu0
      %1397 = vmatprep.mubr.f32.mxu0 0.0
      %1398 = vmatmul.mubr.f32.gmra.mxu0 %v580
      %v1399 = vpop.f32.mrf.mxu0
      %v1400 = vadd.f32 0.0, %v1399
      %v1401 = vpop.f32.mrf.mxu0
      %1402 = vmatprep.mubr.f32.mxu0 0.0
      %1403 = vmatmul.mubr.f32.gmra.mxu0 %v943
      %v1404 = vpop.f32.mrf.mxu0
      %v1405 = vadd.f32 0.0, %v1404
      %v1406 = vpop.f32.mrf.mxu0
      %1407 = vmatprep.mubr.f32.mxu0 0.0
      %1408 = vmatmul.mubr.f32.gmra.mxu0 %v1306
      %v1409 = vpop.f32.mrf.mxu0
      %v1410 = vadd.f32 0.0, %v1409
      %v1411 = vpop.f32.mrf.mxu0
      %1412 = vdwg.mxu0
      %v1413 = vadd.f32 %v1292, %v1375
      %v1414 = vadd.f32 %v1293, %v1380
      %v1415 = vadd.f32 %v1294, %v1385
      %v1416 = vadd.f32 %v1295, %v1390
      %v1417 = vadd.f32 %v1296, %v1395
      %v1418 = vadd.f32 %v1297, %v1400
      %v1419 = vadd.f32 %v1298, %v1405
      %v1420 = vadd.f32 %v1299, %v1410
      %v1421 = vld [vmem:[%s2] sm:$0x1]
      %v1423 = vlaneseq
      %v1424 = vshrl.u32 %v1423, 7
      %v1425 = vsub.s32 0, %v1424
      %v1426 = vrot.slane %v1421, %v1425
      %v1428 = vadd.f32 %v1413, %v1426
      %v1429 = vadd.f32 %v1414, %v1426
      %v1430 = vadd.f32 %v1415, %v1426
      %v1431 = vadd.f32 %v1416, %v1426
      %v1432 = vadd.f32 %v1417, %v1426
      %v1433 = vadd.f32 %v1418, %v1426
      %v1434 = vadd.f32 %v1419, %v1426
      %v1435 = vadd.f32 %v1420, %v1426
      %v1436 = vmax.f32 %v1428, 0.0
      %v1437 = vmax.f32 %v1429, 0.0
      %v1438 = vmax.f32 %v1430, 0.0
      %v1439 = vmax.f32 %v1431, 0.0
      %v1440 = vmax.f32 %v1432, 0.0
      %v1441 = vmax.f32 %v1433, 0.0
      %v1442 = vmax.f32 %v1434, 0.0
      %v1443 = vmax.f32 %v1435, 0.0
      %v1444 = vld [vmem:[%s3] sm:$0xff]
      %v1445 = vld [vmem:[%s4] sm:$0x1]
      %v1447 = vlaneseq
      %v1448 = vshrl.u32 %v1447, 7
      %v1449 = vsub.s32 0, %v1448
      %v1450 = vrot.slane %v1445, %v1449
      %vm1452 = vcmask 64512
      %v1454 = vsel %vm1452, %v1436, 0
      %v1457 = vsel %vm1452, %v1437, 0
      %v1460 = vsel %vm1452, %v1438, 0
      %v1463 = vsel %vm1452, %v1439, 0
      %v1466 = vsel %vm1452, %v1440, 0
      %v1469 = vsel %vm1452, %v1441, 0
      %v1472 = vsel %vm1452, %v1442, 0
      %v1475 = vsel %vm1452, %v1443, 0
      %1477 = vmatprep.subr.mxu0 0.0
      %1478 = vmatpush1.msra.mxu0 0.0
      %1479 = vmatprep.subr.mxu0 0.0
      %1480 = vmatpush1.msra.mxu0 0.0
      %1481 = vmatprep.subr.mxu0 0.0
      %1482 = vmatpush1.msra.mxu0 0.0
      %1483 = vmatprep.subr.mxu0 0.0
      %1484 = vmatpush1.msra.mxu0 0.0
      %1485 = vmatprep.subr.mxu0 0.0
      %1486 = vmatpush1.msra.mxu0 0.0
      %1487 = vmatprep.subr.mxu0 0.0
      %1488 = vmatpush1.msra.mxu0 0.0
      %1489 = vmatprep.subr.mxu0 0.0
      %1490 = vmatpush1.msra.mxu0 0.0
      %1491 = vmatprep.subr.mxu0 0.0
      %1492 = vmatpush1.msra.mxu0 0.0
      %1493 = vmatprep.subr.mxu0 0.0
      %1494 = vmatpush1.msra.mxu0 0.0
      %1495 = vmatprep.subr.mxu0 0.0
      %1496 = vmatpush1.msra.mxu0 0.0
      %1497 = vmatprep.subr.mxu0 0.0
      %1498 = vmatpush1.msra.mxu0 0.0
      %1499 = vmatprep.subr.mxu0 0.0
      %1500 = vmatpush1.msra.mxu0 0.0
      %1501 = vmatprep.subr.mxu0 0.0
      %1502 = vmatpush1.msra.mxu0 0.0
      %1503 = vmatprep.subr.mxu0 0.0
      %1504 = vmatpush1.msra.mxu0 0.0
      %1505 = vmatprep.subr.mxu0 0.0
      %1506 = vmatpush1.msra.mxu0 0.0
      %1507 = vmatprep.subr.mxu0 0.0
      %1508 = vmatpush1.msra.mxu0 %v1444
      %1509 = vmatprep.subr.mxu0 0.0
      %1510 = vmatpush2.msra.mxu0 0.0
      %1511 = vmatprep.subr.mxu0 0.0
      %1512 = vmatpush2.msra.mxu0 0.0
      %1513 = vmatprep.subr.mxu0 0.0
      %1514 = vmatpush2.msra.mxu0 0.0
      %1515 = vmatprep.subr.mxu0 0.0
      %1516 = vmatpush2.msra.mxu0 0.0
      %1517 = vmatprep.subr.mxu0 0.0
      %1518 = vmatpush2.msra.mxu0 0.0
      %1519 = vmatprep.subr.mxu0 0.0
      %1520 = vmatpush2.msra.mxu0 0.0
      %1521 = vmatprep.subr.mxu0 0.0
      %1522 = vmatpush2.msra.mxu0 0.0
      %1523 = vmatprep.subr.mxu0 0.0
      %1524 = vmatpush2.msra.mxu0 0.0
      %1525 = vmatprep.subr.mxu0 0.0
      %1526 = vmatpush2.msra.mxu0 0.0
      %1527 = vmatprep.subr.mxu0 0.0
      %1528 = vmatpush2.msra.mxu0 0.0
      %1529 = vmatprep.subr.mxu0 0.0
      %1530 = vmatpush2.msra.mxu0 0.0
      %1531 = vmatprep.subr.mxu0 0.0
      %1532 = vmatpush2.msra.mxu0 0.0
      %1533 = vmatprep.subr.mxu0 0.0
      %1534 = vmatpush2.msra.mxu0 0.0
      %1535 = vmatprep.subr.mxu0 0.0
      %1536 = vmatpush2.msra.mxu0 0.0
      %1537 = vmatprep.subr.mxu0 0.0
      %1538 = vmatpush2.msra.mxu0 0.0
      %1539 = vmatprep.subr.mxu0 0.0
      %1540 = vmatpush2.msra.mxu0 0.0
      %1541 = vmatprep.mubr.f32.mxu0 0.0
      %1542 = vmatmul.mubr.f32.gmra.mxu0 %v1454
      %v1543 = vpop.f32.mrf.mxu0
      %v1544 = vadd.f32 %v1450, %v1543
      %v1545 = vpop.f32.mrf.mxu0
      %1546 = vmatprep.mubr.f32.mxu0 0.0
      %1547 = vmatmul.mubr.f32.gmra.mxu0 %v1457
      %v1548 = vpop.f32.mrf.mxu0
      %v1549 = vadd.f32 %v1450, %v1548
      %v1550 = vpop.f32.mrf.mxu0
      %1551 = vmatprep.mubr.f32.mxu0 0.0
      %1552 = vmatmul.mubr.f32.gmra.mxu0 %v1460
      %v1553 = vpop.f32.mrf.mxu0
      %v1554 = vadd.f32 %v1450, %v1553
      %v1555 = vpop.f32.mrf.mxu0
      %1556 = vmatprep.mubr.f32.mxu0 0.0
      %1557 = vmatmul.mubr.f32.gmra.mxu0 %v1463
      %v1558 = vpop.f32.mrf.mxu0
      %v1559 = vadd.f32 %v1450, %v1558
      %v1560 = vpop.f32.mrf.mxu0
      %1561 = vmatprep.mubr.f32.mxu0 0.0
      %1562 = vmatmul.mubr.f32.gmra.mxu0 %v1466
      %v1563 = vpop.f32.mrf.mxu0
      %v1564 = vadd.f32 %v1450, %v1563
      %v1565 = vpop.f32.mrf.mxu0
      %1566 = vmatprep.mubr.f32.mxu0 0.0
      %1567 = vmatmul.mubr.f32.gmra.mxu0 %v1469
      %v1568 = vpop.f32.mrf.mxu0
      %v1569 = vadd.f32 %v1450, %v1568
      %v1570 = vpop.f32.mrf.mxu0
      %1571 = vmatprep.mubr.f32.mxu0 0.0
      %1572 = vmatmul.mubr.f32.gmra.mxu0 %v1472
      %v1573 = vpop.f32.mrf.mxu0
      %v1574 = vadd.f32 %v1450, %v1573
      %v1575 = vpop.f32.mrf.mxu0
      %1576 = vmatprep.mubr.f32.mxu0 0.0
      %1577 = vmatmul.mubr.f32.gmra.mxu0 %v1475
      %v1578 = vpop.f32.mrf.mxu0
      %v1579 = vadd.f32 %v1450, %v1578
      %v1580 = vpop.f32.mrf.mxu0
      %1581 = vdwg.mxu0
      %v1582 = vadd.f32 %v1544, %v236
      %v1583 = vadd.f32 %v1549, %v237
      %v1584 = vadd.f32 %v1554, %v238
      %v1585 = vadd.f32 %v1559, %v239
      %v1586 = vadd.f32 %v1564, %v240
      %v1587 = vadd.f32 %v1569, %v241
      %v1588 = vadd.f32 %v1574, %v242
      %v1589 = vadd.f32 %v1579, %v243
      %1590 = vst.msk [vmem:[%s224] sm:$0xff] %vm294, %v1582
      %1591 = vst.msk [vmem:[%s224 + $0x8] sm:$0xff] %vm294, %v1583
      %1592 = vst.msk [vmem:[%s224 + $0x10] sm:$0xff] %vm294, %v1584
      %1593 = vst.msk [vmem:[%s224 + $0x18] sm:$0xff] %vm294, %v1585
      %1594 = vst.msk [vmem:[%s224 + $0x20] sm:$0xff] %vm294, %v1586
      %1595 = vst.msk [vmem:[%s224 + $0x28] sm:$0xff] %vm294, %v1587
      %1596 = vst.msk [vmem:[%s224 + $0x30] sm:$0xff] %vm294, %v1588
      %1597 = vst.msk [vmem:[%s224 + $0x38] sm:$0xff] %vm294, %v1589
      %p1598 = scmp.lt.s32.totalorder %s16, 1
      %s1599 = scalar_select %p1598, %s16, 1
      %s1600 = smul.addr %s1599, 8
      %s1601 = smul.addr %s1600, 8
      %s1602 = scalar_lea.vmem %s5, %s1601
      // Predicated region
      $region41: #{decoder_forward.7} parent=39 // pred_check
        %p1603 = pneg %p144
      $region42: #{decoder_forward.7} parent=39 // pred_check_branch
        %1605 = sbr.rel (%p1603) target = $region44
      $region43: #{decoder_forward.7} parent=39 // pred_region
        _
      $region44: #{decoder_forward.7} parent=39 // pred_fallthru
        _
    $region40: #{decoder_forward.7} parent=5 // pred_fallthru
      _
    %p1606 = scmp.le.s32.totalorder 2, %s11
    // Predicated region
    $region45: #{decoder_forward.7} parent=5 // pred_check
      %p1607 = pneg %p1606
    $region46: #{decoder_forward.7} parent=5 // pred_check_branch
      %1609 = sbr.rel (%p1607) target = $region48
    $region47: #{decoder_forward.7} parent=5 // pred_region
      %s1610 = ssub.s32 %s11, 2
      // Predicated region
      $region49: #{decoder_forward.7} parent=47 // pred_check
        %p1611 = pneg %p150
      $region50: #{decoder_forward.7} parent=47 // pred_check_branch
        %1613 = sbr.rel (%p1611) target = $region52
      $region51: #{decoder_forward.7} parent=47 // pred_region
        %p1614 = scmp.lt.s32.totalorder %s17, 1
        %s1615 = scalar_select %p1614, %s17, 1
        %s1616 = smul.addr %s1615, 8
        %s1617 = smul.addr %s1616, 8
        %s1618 = scalar_lea.vmem %s5, %s1617
      $region52: #{decoder_forward.7} parent=47 // pred_fallthru
        _
    $region48: #{decoder_forward.7} parent=5 // pred_fallthru
      _
  $region6: #{decoder_forward.7} parent=0 // loop_footer
    %s15 = sadd.s32 1, %s11
  $region7: #{decoder_forward.7} parent=0 // loop_footer_branch
    %10 = sbr.rel target = $region3
  $region8: #{decoder_forward.7} parent=0 // loop_exit
    _

// kernel: decoder_forward.8
$region0: #{decoder_forward.8}
  #allocation0 [shape = 'u32[]', space=smem, size = 0x4, offset = 0x4, fixed_abs, tag = 'smem constant byte address 0x4 - core index']
  #allocation1 [shape = 'u32[144,128]{1,0:T(1,128)}', space=vmem, size = 0x12000, scoped, tag = 'internal scratch']
  %s0 = inlined_call_operand.vmem [shape: f32[2,10,10,32], index: 0, kind: input, shape index: {}]
  %s1 = inlined_call_operand.vmem [shape: f32[4,4,32,16], index: 1, kind: input, shape index: {}]
  %s2 = inlined_call_operand.vmem [shape: f32[1,16], index: 2, kind: input, shape index: {}]
  %s3 = inlined_call_operand.vmem [shape: f32[2,2,2,64,16], index: 3, kind: output, shape index: {}]
  %s4 = sld [smem:[#allocation0]]
  $region45: #{decoder_forward.8} parent=0
    _
  %s6 = ssub.s32 1, %s4
  %s7 = scalar_select 0, %s6, %s4
  loop: start=0, step=1, limit=4
  $region2: #{decoder_forward.8} parent=0 // loop_pre_header
    _
  $region3: #{decoder_forward.8} parent=0 // loop_header
    %s9 = sphi 0, %s13
    %p10 = scmp.ge.s32.totalorder %s9, 4
    %s19 = sphi 0, %s21
    %s22 = sphi 0, %s19
    %s23 = sphi 0, %s22
    %s39 = sphi 0, %s23
    %s43 = sphi 0, %s43
    %s45 = sphi 0, %s43
    %s46 = sphi 0, %s45
    %s60 = sphi 0, %s46
    %s64 = sphi 0, %s64
    %s66 = sphi 0, %s64
    %s67 = sphi 0, %s66
    %s81 = sphi 0, %s67
    %s87 = sphi 0, %s89
    %s90 = sphi 0, %s87
    %s91 = sphi 0, %s90
    %s107 = sphi 0, %s91
  $region4: #{decoder_forward.8} parent=0 // loop_header_branch
    %12 = sbr.rel (%p10) target = $region8
  $region5: #{decoder_forward.8} parent=0 // loop_body
    %s14 = ssub.s32 %s9, 1
    %s15 = ssub.s32 %s9, 2
    %s16 = sadd.s32 %s9, 1
    %s17 = ssub.s32 %s9, %s16
    %p18 = scmp.eq.s32.totalorder %s17, 0
    %s20 = sadd.s32 %s19, 1
    %s21 = scalar_select %p18, %s19, %s20
    %p24 = pneg %p18
    %p25 = scmp.eq.s32.totalorder %s9, 1
    %p26 = por %p24, %p25
    %p27 = scmp.ne.s32.totalorder %s19, %s22
    %p28 = scmp.eq.s32.totalorder %s9, 0
    %p29 = por %p27, %p28
    %p30 = scmp.ne.s32.totalorder %s19, %s22
    %p31 = scmp.eq.s32.totalorder %s14, 1
    %p32 = por %p30, %p31
    %p33 = scmp.ne.s32.totalorder %s22, %s23
    %p34 = scmp.eq.s32.totalorder %s14, 0
    %p35 = por %p33, %p34
    %p36 = scmp.ne.s32.totalorder %s22, %s23
    %p37 = scmp.eq.s32.totalorder %s15, 1
    %p38 = por %p36, %p37
    %p40 = scmp.ne.s32.totalorder %s23, %s39
    %p41 = scmp.eq.s32.totalorder %s15, 0
    %p42 = por %p40, %p41
    %s44 = sadd.s32 %s43, 1
    %p47 = scmp.eq.s32.totalorder %s9, 1
    %p48 = scmp.ne.s32.totalorder %s43, %s45
    %p49 = scmp.eq.s32.totalorder %s9, 0
    %p50 = por %p48, %p49
    %p51 = scmp.ne.s32.totalorder %s43, %s45
    %p52 = scmp.eq.s32.totalorder %s14, 1
    %p53 = por %p51, %p52
    %p54 = scmp.ne.s32.totalorder %s45, %s46
    %p55 = scmp.eq.s32.totalorder %s14, 0
    %p56 = por %p54, %p55
    %p57 = scmp.ne.s32.totalorder %s45, %s46
    %p58 = scmp.eq.s32.totalorder %s15, 1
    %p59 = por %p57, %p58
    %p61 = scmp.ne.s32.totalorder %s46, %s60
    %p62 = scmp.eq.s32.totalorder %s15, 0
    %p63 = por %p61, %p62
    %s65 = sadd.s32 %s64, 1
    %p68 = scmp.eq.s32.totalorder %s9, 1
    %p69 = scmp.ne.s32.totalorder %s64, %s66
    %p70 = scmp.eq.s32.totalorder %s9, 0
    %p71 = por %p69, %p70
    %p72 = scmp.ne.s32.totalorder %s64, %s66
    %p73 = scmp.eq.s32.totalorder %s14, 1
    %p74 = por %p72, %p73
    %p75 = scmp.ne.s32.totalorder %s66, %s67
    %p76 = scmp.eq.s32.totalorder %s14, 0
    %p77 = por %p75, %p76
    %p78 = scmp.ne.s32.totalorder %s66, %s67
    %p79 = scmp.eq.s32.totalorder %s15, 1
    %p80 = por %p78, %p79
    %p82 = scmp.ne.s32.totalorder %s67, %s81
    %p83 = scmp.eq.s32.totalorder %s15, 0
    %p84 = por %p82, %p83
    %s85 = ssub.s32 %s9, %s16
    %p86 = scmp.eq.s32.totalorder %s85, 0
    %s88 = sadd.s32 %s87, 1
    %s89 = scalar_select %p86, %s87, %s88
    %p92 = pneg %p86
    %p93 = scmp.eq.s32.totalorder %s9, 1
    %p94 = por %p92, %p93
    %p95 = scmp.ne.s32.totalorder %s87, %s90
    %p96 = scmp.eq.s32.totalorder %s9, 0
    %p97 = por %p95, %p96
    %p98 = scmp.ne.s32.totalorder %s87, %s90
    %p99 = scmp.eq.s32.totalorder %s14, 1
    %p100 = por %p98, %p99
    %p101 = scmp.ne.s32.totalorder %s90, %s91
    %p102 = scmp.eq.s32.totalorder %s14, 0
    %p103 = por %p101, %p102
    %p104 = scmp.ne.s32.totalorder %s90, %s91
    %p105 = scmp.eq.s32.totalorder %s15, 1
    %p106 = por %p104, %p105
    %p108 = scmp.ne.s32.totalorder %s91, %s107
    %p109 = scmp.eq.s32.totalorder %s15, 0
    %p110 = por %p108, %p109
    %p111 = scmp.le.s32.totalorder 1, %s9
    %p112 = scmp.lt.s32.totalorder %s9, 3
    %p113 = pnand %p111, %p112
    %p114 = pneg %p113
    // Predicated region
    $region9: #{decoder_forward.8} parent=5 // pred_check
      _
    $region10: #{decoder_forward.8} parent=5 // pred_check_branch
      %116 = sbr.rel (%p113) target = $region12
    $region11: #{decoder_forward.8} parent=5 // pred_region
      %s117 = ssub.s32 %s9, 1
      // Predicated region
      $region13: #{decoder_forward.8} parent=11 // pred_check
        %p118 = pneg %p56
      $region14: #{decoder_forward.8} parent=11 // pred_check_branch
        %120 = sbr.rel (%p118) target = $region16
      $region15: #{decoder_forward.8} parent=11 // pred_region
        _
      $region16: #{decoder_forward.8} parent=11 // pred_fallthru
        _
      // Predicated region
      $region17: #{decoder_forward.8} parent=11 // pred_check
        %p121 = pneg %p77
      $region18: #{decoder_forward.8} parent=11 // pred_check_branch
        %123 = sbr.rel (%p121) target = $region20
      $region19: #{decoder_forward.8} parent=11 // pred_region
        _
      $region20: #{decoder_forward.8} parent=11 // pred_fallthru
        _
    $region12: #{decoder_forward.8} parent=5 // pred_fallthru
      _
    %p124 = scmp.lt.s32.totalorder %s9, 2
    // Predicated region
    $region21: #{decoder_forward.8} parent=5 // pred_check
      %p125 = pneg %p124
    $region22: #{decoder_forward.8} parent=5 // pred_check_branch
      %127 = sbr.rel (%p125) target = $region24
    $region23: #{decoder_forward.8} parent=5 // pred_region
      // Predicated region
      $region25: #{decoder_forward.8} parent=23 // pred_check
        %p128 = pneg %p29
      $region26: #{decoder_forward.8} parent=23 // pred_check_branch
        %130 = sbr.rel (%p128) target = $region28
      $region27: #{decoder_forward.8} parent=23 // pred_region
        %p131 = scmp.lt.s32.totalorder %s9, 1
        %s132 = scalar_select %p131, %s9, 1
        %s133 = smul.addr %s132, 20
        %s134 = smul.addr %s133, 8
        %s135 = scalar_lea.vmem %s0, %s134
      $region28: #{decoder_forward.8} parent=23 // pred_fallthru
        _
    $region24: #{decoder_forward.8} parent=5 // pred_fallthru
      _
    %p136 = scmp.le.s32.totalorder 1, %s9
    %p137 = scmp.lt.s32.totalorder %s9, 3
    %p138 = pnand %p136, %p137
    %p139 = pneg %p138
    // Predicated region
    $region29: #{decoder_forward.8} parent=5 // pred_check
      _
    $region30: #{decoder_forward.8} parent=5 // pred_check_branch
      %141 = sbr.rel (%p138) target = $region32
    $region31: #{decoder_forward.8} parent=5 // pred_region
      %s142 = ssub.s32 %s9, 1
      %p143 = scmp.lt.s32.totalorder %s14, 1
      %s144 = scalar_select %p143, %s14, 1
      %s145 = smul.addr %s144, 20
      %s146 = smul.addr %s145, 8
      %s147 = scalar_lea.vmem %s0, %s146
      %p148 = pneg %p35
      %p149 = pneg %p32
      %p150 = pneg %p56
      %p151 = pneg %p53
      %p152 = pneg %p77
      %p153 = pneg %p74
      %p154 = pneg %p103
      %p155 = pneg %p100
      %p156 = scmp.lt.s32.totalorder %s14, 1
      %s157 = scalar_select %p156, %s14, 1
      %s158 = smul.addr %s157, 32
      %s159 = smul.addr %s158, 8
      %s160 = scalar_lea.vmem %s3, %s159
      %p161 = scmp.lt.s32.totalorder %s14, 1
      %s162 = scalar_select %p161, %s14, 1
      %s163 = smul.addr %s162, 20
      %s164 = smul.addr %s163, 8
      %s165 = scalar_lea.vmem %s0, %s164
      %p166 = scmp.lt.s32.totalorder %s14, 1
      %s167 = scalar_select %p166, %s14, 1
      %s168 = smul.addr %s167, 32
      %s169 = smul.addr %s168, 8
      %s170 = scalar_lea.vmem %s3, %s169
      %v171 = vld [vmem:[%s165] sm:$0xff]
      %v172 = vld [vmem:[%s165 + $0x10] sm:$0xff]
      %v173 = vld [vmem:[%s165 + $0x20] sm:$0xff]
      %v174 = vld [vmem:[%s165 + $0x30] sm:$0xff]
      %v175 = vld [vmem:[%s165 + $0x40] sm:$0xff]
      %v176 = vld [vmem:[%s165 + $0x50] sm:$0xff]
      %v177 = vld [vmem:[%s165 + $0x60] sm:$0xff]
      %v178 = vld [vmem:[%s165 + $0x70] sm:$0xff]
      %v179 = vld [vmem:[%s165 + $0x80] sm:$0xff]
      %v180 = vld [vmem:[%s165 + $0x90] sm:$0xff]
      %v181 = vld [vmem:[%s165 + $0x1] sm:$0xff]
      %v182 = vld [vmem:[%s165 + $0x11] sm:$0xff]
      %v183 = vld [vmem:[%s165 + $0x21] sm:$0xff]
      %v184 = vld [vmem:[%s165 + $0x31] sm:$0xff]
      %v185 = vld [vmem:[%s165 + $0x41] sm:$0xff]
      %v186 = vld [vmem:[%s165 + $0x51] sm:$0xff]
      %v187 = vld [vmem:[%s165 + $0x61] sm:$0xff]
      %v188 = vld [vmem:[%s165 + $0x71] sm:$0xff]
      %v189 = vld [vmem:[%s165 + $0x81] sm:$0xff]
      %v190 = vld [vmem:[%s165 + $0x91] sm:$0xff]
      %v191 = vld [vmem:[%s165 + $0x2] sm:$0xff]
      %v192 = vld [vmem:[%s165 + $0x12] sm:$0xff]
      %v193 = vld [vmem:[%s165 + $0x22] sm:$0xff]
      %v194 = vld [vmem:[%s165 + $0x32] sm:$0xff]
      %v195 = vld [vmem:[%s165 + $0x42] sm:$0xff]
      %v196 = vld [vmem:[%s165 + $0x52] sm:$0xff]
      %v197 = vld [vmem:[%s165 + $0x62] sm:$0xff]
      %v198 = vld [vmem:[%s165 + $0x72] sm:$0xff]
      %v199 = vld [vmem:[%s165 + $0x82] sm:$0xff]
      %v200 = vld [vmem:[%s165 + $0x92] sm:$0xff]
      %v201 = vmax.f32 %v171, 0.0
      %v202 = vmax.f32 %v172, 0.0
      %v203 = vmax.f32 %v173, 0.0
      %v204 = vmax.f32 %v174, 0.0
      %v205 = vmax.f32 %v175, 0.0
      %v206 = vmax.f32 %v176, 0.0
      %v207 = vmax.f32 %v177, 0.0
      %v208 = vmax.f32 %v178, 0.0
      %v209 = vmax.f32 %v179, 0.0
      %v210 = vmax.f32 %v180, 0.0
      %v211 = vmax.f32 %v181, 0.0
      %v212 = vmax.f32 %v182, 0.0
      %v213 = vmax.f32 %v183, 0.0
      %v214 = vmax.f32 %v184, 0.0
      %v215 = vmax.f32 %v185, 0.0
      %v216 = vmax.f32 %v186, 0.0
      %v217 = vmax.f32 %v187, 0.0
      %v218 = vmax.f32 %v188, 0.0
      %v219 = vmax.f32 %v189, 0.0
      %v220 = vmax.f32 %v190, 0.0
      %v221 = vmax.f32 %v191, 0.0
      %v222 = vmax.f32 %v192, 0.0
      %v223 = vmax.f32 %v193, 0.0
      %v224 = vmax.f32 %v194, 0.0
      %v225 = vmax.f32 %v195, 0.0
      %v226 = vmax.f32 %v196, 0.0
      %v227 = vmax.f32 %v197, 0.0
      %v228 = vmax.f32 %v198, 0.0
      %v229 = vmax.f32 %v199, 0.0
      %v230 = vmax.f32 %v200, 0.0
      %s231 = scalar_lea.vmem %s1, 480
      %v232 = vld [vmem:[%s231] sm:$0xff]
      %v233 = vld [vmem:[%s231 + $0x8] sm:$0xff]
      %v234 = vld [vmem:[%s231 + $0x10] sm:$0xff]
      %v235 = vld [vmem:[%s231 + $0x18] sm:$0xff]
      %s236 = scalar_lea.vmem %s1, 416
      %v237 = vld [vmem:[%s236] sm:$0xff]
      %v238 = vld [vmem:[%s236 + $0x8] sm:$0xff]
      %v239 = vld [vmem:[%s236 + $0x10] sm:$0xff]
      %v240 = vld [vmem:[%s236 + $0x18] sm:$0xff]
      %vm241 = vcmask 261120
      %v243 = vsel %vm241, %v211, 0
      %v246 = vsel %vm241, %v212, 0
      %v249 = vsel %vm241, %v213, 0
      %v252 = vsel %vm241, %v214, 0
      %v255 = vsel %vm241, %v215, 0
      %v258 = vsel %vm241, %v216, 0
      %v261 = vsel %vm241, %v217, 0
      %v264 = vsel %vm241, %v218, 0
      %266 = vmatprep.subr.mxu0 0.0
      %267 = vmatpush1.msra.mxu0 0.0
      %268 = vmatprep.subr.mxu0 0.0
      %269 = vmatpush1.msra.mxu0 0.0
      %270 = vmatprep.subr.mxu0 0.0
      %271 = vmatpush1.msra.mxu0 0.0
      %272 = vmatprep.subr.mxu0 0.0
      %273 = vmatpush1.msra.mxu0 0.0
      %274 = vmatprep.subr.mxu0 0.0
      %275 = vmatpush1.msra.mxu0 0.0
      %276 = vmatprep.subr.mxu0 0.0
      %277 = vmatpush1.msra.mxu0 0.0
      %278 = vmatprep.subr.mxu0 0.0
      %279 = vmatpush1.msra.mxu0 0.0
      %280 = vmatprep.subr.mxu0 0.0
      %281 = vmatpush1.msra.mxu0 0.0
      %282 = vmatprep.subr.mxu0 0.0
      %283 = vmatpush1.msra.mxu0 0.0
      %284 = vmatprep.subr.mxu0 0.0
      %285 = vmatpush1.msra.mxu0 0.0
      %286 = vmatprep.subr.mxu0 0.0
      %287 = vmatpush1.msra.mxu0 0.0
      %288 = vmatprep.subr.mxu0 0.0
      %289 = vmatpush1.msra.mxu0 0.0
      %290 = vmatprep.subr.mxu0 0.0
      %291 = vmatpush1.msra.mxu0 %v240
      %292 = vmatprep.subr.mxu0 0.0
      %293 = vmatpush1.msra.mxu0 %v239
      %294 = vmatprep.subr.mxu0 0.0
      %295 = vmatpush1.msra.mxu0 %v238
      %296 = vmatprep.subr.mxu0 0.0
      %297 = vmatpush1.msra.mxu0 %v237
      %298 = vmatprep.subr.mxu0 0.0
      %299 = vmatpush2.msra.mxu0 0.0
      %300 = vmatprep.subr.mxu0 0.0
      %301 = vmatpush2.msra.mxu0 0.0
      %302 = vmatprep.subr.mxu0 0.0
      %303 = vmatpush2.msra.mxu0 0.0
      %304 = vmatprep.subr.mxu0 0.0
      %305 = vmatpush2.msra.mxu0 0.0
      %306 = vmatprep.subr.mxu0 0.0
      %307 = vmatpush2.msra.mxu0 0.0
      %308 = vmatprep.subr.mxu0 0.0
      %309 = vmatpush2.msra.mxu0 0.0
      %310 = vmatprep.subr.mxu0 0.0
      %311 = vmatpush2.msra.mxu0 0.0
      %312 = vmatprep.subr.mxu0 0.0
      %313 = vmatpush2.msra.mxu0 0.0
      %314 = vmatprep.subr.mxu0 0.0
      %315 = vmatpush2.msra.mxu0 0.0
      %316 = vmatprep.subr.mxu0 0.0
      %317 = vmatpush2.msra.mxu0 0.0
      %318 = vmatprep.subr.mxu0 0.0
      %319 = vmatpush2.msra.mxu0 0.0
      %320 = vmatprep.subr.mxu0 0.0
      %321 = vmatpush2.msra.mxu0 0.0
      %322 = vmatprep.subr.mxu0 0.0
      %323 = vmatpush2.msra.mxu0 0.0
      %324 = vmatprep.subr.mxu0 0.0
      %325 = vmatpush2.msra.mxu0 0.0
      %326 = vmatprep.subr.mxu0 0.0
      %327 = vmatpush2.msra.mxu0 0.0
      %328 = vmatprep.subr.mxu0 0.0
      %329 = vmatpush2.msra.mxu0 0.0
      %330 = vmatprep.mubr.f32.mxu0 0.0
      %331 = vmatmul.mubr.f32.gmra.mxu0 %v243
      %v332 = vpop.f32.mrf.mxu0
      %v333 = vadd.f32 0.0, %v332
      %v334 = vpop.f32.mrf.mxu0
      %335 = vmatprep.mubr.f32.mxu0 0.0
      %336 = vmatmul.mubr.f32.gmra.mxu0 %v246
      %v337 = vpop.f32.mrf.mxu0
      %v338 = vadd.f32 0.0, %v337
      %v339 = vpop.f32.mrf.mxu0
      %340 = vmatprep.mubr.f32.mxu0 0.0
      %341 = vmatmul.mubr.f32.gmra.mxu0 %v249
      %v342 = vpop.f32.mrf.mxu0
      %v343 = vadd.f32 0.0, %v342
      %v344 = vpop.f32.mrf.mxu0
      %345 = vmatprep.mubr.f32.mxu0 0.0
      %346 = vmatmul.mubr.f32.gmra.mxu0 %v252
      %v347 = vpop.f32.mrf.mxu0
      %v348 = vadd.f32 0.0, %v347
      %v349 = vpop.f32.mrf.mxu0
      %350 = vmatprep.mubr.f32.mxu0 0.0
      %351 = vmatmul.mubr.f32.gmra.mxu0 %v255
      %v352 = vpop.f32.mrf.mxu0
      %v353 = vadd.f32 0.0, %v352
      %v354 = vpop.f32.mrf.mxu0
      %355 = vmatprep.mubr.f32.mxu0 0.0
      %356 = vmatmul.mubr.f32.gmra.mxu0 %v258
      %v357 = vpop.f32.mrf.mxu0
      %v358 = vadd.f32 0.0, %v357
      %v359 = vpop.f32.mrf.mxu0
      %360 = vmatprep.mubr.f32.mxu0 0.0
      %361 = vmatmul.mubr.f32.gmra.mxu0 %v261
      %v362 = vpop.f32.mrf.mxu0
      %v363 = vadd.f32 0.0, %v362
      %v364 = vpop.f32.mrf.mxu0
      %365 = vmatprep.mubr.f32.mxu0 0.0
      %366 = vmatmul.mubr.f32.gmra.mxu0 %v264
      %v367 = vpop.f32.mrf.mxu0
      %v368 = vadd.f32 0.0, %v367
      %v369 = vpop.f32.mrf.mxu0
      %370 = vdwg.mxu0
      %v372 = vsel %vm241, %v201, 0
      %v375 = vsel %vm241, %v202, 0
      %v378 = vsel %vm241, %v203, 0
      %v381 = vsel %vm241, %v204, 0
      %v384 = vsel %vm241, %v205, 0
      %v387 = vsel %vm241, %v206, 0
      %v390 = vsel %vm241, %v207, 0
      %v393 = vsel %vm241, %v208, 0
      %395 = vmatprep.subr.mxu0 0.0
      %396 = vmatpush1.msra.mxu0 0.0
      %397 = vmatprep.subr.mxu0 0.0
      %398 = vmatpush1.msra.mxu0 0.0
      %399 = vmatprep.subr.mxu0 0.0
      %400 = vmatpush1.msra.mxu0 0.0
      %401 = vmatprep.subr.mxu0 0.0
      %402 = vmatpush1.msra.mxu0 0.0
      %403 = vmatprep.subr.mxu0 0.0
      %404 = vmatpush1.msra.mxu0 0.0
      %405 = vmatprep.subr.mxu0 0.0
      %406 = vmatpush1.msra.mxu0 0.0
      %407 = vmatprep.subr.mxu0 0.0
      %408 = vmatpush1.msra.mxu0 0.0
      %409 = vmatprep.subr.mxu0 0.0
      %410 = vmatpush1.msra.mxu0 0.0
      %411 = vmatprep.subr.mxu0 0.0
      %412 = vmatpush1.msra.mxu0 0.0
      %413 = vmatprep.subr.mxu0 0.0
      %414 = vmatpush1.msra.mxu0 0.0
      %415 = vmatprep.subr.mxu0 0.0
      %416 = vmatpush1.msra.mxu0 0.0
      %417 = vmatprep.subr.mxu0 0.0
      %418 = vmatpush1.msra.mxu0 0.0
      %419 = vmatprep.subr.mxu0 0.0
      %420 = vmatpush1.msra.mxu0 %v235
      %421 = vmatprep.subr.mxu0 0.0
      %422 = vmatpush1.msra.mxu0 %v234
      %423 = vmatprep.subr.mxu0 0.0
      %424 = vmatpush1.msra.mxu0 %v233
      %425 = vmatprep.subr.mxu0 0.0
      %426 = vmatpush1.msra.mxu0 %v232
      %427 = vmatprep.subr.mxu0 0.0
      %428 = vmatpush2.msra.mxu0 0.0
      %429 = vmatprep.subr.mxu0 0.0
      %430 = vmatpush2.msra.mxu0 0.0
      %431 = vmatprep.subr.mxu0 0.0
      %432 = vmatpush2.msra.mxu0 0.0
      %433 = vmatprep.subr.mxu0 0.0
      %434 = vmatpush2.msra.mxu0 0.0
      %435 = vmatprep.subr.mxu0 0.0
      %436 = vmatpush2.msra.mxu0 0.0
      %437 = vmatprep.subr.mxu0 0.0
      %438 = vmatpush2.msra.mxu0 0.0
      %439 = vmatprep.subr.mxu0 0.0
      %440 = vmatpush2.msra.mxu0 0.0
      %441 = vmatprep.subr.mxu0 0.0
      %442 = vmatpush2.msra.mxu0 0.0
      %443 = vmatprep.subr.mxu0 0.0
      %444 = vmatpush2.msra.mxu0 0.0
      %445 = vmatprep.subr.mxu0 0.0
      %446 = vmatpush2.msra.mxu0 0.0
      %447 = vmatprep.subr.mxu0 0.0
      %448 = vmatpush2.msra.mxu0 0.0
      %449 = vmatprep.subr.mxu0 0.0
      %450 = vmatpush2.msra.mxu0 0.0
      %451 = vmatprep.subr.mxu0 0.0
      %452 = vmatpush2.msra.mxu0 0.0
      %453 = vmatprep.subr.mxu0 0.0
      %454 = vmatpush2.msra.mxu0 0.0
      %455 = vmatprep.subr.mxu0 0.0
      %456 = vmatpush2.msra.mxu0 0.0
      %457 = vmatprep.subr.mxu0 0.0
      %458 = vmatpush2.msra.mxu0 0.0
      %459 = vmatprep.mubr.f32.mxu0 0.0
      %460 = vmatmul.mubr.f32.gmra.mxu0 %v372
      %v461 = vpop.f32.mrf.mxu0
      %v462 = vadd.f32 %v333, %v461
      %v463 = vpop.f32.mrf.mxu0
      %464 = vmatprep.mubr.f32.mxu0 0.0
      %465 = vmatmul.mubr.f32.gmra.mxu0 %v375
      %v466 = vpop.f32.mrf.mxu0
      %v467 = vadd.f32 %v338, %v466
      %v468 = vpop.f32.mrf.mxu0
      %469 = vmatprep.mubr.f32.mxu0 0.0
      %470 = vmatmul.mubr.f32.gmra.mxu0 %v378
      %v471 = vpop.f32.mrf.mxu0
      %v472 = vadd.f32 %v343, %v471
      %v473 = vpop.f32.mrf.mxu0
      %474 = vmatprep.mubr.f32.mxu0 0.0
      %475 = vmatmul.mubr.f32.gmra.mxu0 %v381
      %v476 = vpop.f32.mrf.mxu0
      %v477 = vadd.f32 %v348, %v476
      %v478 = vpop.f32.mrf.mxu0
      %479 = vmatprep.mubr.f32.mxu0 0.0
      %480 = vmatmul.mubr.f32.gmra.mxu0 %v384
      %v481 = vpop.f32.mrf.mxu0
      %v482 = vadd.f32 %v353, %v481
      %v483 = vpop.f32.mrf.mxu0
      %484 = vmatprep.mubr.f32.mxu0 0.0
      %485 = vmatmul.mubr.f32.gmra.mxu0 %v387
      %v486 = vpop.f32.mrf.mxu0
      %v487 = vadd.f32 %v358, %v486
      %v488 = vpop.f32.mrf.mxu0
      %489 = vmatprep.mubr.f32.mxu0 0.0
      %490 = vmatmul.mubr.f32.gmra.mxu0 %v390
      %v491 = vpop.f32.mrf.mxu0
      %v492 = vadd.f32 %v363, %v491
      %v493 = vpop.f32.mrf.mxu0
      %494 = vmatprep.mubr.f32.mxu0 0.0
      %495 = vmatmul.mubr.f32.gmra.mxu0 %v393
      %v496 = vpop.f32.mrf.mxu0
      %v497 = vadd.f32 %v368, %v496
      %v498 = vpop.f32.mrf.mxu0
      %499 = vdwg.mxu0
      %s500 = scalar_lea.vmem %s1, 224
      %v501 = vld [vmem:[%s500] sm:$0xff]
      %v502 = vld [vmem:[%s500 + $0x8] sm:$0xff]
      %v503 = vld [vmem:[%s500 + $0x10] sm:$0xff]
      %v504 = vld [vmem:[%s500 + $0x18] sm:$0xff]
      %v506 = vsel %vm241, %v209, 0
      %508 = vmatprep.subr.mxu0 0.0
      %509 = vmatpush1.msra.mxu0 0.0
      %510 = vmatprep.subr.mxu0 0.0
      %511 = vmatpush1.msra.mxu0 0.0
      %512 = vmatprep.subr.mxu0 0.0
      %513 = vmatpush1.msra.mxu0 0.0
      %514 = vmatprep.subr.mxu0 0.0
      %515 = vmatpush1.msra.mxu0 0.0
      %516 = vmatprep.subr.mxu0 0.0
      %517 = vmatpush1.msra.mxu0 0.0
      %518 = vmatprep.subr.mxu0 0.0
      %519 = vmatpush1.msra.mxu0 0.0
      %520 = vmatprep.subr.mxu0 0.0
      %521 = vmatpush1.msra.mxu0 0.0
      %522 = vmatprep.subr.mxu0 0.0
      %523 = vmatpush1.msra.mxu0 0.0
      %524 = vmatprep.subr.mxu0 0.0
      %525 = vmatpush1.msra.mxu0 0.0
      %526 = vmatprep.subr.mxu0 0.0
      %527 = vmatpush1.msra.mxu0 0.0
      %528 = vmatprep.subr.mxu0 0.0
      %529 = vmatpush1.msra.mxu0 0.0
      %530 = vmatprep.subr.mxu0 0.0
      %531 = vmatpush1.msra.mxu0 0.0
      %532 = vmatprep.subr.mxu0 0.0
      %533 = vmatpush1.msra.mxu0 %v504
      %534 = vmatprep.subr.mxu0 0.0
      %535 = vmatpush1.msra.mxu0 %v503
      %536 = vmatprep.subr.mxu0 0.0
      %537 = vmatpush1.msra.mxu0 %v502
      %538 = vmatprep.subr.mxu0 0.0
      %539 = vmatpush1.msra.mxu0 %v501
      %540 = vmatprep.subr.mxu0 0.0
      %541 = vmatpush2.msra.mxu0 0.0
      %542 = vmatprep.subr.mxu0 0.0
      %543 = vmatpush2.msra.mxu0 0.0
      %544 = vmatprep.subr.mxu0 0.0
      %545 = vmatpush2.msra.mxu0 0.0
      %546 = vmatprep.subr.mxu0 0.0
      %547 = vmatpush2.msra.mxu0 0.0
      %548 = vmatprep.subr.mxu0 0.0
      %549 = vmatpush2.msra.mxu0 0.0
      %550 = vmatprep.subr.mxu0 0.0
      %551 = vmatpush2.msra.mxu0 0.0
      %552 = vmatprep.subr.mxu0 0.0
      %553 = vmatpush2.msra.mxu0 0.0
      %554 = vmatprep.subr.mxu0 0.0
      %555 = vmatpush2.msra.mxu0 0.0
      %556 = vmatprep.subr.mxu0 0.0
      %557 = vmatpush2.msra.mxu0 0.0
      %558 = vmatprep.subr.mxu0 0.0
      %559 = vmatpush2.msra.mxu0 0.0
      %560 = vmatprep.subr.mxu0 0.0
      %561 = vmatpush2.msra.mxu0 0.0
      %562 = vmatprep.subr.mxu0 0.0
      %563 = vmatpush2.msra.mxu0 0.0
      %564 = vmatprep.subr.mxu0 0.0
      %565 = vmatpush2.msra.mxu0 0.0
      %566 = vmatprep.subr.mxu0 0.0
      %567 = vmatpush2.msra.mxu0 0.0
      %568 = vmatprep.subr.mxu0 0.0
      %569 = vmatpush2.msra.mxu0 0.0
      %570 = vmatprep.subr.mxu0 0.0
      %571 = vmatpush2.msra.mxu0 0.0
      %572 = vmatprep.mubr.f32.mxu0 0.0
      %573 = vmatmul.mubr.f32.gmra.mxu0 %v375
      %v574 = vpop.f32.mrf.mxu0
      %v575 = vadd.f32 0.0, %v574
      %v576 = vpop.f32.mrf.mxu0
      %577 = vmatprep.mubr.f32.mxu0 0.0
      %578 = vmatmul.mubr.f32.gmra.mxu0 %v378
      %v579 = vpop.f32.mrf.mxu0
      %v580 = vadd.f32 0.0, %v579
      %v581 = vpop.f32.mrf.mxu0
      %582 = vmatprep.mubr.f32.mxu0 0.0
      %583 = vmatmul.mubr.f32.gmra.mxu0 %v381
      %v584 = vpop.f32.mrf.mxu0
      %v585 = vadd.f32 0.0, %v584
      %v586 = vpop.f32.mrf.mxu0
      %587 = vmatprep.mubr.f32.mxu0 0.0
      %588 = vmatmul.mubr.f32.gmra.mxu0 %v384
      %v589 = vpop.f32.mrf.mxu0
      %v590 = vadd.f32 0.0, %v589
      %v591 = vpop.f32.mrf.mxu0
      %592 = vmatprep.mubr.f32.mxu0 0.0
      %593 = vmatmul.mubr.f32.gmra.mxu0 %v387
      %v594 = vpop.f32.mrf.mxu0
      %v595 = vadd.f32 0.0, %v594
      %v596 = vpop.f32.mrf.mxu0
      %597 = vmatprep.mubr.f32.mxu0 0.0
      %598 = vmatmul.mubr.f32.gmra.mxu0 %v390
      %v599 = vpop.f32.mrf.mxu0
      %v600 = vadd.f32 0.0, %v599
      %v601 = vpop.f32.mrf.mxu0
      %602 = vmatprep.mubr.f32.mxu0 0.0
      %603 = vmatmul.mubr.f32.gmra.mxu0 %v393
      %v604 = vpop.f32.mrf.mxu0
      %v605 = vadd.f32 0.0, %v604
      %v606 = vpop.f32.mrf.mxu0
      %607 = vmatprep.mubr.f32.mxu0 0.0
      %608 = vmatmul.mubr.f32.gmra.mxu0 %v506
      %v609 = vpop.f32.mrf.mxu0
      %v610 = vadd.f32 0.0, %v609
      %v611 = vpop.f32.mrf.mxu0
      %612 = vdwg.mxu0
      %v613 = vadd.f32 %v462, %v575
      %v614 = vadd.f32 %v467, %v580
      %v615 = vadd.f32 %v472, %v585
      %v616 = vadd.f32 %v477, %v590
      %v617 = vadd.f32 %v482, %v595
      %v618 = vadd.f32 %v487, %v600
      %v619 = vadd.f32 %v492, %v605
      %v620 = vadd.f32 %v497, %v610
      %s621 = scalar_lea.vmem %s1, 160
      %v622 = vld [vmem:[%s621] sm:$0xff]
      %v623 = vld [vmem:[%s621 + $0x8] sm:$0xff]
      %v624 = vld [vmem:[%s621 + $0x10] sm:$0xff]
      %v625 = vld [vmem:[%s621 + $0x18] sm:$0xff]
      %v627 = vsel %vm241, %v219, 0
      %629 = vmatprep.subr.mxu0 0.0
      %630 = vmatpush1.msra.mxu0 0.0
      %631 = vmatprep.subr.mxu0 0.0
      %632 = vmatpush1.msra.mxu0 0.0
      %633 = vmatprep.subr.mxu0 0.0
      %634 = vmatpush1.msra.mxu0 0.0
      %635 = vmatprep.subr.mxu0 0.0
      %636 = vmatpush1.msra.mxu0 0.0
      %637 = vmatprep.subr.mxu0 0.0
      %638 = vmatpush1.msra.mxu0 0.0
      %639 = vmatprep.subr.mxu0 0.0
      %640 = vmatpush1.msra.mxu0 0.0
      %641 = vmatprep.subr.mxu0 0.0
      %642 = vmatpush1.msra.mxu0 0.0
      %643 = vmatprep.subr.mxu0 0.0
      %644 = vmatpush1.msra.mxu0 0.0
      %645 = vmatprep.subr.mxu0 0.0
      %646 = vmatpush1.msra.mxu0 0.0
      %647 = vmatprep.subr.mxu0 0.0
      %648 = vmatpush1.msra.mxu0 0.0
      %649 = vmatprep.subr.mxu0 0.0
      %650 = vmatpush1.msra.mxu0 0.0
      %651 = vmatprep.subr.mxu0 0.0
      %652 = vmatpush1.msra.mxu0 0.0
      %653 = vmatprep.subr.mxu0 0.0
      %654 = vmatpush1.msra.mxu0 %v625
      %655 = vmatprep.subr.mxu0 0.0
      %656 = vmatpush1.msra.mxu0 %v624
      %657 = vmatprep.subr.mxu0 0.0
      %658 = vmatpush1.msra.mxu0 %v623
      %659 = vmatprep.subr.mxu0 0.0
      %660 = vmatpush1.msra.mxu0 %v622
      %661 = vmatprep.subr.mxu0 0.0
      %662 = vmatpush2.msra.mxu0 0.0
      %663 = vmatprep.subr.mxu0 0.0
      %664 = vmatpush2.msra.mxu0 0.0
      %665 = vmatprep.subr.mxu0 0.0
      %666 = vmatpush2.msra.mxu0 0.0
      %667 = vmatprep.subr.mxu0 0.0
      %668 = vmatpush2.msra.mxu0 0.0
      %669 = vmatprep.subr.mxu0 0.0
      %670 = vmatpush2.msra.mxu0 0.0
      %671 = vmatprep.subr.mxu0 0.0
      %672 = vmatpush2.msra.mxu0 0.0
      %673 = vmatprep.subr.mxu0 0.0
      %674 = vmatpush2.msra.mxu0 0.0
      %675 = vmatprep.subr.mxu0 0.0
      %676 = vmatpush2.msra.mxu0 0.0
      %677 = vmatprep.subr.mxu0 0.0
      %678 = vmatpush2.msra.mxu0 0.0
      %679 = vmatprep.subr.mxu0 0.0
      %680 = vmatpush2.msra.mxu0 0.0
      %681 = vmatprep.subr.mxu0 0.0
      %682 = vmatpush2.msra.mxu0 0.0
      %683 = vmatprep.subr.mxu0 0.0
      %684 = vmatpush2.msra.mxu0 0.0
      %685 = vmatprep.subr.mxu0 0.0
      %686 = vmatpush2.msra.mxu0 0.0
      %687 = vmatprep.subr.mxu0 0.0
      %688 = vmatpush2.msra.mxu0 0.0
      %689 = vmatprep.subr.mxu0 0.0
      %690 = vmatpush2.msra.mxu0 0.0
      %691 = vmatprep.subr.mxu0 0.0
      %692 = vmatpush2.msra.mxu0 0.0
      %693 = vmatprep.mubr.f32.mxu0 0.0
      %694 = vmatmul.mubr.f32.gmra.mxu0 %v246
      %v695 = vpop.f32.mrf.mxu0
      %v696 = vadd.f32 0.0, %v695
      %v697 = vpop.f32.mrf.mxu0
      %698 = vmatprep.mubr.f32.mxu0 0.0
      %699 = vmatmul.mubr.f32.gmra.mxu0 %v249
      %v700 = vpop.f32.mrf.mxu0
      %v701 = vadd.f32 0.0, %v700
      %v702 = vpop.f32.mrf.mxu0
      %703 = vmatprep.mubr.f32.mxu0 0.0
      %704 = vmatmul.mubr.f32.gmra.mxu0 %v252
      %v705 = vpop.f32.mrf.mxu0
      %v706 = vadd.f32 0.0, %v705
      %v707 = vpop.f32.mrf.mxu0
      %708 = vmatprep.mubr.f32.mxu0 0.0
      %709 = vmatmul.mubr.f32.gmra.mxu0 %v255
      %v710 = vpop.f32.mrf.mxu0
      %v711 = vadd.f32 0.0, %v710
      %v712 = vpop.f32.mrf.mxu0
      %713 = vmatprep.mubr.f32.mxu0 0.0
      %714 = vmatmul.mubr.f32.gmra.mxu0 %v258
      %v715 = vpop.f32.mrf.mxu0
      %v716 = vadd.f32 0.0, %v715
      %v717 = vpop.f32.mrf.mxu0
      %718 = vmatprep.mubr.f32.mxu0 0.0
      %719 = vmatmul.mubr.f32.gmra.mxu0 %v261
      %v720 = vpop.f32.mrf.mxu0
      %v721 = vadd.f32 0.0, %v720
      %v722 = vpop.f32.mrf.mxu0
      %723 = vmatprep.mubr.f32.mxu0 0.0
      %724 = vmatmul.mubr.f32.gmra.mxu0 %v264
      %v725 = vpop.f32.mrf.mxu0
      %v726 = vadd.f32 0.0, %v725
      %v727 = vpop.f32.mrf.mxu0
      %728 = vmatprep.mubr.f32.mxu0 0.0
      %729 = vmatmul.mubr.f32.gmra.mxu0 %v627
      %v730 = vpop.f32.mrf.mxu0
      %v731 = vadd.f32 0.0, %v730
      %v732 = vpop.f32.mrf.mxu0
      %733 = vdwg.mxu0
      %v734 = vadd.f32 %v613, %v696
      %v735 = vadd.f32 %v614, %v701
      %v736 = vadd.f32 %v615, %v706
      %v737 = vadd.f32 %v616, %v711
      %v738 = vadd.f32 %v617, %v716
      %v739 = vadd.f32 %v618, %v721
      %v740 = vadd.f32 %v619, %v726
      %v741 = vadd.f32 %v620, %v731
      %v742 = vld [vmem:[%s2] sm:$0x1]
      %v744 = vlaneseq
      %v745 = vshrl.u32 %v744, 7
      %v746 = vsub.s32 0, %v745
      %v747 = vrot.slane %v742, %v746
      %v749 = vadd.f32 %v734, %v747
      %v750 = vadd.f32 %v735, %v747
      %v751 = vadd.f32 %v736, %v747
      %v752 = vadd.f32 %v737, %v747
      %v753 = vadd.f32 %v738, %v747
      %v754 = vadd.f32 %v739, %v747
      %v755 = vadd.f32 %v740, %v747
      %v756 = vadd.f32 %v741, %v747
      %v757 = vmax.f32 %v749, 0.0
      %v758 = vmax.f32 %v750, 0.0
      %v759 = vmax.f32 %v751, 0.0
      %v760 = vmax.f32 %v752, 0.0
      %v761 = vmax.f32 %v753, 0.0
      %v762 = vmax.f32 %v754, 0.0
      %v763 = vmax.f32 %v755, 0.0
      %v764 = vmax.f32 %v756, 0.0
      %vm765 = vcmask 130048
      %766 = vst.msk [vmem:[%s170] sm:$0xff] %vm765, %v757
      %767 = vst.msk [vmem:[%s170 + $0x8] sm:$0xff] %vm765, %v758
      %768 = vst.msk [vmem:[%s170 + $0x10] sm:$0xff] %vm765, %v759
      %769 = vst.msk [vmem:[%s170 + $0x18] sm:$0xff] %vm765, %v760
      %770 = vst.msk [vmem:[%s170 + $0x20] sm:$0xff] %vm765, %v761
      %771 = vst.msk [vmem:[%s170 + $0x28] sm:$0xff] %vm765, %v762
      %772 = vst.msk [vmem:[%s170 + $0x30] sm:$0xff] %vm765, %v763
      %773 = vst.msk [vmem:[%s170 + $0x38] sm:$0xff] %vm765, %v764
      %s774 = scalar_lea.vmem %s1, 448
      %v775 = vld [vmem:[%s774] sm:$0xff]
      %v776 = vld [vmem:[%s774 + $0x8] sm:$0xff]
      %v777 = vld [vmem:[%s774 + $0x10] sm:$0xff]
      %v778 = vld [vmem:[%s774 + $0x18] sm:$0xff]
      %s779 = scalar_lea.vmem %s1, 384
      %v780 = vld [vmem:[%s779] sm:$0xff]
      %v781 = vld [vmem:[%s779 + $0x8] sm:$0xff]
      %v782 = vld [vmem:[%s779 + $0x10] sm:$0xff]
      %v783 = vld [vmem:[%s779 + $0x18] sm:$0xff]
      %v785 = vsel %vm241, %v221, 0
      %v788 = vsel %vm241, %v222, 0
      %v791 = vsel %vm241, %v223, 0
      %v794 = vsel %vm241, %v224, 0
      %v797 = vsel %vm241, %v225, 0
      %v800 = vsel %vm241, %v226, 0
      %v803 = vsel %vm241, %v227, 0
      %v806 = vsel %vm241, %v228, 0
      %808 = vmatprep.subr.mxu0 0.0
      %809 = vmatpush1.msra.mxu0 0.0
      %810 = vmatprep.subr.mxu0 0.0
      %811 = vmatpush1.msra.mxu0 0.0
      %812 = vmatprep.subr.mxu0 0.0
      %813 = vmatpush1.msra.mxu0 0.0
      %814 = vmatprep.subr.mxu0 0.0
      %815 = vmatpush1.msra.mxu0 0.0
      %816 = vmatprep.subr.mxu0 0.0
      %817 = vmatpush1.msra.mxu0 0.0
      %818 = vmatprep.subr.mxu0 0.0
      %819 = vmatpush1.msra.mxu0 0.0
      %820 = vmatprep.subr.mxu0 0.0
      %821 = vmatpush1.msra.mxu0 0.0
      %822 = vmatprep.subr.mxu0 0.0
      %823 = vmatpush1.msra.mxu0 0.0
      %824 = vmatprep.subr.mxu0 0.0
      %825 = vmatpush1.msra.mxu0 0.0
      %826 = vmatprep.subr.mxu0 0.0
      %827 = vmatpush1.msra.mxu0 0.0
      %828 = vmatprep.subr.mxu0 0.0
      %829 = vmatpush1.msra.mxu0 0.0
      %830 = vmatprep.subr.mxu0 0.0
      %831 = vmatpush1.msra.mxu0 0.0
      %832 = vmatprep.subr.mxu0 0.0
      %833 = vmatpush1.msra.mxu0 %v783
      %834 = vmatprep.subr.mxu0 0.0
      %835 = vmatpush1.msra.mxu0 %v782
      %836 = vmatprep.subr.mxu0 0.0
      %837 = vmatpush1.msra.mxu0 %v781
      %838 = vmatprep.subr.mxu0 0.0
      %839 = vmatpush1.msra.mxu0 %v780
      %840 = vmatprep.subr.mxu0 0.0
      %841 = vmatpush2.msra.mxu0 0.0
      %842 = vmatprep.subr.mxu0 0.0
      %843 = vmatpush2.msra.mxu0 0.0
      %844 = vmatprep.subr.mxu0 0.0
      %845 = vmatpush2.msra.mxu0 0.0
      %846 = vmatprep.subr.mxu0 0.0
      %847 = vmatpush2.msra.mxu0 0.0
      %848 = vmatprep.subr.mxu0 0.0
      %849 = vmatpush2.msra.mxu0 0.0
      %850 = vmatprep.subr.mxu0 0.0
      %851 = vmatpush2.msra.mxu0 0.0
      %852 = vmatprep.subr.mxu0 0.0
      %853 = vmatpush2.msra.mxu0 0.0
      %854 = vmatprep.subr.mxu0 0.0
      %855 = vmatpush2.msra.mxu0 0.0
      %856 = vmatprep.subr.mxu0 0.0
      %857 = vmatpush2.msra.mxu0 0.0
      %858 = vmatprep.subr.mxu0 0.0
      %859 = vmatpush2.msra.mxu0 0.0
      %860 = vmatprep.subr.mxu0 0.0
      %861 = vmatpush2.msra.mxu0 0.0
      %862 = vmatprep.subr.mxu0 0.0
      %863 = vmatpush2.msra.mxu0 0.0
      %864 = vmatprep.subr.mxu0 0.0
      %865 = vmatpush2.msra.mxu0 0.0
      %866 = vmatprep.subr.mxu0 0.0
      %867 = vmatpush2.msra.mxu0 0.0
      %868 = vmatprep.subr.mxu0 0.0
      %869 = vmatpush2.msra.mxu0 0.0
      %870 = vmatprep.subr.mxu0 0.0
      %871 = vmatpush2.msra.mxu0 0.0
      %872 = vmatprep.mubr.f32.mxu0 0.0
      %873 = vmatmul.mubr.f32.gmra.mxu0 %v785
      %v874 = vpop.f32.mrf.mxu0
      %v875 = vadd.f32 0.0, %v874
      %v876 = vpop.f32.mrf.mxu0
      %877 = vmatprep.mubr.f32.mxu0 0.0
      %878 = vmatmul.mubr.f32.gmra.mxu0 %v788
      %v879 = vpop.f32.mrf.mxu0
      %v880 = vadd.f32 0.0, %v879
      %v881 = vpop.f32.mrf.mxu0
      %882 = vmatprep.mubr.f32.mxu0 0.0
      %883 = vmatmul.mubr.f32.gmra.mxu0 %v791
      %v884 = vpop.f32.mrf.mxu0
      %v885 = vadd.f32 0.0, %v884
      %v886 = vpop.f32.mrf.mxu0
      %887 = vmatprep.mubr.f32.mxu0 0.0
      %888 = vmatmul.mubr.f32.gmra.mxu0 %v794
      %v889 = vpop.f32.mrf.mxu0
      %v890 = vadd.f32 0.0, %v889
      %v891 = vpop.f32.mrf.mxu0
      %892 = vmatprep.mubr.f32.mxu0 0.0
      %893 = vmatmul.mubr.f32.gmra.mxu0 %v797
      %v894 = vpop.f32.mrf.mxu0
      %v895 = vadd.f32 0.0, %v894
      %v896 = vpop.f32.mrf.mxu0
      %897 = vmatprep.mubr.f32.mxu0 0.0
      %898 = vmatmul.mubr.f32.gmra.mxu0 %v800
      %v899 = vpop.f32.mrf.mxu0
      %v900 = vadd.f32 0.0, %v899
      %v901 = vpop.f32.mrf.mxu0
      %902 = vmatprep.mubr.f32.mxu0 0.0
      %903 = vmatmul.mubr.f32.gmra.mxu0 %v803
      %v904 = vpop.f32.mrf.mxu0
      %v905 = vadd.f32 0.0, %v904
      %v906 = vpop.f32.mrf.mxu0
      %907 = vmatprep.mubr.f32.mxu0 0.0
      %908 = vmatmul.mubr.f32.gmra.mxu0 %v806
      %v909 = vpop.f32.mrf.mxu0
      %v910 = vadd.f32 0.0, %v909
      %v911 = vpop.f32.mrf.mxu0
      %912 = vdwg.mxu0
      %913 = vmatprep.subr.mxu0 0.0
      %914 = vmatpush1.msra.mxu0 0.0
      %915 = vmatprep.subr.mxu0 0.0
      %916 = vmatpush1.msra.mxu0 0.0
      %917 = vmatprep.subr.mxu0 0.0
      %918 = vmatpush1.msra.mxu0 0.0
      %919 = vmatprep.subr.mxu0 0.0
      %920 = vmatpush1.msra.mxu0 0.0
      %921 = vmatprep.subr.mxu0 0.0
      %922 = vmatpush1.msra.mxu0 0.0
      %923 = vmatprep.subr.mxu0 0.0
      %924 = vmatpush1.msra.mxu0 0.0
      %925 = vmatprep.subr.mxu0 0.0
      %926 = vmatpush1.msra.mxu0 0.0
      %927 = vmatprep.subr.mxu0 0.0
      %928 = vmatpush1.msra.mxu0 0.0
      %929 = vmatprep.subr.mxu0 0.0
      %930 = vmatpush1.msra.mxu0 0.0
      %931 = vmatprep.subr.mxu0 0.0
      %932 = vmatpush1.msra.mxu0 0.0
      %933 = vmatprep.subr.mxu0 0.0
      %934 = vmatpush1.msra.mxu0 0.0
      %935 = vmatprep.subr.mxu0 0.0
      %936 = vmatpush1.msra.mxu0 0.0
      %937 = vmatprep.subr.mxu0 0.0
      %938 = vmatpush1.msra.mxu0 %v778
      %939 = vmatprep.subr.mxu0 0.0
      %940 = vmatpush1.msra.mxu0 %v777
      %941 = vmatprep.subr.mxu0 0.0
      %942 = vmatpush1.msra.mxu0 %v776
      %943 = vmatprep.subr.mxu0 0.0
      %944 = vmatpush1.msra.mxu0 %v775
      %945 = vmatprep.subr.mxu0 0.0
      %946 = vmatpush2.msra.mxu0 0.0
      %947 = vmatprep.subr.mxu0 0.0
      %948 = vmatpush2.msra.mxu0 0.0
      %949 = vmatprep.subr.mxu0 0.0
      %950 = vmatpush2.msra.mxu0 0.0
      %951 = vmatprep.subr.mxu0 0.0
      %952 = vmatpush2.msra.mxu0 0.0
      %953 = vmatprep.subr.mxu0 0.0
      %954 = vmatpush2.msra.mxu0 0.0
      %955 = vmatprep.subr.mxu0 0.0
      %956 = vmatpush2.msra.mxu0 0.0
      %957 = vmatprep.subr.mxu0 0.0
      %958 = vmatpush2.msra.mxu0 0.0
      %959 = vmatprep.subr.mxu0 0.0
      %960 = vmatpush2.msra.mxu0 0.0
      %961 = vmatprep.subr.mxu0 0.0
      %962 = vmatpush2.msra.mxu0 0.0
      %963 = vmatprep.subr.mxu0 0.0
      %964 = vmatpush2.msra.mxu0 0.0
      %965 = vmatprep.subr.mxu0 0.0
      %966 = vmatpush2.msra.mxu0 0.0
      %967 = vmatprep.subr.mxu0 0.0
      %968 = vmatpush2.msra.mxu0 0.0
      %969 = vmatprep.subr.mxu0 0.0
      %970 = vmatpush2.msra.mxu0 0.0
      %971 = vmatprep.subr.mxu0 0.0
      %972 = vmatpush2.msra.mxu0 0.0
      %973 = vmatprep.subr.mxu0 0.0
      %974 = vmatpush2.msra.mxu0 0.0
      %975 = vmatprep.subr.mxu0 0.0
      %976 = vmatpush2.msra.mxu0 0.0
      %977 = vmatprep.mubr.f32.mxu0 0.0
      %978 = vmatmul.mubr.f32.gmra.mxu0 %v243
      %v979 = vpop.f32.mrf.mxu0
      %v980 = vadd.f32 %v875, %v979
      %v981 = vpop.f32.mrf.mxu0
      %982 = vmatprep.mubr.f32.mxu0 0.0
      %983 = vmatmul.mubr.f32.gmra.mxu0 %v246
      %v984 = vpop.f32.mrf.mxu0
      %v985 = vadd.f32 %v880, %v984
      %v986 = vpop.f32.mrf.mxu0
      %987 = vmatprep.mubr.f32.mxu0 0.0
      %988 = vmatmul.mubr.f32.gmra.mxu0 %v249
      %v989 = vpop.f32.mrf.mxu0
      %v990 = vadd.f32 %v885, %v989
      %v991 = vpop.f32.mrf.mxu0
      %992 = vmatprep.mubr.f32.mxu0 0.0
      %993 = vmatmul.mubr.f32.gmra.mxu0 %v252
      %v994 = vpop.f32.mrf.mxu0
      %v995 = vadd.f32 %v890, %v994
      %v996 = vpop.f32.mrf.mxu0
      %997 = vmatprep.mubr.f32.mxu0 0.0
      %998 = vmatmul.mubr.f32.gmra.mxu0 %v255
      %v999 = vpop.f32.mrf.mxu0
      %v1000 = vadd.f32 %v895, %v999
      %v1001 = vpop.f32.mrf.mxu0
      %1002 = vmatprep.mubr.f32.mxu0 0.0
      %1003 = vmatmul.mubr.f32.gmra.mxu0 %v258
      %v1004 = vpop.f32.mrf.mxu0
      %v1005 = vadd.f32 %v900, %v1004
      %v1006 = vpop.f32.mrf.mxu0
      %1007 = vmatprep.mubr.f32.mxu0 0.0
      %1008 = vmatmul.mubr.f32.gmra.mxu0 %v261
      %v1009 = vpop.f32.mrf.mxu0
      %v1010 = vadd.f32 %v905, %v1009
      %v1011 = vpop.f32.mrf.mxu0
      %1012 = vmatprep.mubr.f32.mxu0 0.0
      %1013 = vmatmul.mubr.f32.gmra.mxu0 %v264
      %v1014 = vpop.f32.mrf.mxu0
      %v1015 = vadd.f32 %v910, %v1014
      %v1016 = vpop.f32.mrf.mxu0
      %1017 = vdwg.mxu0
      %s1018 = scalar_lea.vmem %s1, 192
      %v1019 = vld [vmem:[%s1018] sm:$0xff]
      %v1020 = vld [vmem:[%s1018 + $0x8] sm:$0xff]
      %v1021 = vld [vmem:[%s1018 + $0x10] sm:$0xff]
      %v1022 = vld [vmem:[%s1018 + $0x18] sm:$0xff]
      %1023 = vmatprep.subr.mxu0 0.0
      %1024 = vmatpush1.msra.mxu0 0.0
      %1025 = vmatprep.subr.mxu0 0.0
      %1026 = vmatpush1.msra.mxu0 0.0
      %1027 = vmatprep.subr.mxu0 0.0
      %1028 = vmatpush1.msra.mxu0 0.0
      %1029 = vmatprep.subr.mxu0 0.0
      %1030 = vmatpush1.msra.mxu0 0.0
      %1031 = vmatprep.subr.mxu0 0.0
      %1032 = vmatpush1.msra.mxu0 0.0
      %1033 = vmatprep.subr.mxu0 0.0
      %1034 = vmatpush1.msra.mxu0 0.0
      %1035 = vmatprep.subr.mxu0 0.0
      %1036 = vmatpush1.msra.mxu0 0.0
      %1037 = vmatprep.subr.mxu0 0.0
      %1038 = vmatpush1.msra.mxu0 0.0
      %1039 = vmatprep.subr.mxu0 0.0
      %1040 = vmatpush1.msra.mxu0 0.0
      %1041 = vmatprep.subr.mxu0 0.0
      %1042 = vmatpush1.msra.mxu0 0.0
      %1043 = vmatprep.subr.mxu0 0.0
      %1044 = vmatpush1.msra.mxu0 0.0
      %1045 = vmatprep.subr.mxu0 0.0
      %1046 = vmatpush1.msra.mxu0 0.0
      %1047 = vmatprep.subr.mxu0 0.0
      %1048 = vmatpush1.msra.mxu0 %v1022
      %1049 = vmatprep.subr.mxu0 0.0
      %1050 = vmatpush1.msra.mxu0 %v1021
      %1051 = vmatprep.subr.mxu0 0.0
      %1052 = vmatpush1.msra.mxu0 %v1020
      %1053 = vmatprep.subr.mxu0 0.0
      %1054 = vmatpush1.msra.mxu0 %v1019
      %1055 = vmatprep.subr.mxu0 0.0
      %1056 = vmatpush2.msra.mxu0 0.0
      %1057 = vmatprep.subr.mxu0 0.0
      %1058 = vmatpush2.msra.mxu0 0.0
      %1059 = vmatprep.subr.mxu0 0.0
      %1060 = vmatpush2.msra.mxu0 0.0
      %1061 = vmatprep.subr.mxu0 0.0
      %1062 = vmatpush2.msra.mxu0 0.0
      %1063 = vmatprep.subr.mxu0 0.0
      %1064 = vmatpush2.msra.mxu0 0.0
      %1065 = vmatprep.subr.mxu0 0.0
      %1066 = vmatpush2.msra.mxu0 0.0
      %1067 = vmatprep.subr.mxu0 0.0
      %1068 = vmatpush2.msra.mxu0 0.0
      %1069 = vmatprep.subr.mxu0 0.0
      %1070 = vmatpush2.msra.mxu0 0.0
      %1071 = vmatprep.subr.mxu0 0.0
      %1072 = vmatpush2.msra.mxu0 0.0
      %1073 = vmatprep.subr.mxu0 0.0
      %1074 = vmatpush2.msra.mxu0 0.0
      %1075 = vmatprep.subr.mxu0 0.0
      %1076 = vmatpush2.msra.mxu0 0.0
      %1077 = vmatprep.subr.mxu0 0.0
      %1078 = vmatpush2.msra.mxu0 0.0
      %1079 = vmatprep.subr.mxu0 0.0
      %1080 = vmatpush2.msra.mxu0 0.0
      %1081 = vmatprep.subr.mxu0 0.0
      %1082 = vmatpush2.msra.mxu0 0.0
      %1083 = vmatprep.subr.mxu0 0.0
      %1084 = vmatpush2.msra.mxu0 0.0
      %1085 = vmatprep.subr.mxu0 0.0
      %1086 = vmatpush2.msra.mxu0 0.0
      %1087 = vmatprep.mubr.f32.mxu0 0.0
      %1088 = vmatmul.mubr.f32.gmra.mxu0 %v246
      %v1089 = vpop.f32.mrf.mxu0
      %v1090 = vadd.f32 0.0, %v1089
      %v1091 = vpop.f32.mrf.mxu0
      %1092 = vmatprep.mubr.f32.mxu0 0.0
      %1093 = vmatmul.mubr.f32.gmra.mxu0 %v249
      %v1094 = vpop.f32.mrf.mxu0
      %v1095 = vadd.f32 0.0, %v1094
      %v1096 = vpop.f32.mrf.mxu0
      %1097 = vmatprep.mubr.f32.mxu0 0.0
      %1098 = vmatmul.mubr.f32.gmra.mxu0 %v252
      %v1099 = vpop.f32.mrf.mxu0
      %v1100 = vadd.f32 0.0, %v1099
      %v1101 = vpop.f32.mrf.mxu0
      %1102 = vmatprep.mubr.f32.mxu0 0.0
      %1103 = vmatmul.mubr.f32.gmra.mxu0 %v255
      %v1104 = vpop.f32.mrf.mxu0
      %v1105 = vadd.f32 0.0, %v1104
      %v1106 = vpop.f32.mrf.mxu0
      %1107 = vmatprep.mubr.f32.mxu0 0.0
      %1108 = vmatmul.mubr.f32.gmra.mxu0 %v258
      %v1109 = vpop.f32.mrf.mxu0
      %v1110 = vadd.f32 0.0, %v1109
      %v1111 = vpop.f32.mrf.mxu0
      %1112 = vmatprep.mubr.f32.mxu0 0.0
      %1113 = vmatmul.mubr.f32.gmra.mxu0 %v261
      %v1114 = vpop.f32.mrf.mxu0
      %v1115 = vadd.f32 0.0, %v1114
      %v1116 = vpop.f32.mrf.mxu0
      %1117 = vmatprep.mubr.f32.mxu0 0.0
      %1118 = vmatmul.mubr.f32.gmra.mxu0 %v264
      %v1119 = vpop.f32.mrf.mxu0
      %v1120 = vadd.f32 0.0, %v1119
      %v1121 = vpop.f32.mrf.mxu0
      %1122 = vmatprep.mubr.f32.mxu0 0.0
      %1123 = vmatmul.mubr.f32.gmra.mxu0 %v627
      %v1124 = vpop.f32.mrf.mxu0
      %v1125 = vadd.f32 0.0, %v1124
      %v1126 = vpop.f32.mrf.mxu0
      %1127 = vdwg.mxu0
      %v1128 = vadd.f32 %v980, %v1090
      %v1129 = vadd.f32 %v985, %v1095
      %v1130 = vadd.f32 %v990, %v1100
      %v1131 = vadd.f32 %v995, %v1105
      %v1132 = vadd.f32 %v1000, %v1110
      %v1133 = vadd.f32 %v1005, %v1115
      %v1134 = vadd.f32 %v1010, %v1120
      %v1135 = vadd.f32 %v1015, %v1125
      %s1136 = scalar_lea.vmem %s1, 128
      %v1137 = vld [vmem:[%s1136] sm:$0xff]
      %v1138 = vld [vmem:[%s1136 + $0x8] sm:$0xff]
      %v1139 = vld [vmem:[%s1136 + $0x10] sm:$0xff]
      %v1140 = vld [vmem:[%s1136 + $0x18] sm:$0xff]
      %v1142 = vsel %vm241, %v229, 0
      %1144 = vmatprep.subr.mxu0 0.0
      %1145 = vmatpush1.msra.mxu0 0.0
      %1146 = vmatprep.subr.mxu0 0.0
      %1147 = vmatpush1.msra.mxu0 0.0
      %1148 = vmatprep.subr.mxu0 0.0
      %1149 = vmatpush1.msra.mxu0 0.0
      %1150 = vmatprep.subr.mxu0 0.0
      %1151 = vmatpush1.msra.mxu0 0.0
      %1152 = vmatprep.subr.mxu0 0.0
      %1153 = vmatpush1.msra.mxu0 0.0
      %1154 = vmatprep.subr.mxu0 0.0
      %1155 = vmatpush1.msra.mxu0 0.0
      %1156 = vmatprep.subr.mxu0 0.0
      %1157 = vmatpush1.msra.mxu0 0.0
      %1158 = vmatprep.subr.mxu0 0.0
      %1159 = vmatpush1.msra.mxu0 0.0
      %1160 = vmatprep.subr.mxu0 0.0
      %1161 = vmatpush1.msra.mxu0 0.0
      %1162 = vmatprep.subr.mxu0 0.0
      %1163 = vmatpush1.msra.mxu0 0.0
      %1164 = vmatprep.subr.mxu0 0.0
      %1165 = vmatpush1.msra.mxu0 0.0
      %1166 = vmatprep.subr.mxu0 0.0
      %1167 = vmatpush1.msra.mxu0 0.0
      %1168 = vmatprep.subr.mxu0 0.0
      %1169 = vmatpush1.msra.mxu0 %v1140
      %1170 = vmatprep.subr.mxu0 0.0
      %1171 = vmatpush1.msra.mxu0 %v1139
      %1172 = vmatprep.subr.mxu0 0.0
      %1173 = vmatpush1.msra.mxu0 %v1138
      %1174 = vmatprep.subr.mxu0 0.0
      %1175 = vmatpush1.msra.mxu0 %v1137
      %1176 = vmatprep.subr.mxu0 0.0
      %1177 = vmatpush2.msra.mxu0 0.0
      %1178 = vmatprep.subr.mxu0 0.0
      %1179 = vmatpush2.msra.mxu0 0.0
      %1180 = vmatprep.subr.mxu0 0.0
      %1181 = vmatpush2.msra.mxu0 0.0
      %1182 = vmatprep.subr.mxu0 0.0
      %1183 = vmatpush2.msra.mxu0 0.0
      %1184 = vmatprep.subr.mxu0 0.0
      %1185 = vmatpush2.msra.mxu0 0.0
      %1186 = vmatprep.subr.mxu0 0.0
      %1187 = vmatpush2.msra.mxu0 0.0
      %1188 = vmatprep.subr.mxu0 0.0
      %1189 = vmatpush2.msra.mxu0 0.0
      %1190 = vmatprep.subr.mxu0 0.0
      %1191 = vmatpush2.msra.mxu0 0.0
      %1192 = vmatprep.subr.mxu0 0.0
      %1193 = vmatpush2.msra.mxu0 0.0
      %1194 = vmatprep.subr.mxu0 0.0
      %1195 = vmatpush2.msra.mxu0 0.0
      %1196 = vmatprep.subr.mxu0 0.0
      %1197 = vmatpush2.msra.mxu0 0.0
      %1198 = vmatprep.subr.mxu0 0.0
      %1199 = vmatpush2.msra.mxu0 0.0
      %1200 = vmatprep.subr.mxu0 0.0
      %1201 = vmatpush2.msra.mxu0 0.0
      %1202 = vmatprep.subr.mxu0 0.0
      %1203 = vmatpush2.msra.mxu0 0.0
      %1204 = vmatprep.subr.mxu0 0.0
      %1205 = vmatpush2.msra.mxu0 0.0
      %1206 = vmatprep.subr.mxu0 0.0
      %1207 = vmatpush2.msra.mxu0 0.0
      %1208 = vmatprep.mubr.f32.mxu0 0.0
      %1209 = vmatmul.mubr.f32.gmra.mxu0 %v788
      %v1210 = vpop.f32.mrf.mxu0
      %v1211 = vadd.f32 0.0, %v1210
      %v1212 = vpop.f32.mrf.mxu0
      %1213 = vmatprep.mubr.f32.mxu0 0.0
      %1214 = vmatmul.mubr.f32.gmra.mxu0 %v791
      %v1215 = vpop.f32.mrf.mxu0
      %v1216 = vadd.f32 0.0, %v1215
      %v1217 = vpop.f32.mrf.mxu0
      %1218 = vmatprep.mubr.f32.mxu0 0.0
      %1219 = vmatmul.mubr.f32.gmra.mxu0 %v794
      %v1220 = vpop.f32.mrf.mxu0
      %v1221 = vadd.f32 0.0, %v1220
      %v1222 = vpop.f32.mrf.mxu0
      %1223 = vmatprep.mubr.f32.mxu0 0.0
      %1224 = vmatmul.mubr.f32.gmra.mxu0 %v797
      %v1225 = vpop.f32.mrf.mxu0
      %v1226 = vadd.f32 0.0, %v1225
      %v1227 = vpop.f32.mrf.mxu0
      %1228 = vmatprep.mubr.f32.mxu0 0.0
      %1229 = vmatmul.mubr.f32.gmra.mxu0 %v800
      %v1230 = vpop.f32.mrf.mxu0
      %v1231 = vadd.f32 0.0, %v1230
      %v1232 = vpop.f32.mrf.mxu0
      %1233 = vmatprep.mubr.f32.mxu0 0.0
      %1234 = vmatmul.mubr.f32.gmra.mxu0 %v803
      %v1235 = vpop.f32.mrf.mxu0
      %v1236 = vadd.f32 0.0, %v1235
      %v1237 = vpop.f32.mrf.mxu0
      %1238 = vmatprep.mubr.f32.mxu0 0.0
      %1239 = vmatmul.mubr.f32.gmra.mxu0 %v806
      %v1240 = vpop.f32.mrf.mxu0
      %v1241 = vadd.f32 0.0, %v1240
      %v1242 = vpop.f32.mrf.mxu0
      %1243 = vmatprep.mubr.f32.mxu0 0.0
      %1244 = vmatmul.mubr.f32.gmra.mxu0 %v1142
      %v1245 = vpop.f32.mrf.mxu0
      %v1246 = vadd.f32 0.0, %v1245
      %v1247 = vpop.f32.mrf.mxu0
      %1248 = vdwg.mxu0
      %v1249 = vadd.f32 %v1128, %v1211
      %v1250 = vadd.f32 %v1129, %v1216
      %v1251 = vadd.f32 %v1130, %v1221
      %v1252 = vadd.f32 %v1131, %v1226
      %v1253 = vadd.f32 %v1132, %v1231
      %v1254 = vadd.f32 %v1133, %v1236
      %v1255 = vadd.f32 %v1134, %v1241
      %v1256 = vadd.f32 %v1135, %v1246
      %v1257 = vld [vmem:[%s2] sm:$0x1]
      %v1259 = vlaneseq
      %v1260 = vshrl.u32 %v1259, 7
      %v1261 = vsub.s32 0, %v1260
      %v1262 = vrot.slane %v1257, %v1261
      %v1264 = vadd.f32 %v1249, %v1262
      %v1265 = vadd.f32 %v1250, %v1262
      %v1266 = vadd.f32 %v1251, %v1262
      %v1267 = vadd.f32 %v1252, %v1262
      %v1268 = vadd.f32 %v1253, %v1262
      %v1269 = vadd.f32 %v1254, %v1262
      %v1270 = vadd.f32 %v1255, %v1262
      %v1271 = vadd.f32 %v1256, %v1262
      %v1272 = vmax.f32 %v1264, 0.0
      %v1273 = vmax.f32 %v1265, 0.0
      %v1274 = vmax.f32 %v1266, 0.0
      %v1275 = vmax.f32 %v1267, 0.0
      %v1276 = vmax.f32 %v1268, 0.0
      %v1277 = vmax.f32 %v1269, 0.0
      %v1278 = vmax.f32 %v1270, 0.0
      %v1279 = vmax.f32 %v1271, 0.0
      %s1280 = scalar_lea.vmem %s170, 64
      %1281 = vst.msk [vmem:[%s1280] sm:$0xff] %vm765, %v1272
      %1282 = vst.msk [vmem:[%s1280 + $0x8] sm:$0xff] %vm765, %v1273
      %1283 = vst.msk [vmem:[%s1280 + $0x10] sm:$0xff] %vm765, %v1274
      %1284 = vst.msk [vmem:[%s1280 + $0x18] sm:$0xff] %vm765, %v1275
      %1285 = vst.msk [vmem:[%s1280 + $0x20] sm:$0xff] %vm765, %v1276
      %1286 = vst.msk [vmem:[%s1280 + $0x28] sm:$0xff] %vm765, %v1277
      %1287 = vst.msk [vmem:[%s1280 + $0x30] sm:$0xff] %vm765, %v1278
      %1288 = vst.msk [vmem:[%s1280 + $0x38] sm:$0xff] %vm765, %v1279
      %s1289 = scalar_lea.vmem %s1, 352
      %v1290 = vld [vmem:[%s1289] sm:$0xff]
      %v1291 = vld [vmem:[%s1289 + $0x8] sm:$0xff]
      %v1292 = vld [vmem:[%s1289 + $0x10] sm:$0xff]
      %v1293 = vld [vmem:[%s1289 + $0x18] sm:$0xff]
      %s1294 = scalar_lea.vmem %s1, 288
      %v1295 = vld [vmem:[%s1294] sm:$0xff]
      %v1296 = vld [vmem:[%s1294 + $0x8] sm:$0xff]
      %v1297 = vld [vmem:[%s1294 + $0x10] sm:$0xff]
      %v1298 = vld [vmem:[%s1294 + $0x18] sm:$0xff]
      %1299 = vmatprep.subr.mxu0 0.0
      %1300 = vmatpush1.msra.mxu0 0.0
      %1301 = vmatprep.subr.mxu0 0.0
      %1302 = vmatpush1.msra.mxu0 0.0
      %1303 = vmatprep.subr.mxu0 0.0
      %1304 = vmatpush1.msra.mxu0 0.0
      %1305 = vmatprep.subr.mxu0 0.0
      %1306 = vmatpush1.msra.mxu0 0.0
      %1307 = vmatprep.subr.mxu0 0.0
      %1308 = vmatpush1.msra.mxu0 0.0
      %1309 = vmatprep.subr.mxu0 0.0
      %1310 = vmatpush1.msra.mxu0 0.0
      %1311 = vmatprep.subr.mxu0 0.0
      %1312 = vmatpush1.msra.mxu0 0.0
      %1313 = vmatprep.subr.mxu0 0.0
      %1314 = vmatpush1.msra.mxu0 0.0
      %1315 = vmatprep.subr.mxu0 0.0
      %1316 = vmatpush1.msra.mxu0 0.0
      %1317 = vmatprep.subr.mxu0 0.0
      %1318 = vmatpush1.msra.mxu0 0.0
      %1319 = vmatprep.subr.mxu0 0.0
      %1320 = vmatpush1.msra.mxu0 0.0
      %1321 = vmatprep.subr.mxu0 0.0
      %1322 = vmatpush1.msra.mxu0 0.0
      %1323 = vmatprep.subr.mxu0 0.0
      %1324 = vmatpush1.msra.mxu0 %v1298
      %1325 = vmatprep.subr.mxu0 0.0
      %1326 = vmatpush1.msra.mxu0 %v1297
      %1327 = vmatprep.subr.mxu0 0.0
      %1328 = vmatpush1.msra.mxu0 %v1296
      %1329 = vmatprep.subr.mxu0 0.0
      %1330 = vmatpush1.msra.mxu0 %v1295
      %1331 = vmatprep.subr.mxu0 0.0
      %1332 = vmatpush2.msra.mxu0 0.0
      %1333 = vmatprep.subr.mxu0 0.0
      %1334 = vmatpush2.msra.mxu0 0.0
      %1335 = vmatprep.subr.mxu0 0.0
      %1336 = vmatpush2.msra.mxu0 0.0
      %1337 = vmatprep.subr.mxu0 0.0
      %1338 = vmatpush2.msra.mxu0 0.0
      %1339 = vmatprep.subr.mxu0 0.0
      %1340 = vmatpush2.msra.mxu0 0.0
      %1341 = vmatprep.subr.mxu0 0.0
      %1342 = vmatpush2.msra.mxu0 0.0
      %1343 = vmatprep.subr.mxu0 0.0
      %1344 = vmatpush2.msra.mxu0 0.0
      %1345 = vmatprep.subr.mxu0 0.0
      %1346 = vmatpush2.msra.mxu0 0.0
      %1347 = vmatprep.subr.mxu0 0.0
      %1348 = vmatpush2.msra.mxu0 0.0
      %1349 = vmatprep.subr.mxu0 0.0
      %1350 = vmatpush2.msra.mxu0 0.0
      %1351 = vmatprep.subr.mxu0 0.0
      %1352 = vmatpush2.msra.mxu0 0.0
      %1353 = vmatprep.subr.mxu0 0.0
      %1354 = vmatpush2.msra.mxu0 0.0
      %1355 = vmatprep.subr.mxu0 0.0
      %1356 = vmatpush2.msra.mxu0 0.0
      %1357 = vmatprep.subr.mxu0 0.0
      %1358 = vmatpush2.msra.mxu0 0.0
      %1359 = vmatprep.subr.mxu0 0.0
      %1360 = vmatpush2.msra.mxu0 0.0
      %1361 = vmatprep.subr.mxu0 0.0
      %1362 = vmatpush2.msra.mxu0 0.0
      %1363 = vmatprep.mubr.f32.mxu0 0.0
      %1364 = vmatmul.mubr.f32.gmra.mxu0 %v246
      %v1365 = vpop.f32.mrf.mxu0
      %v1366 = vadd.f32 0.0, %v1365
      %v1367 = vpop.f32.mrf.mxu0
      %1368 = vmatprep.mubr.f32.mxu0 0.0
      %1369 = vmatmul.mubr.f32.gmra.mxu0 %v249
      %v1370 = vpop.f32.mrf.mxu0
      %v1371 = vadd.f32 0.0, %v1370
      %v1372 = vpop.f32.mrf.mxu0
      %1373 = vmatprep.mubr.f32.mxu0 0.0
      %1374 = vmatmul.mubr.f32.gmra.mxu0 %v252
      %v1375 = vpop.f32.mrf.mxu0
      %v1376 = vadd.f32 0.0, %v1375
      %v1377 = vpop.f32.mrf.mxu0
      %1378 = vmatprep.mubr.f32.mxu0 0.0
      %1379 = vmatmul.mubr.f32.gmra.mxu0 %v255
      %v1380 = vpop.f32.mrf.mxu0
      %v1381 = vadd.f32 0.0, %v1380
      %v1382 = vpop.f32.mrf.mxu0
      %1383 = vmatprep.mubr.f32.mxu0 0.0
      %1384 = vmatmul.mubr.f32.gmra.mxu0 %v258
      %v1385 = vpop.f32.mrf.mxu0
      %v1386 = vadd.f32 0.0, %v1385
      %v1387 = vpop.f32.mrf.mxu0
      %1388 = vmatprep.mubr.f32.mxu0 0.0
      %1389 = vmatmul.mubr.f32.gmra.mxu0 %v261
      %v1390 = vpop.f32.mrf.mxu0
      %v1391 = vadd.f32 0.0, %v1390
      %v1392 = vpop.f32.mrf.mxu0
      %1393 = vmatprep.mubr.f32.mxu0 0.0
      %1394 = vmatmul.mubr.f32.gmra.mxu0 %v264
      %v1395 = vpop.f32.mrf.mxu0
      %v1396 = vadd.f32 0.0, %v1395
      %v1397 = vpop.f32.mrf.mxu0
      %1398 = vmatprep.mubr.f32.mxu0 0.0
      %1399 = vmatmul.mubr.f32.gmra.mxu0 %v627
      %v1400 = vpop.f32.mrf.mxu0
      %v1401 = vadd.f32 0.0, %v1400
      %v1402 = vpop.f32.mrf.mxu0
      %1403 = vdwg.mxu0
      %1404 = vmatprep.subr.mxu0 0.0
      %1405 = vmatpush1.msra.mxu0 0.0
      %1406 = vmatprep.subr.mxu0 0.0
      %1407 = vmatpush1.msra.mxu0 0.0
      %1408 = vmatprep.subr.mxu0 0.0
      %1409 = vmatpush1.msra.mxu0 0.0
      %1410 = vmatprep.subr.mxu0 0.0
      %1411 = vmatpush1.msra.mxu0 0.0
      %1412 = vmatprep.subr.mxu0 0.0
      %1413 = vmatpush1.msra.mxu0 0.0
      %1414 = vmatprep.subr.mxu0 0.0
      %1415 = vmatpush1.msra.mxu0 0.0
      %1416 = vmatprep.subr.mxu0 0.0
      %1417 = vmatpush1.msra.mxu0 0.0
      %1418 = vmatprep.subr.mxu0 0.0
      %1419 = vmatpush1.msra.mxu0 0.0
      %1420 = vmatprep.subr.mxu0 0.0
      %1421 = vmatpush1.msra.mxu0 0.0
      %1422 = vmatprep.subr.mxu0 0.0
      %1423 = vmatpush1.msra.mxu0 0.0
      %1424 = vmatprep.subr.mxu0 0.0
      %1425 = vmatpush1.msra.mxu0 0.0
      %1426 = vmatprep.subr.mxu0 0.0
      %1427 = vmatpush1.msra.mxu0 0.0
      %1428 = vmatprep.subr.mxu0 0.0
      %1429 = vmatpush1.msra.mxu0 %v1293
      %1430 = vmatprep.subr.mxu0 0.0
      %1431 = vmatpush1.msra.mxu0 %v1292
      %1432 = vmatprep.subr.mxu0 0.0
      %1433 = vmatpush1.msra.mxu0 %v1291
      %1434 = vmatprep.subr.mxu0 0.0
      %1435 = vmatpush1.msra.mxu0 %v1290
      %1436 = vmatprep.subr.mxu0 0.0
      %1437 = vmatpush2.msra.mxu0 0.0
      %1438 = vmatprep.subr.mxu0 0.0
      %1439 = vmatpush2.msra.mxu0 0.0
      %1440 = vmatprep.subr.mxu0 0.0
      %1441 = vmatpush2.msra.mxu0 0.0
      %1442 = vmatprep.subr.mxu0 0.0
      %1443 = vmatpush2.msra.mxu0 0.0
      %1444 = vmatprep.subr.mxu0 0.0
      %1445 = vmatpush2.msra.mxu0 0.0
      %1446 = vmatprep.subr.mxu0 0.0
      %1447 = vmatpush2.msra.mxu0 0.0
      %1448 = vmatprep.subr.mxu0 0.0
      %1449 = vmatpush2.msra.mxu0 0.0
      %1450 = vmatprep.subr.mxu0 0.0
      %1451 = vmatpush2.msra.mxu0 0.0
      %1452 = vmatprep.subr.mxu0 0.0
      %1453 = vmatpush2.msra.mxu0 0.0
      %1454 = vmatprep.subr.mxu0 0.0
      %1455 = vmatpush2.msra.mxu0 0.0
      %1456 = vmatprep.subr.mxu0 0.0
      %1457 = vmatpush2.msra.mxu0 0.0
      %1458 = vmatprep.subr.mxu0 0.0
      %1459 = vmatpush2.msra.mxu0 0.0
      %1460 = vmatprep.subr.mxu0 0.0
      %1461 = vmatpush2.msra.mxu0 0.0
      %1462 = vmatprep.subr.mxu0 0.0
      %1463 = vmatpush2.msra.mxu0 0.0
      %1464 = vmatprep.subr.mxu0 0.0
      %1465 = vmatpush2.msra.mxu0 0.0
      %1466 = vmatprep.subr.mxu0 0.0
      %1467 = vmatpush2.msra.mxu0 0.0
      %1468 = vmatprep.mubr.f32.mxu0 0.0
      %1469 = vmatmul.mubr.f32.gmra.mxu0 %v375
      %v1470 = vpop.f32.mrf.mxu0
      %v1471 = vadd.f32 %v1366, %v1470
      %v1472 = vpop.f32.mrf.mxu0
      %1473 = vmatprep.mubr.f32.mxu0 0.0
      %1474 = vmatmul.mubr.f32.gmra.mxu0 %v378
      %v1475 = vpop.f32.mrf.mxu0
      %v1476 = vadd.f32 %v1371, %v1475
      %v1477 = vpop.f32.mrf.mxu0
      %1478 = vmatprep.mubr.f32.mxu0 0.0
      %1479 = vmatmul.mubr.f32.gmra.mxu0 %v381
      %v1480 = vpop.f32.mrf.mxu0
      %v1481 = vadd.f32 %v1376, %v1480
      %v1482 = vpop.f32.mrf.mxu0
      %1483 = vmatprep.mubr.f32.mxu0 0.0
      %1484 = vmatmul.mubr.f32.gmra.mxu0 %v384
      %v1485 = vpop.f32.mrf.mxu0
      %v1486 = vadd.f32 %v1381, %v1485
      %v1487 = vpop.f32.mrf.mxu0
      %1488 = vmatprep.mubr.f32.mxu0 0.0
      %1489 = vmatmul.mubr.f32.gmra.mxu0 %v387
      %v1490 = vpop.f32.mrf.mxu0
      %v1491 = vadd.f32 %v1386, %v1490
      %v1492 = vpop.f32.mrf.mxu0
      %1493 = vmatprep.mubr.f32.mxu0 0.0
      %1494 = vmatmul.mubr.f32.gmra.mxu0 %v390
      %v1495 = vpop.f32.mrf.mxu0
      %v1496 = vadd.f32 %v1391, %v1495
      %v1497 = vpop.f32.mrf.mxu0
      %1498 = vmatprep.mubr.f32.mxu0 0.0
      %1499 = vmatmul.mubr.f32.gmra.mxu0 %v393
      %v1500 = vpop.f32.mrf.mxu0
      %v1501 = vadd.f32 %v1396, %v1500
      %v1502 = vpop.f32.mrf.mxu0
      %1503 = vmatprep.mubr.f32.mxu0 0.0
      %1504 = vmatmul.mubr.f32.gmra.mxu0 %v506
      %v1505 = vpop.f32.mrf.mxu0
      %v1506 = vadd.f32 %v1401, %v1505
      %v1507 = vpop.f32.mrf.mxu0
      %1508 = vdwg.mxu0
      %s1509 = scalar_lea.vmem %s1, 96
      %v1510 = vld [vmem:[%s1509] sm:$0xff]
      %v1511 = vld [vmem:[%s1509 + $0x8] sm:$0xff]
      %v1512 = vld [vmem:[%s1509 + $0x10] sm:$0xff]
      %v1513 = vld [vmem:[%s1509 + $0x18] sm:$0xff]
      %v1515 = vsel %vm241, %v210, 0
      %1517 = vmatprep.subr.mxu0 0.0
      %1518 = vmatpush1.msra.mxu0 0.0
      %1519 = vmatprep.subr.mxu0 0.0
      %1520 = vmatpush1.msra.mxu0 0.0
      %1521 = vmatprep.subr.mxu0 0.0
      %1522 = vmatpush1.msra.mxu0 0.0
      %1523 = vmatprep.subr.mxu0 0.0
      %1524 = vmatpush1.msra.mxu0 0.0
      %1525 = vmatprep.subr.mxu0 0.0
      %1526 = vmatpush1.msra.mxu0 0.0
      %1527 = vmatprep.subr.mxu0 0.0
      %1528 = vmatpush1.msra.mxu0 0.0
      %1529 = vmatprep.subr.mxu0 0.0
      %1530 = vmatpush1.msra.mxu0 0.0
      %1531 = vmatprep.subr.mxu0 0.0
      %1532 = vmatpush1.msra.mxu0 0.0
      %1533 = vmatprep.subr.mxu0 0.0
      %1534 = vmatpush1.msra.mxu0 0.0
      %1535 = vmatprep.subr.mxu0 0.0
      %1536 = vmatpush1.msra.mxu0 0.0
      %1537 = vmatprep.subr.mxu0 0.0
      %1538 = vmatpush1.msra.mxu0 0.0
      %1539 = vmatprep.subr.mxu0 0.0
      %1540 = vmatpush1.msra.mxu0 0.0
      %1541 = vmatprep.subr.mxu0 0.0
      %1542 = vmatpush1.msra.mxu0 %v1513
      %1543 = vmatprep.subr.mxu0 0.0
      %1544 = vmatpush1.msra.mxu0 %v1512
      %1545 = vmatprep.subr.mxu0 0.0
      %1546 = vmatpush1.msra.mxu0 %v1511
      %1547 = vmatprep.subr.mxu0 0.0
      %1548 = vmatpush1.msra.mxu0 %v1510
      %1549 = vmatprep.subr.mxu0 0.0
      %1550 = vmatpush2.msra.mxu0 0.0
      %1551 = vmatprep.subr.mxu0 0.0
      %1552 = vmatpush2.msra.mxu0 0.0
      %1553 = vmatprep.subr.mxu0 0.0
      %1554 = vmatpush2.msra.mxu0 0.0
      %1555 = vmatprep.subr.mxu0 0.0
      %1556 = vmatpush2.msra.mxu0 0.0
      %1557 = vmatprep.subr.mxu0 0.0
      %1558 = vmatpush2.msra.mxu0 0.0
      %1559 = vmatprep.subr.mxu0 0.0
      %1560 = vmatpush2.msra.mxu0 0.0
      %1561 = vmatprep.subr.mxu0 0.0
      %1562 = vmatpush2.msra.mxu0 0.0
      %1563 = vmatprep.subr.mxu0 0.0
      %1564 = vmatpush2.msra.mxu0 0.0
      %1565 = vmatprep.subr.mxu0 0.0
      %1566 = vmatpush2.msra.mxu0 0.0
      %1567 = vmatprep.subr.mxu0 0.0
      %1568 = vmatpush2.msra.mxu0 0.0
      %1569 = vmatprep.subr.mxu0 0.0
      %1570 = vmatpush2.msra.mxu0 0.0
      %1571 = vmatprep.subr.mxu0 0.0
      %1572 = vmatpush2.msra.mxu0 0.0
      %1573 = vmatprep.subr.mxu0 0.0
      %1574 = vmatpush2.msra.mxu0 0.0
      %1575 = vmatprep.subr.mxu0 0.0
      %1576 = vmatpush2.msra.mxu0 0.0
      %1577 = vmatprep.subr.mxu0 0.0
      %1578 = vmatpush2.msra.mxu0 0.0
      %1579 = vmatprep.subr.mxu0 0.0
      %1580 = vmatpush2.msra.mxu0 0.0
      %1581 = vmatprep.mubr.f32.mxu0 0.0
      %1582 = vmatmul.mubr.f32.gmra.mxu0 %v378
      %v1583 = vpop.f32.mrf.mxu0
      %v1584 = vadd.f32 0.0, %v1583
      %v1585 = vpop.f32.mrf.mxu0
      %1586 = vmatprep.mubr.f32.mxu0 0.0
      %1587 = vmatmul.mubr.f32.gmra.mxu0 %v381
      %v1588 = vpop.f32.mrf.mxu0
      %v1589 = vadd.f32 0.0, %v1588
      %v1590 = vpop.f32.mrf.mxu0
      %1591 = vmatprep.mubr.f32.mxu0 0.0
      %1592 = vmatmul.mubr.f32.gmra.mxu0 %v384
      %v1593 = vpop.f32.mrf.mxu0
      %v1594 = vadd.f32 0.0, %v1593
      %v1595 = vpop.f32.mrf.mxu0
      %1596 = vmatprep.mubr.f32.mxu0 0.0
      %1597 = vmatmul.mubr.f32.gmra.mxu0 %v387
      %v1598 = vpop.f32.mrf.mxu0
      %v1599 = vadd.f32 0.0, %v1598
      %v1600 = vpop.f32.mrf.mxu0
      %1601 = vmatprep.mubr.f32.mxu0 0.0
      %1602 = vmatmul.mubr.f32.gmra.mxu0 %v390
      %v1603 = vpop.f32.mrf.mxu0
      %v1604 = vadd.f32 0.0, %v1603
      %v1605 = vpop.f32.mrf.mxu0
      %1606 = vmatprep.mubr.f32.mxu0 0.0
      %1607 = vmatmul.mubr.f32.gmra.mxu0 %v393
      %v1608 = vpop.f32.mrf.mxu0
      %v1609 = vadd.f32 0.0, %v1608
      %v1610 = vpop.f32.mrf.mxu0
      %1611 = vmatprep.mubr.f32.mxu0 0.0
      %1612 = vmatmul.mubr.f32.gmra.mxu0 %v506
      %v1613 = vpop.f32.mrf.mxu0
      %v1614 = vadd.f32 0.0, %v1613
      %v1615 = vpop.f32.mrf.mxu0
      %1616 = vmatprep.mubr.f32.mxu0 0.0
      %1617 = vmatmul.mubr.f32.gmra.mxu0 %v1515
      %v1618 = vpop.f32.mrf.mxu0
      %v1619 = vadd.f32 0.0, %v1618
      %v1620 = vpop.f32.mrf.mxu0
      %1621 = vdwg.mxu0
      %v1622 = vadd.f32 %v1471, %v1584
      %v1623 = vadd.f32 %v1476, %v1589
      %v1624 = vadd.f32 %v1481, %v1594
      %v1625 = vadd.f32 %v1486, %v1599
      %v1626 = vadd.f32 %v1491, %v1604
      %v1627 = vadd.f32 %v1496, %v1609
      %v1628 = vadd.f32 %v1501, %v1614
      %v1629 = vadd.f32 %v1506, %v1619
      %s1630 = scalar_lea.vmem %s1, 32
      %v1631 = vld [vmem:[%s1630] sm:$0xff]
      %v1632 = vld [vmem:[%s1630 + $0x8] sm:$0xff]
      %v1633 = vld [vmem:[%s1630 + $0x10] sm:$0xff]
      %v1634 = vld [vmem:[%s1630 + $0x18] sm:$0xff]
      %v1636 = vsel %vm241, %v220, 0
      %1638 = vmatprep.subr.mxu0 0.0
      %1639 = vmatpush1.msra.mxu0 0.0
      %1640 = vmatprep.subr.mxu0 0.0
      %1641 = vmatpush1.msra.mxu0 0.0
      %1642 = vmatprep.subr.mxu0 0.0
      %1643 = vmatpush1.msra.mxu0 0.0
      %1644 = vmatprep.subr.mxu0 0.0
      %1645 = vmatpush1.msra.mxu0 0.0
      %1646 = vmatprep.subr.mxu0 0.0
      %1647 = vmatpush1.msra.mxu0 0.0
      %1648 = vmatprep.subr.mxu0 0.0
      %1649 = vmatpush1.msra.mxu0 0.0
      %1650 = vmatprep.subr.mxu0 0.0
      %1651 = vmatpush1.msra.mxu0 0.0
      %1652 = vmatprep.subr.mxu0 0.0
      %1653 = vmatpush1.msra.mxu0 0.0
      %1654 = vmatprep.subr.mxu0 0.0
      %1655 = vmatpush1.msra.mxu0 0.0
      %1656 = vmatprep.subr.mxu0 0.0
      %1657 = vmatpush1.msra.mxu0 0.0
      %1658 = vmatprep.subr.mxu0 0.0
      %1659 = vmatpush1.msra.mxu0 0.0
      %1660 = vmatprep.subr.mxu0 0.0
      %1661 = vmatpush1.msra.mxu0 0.0
      %1662 = vmatprep.subr.mxu0 0.0
      %1663 = vmatpush1.msra.mxu0 %v1634
      %1664 = vmatprep.subr.mxu0 0.0
      %1665 = vmatpush1.msra.mxu0 %v1633
      %1666 = vmatprep.subr.mxu0 0.0
      %1667 = vmatpush1.msra.mxu0 %v1632
      %1668 = vmatprep.subr.mxu0 0.0
      %1669 = vmatpush1.msra.mxu0 %v1631
      %1670 = vmatprep.subr.mxu0 0.0
      %1671 = vmatpush2.msra.mxu0 0.0
      %1672 = vmatprep.subr.mxu0 0.0
      %1673 = vmatpush2.msra.mxu0 0.0
      %1674 = vmatprep.subr.mxu0 0.0
      %1675 = vmatpush2.msra.mxu0 0.0
      %1676 = vmatprep.subr.mxu0 0.0
      %1677 = vmatpush2.msra.mxu0 0.0
      %1678 = vmatprep.subr.mxu0 0.0
      %1679 = vmatpush2.msra.mxu0 0.0
      %1680 = vmatprep.subr.mxu0 0.0
      %1681 = vmatpush2.msra.mxu0 0.0
      %1682 = vmatprep.subr.mxu0 0.0
      %1683 = vmatpush2.msra.mxu0 0.0
      %1684 = vmatprep.subr.mxu0 0.0
      %1685 = vmatpush2.msra.mxu0 0.0
      %1686 = vmatprep.subr.mxu0 0.0
      %1687 = vmatpush2.msra.mxu0 0.0
      %1688 = vmatprep.subr.mxu0 0.0
      %1689 = vmatpush2.msra.mxu0 0.0
      %1690 = vmatprep.subr.mxu0 0.0
      %1691 = vmatpush2.msra.mxu0 0.0
      %1692 = vmatprep.subr.mxu0 0.0
      %1693 = vmatpush2.msra.mxu0 0.0
      %1694 = vmatprep.subr.mxu0 0.0
      %1695 = vmatpush2.msra.mxu0 0.0
      %1696 = vmatprep.subr.mxu0 0.0
      %1697 = vmatpush2.msra.mxu0 0.0
      %1698 = vmatprep.subr.mxu0 0.0
      %1699 = vmatpush2.msra.mxu0 0.0
      %1700 = vmatprep.subr.mxu0 0.0
      %1701 = vmatpush2.msra.mxu0 0.0
      %1702 = vmatprep.mubr.f32.mxu0 0.0
      %1703 = vmatmul.mubr.f32.gmra.mxu0 %v249
      %v1704 = vpop.f32.mrf.mxu0
      %v1705 = vadd.f32 0.0, %v1704
      %v1706 = vpop.f32.mrf.mxu0
      %1707 = vmatprep.mubr.f32.mxu0 0.0
      %1708 = vmatmul.mubr.f32.gmra.mxu0 %v252
      %v1709 = vpop.f32.mrf.mxu0
      %v1710 = vadd.f32 0.0, %v1709
      %v1711 = vpop.f32.mrf.mxu0
      %1712 = vmatprep.mubr.f32.mxu0 0.0
      %1713 = vmatmul.mubr.f32.gmra.mxu0 %v255
      %v1714 = vpop.f32.mrf.mxu0
      %v1715 = vadd.f32 0.0, %v1714
      %v1716 = vpop.f32.mrf.mxu0
      %1717 = vmatprep.mubr.f32.mxu0 0.0
      %1718 = vmatmul.mubr.f32.gmra.mxu0 %v258
      %v1719 = vpop.f32.mrf.mxu0
      %v1720 = vadd.f32 0.0, %v1719
      %v1721 = vpop.f32.mrf.mxu0
      %1722 = vmatprep.mubr.f32.mxu0 0.0
      %1723 = vmatmul.mubr.f32.gmra.mxu0 %v261
      %v1724 = vpop.f32.mrf.mxu0
      %v1725 = vadd.f32 0.0, %v1724
      %v1726 = vpop.f32.mrf.mxu0
      %1727 = vmatprep.mubr.f32.mxu0 0.0
      %1728 = vmatmul.mubr.f32.gmra.mxu0 %v264
      %v1729 = vpop.f32.mrf.mxu0
      %v1730 = vadd.f32 0.0, %v1729
      %v1731 = vpop.f32.mrf.mxu0
      %1732 = vmatprep.mubr.f32.mxu0 0.0
      %1733 = vmatmul.mubr.f32.gmra.mxu0 %v627
      %v1734 = vpop.f32.mrf.mxu0
      %v1735 = vadd.f32 0.0, %v1734
      %v1736 = vpop.f32.mrf.mxu0
      %1737 = vmatprep.mubr.f32.mxu0 0.0
      %1738 = vmatmul.mubr.f32.gmra.mxu0 %v1636
      %v1739 = vpop.f32.mrf.mxu0
      %v1740 = vadd.f32 0.0, %v1739
      %v1741 = vpop.f32.mrf.mxu0
      %1742 = vdwg.mxu0
      %v1743 = vadd.f32 %v1622, %v1705
      %v1744 = vadd.f32 %v1623, %v1710
      %v1745 = vadd.f32 %v1624, %v1715
      %v1746 = vadd.f32 %v1625, %v1720
      %v1747 = vadd.f32 %v1626, %v1725
      %v1748 = vadd.f32 %v1627, %v1730
      %v1749 = vadd.f32 %v1628, %v1735
      %v1750 = vadd.f32 %v1629, %v1740
      %v1751 = vld [vmem:[%s2] sm:$0x1]
      %v1753 = vlaneseq
      %v1754 = vshrl.u32 %v1753, 7
      %v1755 = vsub.s32 0, %v1754
      %v1756 = vrot.slane %v1751, %v1755
      %v1758 = vadd.f32 %v1743, %v1756
      %v1759 = vadd.f32 %v1744, %v1756
      %v1760 = vadd.f32 %v1745, %v1756
      %v1761 = vadd.f32 %v1746, %v1756
      %v1762 = vadd.f32 %v1747, %v1756
      %v1763 = vadd.f32 %v1748, %v1756
      %v1764 = vadd.f32 %v1749, %v1756
      %v1765 = vadd.f32 %v1750, %v1756
      %v1766 = vmax.f32 %v1758, 0.0
      %v1767 = vmax.f32 %v1759, 0.0
      %v1768 = vmax.f32 %v1760, 0.0
      %v1769 = vmax.f32 %v1761, 0.0
      %v1770 = vmax.f32 %v1762, 0.0
      %v1771 = vmax.f32 %v1763, 0.0
      %v1772 = vmax.f32 %v1764, 0.0
      %v1773 = vmax.f32 %v1765, 0.0
      %s1774 = scalar_lea.vmem %s170, 128
      %1775 = vst.msk [vmem:[%s1774] sm:$0xff] %vm765, %v1766
      %1776 = vst.msk [vmem:[%s1774 + $0x8] sm:$0xff] %vm765, %v1767
      %1777 = vst.msk [vmem:[%s1774 + $0x10] sm:$0xff] %vm765, %v1768
      %1778 = vst.msk [vmem:[%s1774 + $0x18] sm:$0xff] %vm765, %v1769
      %1779 = vst.msk [vmem:[%s1774 + $0x20] sm:$0xff] %vm765, %v1770
      %1780 = vst.msk [vmem:[%s1774 + $0x28] sm:$0xff] %vm765, %v1771
      %1781 = vst.msk [vmem:[%s1774 + $0x30] sm:$0xff] %vm765, %v1772
      %1782 = vst.msk [vmem:[%s1774 + $0x38] sm:$0xff] %vm765, %v1773
      %s1783 = scalar_lea.vmem %s1, 320
      %v1784 = vld [vmem:[%s1783] sm:$0xff]
      %v1785 = vld [vmem:[%s1783 + $0x8] sm:$0xff]
      %v1786 = vld [vmem:[%s1783 + $0x10] sm:$0xff]
      %v1787 = vld [vmem:[%s1783 + $0x18] sm:$0xff]
      %s1788 = scalar_lea.vmem %s1, 256
      %v1789 = vld [vmem:[%s1788] sm:$0xff]
      %v1790 = vld [vmem:[%s1788 + $0x8] sm:$0xff]
      %v1791 = vld [vmem:[%s1788 + $0x10] sm:$0xff]
      %v1792 = vld [vmem:[%s1788 + $0x18] sm:$0xff]
      %1793 = vmatprep.subr.mxu0 0.0
      %1794 = vmatpush1.msra.mxu0 0.0
      %1795 = vmatprep.subr.mxu0 0.0
      %1796 = vmatpush1.msra.mxu0 0.0
      %1797 = vmatprep.subr.mxu0 0.0
      %1798 = vmatpush1.msra.mxu0 0.0
      %1799 = vmatprep.subr.mxu0 0.0
      %1800 = vmatpush1.msra.mxu0 0.0
      %1801 = vmatprep.subr.mxu0 0.0
      %1802 = vmatpush1.msra.mxu0 0.0
      %1803 = vmatprep.subr.mxu0 0.0
      %1804 = vmatpush1.msra.mxu0 0.0
      %1805 = vmatprep.subr.mxu0 0.0
      %1806 = vmatpush1.msra.mxu0 0.0
      %1807 = vmatprep.subr.mxu0 0.0
      %1808 = vmatpush1.msra.mxu0 0.0
      %1809 = vmatprep.subr.mxu0 0.0
      %1810 = vmatpush1.msra.mxu0 0.0
      %1811 = vmatprep.subr.mxu0 0.0
      %1812 = vmatpush1.msra.mxu0 0.0
      %1813 = vmatprep.subr.mxu0 0.0
      %1814 = vmatpush1.msra.mxu0 0.0
      %1815 = vmatprep.subr.mxu0 0.0
      %1816 = vmatpush1.msra.mxu0 0.0
      %1817 = vmatprep.subr.mxu0 0.0
      %1818 = vmatpush1.msra.mxu0 %v1792
      %1819 = vmatprep.subr.mxu0 0.0
      %1820 = vmatpush1.msra.mxu0 %v1791
      %1821 = vmatprep.subr.mxu0 0.0
      %1822 = vmatpush1.msra.mxu0 %v1790
      %1823 = vmatprep.subr.mxu0 0.0
      %1824 = vmatpush1.msra.mxu0 %v1789
      %1825 = vmatprep.subr.mxu0 0.0
      %1826 = vmatpush2.msra.mxu0 0.0
      %1827 = vmatprep.subr.mxu0 0.0
      %1828 = vmatpush2.msra.mxu0 0.0
      %1829 = vmatprep.subr.mxu0 0.0
      %1830 = vmatpush2.msra.mxu0 0.0
      %1831 = vmatprep.subr.mxu0 0.0
      %1832 = vmatpush2.msra.mxu0 0.0
      %1833 = vmatprep.subr.mxu0 0.0
      %1834 = vmatpush2.msra.mxu0 0.0
      %1835 = vmatprep.subr.mxu0 0.0
      %1836 = vmatpush2.msra.mxu0 0.0
      %1837 = vmatprep.subr.mxu0 0.0
      %1838 = vmatpush2.msra.mxu0 0.0
      %1839 = vmatprep.subr.mxu0 0.0
      %1840 = vmatpush2.msra.mxu0 0.0
      %1841 = vmatprep.subr.mxu0 0.0
      %1842 = vmatpush2.msra.mxu0 0.0
      %1843 = vmatprep.subr.mxu0 0.0
      %1844 = vmatpush2.msra.mxu0 0.0
      %1845 = vmatprep.subr.mxu0 0.0
      %1846 = vmatpush2.msra.mxu0 0.0
      %1847 = vmatprep.subr.mxu0 0.0
      %1848 = vmatpush2.msra.mxu0 0.0
      %1849 = vmatprep.subr.mxu0 0.0
      %1850 = vmatpush2.msra.mxu0 0.0
      %1851 = vmatprep.subr.mxu0 0.0
      %1852 = vmatpush2.msra.mxu0 0.0
      %1853 = vmatprep.subr.mxu0 0.0
      %1854 = vmatpush2.msra.mxu0 0.0
      %1855 = vmatprep.subr.mxu0 0.0
      %1856 = vmatpush2.msra.mxu0 0.0
      %1857 = vmatprep.mubr.f32.mxu0 0.0
      %1858 = vmatmul.mubr.f32.gmra.mxu0 %v788
      %v1859 = vpop.f32.mrf.mxu0
      %v1860 = vadd.f32 0.0, %v1859
      %v1861 = vpop.f32.mrf.mxu0
      %1862 = vmatprep.mubr.f32.mxu0 0.0
      %1863 = vmatmul.mubr.f32.gmra.mxu0 %v791
      %v1864 = vpop.f32.mrf.mxu0
      %v1865 = vadd.f32 0.0, %v1864
      %v1866 = vpop.f32.mrf.mxu0
      %1867 = vmatprep.mubr.f32.mxu0 0.0
      %1868 = vmatmul.mubr.f32.gmra.mxu0 %v794
      %v1869 = vpop.f32.mrf.mxu0
      %v1870 = vadd.f32 0.0, %v1869
      %v1871 = vpop.f32.mrf.mxu0
      %1872 = vmatprep.mubr.f32.mxu0 0.0
      %1873 = vmatmul.mubr.f32.gmra.mxu0 %v797
      %v1874 = vpop.f32.mrf.mxu0
      %v1875 = vadd.f32 0.0, %v1874
      %v1876 = vpop.f32.mrf.mxu0
      %1877 = vmatprep.mubr.f32.mxu0 0.0
      %1878 = vmatmul.mubr.f32.gmra.mxu0 %v800
      %v1879 = vpop.f32.mrf.mxu0
      %v1880 = vadd.f32 0.0, %v1879
      %v1881 = vpop.f32.mrf.mxu0
      %1882 = vmatprep.mubr.f32.mxu0 0.0
      %1883 = vmatmul.mubr.f32.gmra.mxu0 %v803
      %v1884 = vpop.f32.mrf.mxu0
      %v1885 = vadd.f32 0.0, %v1884
      %v1886 = vpop.f32.mrf.mxu0
      %1887 = vmatprep.mubr.f32.mxu0 0.0
      %1888 = vmatmul.mubr.f32.gmra.mxu0 %v806
      %v1889 = vpop.f32.mrf.mxu0
      %v1890 = vadd.f32 0.0, %v1889
      %v1891 = vpop.f32.mrf.mxu0
      %1892 = vmatprep.mubr.f32.mxu0 0.0
      %1893 = vmatmul.mubr.f32.gmra.mxu0 %v1142
      %v1894 = vpop.f32.mrf.mxu0
      %v1895 = vadd.f32 0.0, %v1894
      %v1896 = vpop.f32.mrf.mxu0
      %1897 = vdwg.mxu0
      %1898 = vmatprep.subr.mxu0 0.0
      %1899 = vmatpush1.msra.mxu0 0.0
      %1900 = vmatprep.subr.mxu0 0.0
      %1901 = vmatpush1.msra.mxu0 0.0
      %1902 = vmatprep.subr.mxu0 0.0
      %1903 = vmatpush1.msra.mxu0 0.0
      %1904 = vmatprep.subr.mxu0 0.0
      %1905 = vmatpush1.msra.mxu0 0.0
      %1906 = vmatprep.subr.mxu0 0.0
      %1907 = vmatpush1.msra.mxu0 0.0
      %1908 = vmatprep.subr.mxu0 0.0
      %1909 = vmatpush1.msra.mxu0 0.0
      %1910 = vmatprep.subr.mxu0 0.0
      %1911 = vmatpush1.msra.mxu0 0.0
      %1912 = vmatprep.subr.mxu0 0.0
      %1913 = vmatpush1.msra.mxu0 0.0
      %1914 = vmatprep.subr.mxu0 0.0
      %1915 = vmatpush1.msra.mxu0 0.0
      %1916 = vmatprep.subr.mxu0 0.0
      %1917 = vmatpush1.msra.mxu0 0.0
      %1918 = vmatprep.subr.mxu0 0.0
      %1919 = vmatpush1.msra.mxu0 0.0
      %1920 = vmatprep.subr.mxu0 0.0
      %1921 = vmatpush1.msra.mxu0 0.0
      %1922 = vmatprep.subr.mxu0 0.0
      %1923 = vmatpush1.msra.mxu0 %v1787
      %1924 = vmatprep.subr.mxu0 0.0
      %1925 = vmatpush1.msra.mxu0 %v1786
      %1926 = vmatprep.subr.mxu0 0.0
      %1927 = vmatpush1.msra.mxu0 %v1785
      %1928 = vmatprep.subr.mxu0 0.0
      %1929 = vmatpush1.msra.mxu0 %v1784
      %1930 = vmatprep.subr.mxu0 0.0
      %1931 = vmatpush2.msra.mxu0 0.0
      %1932 = vmatprep.subr.mxu0 0.0
      %1933 = vmatpush2.msra.mxu0 0.0
      %1934 = vmatprep.subr.mxu0 0.0
      %1935 = vmatpush2.msra.mxu0 0.0
      %1936 = vmatprep.subr.mxu0 0.0
      %1937 = vmatpush2.msra.mxu0 0.0
      %1938 = vmatprep.subr.mxu0 0.0
      %1939 = vmatpush2.msra.mxu0 0.0
      %1940 = vmatprep.subr.mxu0 0.0
      %1941 = vmatpush2.msra.mxu0 0.0
      %1942 = vmatprep.subr.mxu0 0.0
      %1943 = vmatpush2.msra.mxu0 0.0
      %1944 = vmatprep.subr.mxu0 0.0
      %1945 = vmatpush2.msra.mxu0 0.0
      %1946 = vmatprep.subr.mxu0 0.0
      %1947 = vmatpush2.msra.mxu0 0.0
      %1948 = vmatprep.subr.mxu0 0.0
      %1949 = vmatpush2.msra.mxu0 0.0
      %1950 = vmatprep.subr.mxu0 0.0
      %1951 = vmatpush2.msra.mxu0 0.0
      %1952 = vmatprep.subr.mxu0 0.0
      %1953 = vmatpush2.msra.mxu0 0.0
      %1954 = vmatprep.subr.mxu0 0.0
      %1955 = vmatpush2.msra.mxu0 0.0
      %1956 = vmatprep.subr.mxu0 0.0
      %1957 = vmatpush2.msra.mxu0 0.0
      %1958 = vmatprep.subr.mxu0 0.0
      %1959 = vmatpush2.msra.mxu0 0.0
      %1960 = vmatprep.subr.mxu0 0.0
      %1961 = vmatpush2.msra.mxu0 0.0
      %1962 = vmatprep.mubr.f32.mxu0 0.0
      %1963 = vmatmul.mubr.f32.gmra.mxu0 %v246
      %v1964 = vpop.f32.mrf.mxu0
      %v1965 = vadd.f32 %v1860, %v1964
      %v1966 = vpop.f32.mrf.mxu0
      %1967 = vmatprep.mubr.f32.mxu0 0.0
      %1968 = vmatmul.mubr.f32.gmra.mxu0 %v249
      %v1969 = vpop.f32.mrf.mxu0
      %v1970 = vadd.f32 %v1865, %v1969
      %v1971 = vpop.f32.mrf.mxu0
      %1972 = vmatprep.mubr.f32.mxu0 0.0
      %1973 = vmatmul.mubr.f32.gmra.mxu0 %v252
      %v1974 = vpop.f32.mrf.mxu0
      %v1975 = vadd.f32 %v1870, %v1974
      %v1976 = vpop.f32.mrf.mxu0
      %1977 = vmatprep.mubr.f32.mxu0 0.0
      %1978 = vmatmul.mubr.f32.gmra.mxu0 %v255
      %v1979 = vpop.f32.mrf.mxu0
      %v1980 = vadd.f32 %v1875, %v1979
      %v1981 = vpop.f32.mrf.mxu0
      %1982 = vmatprep.mubr.f32.mxu0 0.0
      %1983 = vmatmul.mubr.f32.gmra.mxu0 %v258
      %v1984 = vpop.f32.mrf.mxu0
      %v1985 = vadd.f32 %v1880, %v1984
      %v1986 = vpop.f32.mrf.mxu0
      %1987 = vmatprep.mubr.f32.mxu0 0.0
      %1988 = vmatmul.mubr.f32.gmra.mxu0 %v261
      %v1989 = vpop.f32.mrf.mxu0
      %v1990 = vadd.f32 %v1885, %v1989
      %v1991 = vpop.f32.mrf.mxu0
      %1992 = vmatprep.mubr.f32.mxu0 0.0
      %1993 = vmatmul.mubr.f32.gmra.mxu0 %v264
      %v1994 = vpop.f32.mrf.mxu0
      %v1995 = vadd.f32 %v1890, %v1994
      %v1996 = vpop.f32.mrf.mxu0
      %1997 = vmatprep.mubr.f32.mxu0 0.0
      %1998 = vmatmul.mubr.f32.gmra.mxu0 %v627
      %v1999 = vpop.f32.mrf.mxu0
      %v2000 = vadd.f32 %v1895, %v1999
      %v2001 = vpop.f32.mrf.mxu0
      %2002 = vdwg.mxu0
      %s2003 = scalar_lea.vmem %s1, 64
      %v2004 = vld [vmem:[%s2003] sm:$0xff]
      %v2005 = vld [vmem:[%s2003 + $0x8] sm:$0xff]
      %v2006 = vld [vmem:[%s2003 + $0x10] sm:$0xff]
      %v2007 = vld [vmem:[%s2003 + $0x18] sm:$0xff]
      %2008 = vmatprep.subr.mxu0 0.0
      %2009 = vmatpush1.msra.mxu0 0.0
      %2010 = vmatprep.subr.mxu0 0.0
      %2011 = vmatpush1.msra.mxu0 0.0
      %2012 = vmatprep.subr.mxu0 0.0
      %2013 = vmatpush1.msra.mxu0 0.0
      %2014 = vmatprep.subr.mxu0 0.0
      %2015 = vmatpush1.msra.mxu0 0.0
      %2016 = vmatprep.subr.mxu0 0.0
      %2017 = vmatpush1.msra.mxu0 0.0
      %2018 = vmatprep.subr.mxu0 0.0
      %2019 = vmatpush1.msra.mxu0 0.0
      %2020 = vmatprep.subr.mxu0 0.0
      %2021 = vmatpush1.msra.mxu0 0.0
      %2022 = vmatprep.subr.mxu0 0.0
      %2023 = vmatpush1.msra.mxu0 0.0
      %2024 = vmatprep.subr.mxu0 0.0
      %2025 = vmatpush1.msra.mxu0 0.0
      %2026 = vmatprep.subr.mxu0 0.0
      %2027 = vmatpush1.msra.mxu0 0.0
      %2028 = vmatprep.subr.mxu0 0.0
      %2029 = vmatpush1.msra.mxu0 0.0
      %2030 = vmatprep.subr.mxu0 0.0
      %2031 = vmatpush1.msra.mxu0 0.0
      %2032 = vmatprep.subr.mxu0 0.0
      %2033 = vmatpush1.msra.mxu0 %v2007
      %2034 = vmatprep.subr.mxu0 0.0
      %2035 = vmatpush1.msra.mxu0 %v2006
      %2036 = vmatprep.subr.mxu0 0.0
      %2037 = vmatpush1.msra.mxu0 %v2005
      %2038 = vmatprep.subr.mxu0 0.0
      %2039 = vmatpush1.msra.mxu0 %v2004
      %2040 = vmatprep.subr.mxu0 0.0
      %2041 = vmatpush2.msra.mxu0 0.0
      %2042 = vmatprep.subr.mxu0 0.0
      %2043 = vmatpush2.msra.mxu0 0.0
      %2044 = vmatprep.subr.mxu0 0.0
      %2045 = vmatpush2.msra.mxu0 0.0
      %2046 = vmatprep.subr.mxu0 0.0
      %2047 = vmatpush2.msra.mxu0 0.0
      %2048 = vmatprep.subr.mxu0 0.0
      %2049 = vmatpush2.msra.mxu0 0.0
      %2050 = vmatprep.subr.mxu0 0.0
      %2051 = vmatpush2.msra.mxu0 0.0
      %2052 = vmatprep.subr.mxu0 0.0
      %2053 = vmatpush2.msra.mxu0 0.0
      %2054 = vmatprep.subr.mxu0 0.0
      %2055 = vmatpush2.msra.mxu0 0.0
      %2056 = vmatprep.subr.mxu0 0.0
      %2057 = vmatpush2.msra.mxu0 0.0
      %2058 = vmatprep.subr.mxu0 0.0
      %2059 = vmatpush2.msra.mxu0 0.0
      %2060 = vmatprep.subr.mxu0 0.0
      %2061 = vmatpush2.msra.mxu0 0.0
      %2062 = vmatprep.subr.mxu0 0.0
      %2063 = vmatpush2.msra.mxu0 0.0
      %2064 = vmatprep.subr.mxu0 0.0
      %2065 = vmatpush2.msra.mxu0 0.0
      %2066 = vmatprep.subr.mxu0 0.0
      %2067 = vmatpush2.msra.mxu0 0.0
      %2068 = vmatprep.subr.mxu0 0.0
      %2069 = vmatpush2.msra.mxu0 0.0
      %2070 = vmatprep.subr.mxu0 0.0
      %2071 = vmatpush2.msra.mxu0 0.0
      %2072 = vmatprep.mubr.f32.mxu0 0.0
      %2073 = vmatmul.mubr.f32.gmra.mxu0 %v249
      %v2074 = vpop.f32.mrf.mxu0
      %v2075 = vadd.f32 0.0, %v2074
      %v2076 = vpop.f32.mrf.mxu0
      %2077 = vmatprep.mubr.f32.mxu0 0.0
      %2078 = vmatmul.mubr.f32.gmra.mxu0 %v252
      %v2079 = vpop.f32.mrf.mxu0
      %v2080 = vadd.f32 0.0, %v2079
      %v2081 = vpop.f32.mrf.mxu0
      %2082 = vmatprep.mubr.f32.mxu0 0.0
      %2083 = vmatmul.mubr.f32.gmra.mxu0 %v255
      %v2084 = vpop.f32.mrf.mxu0
      %v2085 = vadd.f32 0.0, %v2084
      %v2086 = vpop.f32.mrf.mxu0
      %2087 = vmatprep.mubr.f32.mxu0 0.0
      %2088 = vmatmul.mubr.f32.gmra.mxu0 %v258
      %v2089 = vpop.f32.mrf.mxu0
      %v2090 = vadd.f32 0.0, %v2089
      %v2091 = vpop.f32.mrf.mxu0
      %2092 = vmatprep.mubr.f32.mxu0 0.0
      %2093 = vmatmul.mubr.f32.gmra.mxu0 %v261
      %v2094 = vpop.f32.mrf.mxu0
      %v2095 = vadd.f32 0.0, %v2094
      %v2096 = vpop.f32.mrf.mxu0
      %2097 = vmatprep.mubr.f32.mxu0 0.0
      %2098 = vmatmul.mubr.f32.gmra.mxu0 %v264
      %v2099 = vpop.f32.mrf.mxu0
      %v2100 = vadd.f32 0.0, %v2099
      %v2101 = vpop.f32.mrf.mxu0
      %2102 = vmatprep.mubr.f32.mxu0 0.0
      %2103 = vmatmul.mubr.f32.gmra.mxu0 %v627
      %v2104 = vpop.f32.mrf.mxu0
      %v2105 = vadd.f32 0.0, %v2104
      %v2106 = vpop.f32.mrf.mxu0
      %2107 = vmatprep.mubr.f32.mxu0 0.0
      %2108 = vmatmul.mubr.f32.gmra.mxu0 %v1636
      %v2109 = vpop.f32.mrf.mxu0
      %v2110 = vadd.f32 0.0, %v2109
      %v2111 = vpop.f32.mrf.mxu0
      %2112 = vdwg.mxu0
      %v2113 = vadd.f32 %v1965, %v2075
      %v2114 = vadd.f32 %v1970, %v2080
      %v2115 = vadd.f32 %v1975, %v2085
      %v2116 = vadd.f32 %v1980, %v2090
      %v2117 = vadd.f32 %v1985, %v2095
      %v2118 = vadd.f32 %v1990, %v2100
      %v2119 = vadd.f32 %v1995, %v2105
      %v2120 = vadd.f32 %v2000, %v2110
      %v2121 = vld [vmem:[%s1] sm:$0xff]
      %v2122 = vld [vmem:[%s1 + $0x8] sm:$0xff]
      %v2123 = vld [vmem:[%s1 + $0x10] sm:$0xff]
      %v2124 = vld [vmem:[%s1 + $0x18] sm:$0xff]
      %v2126 = vsel %vm241, %v230, 0
      %2128 = vmatprep.subr.mxu0 0.0
      %2129 = vmatpush1.msra.mxu0 0.0
      %2130 = vmatprep.subr.mxu0 0.0
      %2131 = vmatpush1.msra.mxu0 0.0
      %2132 = vmatprep.subr.mxu0 0.0
      %2133 = vmatpush1.msra.mxu0 0.0
      %2134 = vmatprep.subr.mxu0 0.0
      %2135 = vmatpush1.msra.mxu0 0.0
      %2136 = vmatprep.subr.mxu0 0.0
      %2137 = vmatpush1.msra.mxu0 0.0
      %2138 = vmatprep.subr.mxu0 0.0
      %2139 = vmatpush1.msra.mxu0 0.0
      %2140 = vmatprep.subr.mxu0 0.0
      %2141 = vmatpush1.msra.mxu0 0.0
      %2142 = vmatprep.subr.mxu0 0.0
      %2143 = vmatpush1.msra.mxu0 0.0
      %2144 = vmatprep.subr.mxu0 0.0
      %2145 = vmatpush1.msra.mxu0 0.0
      %2146 = vmatprep.subr.mxu0 0.0
      %2147 = vmatpush1.msra.mxu0 0.0
      %2148 = vmatprep.subr.mxu0 0.0
      %2149 = vmatpush1.msra.mxu0 0.0
      %2150 = vmatprep.subr.mxu0 0.0
      %2151 = vmatpush1.msra.mxu0 0.0
      %2152 = vmatprep.subr.mxu0 0.0
      %2153 = vmatpush1.msra.mxu0 %v2124
      %2154 = vmatprep.subr.mxu0 0.0
      %2155 = vmatpush1.msra.mxu0 %v2123
      %2156 = vmatprep.subr.mxu0 0.0
      %2157 = vmatpush1.msra.mxu0 %v2122
      %2158 = vmatprep.subr.mxu0 0.0
      %2159 = vmatpush1.msra.mxu0 %v2121
      %2160 = vmatprep.subr.mxu0 0.0
      %2161 = vmatpush2.msra.mxu0 0.0
      %2162 = vmatprep.subr.mxu0 0.0
      %2163 = vmatpush2.msra.mxu0 0.0
      %2164 = vmatprep.subr.mxu0 0.0
      %2165 = vmatpush2.msra.mxu0 0.0
      %2166 = vmatprep.subr.mxu0 0.0
      %2167 = vmatpush2.msra.mxu0 0.0
      %2168 = vmatprep.subr.mxu0 0.0
      %2169 = vmatpush2.msra.mxu0 0.0
      %2170 = vmatprep.subr.mxu0 0.0
      %2171 = vmatpush2.msra.mxu0 0.0
      %2172 = vmatprep.subr.mxu0 0.0
      %2173 = vmatpush2.msra.mxu0 0.0
      %2174 = vmatprep.subr.mxu0 0.0
      %2175 = vmatpush2.msra.mxu0 0.0
      %2176 = vmatprep.subr.mxu0 0.0
      %2177 = vmatpush2.msra.mxu0 0.0
      %2178 = vmatprep.subr.mxu0 0.0
      %2179 = vmatpush2.msra.mxu0 0.0
      %2180 = vmatprep.subr.mxu0 0.0
      %2181 = vmatpush2.msra.mxu0 0.0
      %2182 = vmatprep.subr.mxu0 0.0
      %2183 = vmatpush2.msra.mxu0 0.0
      %2184 = vmatprep.subr.mxu0 0.0
      %2185 = vmatpush2.msra.mxu0 0.0
      %2186 = vmatprep.subr.mxu0 0.0
      %2187 = vmatpush2.msra.mxu0 0.0
      %2188 = vmatprep.subr.mxu0 0.0
      %2189 = vmatpush2.msra.mxu0 0.0
      %2190 = vmatprep.subr.mxu0 0.0
      %2191 = vmatpush2.msra.mxu0 0.0
      %2192 = vmatprep.mubr.f32.mxu0 0.0
      %2193 = vmatmul.mubr.f32.gmra.mxu0 %v791
      %v2194 = vpop.f32.mrf.mxu0
      %v2195 = vadd.f32 0.0, %v2194
      %v2196 = vpop.f32.mrf.mxu0
      %2197 = vmatprep.mubr.f32.mxu0 0.0
      %2198 = vmatmul.mubr.f32.gmra.mxu0 %v794
      %v2199 = vpop.f32.mrf.mxu0
      %v2200 = vadd.f32 0.0, %v2199
      %v2201 = vpop.f32.mrf.mxu0
      %2202 = vmatprep.mubr.f32.mxu0 0.0
      %2203 = vmatmul.mubr.f32.gmra.mxu0 %v797
      %v2204 = vpop.f32.mrf.mxu0
      %v2205 = vadd.f32 0.0, %v2204
      %v2206 = vpop.f32.mrf.mxu0
      %2207 = vmatprep.mubr.f32.mxu0 0.0
      %2208 = vmatmul.mubr.f32.gmra.mxu0 %v800
      %v2209 = vpop.f32.mrf.mxu0
      %v2210 = vadd.f32 0.0, %v2209
      %v2211 = vpop.f32.mrf.mxu0
      %2212 = vmatprep.mubr.f32.mxu0 0.0
      %2213 = vmatmul.mubr.f32.gmra.mxu0 %v803
      %v2214 = vpop.f32.mrf.mxu0
      %v2215 = vadd.f32 0.0, %v2214
      %v2216 = vpop.f32.mrf.mxu0
      %2217 = vmatprep.mubr.f32.mxu0 0.0
      %2218 = vmatmul.mubr.f32.gmra.mxu0 %v806
      %v2219 = vpop.f32.mrf.mxu0
      %v2220 = vadd.f32 0.0, %v2219
      %v2221 = vpop.f32.mrf.mxu0
      %2222 = vmatprep.mubr.f32.mxu0 0.0
      %2223 = vmatmul.mubr.f32.gmra.mxu0 %v1142
      %v2224 = vpop.f32.mrf.mxu0
      %v2225 = vadd.f32 0.0, %v2224
      %v2226 = vpop.f32.mrf.mxu0
      %2227 = vmatprep.mubr.f32.mxu0 0.0
      %2228 = vmatmul.mubr.f32.gmra.mxu0 %v2126
      %v2229 = vpop.f32.mrf.mxu0
      %v2230 = vadd.f32 0.0, %v2229
      %v2231 = vpop.f32.mrf.mxu0
      %2232 = vdwg.mxu0
      %v2233 = vadd.f32 %v2113, %v2195
      %v2234 = vadd.f32 %v2114, %v2200
      %v2235 = vadd.f32 %v2115, %v2205
      %v2236 = vadd.f32 %v2116, %v2210
      %v2237 = vadd.f32 %v2117, %v2215
      %v2238 = vadd.f32 %v2118, %v2220
      %v2239 = vadd.f32 %v2119, %v2225
      %v2240 = vadd.f32 %v2120, %v2230
      %v2241 = vld [vmem:[%s2] sm:$0x1]
      %v2243 = vlaneseq
      %v2244 = vshrl.u32 %v2243, 7
      %v2245 = vsub.s32 0, %v2244
      %v2246 = vrot.slane %v2241, %v2245
      %v2248 = vadd.f32 %v2233, %v2246
      %v2249 = vadd.f32 %v2234, %v2246
      %v2250 = vadd.f32 %v2235, %v2246
      %v2251 = vadd.f32 %v2236, %v2246
      %v2252 = vadd.f32 %v2237, %v2246
      %v2253 = vadd.f32 %v2238, %v2246
      %v2254 = vadd.f32 %v2239, %v2246
      %v2255 = vadd.f32 %v2240, %v2246
      %v2256 = vmax.f32 %v2248, 0.0
      %v2257 = vmax.f32 %v2249, 0.0
      %v2258 = vmax.f32 %v2250, 0.0
      %v2259 = vmax.f32 %v2251, 0.0
      %v2260 = vmax.f32 %v2252, 0.0
      %v2261 = vmax.f32 %v2253, 0.0
      %v2262 = vmax.f32 %v2254, 0.0
      %v2263 = vmax.f32 %v2255, 0.0
      %s2264 = scalar_lea.vmem %s170, 192
      %2265 = vst.msk [vmem:[%s2264] sm:$0xff] %vm765, %v2256
      %2266 = vst.msk [vmem:[%s2264 + $0x8] sm:$0xff] %vm765, %v2257
      %2267 = vst.msk [vmem:[%s2264 + $0x10] sm:$0xff] %vm765, %v2258
      %2268 = vst.msk [vmem:[%s2264 + $0x18] sm:$0xff] %vm765, %v2259
      %2269 = vst.msk [vmem:[%s2264 + $0x20] sm:$0xff] %vm765, %v2260
      %2270 = vst.msk [vmem:[%s2264 + $0x28] sm:$0xff] %vm765, %v2261
      %2271 = vst.msk [vmem:[%s2264 + $0x30] sm:$0xff] %vm765, %v2262
      %2272 = vst.msk [vmem:[%s2264 + $0x38] sm:$0xff] %vm765, %v2263
      %p2273 = scmp.lt.s32.totalorder %s14, 1
      %s2274 = scalar_select %p2273, %s14, 1
      %s2275 = smul.addr %s2274, 32
      %s2276 = smul.addr %s2275, 8
      %s2277 = scalar_lea.vmem %s3, %s2276
      // Predicated region
      $region33: #{decoder_forward.8} parent=31 // pred_check
        %p2278 = pneg %p100
      $region34: #{decoder_forward.8} parent=31 // pred_check_branch
        %2280 = sbr.rel (%p2278) target = $region36
      $region35: #{decoder_forward.8} parent=31 // pred_region
        _
      $region36: #{decoder_forward.8} parent=31 // pred_fallthru
        _
    $region32: #{decoder_forward.8} parent=5 // pred_fallthru
      _
    %p2281 = scmp.le.s32.totalorder 2, %s9
    // Predicated region
    $region37: #{decoder_forward.8} parent=5 // pred_check
      %p2282 = pneg %p2281
    $region38: #{decoder_forward.8} parent=5 // pred_check_branch
      %2284 = sbr.rel (%p2282) target = $region40
    $region39: #{decoder_forward.8} parent=5 // pred_region
      %s2285 = ssub.s32 %s9, 2
      // Predicated region
      $region41: #{decoder_forward.8} parent=39 // pred_check
        %p2286 = pneg %p106
      $region42: #{decoder_forward.8} parent=39 // pred_check_branch
        %2288 = sbr.rel (%p2286) target = $region44
      $region43: #{decoder_forward.8} parent=39 // pred_region
        %p2289 = scmp.lt.s32.totalorder %s15, 1
        %s2290 = scalar_select %p2289, %s15, 1
        %s2291 = smul.addr %s2290, 32
        %s2292 = smul.addr %s2291, 8
        %s2293 = scalar_lea.vmem %s3, %s2292
      $region44: #{decoder_forward.8} parent=39 // pred_fallthru
        _
    $region40: #{decoder_forward.8} parent=5 // pred_fallthru
      _
  $region6: #{decoder_forward.8} parent=0 // loop_footer
    %s13 = sadd.s32 1, %s9
  $region7: #{decoder_forward.8} parent=0 // loop_footer_branch
    %8 = sbr.rel target = $region3
  $region8: #{decoder_forward.8} parent=0 // loop_exit
    _

// kernel: decoder_forward.9
$region0: #{decoder_forward.9}
  #allocation0 [shape = 'u32[]', space=smem, size = 0x4, offset = 0x4, fixed_abs, tag = 'smem constant byte address 0x4 - core index']
  #allocation1 [shape = 'u32[144,128]{1,0:T(1,128)}', space=vmem, size = 0x12000, scoped, tag = 'internal scratch']
  %s0 = inlined_call_operand.vmem [shape: f32[2,18,18,16], index: 0, kind: input, shape index: {}]
  %s1 = inlined_call_operand.vmem [shape: f32[4,4,3,16], index: 1, kind: input, shape index: {}]
  %s2 = inlined_call_operand.vmem [shape: f32[3,1], index: 2, kind: input, shape index: {}]
  %s3 = inlined_call_operand.vmem [shape: f32[2,2,2,3,256], index: 3, kind: output, shape index: {}]
  %s4 = sld [smem:[#allocation0]]
  $region45: #{decoder_forward.9} parent=0
    _
  %s6 = ssub.s32 1, %s4
  %s7 = scalar_select 0, %s6, %s4
  loop: start=0, step=1, limit=4
  $region2: #{decoder_forward.9} parent=0 // loop_pre_header
    _
  $region3: #{decoder_forward.9} parent=0 // loop_header
    %s9 = sphi 0, %s13
    %p10 = scmp.ge.s32.totalorder %s9, 4
    %s19 = sphi 0, %s21
    %s22 = sphi 0, %s19
    %s23 = sphi 0, %s22
    %s39 = sphi 0, %s23
    %s43 = sphi 0, %s43
    %s45 = sphi 0, %s43
    %s46 = sphi 0, %s45
    %s60 = sphi 0, %s46
    %s64 = sphi 0, %s64
    %s66 = sphi 0, %s64
    %s67 = sphi 0, %s66
    %s81 = sphi 0, %s67
    %s87 = sphi 0, %s89
    %s90 = sphi 0, %s87
    %s91 = sphi 0, %s90
    %s107 = sphi 0, %s91
  $region4: #{decoder_forward.9} parent=0 // loop_header_branch
    %12 = sbr.rel (%p10) target = $region8
  $region5: #{decoder_forward.9} parent=0 // loop_body
    %s14 = ssub.s32 %s9, 1
    %s15 = ssub.s32 %s9, 2
    %s16 = sadd.s32 %s9, 1
    %s17 = ssub.s32 %s9, %s16
    %p18 = scmp.eq.s32.totalorder %s17, 0
    %s20 = sadd.s32 %s19, 1
    %s21 = scalar_select %p18, %s19, %s20
    %p24 = pneg %p18
    %p25 = scmp.eq.s32.totalorder %s9, 1
    %p26 = por %p24, %p25
    %p27 = scmp.ne.s32.totalorder %s19, %s22
    %p28 = scmp.eq.s32.totalorder %s9, 0
    %p29 = por %p27, %p28
    %p30 = scmp.ne.s32.totalorder %s19, %s22
    %p31 = scmp.eq.s32.totalorder %s14, 1
    %p32 = por %p30, %p31
    %p33 = scmp.ne.s32.totalorder %s22, %s23
    %p34 = scmp.eq.s32.totalorder %s14, 0
    %p35 = por %p33, %p34
    %p36 = scmp.ne.s32.totalorder %s22, %s23
    %p37 = scmp.eq.s32.totalorder %s15, 1
    %p38 = por %p36, %p37
    %p40 = scmp.ne.s32.totalorder %s23, %s39
    %p41 = scmp.eq.s32.totalorder %s15, 0
    %p42 = por %p40, %p41
    %s44 = sadd.s32 %s43, 1
    %p47 = scmp.eq.s32.totalorder %s9, 1
    %p48 = scmp.ne.s32.totalorder %s43, %s45
    %p49 = scmp.eq.s32.totalorder %s9, 0
    %p50 = por %p48, %p49
    %p51 = scmp.ne.s32.totalorder %s43, %s45
    %p52 = scmp.eq.s32.totalorder %s14, 1
    %p53 = por %p51, %p52
    %p54 = scmp.ne.s32.totalorder %s45, %s46
    %p55 = scmp.eq.s32.totalorder %s14, 0
    %p56 = por %p54, %p55
    %p57 = scmp.ne.s32.totalorder %s45, %s46
    %p58 = scmp.eq.s32.totalorder %s15, 1
    %p59 = por %p57, %p58
    %p61 = scmp.ne.s32.totalorder %s46, %s60
    %p62 = scmp.eq.s32.totalorder %s15, 0
    %p63 = por %p61, %p62
    %s65 = sadd.s32 %s64, 1
    %p68 = scmp.eq.s32.totalorder %s9, 1
    %p69 = scmp.ne.s32.totalorder %s64, %s66
    %p70 = scmp.eq.s32.totalorder %s9, 0
    %p71 = por %p69, %p70
    %p72 = scmp.ne.s32.totalorder %s64, %s66
    %p73 = scmp.eq.s32.totalorder %s14, 1
    %p74 = por %p72, %p73
    %p75 = scmp.ne.s32.totalorder %s66, %s67
    %p76 = scmp.eq.s32.totalorder %s14, 0
    %p77 = por %p75, %p76
    %p78 = scmp.ne.s32.totalorder %s66, %s67
    %p79 = scmp.eq.s32.totalorder %s15, 1
    %p80 = por %p78, %p79
    %p82 = scmp.ne.s32.totalorder %s67, %s81
    %p83 = scmp.eq.s32.totalorder %s15, 0
    %p84 = por %p82, %p83
    %s85 = ssub.s32 %s9, %s16
    %p86 = scmp.eq.s32.totalorder %s85, 0
    %s88 = sadd.s32 %s87, 1
    %s89 = scalar_select %p86, %s87, %s88
    %p92 = pneg %p86
    %p93 = scmp.eq.s32.totalorder %s9, 1
    %p94 = por %p92, %p93
    %p95 = scmp.ne.s32.totalorder %s87, %s90
    %p96 = scmp.eq.s32.totalorder %s9, 0
    %p97 = por %p95, %p96
    %p98 = scmp.ne.s32.totalorder %s87, %s90
    %p99 = scmp.eq.s32.totalorder %s14, 1
    %p100 = por %p98, %p99
    %p101 = scmp.ne.s32.totalorder %s90, %s91
    %p102 = scmp.eq.s32.totalorder %s14, 0
    %p103 = por %p101, %p102
    %p104 = scmp.ne.s32.totalorder %s90, %s91
    %p105 = scmp.eq.s32.totalorder %s15, 1
    %p106 = por %p104, %p105
    %p108 = scmp.ne.s32.totalorder %s91, %s107
    %p109 = scmp.eq.s32.totalorder %s15, 0
    %p110 = por %p108, %p109
    %p111 = scmp.le.s32.totalorder 1, %s9
    %p112 = scmp.lt.s32.totalorder %s9, 3
    %p113 = pnand %p111, %p112
    %p114 = pneg %p113
    // Predicated region
    $region9: #{decoder_forward.9} parent=5 // pred_check
      _
    $region10: #{decoder_forward.9} parent=5 // pred_check_branch
      %116 = sbr.rel (%p113) target = $region12
    $region11: #{decoder_forward.9} parent=5 // pred_region
      %s117 = ssub.s32 %s9, 1
      // Predicated region
      $region13: #{decoder_forward.9} parent=11 // pred_check
        %p118 = pneg %p56
      $region14: #{decoder_forward.9} parent=11 // pred_check_branch
        %120 = sbr.rel (%p118) target = $region16
      $region15: #{decoder_forward.9} parent=11 // pred_region
        _
      $region16: #{decoder_forward.9} parent=11 // pred_fallthru
        _
      // Predicated region
      $region17: #{decoder_forward.9} parent=11 // pred_check
        %p121 = pneg %p77
      $region18: #{decoder_forward.9} parent=11 // pred_check_branch
        %123 = sbr.rel (%p121) target = $region20
      $region19: #{decoder_forward.9} parent=11 // pred_region
        _
      $region20: #{decoder_forward.9} parent=11 // pred_fallthru
        _
    $region12: #{decoder_forward.9} parent=5 // pred_fallthru
      _
    %p124 = scmp.lt.s32.totalorder %s9, 2
    // Predicated region
    $region21: #{decoder_forward.9} parent=5 // pred_check
      %p125 = pneg %p124
    $region22: #{decoder_forward.9} parent=5 // pred_check_branch
      %127 = sbr.rel (%p125) target = $region24
    $region23: #{decoder_forward.9} parent=5 // pred_region
      // Predicated region
      $region25: #{decoder_forward.9} parent=23 // pred_check
        %p128 = pneg %p29
      $region26: #{decoder_forward.9} parent=23 // pred_check_branch
        %130 = sbr.rel (%p128) target = $region28
      $region27: #{decoder_forward.9} parent=23 // pred_region
        %p131 = scmp.lt.s32.totalorder %s9, 1
        %s132 = scalar_select %p131, %s9, 1
        %s133 = smul.addr %s132, 54
        %s134 = smul.addr %s133, 8
        %s135 = scalar_lea.vmem %s0, %s134
      $region28: #{decoder_forward.9} parent=23 // pred_fallthru
        _
    $region24: #{decoder_forward.9} parent=5 // pred_fallthru
      _
    %p136 = scmp.le.s32.totalorder 1, %s9
    %p137 = scmp.lt.s32.totalorder %s9, 3
    %p138 = pnand %p136, %p137
    %p139 = pneg %p138
    // Predicated region
    $region29: #{decoder_forward.9} parent=5 // pred_check
      _
    $region30: #{decoder_forward.9} parent=5 // pred_check_branch
      %141 = sbr.rel (%p138) target = $region32
    $region31: #{decoder_forward.9} parent=5 // pred_region
      %s142 = ssub.s32 %s9, 1
      %p143 = scmp.lt.s32.totalorder %s14, 1
      %s144 = scalar_select %p143, %s14, 1
      %s145 = smul.addr %s144, 54
      %s146 = smul.addr %s145, 8
      %s147 = scalar_lea.vmem %s0, %s146
      %p148 = pneg %p35
      %p149 = pneg %p32
      %p150 = pneg %p56
      %p151 = pneg %p53
      %p152 = pneg %p77
      %p153 = pneg %p74
      %p154 = pneg %p103
      %p155 = pneg %p100
      %p156 = scmp.lt.s32.totalorder %s14, 1
      %s157 = scalar_select %p156, %s14, 1
      %s158 = smul.addr %s157, 8
      %s159 = smul.addr %s158, 4
      %s160 = scalar_lea.vmem %s3, %s159
      %p161 = scmp.lt.s32.totalorder %s14, 1
      %s162 = scalar_select %p161, %s14, 1
      %s163 = smul.addr %s162, 54
      %s164 = smul.addr %s163, 8
      %s165 = scalar_lea.vmem %s0, %s164
      %p166 = scmp.lt.s32.totalorder %s14, 1
      %s167 = scalar_select %p166, %s14, 1
      %s168 = smul.addr %s167, 8
      %s169 = smul.addr %s168, 4
      %s170 = scalar_lea.vmem %s3, %s169
      %v171 = vld [vmem:[%s165] sm:$0xff]
      %v172 = vld [vmem:[%s165 + $0x8] sm:$0xff]
      %v173 = vld [vmem:[%s165 + $0x18] sm:$0xff]
      %v174 = vld [vmem:[%s165 + $0x20] sm:$0xff]
      %v175 = vld [vmem:[%s165 + $0x30] sm:$0xff]
      %v176 = vld [vmem:[%s165 + $0x38] sm:$0xff]
      %v177 = vld [vmem:[%s165 + $0x48] sm:$0xff]
      %v178 = vld [vmem:[%s165 + $0x50] sm:$0xff]
      %v179 = vld [vmem:[%s165 + $0x60] sm:$0xff]
      %v180 = vld [vmem:[%s165 + $0x68] sm:$0xff]
      %v181 = vld [vmem:[%s165 + $0x78] sm:$0xff]
      %v182 = vld [vmem:[%s165 + $0x80] sm:$0xff]
      %v183 = vld [vmem:[%s165 + $0x90] sm:$0xff]
      %v184 = vld [vmem:[%s165 + $0x98] sm:$0xff]
      %v185 = vld [vmem:[%s165 + $0xa8] sm:$0xff]
      %v186 = vld [vmem:[%s165 + $0xb0] sm:$0xff]
      %v187 = vld [vmem:[%s165 + $0xc0] sm:$0xff]
      %v188 = vld [vmem:[%s165 + $0xc8] sm:$0xff]
      %v189 = vld [vmem:[%s165 + $0xd8] sm:$0xff]
      %v190 = vld [vmem:[%s165 + $0xe0] sm:$0xff]
      %v191 = vld [vmem:[%s165 + $0xf0] sm:$0xff]
      %v192 = vld [vmem:[%s165 + $0xf8] sm:$0xff]
      %v193 = vld [vmem:[%s165 + $0x108] sm:$0xff]
      %v194 = vld [vmem:[%s165 + $0x110] sm:$0xff]
      %v195 = vld [vmem:[%s165 + $0x120] sm:$0xff]
      %v196 = vld [vmem:[%s165 + $0x128] sm:$0xff]
      %v197 = vld [vmem:[%s165 + $0x138] sm:$0xff]
      %v198 = vld [vmem:[%s165 + $0x140] sm:$0xff]
      %v199 = vld [vmem:[%s165 + $0x150] sm:$0xff]
      %v200 = vld [vmem:[%s165 + $0x158] sm:$0xff]
      %v201 = vld [vmem:[%s165 + $0x168] sm:$0xff]
      %v202 = vld [vmem:[%s165 + $0x170] sm:$0xff]
      %v203 = vld [vmem:[%s165 + $0x180] sm:$0xff]
      %v204 = vld [vmem:[%s165 + $0x188] sm:$0xff]
      %v205 = vld [vmem:[%s165 + $0x198] sm:$0xff]
      %v206 = vld [vmem:[%s165 + $0x1a0] sm:$0xff]
      %v207 = vld [vmem:[%s165 + $0x1] sm:$0xff]
      %v208 = vld [vmem:[%s165 + $0x9] sm:$0xff]
      %v209 = vld [vmem:[%s165 + $0x19] sm:$0xff]
      %v210 = vld [vmem:[%s165 + $0x21] sm:$0xff]
      %v211 = vld [vmem:[%s165 + $0x31] sm:$0xff]
      %v212 = vld [vmem:[%s165 + $0x39] sm:$0xff]
      %v213 = vld [vmem:[%s165 + $0x49] sm:$0xff]
      %v214 = vld [vmem:[%s165 + $0x51] sm:$0xff]
      %v215 = vld [vmem:[%s165 + $0x61] sm:$0xff]
      %v216 = vld [vmem:[%s165 + $0x69] sm:$0xff]
      %v217 = vld [vmem:[%s165 + $0x79] sm:$0xff]
      %v218 = vld [vmem:[%s165 + $0x81] sm:$0xff]
      %v219 = vld [vmem:[%s165 + $0x91] sm:$0xff]
      %v220 = vld [vmem:[%s165 + $0x99] sm:$0xff]
      %v221 = vld [vmem:[%s165 + $0xa9] sm:$0xff]
      %v222 = vld [vmem:[%s165 + $0xb1] sm:$0xff]
      %v223 = vld [vmem:[%s165 + $0xc1] sm:$0xff]
      %v224 = vld [vmem:[%s165 + $0xc9] sm:$0xff]
      %v225 = vld [vmem:[%s165 + $0xd9] sm:$0xff]
      %v226 = vld [vmem:[%s165 + $0xe1] sm:$0xff]
      %v227 = vld [vmem:[%s165 + $0xf1] sm:$0xff]
      %v228 = vld [vmem:[%s165 + $0xf9] sm:$0xff]
      %v229 = vld [vmem:[%s165 + $0x109] sm:$0xff]
      %v230 = vld [vmem:[%s165 + $0x111] sm:$0xff]
      %v231 = vld [vmem:[%s165 + $0x121] sm:$0xff]
      %v232 = vld [vmem:[%s165 + $0x129] sm:$0xff]
      %v233 = vld [vmem:[%s165 + $0x139] sm:$0xff]
      %v234 = vld [vmem:[%s165 + $0x141] sm:$0xff]
      %v235 = vld [vmem:[%s165 + $0x151] sm:$0xff]
      %v236 = vld [vmem:[%s165 + $0x159] sm:$0xff]
      %v237 = vld [vmem:[%s165 + $0x169] sm:$0xff]
      %v238 = vld [vmem:[%s165 + $0x171] sm:$0xff]
      %v239 = vld [vmem:[%s165 + $0x181] sm:$0xff]
      %v240 = vld [vmem:[%s165 + $0x189] sm:$0xff]
      %v241 = vld [vmem:[%s165 + $0x199] sm:$0xff]
      %v242 = vld [vmem:[%s165 + $0x1a1] sm:$0xff]
      %v243 = vld [vmem:[%s165 + $0x2] sm:$0xff]
      %v244 = vld [vmem:[%s165 + $0xa] sm:$0xff]
      %v245 = vld [vmem:[%s165 + $0x1a] sm:$0xff]
      %v246 = vld [vmem:[%s165 + $0x22] sm:$0xff]
      %v247 = vld [vmem:[%s165 + $0x32] sm:$0xff]
      %v248 = vld [vmem:[%s165 + $0x3a] sm:$0xff]
      %v249 = vld [vmem:[%s165 + $0x4a] sm:$0xff]
      %v250 = vld [vmem:[%s165 + $0x52] sm:$0xff]
      %v251 = vld [vmem:[%s165 + $0x62] sm:$0xff]
      %v252 = vld [vmem:[%s165 + $0x6a] sm:$0xff]
      %v253 = vld [vmem:[%s165 + $0x7a] sm:$0xff]
      %v254 = vld [vmem:[%s165 + $0x82] sm:$0xff]
      %v255 = vld [vmem:[%s165 + $0x92] sm:$0xff]
      %v256 = vld [vmem:[%s165 + $0x9a] sm:$0xff]
      %v257 = vld [vmem:[%s165 + $0xaa] sm:$0xff]
      %v258 = vld [vmem:[%s165 + $0xb2] sm:$0xff]
      %v259 = vld [vmem:[%s165 + $0xc2] sm:$0xff]
      %v260 = vld [vmem:[%s165 + $0xca] sm:$0xff]
      %v261 = vld [vmem:[%s165 + $0xda] sm:$0xff]
      %v262 = vld [vmem:[%s165 + $0xe2] sm:$0xff]
      %v263 = vld [vmem:[%s165 + $0xf2] sm:$0xff]
      %v264 = vld [vmem:[%s165 + $0xfa] sm:$0xff]
      %v265 = vld [vmem:[%s165 + $0x10a] sm:$0xff]
      %v266 = vld [vmem:[%s165 + $0x112] sm:$0xff]
      %v267 = vld [vmem:[%s165 + $0x122] sm:$0xff]
      %v268 = vld [vmem:[%s165 + $0x12a] sm:$0xff]
      %v269 = vld [vmem:[%s165 + $0x13a] sm:$0xff]
      %v270 = vld [vmem:[%s165 + $0x142] sm:$0xff]
      %v271 = vld [vmem:[%s165 + $0x152] sm:$0xff]
      %v272 = vld [vmem:[%s165 + $0x15a] sm:$0xff]
      %v273 = vld [vmem:[%s165 + $0x16a] sm:$0xff]
      %v274 = vld [vmem:[%s165 + $0x172] sm:$0xff]
      %v275 = vld [vmem:[%s165 + $0x182] sm:$0xff]
      %v276 = vld [vmem:[%s165 + $0x18a] sm:$0xff]
      %v277 = vld [vmem:[%s165 + $0x19a] sm:$0xff]
      %v278 = vld [vmem:[%s165 + $0x1a2] sm:$0xff]
      %s279 = scalar_lea.vmem %s1, 60
      %v280 = vld [vmem:[%s279] sm:$0x7]
      %s281 = scalar_lea.vmem %s1, 52
      %v282 = vld [vmem:[%s281] sm:$0x7]
      %vm283 = vcmask 130048
      %v285 = vsel %vm283, %v282, 0
      %v288 = vsel %vm283, %v207, 0
      %v291 = vsel %vm283, %v208, 0
      %v294 = vsel %vm283, %v209, 0
      %v297 = vsel %vm283, %v210, 0
      %v300 = vsel %vm283, %v211, 0
      %v303 = vsel %vm283, %v212, 0
      %v306 = vsel %vm283, %v213, 0
      %v309 = vsel %vm283, %v214, 0
      %v312 = vsel %vm283, %v215, 0
      %v315 = vsel %vm283, %v216, 0
      %v318 = vsel %vm283, %v217, 0
      %v321 = vsel %vm283, %v218, 0
      %v324 = vsel %vm283, %v219, 0
      %v327 = vsel %vm283, %v220, 0
      %v330 = vsel %vm283, %v221, 0
      %v333 = vsel %vm283, %v222, 0
      %v336 = vsel %vm283, %v223, 0
      %v339 = vsel %vm283, %v224, 0
      %v342 = vsel %vm283, %v225, 0
      %v345 = vsel %vm283, %v226, 0
      %v348 = vsel %vm283, %v227, 0
      %v351 = vsel %vm283, %v228, 0
      %v354 = vsel %vm283, %v229, 0
      %v357 = vsel %vm283, %v230, 0
      %v360 = vsel %vm283, %v231, 0
      %v363 = vsel %vm283, %v232, 0
      %v366 = vsel %vm283, %v233, 0
      %v369 = vsel %vm283, %v234, 0
      %v372 = vsel %vm283, %v235, 0
      %v375 = vsel %vm283, %v236, 0
      %v378 = vsel %vm283, %v237, 0
      %v381 = vsel %vm283, %v238, 0
      %383 = vmatprep.subr.mxu0 0.0
      %384 = vmatpush1.xpose.msra.mxu0 %v333
      %385 = vmatprep.subr.mxu0 0.0
      %386 = vmatpush1.xpose.msra.mxu0 %v330
      %387 = vmatprep.subr.mxu0 0.0
      %388 = vmatpush1.xpose.msra.mxu0 %v327
      %389 = vmatprep.subr.mxu0 0.0
      %390 = vmatpush1.xpose.msra.mxu0 %v324
      %391 = vmatprep.subr.mxu0 0.0
      %392 = vmatpush1.xpose.msra.mxu0 %v321
      %393 = vmatprep.subr.mxu0 0.0
      %394 = vmatpush1.xpose.msra.mxu0 %v318
      %395 = vmatprep.subr.mxu0 0.0
      %396 = vmatpush1.xpose.msra.mxu0 %v315
      %397 = vmatprep.subr.mxu0 0.0
      %398 = vmatpush1.xpose.msra.mxu0 %v312
      %399 = vmatprep.subr.mxu0 0.0
      %400 = vmatpush1.xpose.msra.mxu0 %v309
      %401 = vmatprep.subr.mxu0 0.0
      %402 = vmatpush1.xpose.msra.mxu0 %v306
      %403 = vmatprep.subr.mxu0 0.0
      %404 = vmatpush1.xpose.msra.mxu0 %v303
      %405 = vmatprep.subr.mxu0 0.0
      %406 = vmatpush1.xpose.msra.mxu0 %v300
      %407 = vmatprep.subr.mxu0 0.0
      %408 = vmatpush1.xpose.msra.mxu0 %v297
      %409 = vmatprep.subr.mxu0 0.0
      %410 = vmatpush1.xpose.msra.mxu0 %v294
      %411 = vmatprep.subr.mxu0 0.0
      %412 = vmatpush1.xpose.msra.mxu0 %v291
      %413 = vmatprep.subr.mxu0 0.0
      %414 = vmatpush1.xpose.msra.mxu0 %v288
      %415 = vmatprep.subr.mxu0 0.0
      %416 = vmatpush2.xpose.msra.mxu0 %v381
      %417 = vmatprep.subr.mxu0 0.0
      %418 = vmatpush2.xpose.msra.mxu0 %v378
      %419 = vmatprep.subr.mxu0 0.0
      %420 = vmatpush2.xpose.msra.mxu0 %v375
      %421 = vmatprep.subr.mxu0 0.0
      %422 = vmatpush2.xpose.msra.mxu0 %v372
      %423 = vmatprep.subr.mxu0 0.0
      %424 = vmatpush2.xpose.msra.mxu0 %v369
      %425 = vmatprep.subr.mxu0 0.0
      %426 = vmatpush2.xpose.msra.mxu0 %v366
      %427 = vmatprep.subr.mxu0 0.0
      %428 = vmatpush2.xpose.msra.mxu0 %v363
      %429 = vmatprep.subr.mxu0 0.0
      %430 = vmatpush2.xpose.msra.mxu0 %v360
      %431 = vmatprep.subr.mxu0 0.0
      %432 = vmatpush2.xpose.msra.mxu0 %v357
      %433 = vmatprep.subr.mxu0 0.0
      %434 = vmatpush2.xpose.msra.mxu0 %v354
      %435 = vmatprep.subr.mxu0 0.0
      %436 = vmatpush2.xpose.msra.mxu0 %v351
      %437 = vmatprep.subr.mxu0 0.0
      %438 = vmatpush2.xpose.msra.mxu0 %v348
      %439 = vmatprep.subr.mxu0 0.0
      %440 = vmatpush2.xpose.msra.mxu0 %v345
      %441 = vmatprep.subr.mxu0 0.0
      %442 = vmatpush2.xpose.msra.mxu0 %v342
      %443 = vmatprep.subr.mxu0 0.0
      %444 = vmatpush2.xpose.msra.mxu0 %v339
      %445 = vmatprep.subr.mxu0 0.0
      %446 = vmatpush2.xpose.msra.mxu0 %v336
      %447 = vmatprep.mubr.f32.mxu0 0.0
      %448 = vmatmul.mubr.f32.gmra.mxu0 %v285
      %v449 = vpop.f32.mrf.mxu0
      %v450 = vadd.f32 0.0, %v449
      %v451 = vpop.f32.mrf.mxu0
      %v452 = vadd.f32 0.0, %v451
      %453 = vdwg.mxu0
      %v455 = vsel %vm283, %v280, 0
      %v458 = vsel %vm283, %v171, 0
      %v461 = vsel %vm283, %v172, 0
      %v464 = vsel %vm283, %v173, 0
      %v467 = vsel %vm283, %v174, 0
      %v470 = vsel %vm283, %v175, 0
      %v473 = vsel %vm283, %v176, 0
      %v476 = vsel %vm283, %v177, 0
      %v479 = vsel %vm283, %v178, 0
      %v482 = vsel %vm283, %v179, 0
      %v485 = vsel %vm283, %v180, 0
      %v488 = vsel %vm283, %v181, 0
      %v491 = vsel %vm283, %v182, 0
      %v494 = vsel %vm283, %v183, 0
      %v497 = vsel %vm283, %v184, 0
      %v500 = vsel %vm283, %v185, 0
      %v503 = vsel %vm283, %v186, 0
      %v506 = vsel %vm283, %v187, 0
      %v509 = vsel %vm283, %v188, 0
      %v512 = vsel %vm283, %v189, 0
      %v515 = vsel %vm283, %v190, 0
      %v518 = vsel %vm283, %v191, 0
      %v521 = vsel %vm283, %v192, 0
      %v524 = vsel %vm283, %v193, 0
      %v527 = vsel %vm283, %v194, 0
      %v530 = vsel %vm283, %v195, 0
      %v533 = vsel %vm283, %v196, 0
      %v536 = vsel %vm283, %v197, 0
      %v539 = vsel %vm283, %v198, 0
      %v542 = vsel %vm283, %v199, 0
      %v545 = vsel %vm283, %v200, 0
      %v548 = vsel %vm283, %v201, 0
      %v551 = vsel %vm283, %v202, 0
      %553 = vmatprep.subr.mxu0 0.0
      %554 = vmatpush1.xpose.msra.mxu0 %v503
      %555 = vmatprep.subr.mxu0 0.0
      %556 = vmatpush1.xpose.msra.mxu0 %v500
      %557 = vmatprep.subr.mxu0 0.0
      %558 = vmatpush1.xpose.msra.mxu0 %v497
      %559 = vmatprep.subr.mxu0 0.0
      %560 = vmatpush1.xpose.msra.mxu0 %v494
      %561 = vmatprep.subr.mxu0 0.0
      %562 = vmatpush1.xpose.msra.mxu0 %v491
      %563 = vmatprep.subr.mxu0 0.0
      %564 = vmatpush1.xpose.msra.mxu0 %v488
      %565 = vmatprep.subr.mxu0 0.0
      %566 = vmatpush1.xpose.msra.mxu0 %v485
      %567 = vmatprep.subr.mxu0 0.0
      %568 = vmatpush1.xpose.msra.mxu0 %v482
      %569 = vmatprep.subr.mxu0 0.0
      %570 = vmatpush1.xpose.msra.mxu0 %v479
      %571 = vmatprep.subr.mxu0 0.0
      %572 = vmatpush1.xpose.msra.mxu0 %v476
      %573 = vmatprep.subr.mxu0 0.0
      %574 = vmatpush1.xpose.msra.mxu0 %v473
      %575 = vmatprep.subr.mxu0 0.0
      %576 = vmatpush1.xpose.msra.mxu0 %v470
      %577 = vmatprep.subr.mxu0 0.0
      %578 = vmatpush1.xpose.msra.mxu0 %v467
      %579 = vmatprep.subr.mxu0 0.0
      %580 = vmatpush1.xpose.msra.mxu0 %v464
      %581 = vmatprep.subr.mxu0 0.0
      %582 = vmatpush1.xpose.msra.mxu0 %v461
      %583 = vmatprep.subr.mxu0 0.0
      %584 = vmatpush1.xpose.msra.mxu0 %v458
      %585 = vmatprep.subr.mxu0 0.0
      %586 = vmatpush2.xpose.msra.mxu0 %v551
      %587 = vmatprep.subr.mxu0 0.0
      %588 = vmatpush2.xpose.msra.mxu0 %v548
      %589 = vmatprep.subr.mxu0 0.0
      %590 = vmatpush2.xpose.msra.mxu0 %v545
      %591 = vmatprep.subr.mxu0 0.0
      %592 = vmatpush2.xpose.msra.mxu0 %v542
      %593 = vmatprep.subr.mxu0 0.0
      %594 = vmatpush2.xpose.msra.mxu0 %v539
      %595 = vmatprep.subr.mxu0 0.0
      %596 = vmatpush2.xpose.msra.mxu0 %v536
      %597 = vmatprep.subr.mxu0 0.0
      %598 = vmatpush2.xpose.msra.mxu0 %v533
      %599 = vmatprep.subr.mxu0 0.0
      %600 = vmatpush2.xpose.msra.mxu0 %v530
      %601 = vmatprep.subr.mxu0 0.0
      %602 = vmatpush2.xpose.msra.mxu0 %v527
      %603 = vmatprep.subr.mxu0 0.0
      %604 = vmatpush2.xpose.msra.mxu0 %v524
      %605 = vmatprep.subr.mxu0 0.0
      %606 = vmatpush2.xpose.msra.mxu0 %v521
      %607 = vmatprep.subr.mxu0 0.0
      %608 = vmatpush2.xpose.msra.mxu0 %v518
      %609 = vmatprep.subr.mxu0 0.0
      %610 = vmatpush2.xpose.msra.mxu0 %v515
      %611 = vmatprep.subr.mxu0 0.0
      %612 = vmatpush2.xpose.msra.mxu0 %v512
      %613 = vmatprep.subr.mxu0 0.0
      %614 = vmatpush2.xpose.msra.mxu0 %v509
      %615 = vmatprep.subr.mxu0 0.0
      %616 = vmatpush2.xpose.msra.mxu0 %v506
      %617 = vmatprep.mubr.f32.mxu0 0.0
      %618 = vmatmul.mubr.f32.gmra.mxu0 %v455
      %v619 = vpop.f32.mrf.mxu0
      %v620 = vadd.f32 %v450, %v619
      %v621 = vpop.f32.mrf.mxu0
      %v622 = vadd.f32 %v452, %v621
      %623 = vdwg.mxu0
      %s624 = scalar_lea.vmem %s1, 28
      %v625 = vld [vmem:[%s624] sm:$0x7]
      %v627 = vsel %vm283, %v625, 0
      %v630 = vsel %vm283, %v203, 0
      %v633 = vsel %vm283, %v204, 0
      %635 = vmatprep.subr.mxu0 0.0
      %636 = vmatpush1.xpose.msra.mxu0 %v509
      %637 = vmatprep.subr.mxu0 0.0
      %638 = vmatpush1.xpose.msra.mxu0 %v506
      %639 = vmatprep.subr.mxu0 0.0
      %640 = vmatpush1.xpose.msra.mxu0 %v503
      %641 = vmatprep.subr.mxu0 0.0
      %642 = vmatpush1.xpose.msra.mxu0 %v500
      %643 = vmatprep.subr.mxu0 0.0
      %644 = vmatpush1.xpose.msra.mxu0 %v497
      %645 = vmatprep.subr.mxu0 0.0
      %646 = vmatpush1.xpose.msra.mxu0 %v494
      %647 = vmatprep.subr.mxu0 0.0
      %648 = vmatpush1.xpose.msra.mxu0 %v491
      %649 = vmatprep.subr.mxu0 0.0
      %650 = vmatpush1.xpose.msra.mxu0 %v488
      %651 = vmatprep.subr.mxu0 0.0
      %652 = vmatpush1.xpose.msra.mxu0 %v485
      %653 = vmatprep.subr.mxu0 0.0
      %654 = vmatpush1.xpose.msra.mxu0 %v482
      %655 = vmatprep.subr.mxu0 0.0
      %656 = vmatpush1.xpose.msra.mxu0 %v479
      %657 = vmatprep.subr.mxu0 0.0
      %658 = vmatpush1.xpose.msra.mxu0 %v476
      %659 = vmatprep.subr.mxu0 0.0
      %660 = vmatpush1.xpose.msra.mxu0 %v473
      %661 = vmatprep.subr.mxu0 0.0
      %662 = vmatpush1.xpose.msra.mxu0 %v470
      %663 = vmatprep.subr.mxu0 0.0
      %664 = vmatpush1.xpose.msra.mxu0 %v467
      %665 = vmatprep.subr.mxu0 0.0
      %666 = vmatpush1.xpose.msra.mxu0 %v464
      %667 = vmatprep.subr.mxu0 0.0
      %668 = vmatpush2.xpose.msra.mxu0 %v633
      %669 = vmatprep.subr.mxu0 0.0
      %670 = vmatpush2.xpose.msra.mxu0 %v630
      %671 = vmatprep.subr.mxu0 0.0
      %672 = vmatpush2.xpose.msra.mxu0 %v551
      %673 = vmatprep.subr.mxu0 0.0
      %674 = vmatpush2.xpose.msra.mxu0 %v548
      %675 = vmatprep.subr.mxu0 0.0
      %676 = vmatpush2.xpose.msra.mxu0 %v545
      %677 = vmatprep.subr.mxu0 0.0
      %678 = vmatpush2.xpose.msra.mxu0 %v542
      %679 = vmatprep.subr.mxu0 0.0
      %680 = vmatpush2.xpose.msra.mxu0 %v539
      %681 = vmatprep.subr.mxu0 0.0
      %682 = vmatpush2.xpose.msra.mxu0 %v536
      %683 = vmatprep.subr.mxu0 0.0
      %684 = vmatpush2.xpose.msra.mxu0 %v533
      %685 = vmatprep.subr.mxu0 0.0
      %686 = vmatpush2.xpose.msra.mxu0 %v530
      %687 = vmatprep.subr.mxu0 0.0
      %688 = vmatpush2.xpose.msra.mxu0 %v527
      %689 = vmatprep.subr.mxu0 0.0
      %690 = vmatpush2.xpose.msra.mxu0 %v524
      %691 = vmatprep.subr.mxu0 0.0
      %692 = vmatpush2.xpose.msra.mxu0 %v521
      %693 = vmatprep.subr.mxu0 0.0
      %694 = vmatpush2.xpose.msra.mxu0 %v518
      %695 = vmatprep.subr.mxu0 0.0
      %696 = vmatpush2.xpose.msra.mxu0 %v515
      %697 = vmatprep.subr.mxu0 0.0
      %698 = vmatpush2.xpose.msra.mxu0 %v512
      %699 = vmatprep.mubr.f32.mxu0 0.0
      %700 = vmatmul.mubr.f32.gmra.mxu0 %v627
      %v701 = vpop.f32.mrf.mxu0
      %v702 = vadd.f32 0.0, %v701
      %v703 = vpop.f32.mrf.mxu0
      %v704 = vadd.f32 0.0, %v703
      %705 = vdwg.mxu0
      %v706 = vadd.f32 %v620, %v702
      %v707 = vadd.f32 %v622, %v704
      %s708 = scalar_lea.vmem %s1, 20
      %v709 = vld [vmem:[%s708] sm:$0x7]
      %v711 = vsel %vm283, %v709, 0
      %v714 = vsel %vm283, %v239, 0
      %v717 = vsel %vm283, %v240, 0
      %719 = vmatprep.subr.mxu0 0.0
      %720 = vmatpush1.xpose.msra.mxu0 %v339
      %721 = vmatprep.subr.mxu0 0.0
      %722 = vmatpush1.xpose.msra.mxu0 %v336
      %723 = vmatprep.subr.mxu0 0.0
      %724 = vmatpush1.xpose.msra.mxu0 %v333
      %725 = vmatprep.subr.mxu0 0.0
      %726 = vmatpush1.xpose.msra.mxu0 %v330
      %727 = vmatprep.subr.mxu0 0.0
      %728 = vmatpush1.xpose.msra.mxu0 %v327
      %729 = vmatprep.subr.mxu0 0.0
      %730 = vmatpush1.xpose.msra.mxu0 %v324
      %731 = vmatprep.subr.mxu0 0.0
      %732 = vmatpush1.xpose.msra.mxu0 %v321
      %733 = vmatprep.subr.mxu0 0.0
      %734 = vmatpush1.xpose.msra.mxu0 %v318
      %735 = vmatprep.subr.mxu0 0.0
      %736 = vmatpush1.xpose.msra.mxu0 %v315
      %737 = vmatprep.subr.mxu0 0.0
      %738 = vmatpush1.xpose.msra.mxu0 %v312
      %739 = vmatprep.subr.mxu0 0.0
      %740 = vmatpush1.xpose.msra.mxu0 %v309
      %741 = vmatprep.subr.mxu0 0.0
      %742 = vmatpush1.xpose.msra.mxu0 %v306
      %743 = vmatprep.subr.mxu0 0.0
      %744 = vmatpush1.xpose.msra.mxu0 %v303
      %745 = vmatprep.subr.mxu0 0.0
      %746 = vmatpush1.xpose.msra.mxu0 %v300
      %747 = vmatprep.subr.mxu0 0.0
      %748 = vmatpush1.xpose.msra.mxu0 %v297
      %749 = vmatprep.subr.mxu0 0.0
      %750 = vmatpush1.xpose.msra.mxu0 %v294
      %751 = vmatprep.subr.mxu0 0.0
      %752 = vmatpush2.xpose.msra.mxu0 %v717
      %753 = vmatprep.subr.mxu0 0.0
      %754 = vmatpush2.xpose.msra.mxu0 %v714
      %755 = vmatprep.subr.mxu0 0.0
      %756 = vmatpush2.xpose.msra.mxu0 %v381
      %757 = vmatprep.subr.mxu0 0.0
      %758 = vmatpush2.xpose.msra.mxu0 %v378
      %759 = vmatprep.subr.mxu0 0.0
      %760 = vmatpush2.xpose.msra.mxu0 %v375
      %761 = vmatprep.subr.mxu0 0.0
      %762 = vmatpush2.xpose.msra.mxu0 %v372
      %763 = vmatprep.subr.mxu0 0.0
      %764 = vmatpush2.xpose.msra.mxu0 %v369
      %765 = vmatprep.subr.mxu0 0.0
      %766 = vmatpush2.xpose.msra.mxu0 %v366
      %767 = vmatprep.subr.mxu0 0.0
      %768 = vmatpush2.xpose.msra.mxu0 %v363
      %769 = vmatprep.subr.mxu0 0.0
      %770 = vmatpush2.xpose.msra.mxu0 %v360
      %771 = vmatprep.subr.mxu0 0.0
      %772 = vmatpush2.xpose.msra.mxu0 %v357
      %773 = vmatprep.subr.mxu0 0.0
      %774 = vmatpush2.xpose.msra.mxu0 %v354
      %775 = vmatprep.subr.mxu0 0.0
      %776 = vmatpush2.xpose.msra.mxu0 %v351
      %777 = vmatprep.subr.mxu0 0.0
      %778 = vmatpush2.xpose.msra.mxu0 %v348
      %779 = vmatprep.subr.mxu0 0.0
      %780 = vmatpush2.xpose.msra.mxu0 %v345
      %781 = vmatprep.subr.mxu0 0.0
      %782 = vmatpush2.xpose.msra.mxu0 %v342
      %783 = vmatprep.mubr.f32.mxu0 0.0
      %784 = vmatmul.mubr.f32.gmra.mxu0 %v711
      %v785 = vpop.f32.mrf.mxu0
      %v786 = vadd.f32 0.0, %v785
      %v787 = vpop.f32.mrf.mxu0
      %v788 = vadd.f32 0.0, %v787
      %789 = vdwg.mxu0
      %v790 = vadd.f32 %v706, %v786
      %v791 = vadd.f32 %v707, %v788
      %v792 = vld [vmem:[%s2] sm:$0x7]
      %794 = vset.pattern.permute.xlu0 0
      %795 = vperm.xlu0 %794, %v792
      %v796 = vpop.permute.xlu0 %795
      %v798 = vadd.f32 %v790, %v796
      %v799 = vadd.f32 %v791, %v796
      %v802 = vcombine.low %v798, %v799
      %804 = vst [vmem:[%s170] sm:$0x77] %v802
      %s805 = scalar_lea.vmem %s1, 56
      %v806 = vld [vmem:[%s805] sm:$0x7]
      %s807 = scalar_lea.vmem %s1, 48
      %v808 = vld [vmem:[%s807] sm:$0x7]
      %v810 = vsel %vm283, %v808, 0
      %v813 = vsel %vm283, %v243, 0
      %v816 = vsel %vm283, %v244, 0
      %v819 = vsel %vm283, %v245, 0
      %v822 = vsel %vm283, %v246, 0
      %v825 = vsel %vm283, %v247, 0
      %v828 = vsel %vm283, %v248, 0
      %v831 = vsel %vm283, %v249, 0
      %v834 = vsel %vm283, %v250, 0
      %v837 = vsel %vm283, %v251, 0
      %v840 = vsel %vm283, %v252, 0
      %v843 = vsel %vm283, %v253, 0
      %v846 = vsel %vm283, %v254, 0
      %v849 = vsel %vm283, %v255, 0
      %v852 = vsel %vm283, %v256, 0
      %v855 = vsel %vm283, %v257, 0
      %v858 = vsel %vm283, %v258, 0
      %v861 = vsel %vm283, %v259, 0
      %v864 = vsel %vm283, %v260, 0
      %v867 = vsel %vm283, %v261, 0
      %v870 = vsel %vm283, %v262, 0
      %v873 = vsel %vm283, %v263, 0
      %v876 = vsel %vm283, %v264, 0
      %v879 = vsel %vm283, %v265, 0
      %v882 = vsel %vm283, %v266, 0
      %v885 = vsel %vm283, %v267, 0
      %v888 = vsel %vm283, %v268, 0
      %v891 = vsel %vm283, %v269, 0
      %v894 = vsel %vm283, %v270, 0
      %v897 = vsel %vm283, %v271, 0
      %v900 = vsel %vm283, %v272, 0
      %v903 = vsel %vm283, %v273, 0
      %v906 = vsel %vm283, %v274, 0
      %908 = vmatprep.subr.mxu0 0.0
      %909 = vmatpush1.xpose.msra.mxu0 %v858
      %910 = vmatprep.subr.mxu0 0.0
      %911 = vmatpush1.xpose.msra.mxu0 %v855
      %912 = vmatprep.subr.mxu0 0.0
      %913 = vmatpush1.xpose.msra.mxu0 %v852
      %914 = vmatprep.subr.mxu0 0.0
      %915 = vmatpush1.xpose.msra.mxu0 %v849
      %916 = vmatprep.subr.mxu0 0.0
      %917 = vmatpush1.xpose.msra.mxu0 %v846
      %918 = vmatprep.subr.mxu0 0.0
      %919 = vmatpush1.xpose.msra.mxu0 %v843
      %920 = vmatprep.subr.mxu0 0.0
      %921 = vmatpush1.xpose.msra.mxu0 %v840
      %922 = vmatprep.subr.mxu0 0.0
      %923 = vmatpush1.xpose.msra.mxu0 %v837
      %924 = vmatprep.subr.mxu0 0.0
      %925 = vmatpush1.xpose.msra.mxu0 %v834
      %926 = vmatprep.subr.mxu0 0.0
      %927 = vmatpush1.xpose.msra.mxu0 %v831
      %928 = vmatprep.subr.mxu0 0.0
      %929 = vmatpush1.xpose.msra.mxu0 %v828
      %930 = vmatprep.subr.mxu0 0.0
      %931 = vmatpush1.xpose.msra.mxu0 %v825
      %932 = vmatprep.subr.mxu0 0.0
      %933 = vmatpush1.xpose.msra.mxu0 %v822
      %934 = vmatprep.subr.mxu0 0.0
      %935 = vmatpush1.xpose.msra.mxu0 %v819
      %936 = vmatprep.subr.mxu0 0.0
      %937 = vmatpush1.xpose.msra.mxu0 %v816
      %938 = vmatprep.subr.mxu0 0.0
      %939 = vmatpush1.xpose.msra.mxu0 %v813
      %940 = vmatprep.subr.mxu0 0.0
      %941 = vmatpush2.xpose.msra.mxu0 %v906
      %942 = vmatprep.subr.mxu0 0.0
      %943 = vmatpush2.xpose.msra.mxu0 %v903
      %944 = vmatprep.subr.mxu0 0.0
      %945 = vmatpush2.xpose.msra.mxu0 %v900
      %946 = vmatprep.subr.mxu0 0.0
      %947 = vmatpush2.xpose.msra.mxu0 %v897
      %948 = vmatprep.subr.mxu0 0.0
      %949 = vmatpush2.xpose.msra.mxu0 %v894
      %950 = vmatprep.subr.mxu0 0.0
      %951 = vmatpush2.xpose.msra.mxu0 %v891
      %952 = vmatprep.subr.mxu0 0.0
      %953 = vmatpush2.xpose.msra.mxu0 %v888
      %954 = vmatprep.subr.mxu0 0.0
      %955 = vmatpush2.xpose.msra.mxu0 %v885
      %956 = vmatprep.subr.mxu0 0.0
      %957 = vmatpush2.xpose.msra.mxu0 %v882
      %958 = vmatprep.subr.mxu0 0.0
      %959 = vmatpush2.xpose.msra.mxu0 %v879
      %960 = vmatprep.subr.mxu0 0.0
      %961 = vmatpush2.xpose.msra.mxu0 %v876
      %962 = vmatprep.subr.mxu0 0.0
      %963 = vmatpush2.xpose.msra.mxu0 %v873
      %964 = vmatprep.subr.mxu0 0.0
      %965 = vmatpush2.xpose.msra.mxu0 %v870
      %966 = vmatprep.subr.mxu0 0.0
      %967 = vmatpush2.xpose.msra.mxu0 %v867
      %968 = vmatprep.subr.mxu0 0.0
      %969 = vmatpush2.xpose.msra.mxu0 %v864
      %970 = vmatprep.subr.mxu0 0.0
      %971 = vmatpush2.xpose.msra.mxu0 %v861
      %972 = vmatprep.mubr.f32.mxu0 0.0
      %973 = vmatmul.mubr.f32.gmra.mxu0 %v810
      %v974 = vpop.f32.mrf.mxu0
      %v975 = vadd.f32 0.0, %v974
      %v976 = vpop.f32.mrf.mxu0
      %v977 = vadd.f32 0.0, %v976
      %978 = vdwg.mxu0
      %v980 = vsel %vm283, %v806, 0
      %982 = vmatprep.subr.mxu0 0.0
      %983 = vmatpush1.xpose.msra.mxu0 %v333
      %984 = vmatprep.subr.mxu0 0.0
      %985 = vmatpush1.xpose.msra.mxu0 %v330
      %986 = vmatprep.subr.mxu0 0.0
      %987 = vmatpush1.xpose.msra.mxu0 %v327
      %988 = vmatprep.subr.mxu0 0.0
      %989 = vmatpush1.xpose.msra.mxu0 %v324
      %990 = vmatprep.subr.mxu0 0.0
      %991 = vmatpush1.xpose.msra.mxu0 %v321
      %992 = vmatprep.subr.mxu0 0.0
      %993 = vmatpush1.xpose.msra.mxu0 %v318
      %994 = vmatprep.subr.mxu0 0.0
      %995 = vmatpush1.xpose.msra.mxu0 %v315
      %996 = vmatprep.subr.mxu0 0.0
      %997 = vmatpush1.xpose.msra.mxu0 %v312
      %998 = vmatprep.subr.mxu0 0.0
      %999 = vmatpush1.xpose.msra.mxu0 %v309
      %1000 = vmatprep.subr.mxu0 0.0
      %1001 = vmatpush1.xpose.msra.mxu0 %v306
      %1002 = vmatprep.subr.mxu0 0.0
      %1003 = vmatpush1.xpose.msra.mxu0 %v303
      %1004 = vmatprep.subr.mxu0 0.0
      %1005 = vmatpush1.xpose.msra.mxu0 %v300
      %1006 = vmatprep.subr.mxu0 0.0
      %1007 = vmatpush1.xpose.msra.mxu0 %v297
      %1008 = vmatprep.subr.mxu0 0.0
      %1009 = vmatpush1.xpose.msra.mxu0 %v294
      %1010 = vmatprep.subr.mxu0 0.0
      %1011 = vmatpush1.xpose.msra.mxu0 %v291
      %1012 = vmatprep.subr.mxu0 0.0
      %1013 = vmatpush1.xpose.msra.mxu0 %v288
      %1014 = vmatprep.subr.mxu0 0.0
      %1015 = vmatpush2.xpose.msra.mxu0 %v381
      %1016 = vmatprep.subr.mxu0 0.0
      %1017 = vmatpush2.xpose.msra.mxu0 %v378
      %1018 = vmatprep.subr.mxu0 0.0
      %1019 = vmatpush2.xpose.msra.mxu0 %v375
      %1020 = vmatprep.subr.mxu0 0.0
      %1021 = vmatpush2.xpose.msra.mxu0 %v372
      %1022 = vmatprep.subr.mxu0 0.0
      %1023 = vmatpush2.xpose.msra.mxu0 %v369
      %1024 = vmatprep.subr.mxu0 0.0
      %1025 = vmatpush2.xpose.msra.mxu0 %v366
      %1026 = vmatprep.subr.mxu0 0.0
      %1027 = vmatpush2.xpose.msra.mxu0 %v363
      %1028 = vmatprep.subr.mxu0 0.0
      %1029 = vmatpush2.xpose.msra.mxu0 %v360
      %1030 = vmatprep.subr.mxu0 0.0
      %1031 = vmatpush2.xpose.msra.mxu0 %v357
      %1032 = vmatprep.subr.mxu0 0.0
      %1033 = vmatpush2.xpose.msra.mxu0 %v354
      %1034 = vmatprep.subr.mxu0 0.0
      %1035 = vmatpush2.xpose.msra.mxu0 %v351
      %1036 = vmatprep.subr.mxu0 0.0
      %1037 = vmatpush2.xpose.msra.mxu0 %v348
      %1038 = vmatprep.subr.mxu0 0.0
      %1039 = vmatpush2.xpose.msra.mxu0 %v345
      %1040 = vmatprep.subr.mxu0 0.0
      %1041 = vmatpush2.xpose.msra.mxu0 %v342
      %1042 = vmatprep.subr.mxu0 0.0
      %1043 = vmatpush2.xpose.msra.mxu0 %v339
      %1044 = vmatprep.subr.mxu0 0.0
      %1045 = vmatpush2.xpose.msra.mxu0 %v336
      %1046 = vmatprep.mubr.f32.mxu0 0.0
      %1047 = vmatmul.mubr.f32.gmra.mxu0 %v980
      %v1048 = vpop.f32.mrf.mxu0
      %v1049 = vadd.f32 %v975, %v1048
      %v1050 = vpop.f32.mrf.mxu0
      %v1051 = vadd.f32 %v977, %v1050
      %1052 = vdwg.mxu0
      %s1053 = scalar_lea.vmem %s1, 24
      %v1054 = vld [vmem:[%s1053] sm:$0x7]
      %v1056 = vsel %vm283, %v1054, 0
      %1058 = vmatprep.subr.mxu0 0.0
      %1059 = vmatpush1.xpose.msra.mxu0 %v339
      %1060 = vmatprep.subr.mxu0 0.0
      %1061 = vmatpush1.xpose.msra.mxu0 %v336
      %1062 = vmatprep.subr.mxu0 0.0
      %1063 = vmatpush1.xpose.msra.mxu0 %v333
      %1064 = vmatprep.subr.mxu0 0.0
      %1065 = vmatpush1.xpose.msra.mxu0 %v330
      %1066 = vmatprep.subr.mxu0 0.0
      %1067 = vmatpush1.xpose.msra.mxu0 %v327
      %1068 = vmatprep.subr.mxu0 0.0
      %1069 = vmatpush1.xpose.msra.mxu0 %v324
      %1070 = vmatprep.subr.mxu0 0.0
      %1071 = vmatpush1.xpose.msra.mxu0 %v321
      %1072 = vmatprep.subr.mxu0 0.0
      %1073 = vmatpush1.xpose.msra.mxu0 %v318
      %1074 = vmatprep.subr.mxu0 0.0
      %1075 = vmatpush1.xpose.msra.mxu0 %v315
      %1076 = vmatprep.subr.mxu0 0.0
      %1077 = vmatpush1.xpose.msra.mxu0 %v312
      %1078 = vmatprep.subr.mxu0 0.0
      %1079 = vmatpush1.xpose.msra.mxu0 %v309
      %1080 = vmatprep.subr.mxu0 0.0
      %1081 = vmatpush1.xpose.msra.mxu0 %v306
      %1082 = vmatprep.subr.mxu0 0.0
      %1083 = vmatpush1.xpose.msra.mxu0 %v303
      %1084 = vmatprep.subr.mxu0 0.0
      %1085 = vmatpush1.xpose.msra.mxu0 %v300
      %1086 = vmatprep.subr.mxu0 0.0
      %1087 = vmatpush1.xpose.msra.mxu0 %v297
      %1088 = vmatprep.subr.mxu0 0.0
      %1089 = vmatpush1.xpose.msra.mxu0 %v294
      %1090 = vmatprep.subr.mxu0 0.0
      %1091 = vmatpush2.xpose.msra.mxu0 %v717
      %1092 = vmatprep.subr.mxu0 0.0
      %1093 = vmatpush2.xpose.msra.mxu0 %v714
      %1094 = vmatprep.subr.mxu0 0.0
      %1095 = vmatpush2.xpose.msra.mxu0 %v381
      %1096 = vmatprep.subr.mxu0 0.0
      %1097 = vmatpush2.xpose.msra.mxu0 %v378
      %1098 = vmatprep.subr.mxu0 0.0
      %1099 = vmatpush2.xpose.msra.mxu0 %v375
      %1100 = vmatprep.subr.mxu0 0.0
      %1101 = vmatpush2.xpose.msra.mxu0 %v372
      %1102 = vmatprep.subr.mxu0 0.0
      %1103 = vmatpush2.xpose.msra.mxu0 %v369
      %1104 = vmatprep.subr.mxu0 0.0
      %1105 = vmatpush2.xpose.msra.mxu0 %v366
      %1106 = vmatprep.subr.mxu0 0.0
      %1107 = vmatpush2.xpose.msra.mxu0 %v363
      %1108 = vmatprep.subr.mxu0 0.0
      %1109 = vmatpush2.xpose.msra.mxu0 %v360
      %1110 = vmatprep.subr.mxu0 0.0
      %1111 = vmatpush2.xpose.msra.mxu0 %v357
      %1112 = vmatprep.subr.mxu0 0.0
      %1113 = vmatpush2.xpose.msra.mxu0 %v354
      %1114 = vmatprep.subr.mxu0 0.0
      %1115 = vmatpush2.xpose.msra.mxu0 %v351
      %1116 = vmatprep.subr.mxu0 0.0
      %1117 = vmatpush2.xpose.msra.mxu0 %v348
      %1118 = vmatprep.subr.mxu0 0.0
      %1119 = vmatpush2.xpose.msra.mxu0 %v345
      %1120 = vmatprep.subr.mxu0 0.0
      %1121 = vmatpush2.xpose.msra.mxu0 %v342
      %1122 = vmatprep.mubr.f32.mxu0 0.0
      %1123 = vmatmul.mubr.f32.gmra.mxu0 %v1056
      %v1124 = vpop.f32.mrf.mxu0
      %v1125 = vadd.f32 0.0, %v1124
      %v1126 = vpop.f32.mrf.mxu0
      %v1127 = vadd.f32 0.0, %v1126
      %1128 = vdwg.mxu0
      %v1129 = vadd.f32 %v1049, %v1125
      %v1130 = vadd.f32 %v1051, %v1127
      %s1131 = scalar_lea.vmem %s1, 16
      %v1132 = vld [vmem:[%s1131] sm:$0x7]
      %v1134 = vsel %vm283, %v1132, 0
      %v1137 = vsel %vm283, %v275, 0
      %v1140 = vsel %vm283, %v276, 0
      %1142 = vmatprep.subr.mxu0 0.0
      %1143 = vmatpush1.xpose.msra.mxu0 %v864
      %1144 = vmatprep.subr.mxu0 0.0
      %1145 = vmatpush1.xpose.msra.mxu0 %v861
      %1146 = vmatprep.subr.mxu0 0.0
      %1147 = vmatpush1.xpose.msra.mxu0 %v858
      %1148 = vmatprep.subr.mxu0 0.0
      %1149 = vmatpush1.xpose.msra.mxu0 %v855
      %1150 = vmatprep.subr.mxu0 0.0
      %1151 = vmatpush1.xpose.msra.mxu0 %v852
      %1152 = vmatprep.subr.mxu0 0.0
      %1153 = vmatpush1.xpose.msra.mxu0 %v849
      %1154 = vmatprep.subr.mxu0 0.0
      %1155 = vmatpush1.xpose.msra.mxu0 %v846
      %1156 = vmatprep.subr.mxu0 0.0
      %1157 = vmatpush1.xpose.msra.mxu0 %v843
      %1158 = vmatprep.subr.mxu0 0.0
      %1159 = vmatpush1.xpose.msra.mxu0 %v840
      %1160 = vmatprep.subr.mxu0 0.0
      %1161 = vmatpush1.xpose.msra.mxu0 %v837
      %1162 = vmatprep.subr.mxu0 0.0
      %1163 = vmatpush1.xpose.msra.mxu0 %v834
      %1164 = vmatprep.subr.mxu0 0.0
      %1165 = vmatpush1.xpose.msra.mxu0 %v831
      %1166 = vmatprep.subr.mxu0 0.0
      %1167 = vmatpush1.xpose.msra.mxu0 %v828
      %1168 = vmatprep.subr.mxu0 0.0
      %1169 = vmatpush1.xpose.msra.mxu0 %v825
      %1170 = vmatprep.subr.mxu0 0.0
      %1171 = vmatpush1.xpose.msra.mxu0 %v822
      %1172 = vmatprep.subr.mxu0 0.0
      %1173 = vmatpush1.xpose.msra.mxu0 %v819
      %1174 = vmatprep.subr.mxu0 0.0
      %1175 = vmatpush2.xpose.msra.mxu0 %v1140
      %1176 = vmatprep.subr.mxu0 0.0
      %1177 = vmatpush2.xpose.msra.mxu0 %v1137
      %1178 = vmatprep.subr.mxu0 0.0
      %1179 = vmatpush2.xpose.msra.mxu0 %v906
      %1180 = vmatprep.subr.mxu0 0.0
      %1181 = vmatpush2.xpose.msra.mxu0 %v903
      %1182 = vmatprep.subr.mxu0 0.0
      %1183 = vmatpush2.xpose.msra.mxu0 %v900
      %1184 = vmatprep.subr.mxu0 0.0
      %1185 = vmatpush2.xpose.msra.mxu0 %v897
      %1186 = vmatprep.subr.mxu0 0.0
      %1187 = vmatpush2.xpose.msra.mxu0 %v894
      %1188 = vmatprep.subr.mxu0 0.0
      %1189 = vmatpush2.xpose.msra.mxu0 %v891
      %1190 = vmatprep.subr.mxu0 0.0
      %1191 = vmatpush2.xpose.msra.mxu0 %v888
      %1192 = vmatprep.subr.mxu0 0.0
      %1193 = vmatpush2.xpose.msra.mxu0 %v885
      %1194 = vmatprep.subr.mxu0 0.0
      %1195 = vmatpush2.xpose.msra.mxu0 %v882
      %1196 = vmatprep.subr.mxu0 0.0
      %1197 = vmatpush2.xpose.msra.mxu0 %v879
      %1198 = vmatprep.subr.mxu0 0.0
      %1199 = vmatpush2.xpose.msra.mxu0 %v876
      %1200 = vmatprep.subr.mxu0 0.0
      %1201 = vmatpush2.xpose.msra.mxu0 %v873
      %1202 = vmatprep.subr.mxu0 0.0
      %1203 = vmatpush2.xpose.msra.mxu0 %v870
      %1204 = vmatprep.subr.mxu0 0.0
      %1205 = vmatpush2.xpose.msra.mxu0 %v867
      %1206 = vmatprep.mubr.f32.mxu0 0.0
      %1207 = vmatmul.mubr.f32.gmra.mxu0 %v1134
      %v1208 = vpop.f32.mrf.mxu0
      %v1209 = vadd.f32 0.0, %v1208
      %v1210 = vpop.f32.mrf.mxu0
      %v1211 = vadd.f32 0.0, %v1210
      %1212 = vdwg.mxu0
      %v1213 = vadd.f32 %v1129, %v1209
      %v1214 = vadd.f32 %v1130, %v1211
      %v1215 = vld [vmem:[%s2] sm:$0x7]
      %1217 = vset.pattern.permute.xlu0 0
      %1218 = vperm.xlu0 %1217, %v1215
      %v1219 = vpop.permute.xlu0 %1218
      %v1221 = vadd.f32 %v1213, %v1219
      %v1222 = vadd.f32 %v1214, %v1219
      %v1225 = vcombine.low %v1221, %v1222
      %s1227 = scalar_lea.vmem %s170, 8
      %1228 = vst [vmem:[%s1227] sm:$0x77] %v1225
      %s1229 = scalar_lea.vmem %s1, 44
      %v1230 = vld [vmem:[%s1229] sm:$0x7]
      %s1231 = scalar_lea.vmem %s1, 36
      %v1232 = vld [vmem:[%s1231] sm:$0x7]
      %v1234 = vsel %vm283, %v1232, 0
      %1236 = vmatprep.subr.mxu0 0.0
      %1237 = vmatpush1.xpose.msra.mxu0 %v339
      %1238 = vmatprep.subr.mxu0 0.0
      %1239 = vmatpush1.xpose.msra.mxu0 %v336
      %1240 = vmatprep.subr.mxu0 0.0
      %1241 = vmatpush1.xpose.msra.mxu0 %v333
      %1242 = vmatprep.subr.mxu0 0.0
      %1243 = vmatpush1.xpose.msra.mxu0 %v330
      %1244 = vmatprep.subr.mxu0 0.0
      %1245 = vmatpush1.xpose.msra.mxu0 %v327
      %1246 = vmatprep.subr.mxu0 0.0
      %1247 = vmatpush1.xpose.msra.mxu0 %v324
      %1248 = vmatprep.subr.mxu0 0.0
      %1249 = vmatpush1.xpose.msra.mxu0 %v321
      %1250 = vmatprep.subr.mxu0 0.0
      %1251 = vmatpush1.xpose.msra.mxu0 %v318
      %1252 = vmatprep.subr.mxu0 0.0
      %1253 = vmatpush1.xpose.msra.mxu0 %v315
      %1254 = vmatprep.subr.mxu0 0.0
      %1255 = vmatpush1.xpose.msra.mxu0 %v312
      %1256 = vmatprep.subr.mxu0 0.0
      %1257 = vmatpush1.xpose.msra.mxu0 %v309
      %1258 = vmatprep.subr.mxu0 0.0
      %1259 = vmatpush1.xpose.msra.mxu0 %v306
      %1260 = vmatprep.subr.mxu0 0.0
      %1261 = vmatpush1.xpose.msra.mxu0 %v303
      %1262 = vmatprep.subr.mxu0 0.0
      %1263 = vmatpush1.xpose.msra.mxu0 %v300
      %1264 = vmatprep.subr.mxu0 0.0
      %1265 = vmatpush1.xpose.msra.mxu0 %v297
      %1266 = vmatprep.subr.mxu0 0.0
      %1267 = vmatpush1.xpose.msra.mxu0 %v294
      %1268 = vmatprep.subr.mxu0 0.0
      %1269 = vmatpush2.xpose.msra.mxu0 %v717
      %1270 = vmatprep.subr.mxu0 0.0
      %1271 = vmatpush2.xpose.msra.mxu0 %v714
      %1272 = vmatprep.subr.mxu0 0.0
      %1273 = vmatpush2.xpose.msra.mxu0 %v381
      %1274 = vmatprep.subr.mxu0 0.0
      %1275 = vmatpush2.xpose.msra.mxu0 %v378
      %1276 = vmatprep.subr.mxu0 0.0
      %1277 = vmatpush2.xpose.msra.mxu0 %v375
      %1278 = vmatprep.subr.mxu0 0.0
      %1279 = vmatpush2.xpose.msra.mxu0 %v372
      %1280 = vmatprep.subr.mxu0 0.0
      %1281 = vmatpush2.xpose.msra.mxu0 %v369
      %1282 = vmatprep.subr.mxu0 0.0
      %1283 = vmatpush2.xpose.msra.mxu0 %v366
      %1284 = vmatprep.subr.mxu0 0.0
      %1285 = vmatpush2.xpose.msra.mxu0 %v363
      %1286 = vmatprep.subr.mxu0 0.0
      %1287 = vmatpush2.xpose.msra.mxu0 %v360
      %1288 = vmatprep.subr.mxu0 0.0
      %1289 = vmatpush2.xpose.msra.mxu0 %v357
      %1290 = vmatprep.subr.mxu0 0.0
      %1291 = vmatpush2.xpose.msra.mxu0 %v354
      %1292 = vmatprep.subr.mxu0 0.0
      %1293 = vmatpush2.xpose.msra.mxu0 %v351
      %1294 = vmatprep.subr.mxu0 0.0
      %1295 = vmatpush2.xpose.msra.mxu0 %v348
      %1296 = vmatprep.subr.mxu0 0.0
      %1297 = vmatpush2.xpose.msra.mxu0 %v345
      %1298 = vmatprep.subr.mxu0 0.0
      %1299 = vmatpush2.xpose.msra.mxu0 %v342
      %1300 = vmatprep.mubr.f32.mxu0 0.0
      %1301 = vmatmul.mubr.f32.gmra.mxu0 %v1234
      %v1302 = vpop.f32.mrf.mxu0
      %v1303 = vadd.f32 0.0, %v1302
      %v1304 = vpop.f32.mrf.mxu0
      %v1305 = vadd.f32 0.0, %v1304
      %1306 = vdwg.mxu0
      %v1308 = vsel %vm283, %v1230, 0
      %1310 = vmatprep.subr.mxu0 0.0
      %1311 = vmatpush1.xpose.msra.mxu0 %v509
      %1312 = vmatprep.subr.mxu0 0.0
      %1313 = vmatpush1.xpose.msra.mxu0 %v506
      %1314 = vmatprep.subr.mxu0 0.0
      %1315 = vmatpush1.xpose.msra.mxu0 %v503
      %1316 = vmatprep.subr.mxu0 0.0
      %1317 = vmatpush1.xpose.msra.mxu0 %v500
      %1318 = vmatprep.subr.mxu0 0.0
      %1319 = vmatpush1.xpose.msra.mxu0 %v497
      %1320 = vmatprep.subr.mxu0 0.0
      %1321 = vmatpush1.xpose.msra.mxu0 %v494
      %1322 = vmatprep.subr.mxu0 0.0
      %1323 = vmatpush1.xpose.msra.mxu0 %v491
      %1324 = vmatprep.subr.mxu0 0.0
      %1325 = vmatpush1.xpose.msra.mxu0 %v488
      %1326 = vmatprep.subr.mxu0 0.0
      %1327 = vmatpush1.xpose.msra.mxu0 %v485
      %1328 = vmatprep.subr.mxu0 0.0
      %1329 = vmatpush1.xpose.msra.mxu0 %v482
      %1330 = vmatprep.subr.mxu0 0.0
      %1331 = vmatpush1.xpose.msra.mxu0 %v479
      %1332 = vmatprep.subr.mxu0 0.0
      %1333 = vmatpush1.xpose.msra.mxu0 %v476
      %1334 = vmatprep.subr.mxu0 0.0
      %1335 = vmatpush1.xpose.msra.mxu0 %v473
      %1336 = vmatprep.subr.mxu0 0.0
      %1337 = vmatpush1.xpose.msra.mxu0 %v470
      %1338 = vmatprep.subr.mxu0 0.0
      %1339 = vmatpush1.xpose.msra.mxu0 %v467
      %1340 = vmatprep.subr.mxu0 0.0
      %1341 = vmatpush1.xpose.msra.mxu0 %v464
      %1342 = vmatprep.subr.mxu0 0.0
      %1343 = vmatpush2.xpose.msra.mxu0 %v633
      %1344 = vmatprep.subr.mxu0 0.0
      %1345 = vmatpush2.xpose.msra.mxu0 %v630
      %1346 = vmatprep.subr.mxu0 0.0
      %1347 = vmatpush2.xpose.msra.mxu0 %v551
      %1348 = vmatprep.subr.mxu0 0.0
      %1349 = vmatpush2.xpose.msra.mxu0 %v548
      %1350 = vmatprep.subr.mxu0 0.0
      %1351 = vmatpush2.xpose.msra.mxu0 %v545
      %1352 = vmatprep.subr.mxu0 0.0
      %1353 = vmatpush2.xpose.msra.mxu0 %v542
      %1354 = vmatprep.subr.mxu0 0.0
      %1355 = vmatpush2.xpose.msra.mxu0 %v539
      %1356 = vmatprep.subr.mxu0 0.0
      %1357 = vmatpush2.xpose.msra.mxu0 %v536
      %1358 = vmatprep.subr.mxu0 0.0
      %1359 = vmatpush2.xpose.msra.mxu0 %v533
      %1360 = vmatprep.subr.mxu0 0.0
      %1361 = vmatpush2.xpose.msra.mxu0 %v530
      %1362 = vmatprep.subr.mxu0 0.0
      %1363 = vmatpush2.xpose.msra.mxu0 %v527
      %1364 = vmatprep.subr.mxu0 0.0
      %1365 = vmatpush2.xpose.msra.mxu0 %v524
      %1366 = vmatprep.subr.mxu0 0.0
      %1367 = vmatpush2.xpose.msra.mxu0 %v521
      %1368 = vmatprep.subr.mxu0 0.0
      %1369 = vmatpush2.xpose.msra.mxu0 %v518
      %1370 = vmatprep.subr.mxu0 0.0
      %1371 = vmatpush2.xpose.msra.mxu0 %v515
      %1372 = vmatprep.subr.mxu0 0.0
      %1373 = vmatpush2.xpose.msra.mxu0 %v512
      %1374 = vmatprep.mubr.f32.mxu0 0.0
      %1375 = vmatmul.mubr.f32.gmra.mxu0 %v1308
      %v1376 = vpop.f32.mrf.mxu0
      %v1377 = vadd.f32 %v1303, %v1376
      %v1378 = vpop.f32.mrf.mxu0
      %v1379 = vadd.f32 %v1305, %v1378
      %1380 = vdwg.mxu0
      %s1381 = scalar_lea.vmem %s1, 12
      %v1382 = vld [vmem:[%s1381] sm:$0x7]
      %v1384 = vsel %vm283, %v1382, 0
      %v1387 = vsel %vm283, %v205, 0
      %v1390 = vsel %vm283, %v206, 0
      %1392 = vmatprep.subr.mxu0 0.0
      %1393 = vmatpush1.xpose.msra.mxu0 %v515
      %1394 = vmatprep.subr.mxu0 0.0
      %1395 = vmatpush1.xpose.msra.mxu0 %v512
      %1396 = vmatprep.subr.mxu0 0.0
      %1397 = vmatpush1.xpose.msra.mxu0 %v509
      %1398 = vmatprep.subr.mxu0 0.0
      %1399 = vmatpush1.xpose.msra.mxu0 %v506
      %1400 = vmatprep.subr.mxu0 0.0
      %1401 = vmatpush1.xpose.msra.mxu0 %v503
      %1402 = vmatprep.subr.mxu0 0.0
      %1403 = vmatpush1.xpose.msra.mxu0 %v500
      %1404 = vmatprep.subr.mxu0 0.0
      %1405 = vmatpush1.xpose.msra.mxu0 %v497
      %1406 = vmatprep.subr.mxu0 0.0
      %1407 = vmatpush1.xpose.msra.mxu0 %v494
      %1408 = vmatprep.subr.mxu0 0.0
      %1409 = vmatpush1.xpose.msra.mxu0 %v491
      %1410 = vmatprep.subr.mxu0 0.0
      %1411 = vmatpush1.xpose.msra.mxu0 %v488
      %1412 = vmatprep.subr.mxu0 0.0
      %1413 = vmatpush1.xpose.msra.mxu0 %v485
      %1414 = vmatprep.subr.mxu0 0.0
      %1415 = vmatpush1.xpose.msra.mxu0 %v482
      %1416 = vmatprep.subr.mxu0 0.0
      %1417 = vmatpush1.xpose.msra.mxu0 %v479
      %1418 = vmatprep.subr.mxu0 0.0
      %1419 = vmatpush1.xpose.msra.mxu0 %v476
      %1420 = vmatprep.subr.mxu0 0.0
      %1421 = vmatpush1.xpose.msra.mxu0 %v473
      %1422 = vmatprep.subr.mxu0 0.0
      %1423 = vmatpush1.xpose.msra.mxu0 %v470
      %1424 = vmatprep.subr.mxu0 0.0
      %1425 = vmatpush2.xpose.msra.mxu0 %v1390
      %1426 = vmatprep.subr.mxu0 0.0
      %1427 = vmatpush2.xpose.msra.mxu0 %v1387
      %1428 = vmatprep.subr.mxu0 0.0
      %1429 = vmatpush2.xpose.msra.mxu0 %v633
      %1430 = vmatprep.subr.mxu0 0.0
      %1431 = vmatpush2.xpose.msra.mxu0 %v630
      %1432 = vmatprep.subr.mxu0 0.0
      %1433 = vmatpush2.xpose.msra.mxu0 %v551
      %1434 = vmatprep.subr.mxu0 0.0
      %1435 = vmatpush2.xpose.msra.mxu0 %v548
      %1436 = vmatprep.subr.mxu0 0.0
      %1437 = vmatpush2.xpose.msra.mxu0 %v545
      %1438 = vmatprep.subr.mxu0 0.0
      %1439 = vmatpush2.xpose.msra.mxu0 %v542
      %1440 = vmatprep.subr.mxu0 0.0
      %1441 = vmatpush2.xpose.msra.mxu0 %v539
      %1442 = vmatprep.subr.mxu0 0.0
      %1443 = vmatpush2.xpose.msra.mxu0 %v536
      %1444 = vmatprep.subr.mxu0 0.0
      %1445 = vmatpush2.xpose.msra.mxu0 %v533
      %1446 = vmatprep.subr.mxu0 0.0
      %1447 = vmatpush2.xpose.msra.mxu0 %v530
      %1448 = vmatprep.subr.mxu0 0.0
      %1449 = vmatpush2.xpose.msra.mxu0 %v527
      %1450 = vmatprep.subr.mxu0 0.0
      %1451 = vmatpush2.xpose.msra.mxu0 %v524
      %1452 = vmatprep.subr.mxu0 0.0
      %1453 = vmatpush2.xpose.msra.mxu0 %v521
      %1454 = vmatprep.subr.mxu0 0.0
      %1455 = vmatpush2.xpose.msra.mxu0 %v518
      %1456 = vmatprep.mubr.f32.mxu0 0.0
      %1457 = vmatmul.mubr.f32.gmra.mxu0 %v1384
      %v1458 = vpop.f32.mrf.mxu0
      %v1459 = vadd.f32 0.0, %v1458
      %v1460 = vpop.f32.mrf.mxu0
      %v1461 = vadd.f32 0.0, %v1460
      %1462 = vdwg.mxu0
      %v1463 = vadd.f32 %v1377, %v1459
      %v1464 = vadd.f32 %v1379, %v1461
      %s1465 = scalar_lea.vmem %s1, 4
      %v1466 = vld [vmem:[%s1465] sm:$0x7]
      %v1468 = vsel %vm283, %v1466, 0
      %v1471 = vsel %vm283, %v241, 0
      %v1474 = vsel %vm283, %v242, 0
      %1476 = vmatprep.subr.mxu0 0.0
      %1477 = vmatpush1.xpose.msra.mxu0 %v345
      %1478 = vmatprep.subr.mxu0 0.0
      %1479 = vmatpush1.xpose.msra.mxu0 %v342
      %1480 = vmatprep.subr.mxu0 0.0
      %1481 = vmatpush1.xpose.msra.mxu0 %v339
      %1482 = vmatprep.subr.mxu0 0.0
      %1483 = vmatpush1.xpose.msra.mxu0 %v336
      %1484 = vmatprep.subr.mxu0 0.0
      %1485 = vmatpush1.xpose.msra.mxu0 %v333
      %1486 = vmatprep.subr.mxu0 0.0
      %1487 = vmatpush1.xpose.msra.mxu0 %v330
      %1488 = vmatprep.subr.mxu0 0.0
      %1489 = vmatpush1.xpose.msra.mxu0 %v327
      %1490 = vmatprep.subr.mxu0 0.0
      %1491 = vmatpush1.xpose.msra.mxu0 %v324
      %1492 = vmatprep.subr.mxu0 0.0
      %1493 = vmatpush1.xpose.msra.mxu0 %v321
      %1494 = vmatprep.subr.mxu0 0.0
      %1495 = vmatpush1.xpose.msra.mxu0 %v318
      %1496 = vmatprep.subr.mxu0 0.0
      %1497 = vmatpush1.xpose.msra.mxu0 %v315
      %1498 = vmatprep.subr.mxu0 0.0
      %1499 = vmatpush1.xpose.msra.mxu0 %v312
      %1500 = vmatprep.subr.mxu0 0.0
      %1501 = vmatpush1.xpose.msra.mxu0 %v309
      %1502 = vmatprep.subr.mxu0 0.0
      %1503 = vmatpush1.xpose.msra.mxu0 %v306
      %1504 = vmatprep.subr.mxu0 0.0
      %1505 = vmatpush1.xpose.msra.mxu0 %v303
      %1506 = vmatprep.subr.mxu0 0.0
      %1507 = vmatpush1.xpose.msra.mxu0 %v300
      %1508 = vmatprep.subr.mxu0 0.0
      %1509 = vmatpush2.xpose.msra.mxu0 %v1474
      %1510 = vmatprep.subr.mxu0 0.0
      %1511 = vmatpush2.xpose.msra.mxu0 %v1471
      %1512 = vmatprep.subr.mxu0 0.0
      %1513 = vmatpush2.xpose.msra.mxu0 %v717
      %1514 = vmatprep.subr.mxu0 0.0
      %1515 = vmatpush2.xpose.msra.mxu0 %v714
      %1516 = vmatprep.subr.mxu0 0.0
      %1517 = vmatpush2.xpose.msra.mxu0 %v381
      %1518 = vmatprep.subr.mxu0 0.0
      %1519 = vmatpush2.xpose.msra.mxu0 %v378
      %1520 = vmatprep.subr.mxu0 0.0
      %1521 = vmatpush2.xpose.msra.mxu0 %v375
      %1522 = vmatprep.subr.mxu0 0.0
      %1523 = vmatpush2.xpose.msra.mxu0 %v372
      %1524 = vmatprep.subr.mxu0 0.0
      %1525 = vmatpush2.xpose.msra.mxu0 %v369
      %1526 = vmatprep.subr.mxu0 0.0
      %1527 = vmatpush2.xpose.msra.mxu0 %v366
      %1528 = vmatprep.subr.mxu0 0.0
      %1529 = vmatpush2.xpose.msra.mxu0 %v363
      %1530 = vmatprep.subr.mxu0 0.0
      %1531 = vmatpush2.xpose.msra.mxu0 %v360
      %1532 = vmatprep.subr.mxu0 0.0
      %1533 = vmatpush2.xpose.msra.mxu0 %v357
      %1534 = vmatprep.subr.mxu0 0.0
      %1535 = vmatpush2.xpose.msra.mxu0 %v354
      %1536 = vmatprep.subr.mxu0 0.0
      %1537 = vmatpush2.xpose.msra.mxu0 %v351
      %1538 = vmatprep.subr.mxu0 0.0
      %1539 = vmatpush2.xpose.msra.mxu0 %v348
      %1540 = vmatprep.mubr.f32.mxu0 0.0
      %1541 = vmatmul.mubr.f32.gmra.mxu0 %v1468
      %v1542 = vpop.f32.mrf.mxu0
      %v1543 = vadd.f32 0.0, %v1542
      %v1544 = vpop.f32.mrf.mxu0
      %v1545 = vadd.f32 0.0, %v1544
      %1546 = vdwg.mxu0
      %v1547 = vadd.f32 %v1463, %v1543
      %v1548 = vadd.f32 %v1464, %v1545
      %v1549 = vld [vmem:[%s2] sm:$0x7]
      %1551 = vset.pattern.permute.xlu0 0
      %1552 = vperm.xlu0 %1551, %v1549
      %v1553 = vpop.permute.xlu0 %1552
      %v1555 = vadd.f32 %v1547, %v1553
      %v1556 = vadd.f32 %v1548, %v1553
      %v1559 = vcombine.low %v1555, %v1556
      %s1561 = scalar_lea.vmem %s170, 16
      %1562 = vst [vmem:[%s1561] sm:$0x77] %v1559
      %s1563 = scalar_lea.vmem %s1, 40
      %v1564 = vld [vmem:[%s1563] sm:$0x7]
      %s1565 = scalar_lea.vmem %s1, 32
      %v1566 = vld [vmem:[%s1565] sm:$0x7]
      %v1568 = vsel %vm283, %v1566, 0
      %1570 = vmatprep.subr.mxu0 0.0
      %1571 = vmatpush1.xpose.msra.mxu0 %v864
      %1572 = vmatprep.subr.mxu0 0.0
      %1573 = vmatpush1.xpose.msra.mxu0 %v861
      %1574 = vmatprep.subr.mxu0 0.0
      %1575 = vmatpush1.xpose.msra.mxu0 %v858
      %1576 = vmatprep.subr.mxu0 0.0
      %1577 = vmatpush1.xpose.msra.mxu0 %v855
      %1578 = vmatprep.subr.mxu0 0.0
      %1579 = vmatpush1.xpose.msra.mxu0 %v852
      %1580 = vmatprep.subr.mxu0 0.0
      %1581 = vmatpush1.xpose.msra.mxu0 %v849
      %1582 = vmatprep.subr.mxu0 0.0
      %1583 = vmatpush1.xpose.msra.mxu0 %v846
      %1584 = vmatprep.subr.mxu0 0.0
      %1585 = vmatpush1.xpose.msra.mxu0 %v843
      %1586 = vmatprep.subr.mxu0 0.0
      %1587 = vmatpush1.xpose.msra.mxu0 %v840
      %1588 = vmatprep.subr.mxu0 0.0
      %1589 = vmatpush1.xpose.msra.mxu0 %v837
      %1590 = vmatprep.subr.mxu0 0.0
      %1591 = vmatpush1.xpose.msra.mxu0 %v834
      %1592 = vmatprep.subr.mxu0 0.0
      %1593 = vmatpush1.xpose.msra.mxu0 %v831
      %1594 = vmatprep.subr.mxu0 0.0
      %1595 = vmatpush1.xpose.msra.mxu0 %v828
      %1596 = vmatprep.subr.mxu0 0.0
      %1597 = vmatpush1.xpose.msra.mxu0 %v825
      %1598 = vmatprep.subr.mxu0 0.0
      %1599 = vmatpush1.xpose.msra.mxu0 %v822
      %1600 = vmatprep.subr.mxu0 0.0
      %1601 = vmatpush1.xpose.msra.mxu0 %v819
      %1602 = vmatprep.subr.mxu0 0.0
      %1603 = vmatpush2.xpose.msra.mxu0 %v1140
      %1604 = vmatprep.subr.mxu0 0.0
      %1605 = vmatpush2.xpose.msra.mxu0 %v1137
      %1606 = vmatprep.subr.mxu0 0.0
      %1607 = vmatpush2.xpose.msra.mxu0 %v906
      %1608 = vmatprep.subr.mxu0 0.0
      %1609 = vmatpush2.xpose.msra.mxu0 %v903
      %1610 = vmatprep.subr.mxu0 0.0
      %1611 = vmatpush2.xpose.msra.mxu0 %v900
      %1612 = vmatprep.subr.mxu0 0.0
      %1613 = vmatpush2.xpose.msra.mxu0 %v897
      %1614 = vmatprep.subr.mxu0 0.0
      %1615 = vmatpush2.xpose.msra.mxu0 %v894
      %1616 = vmatprep.subr.mxu0 0.0
      %1617 = vmatpush2.xpose.msra.mxu0 %v891
      %1618 = vmatprep.subr.mxu0 0.0
      %1619 = vmatpush2.xpose.msra.mxu0 %v888
      %1620 = vmatprep.subr.mxu0 0.0
      %1621 = vmatpush2.xpose.msra.mxu0 %v885
      %1622 = vmatprep.subr.mxu0 0.0
      %1623 = vmatpush2.xpose.msra.mxu0 %v882
      %1624 = vmatprep.subr.mxu0 0.0
      %1625 = vmatpush2.xpose.msra.mxu0 %v879
      %1626 = vmatprep.subr.mxu0 0.0
      %1627 = vmatpush2.xpose.msra.mxu0 %v876
      %1628 = vmatprep.subr.mxu0 0.0
      %1629 = vmatpush2.xpose.msra.mxu0 %v873
      %1630 = vmatprep.subr.mxu0 0.0
      %1631 = vmatpush2.xpose.msra.mxu0 %v870
      %1632 = vmatprep.subr.mxu0 0.0
      %1633 = vmatpush2.xpose.msra.mxu0 %v867
      %1634 = vmatprep.mubr.f32.mxu0 0.0
      %1635 = vmatmul.mubr.f32.gmra.mxu0 %v1568
      %v1636 = vpop.f32.mrf.mxu0
      %v1637 = vadd.f32 0.0, %v1636
      %v1638 = vpop.f32.mrf.mxu0
      %v1639 = vadd.f32 0.0, %v1638
      %1640 = vdwg.mxu0
      %v1642 = vsel %vm283, %v1564, 0
      %1644 = vmatprep.subr.mxu0 0.0
      %1645 = vmatpush1.xpose.msra.mxu0 %v339
      %1646 = vmatprep.subr.mxu0 0.0
      %1647 = vmatpush1.xpose.msra.mxu0 %v336
      %1648 = vmatprep.subr.mxu0 0.0
      %1649 = vmatpush1.xpose.msra.mxu0 %v333
      %1650 = vmatprep.subr.mxu0 0.0
      %1651 = vmatpush1.xpose.msra.mxu0 %v330
      %1652 = vmatprep.subr.mxu0 0.0
      %1653 = vmatpush1.xpose.msra.mxu0 %v327
      %1654 = vmatprep.subr.mxu0 0.0
      %1655 = vmatpush1.xpose.msra.mxu0 %v324
      %1656 = vmatprep.subr.mxu0 0.0
      %1657 = vmatpush1.xpose.msra.mxu0 %v321
      %1658 = vmatprep.subr.mxu0 0.0
      %1659 = vmatpush1.xpose.msra.mxu0 %v318
      %1660 = vmatprep.subr.mxu0 0.0
      %1661 = vmatpush1.xpose.msra.mxu0 %v315
      %1662 = vmatprep.subr.mxu0 0.0
      %1663 = vmatpush1.xpose.msra.mxu0 %v312
      %1664 = vmatprep.subr.mxu0 0.0
      %1665 = vmatpush1.xpose.msra.mxu0 %v309
      %1666 = vmatprep.subr.mxu0 0.0
      %1667 = vmatpush1.xpose.msra.mxu0 %v306
      %1668 = vmatprep.subr.mxu0 0.0
      %1669 = vmatpush1.xpose.msra.mxu0 %v303
      %1670 = vmatprep.subr.mxu0 0.0
      %1671 = vmatpush1.xpose.msra.mxu0 %v300
      %1672 = vmatprep.subr.mxu0 0.0
      %1673 = vmatpush1.xpose.msra.mxu0 %v297
      %1674 = vmatprep.subr.mxu0 0.0
      %1675 = vmatpush1.xpose.msra.mxu0 %v294
      %1676 = vmatprep.subr.mxu0 0.0
      %1677 = vmatpush2.xpose.msra.mxu0 %v717
      %1678 = vmatprep.subr.mxu0 0.0
      %1679 = vmatpush2.xpose.msra.mxu0 %v714
      %1680 = vmatprep.subr.mxu0 0.0
      %1681 = vmatpush2.xpose.msra.mxu0 %v381
      %1682 = vmatprep.subr.mxu0 0.0
      %1683 = vmatpush2.xpose.msra.mxu0 %v378
      %1684 = vmatprep.subr.mxu0 0.0
      %1685 = vmatpush2.xpose.msra.mxu0 %v375
      %1686 = vmatprep.subr.mxu0 0.0
      %1687 = vmatpush2.xpose.msra.mxu0 %v372
      %1688 = vmatprep.subr.mxu0 0.0
      %1689 = vmatpush2.xpose.msra.mxu0 %v369
      %1690 = vmatprep.subr.mxu0 0.0
      %1691 = vmatpush2.xpose.msra.mxu0 %v366
      %1692 = vmatprep.subr.mxu0 0.0
      %1693 = vmatpush2.xpose.msra.mxu0 %v363
      %1694 = vmatprep.subr.mxu0 0.0
      %1695 = vmatpush2.xpose.msra.mxu0 %v360
      %1696 = vmatprep.subr.mxu0 0.0
      %1697 = vmatpush2.xpose.msra.mxu0 %v357
      %1698 = vmatprep.subr.mxu0 0.0
      %1699 = vmatpush2.xpose.msra.mxu0 %v354
      %1700 = vmatprep.subr.mxu0 0.0
      %1701 = vmatpush2.xpose.msra.mxu0 %v351
      %1702 = vmatprep.subr.mxu0 0.0
      %1703 = vmatpush2.xpose.msra.mxu0 %v348
      %1704 = vmatprep.subr.mxu0 0.0
      %1705 = vmatpush2.xpose.msra.mxu0 %v345
      %1706 = vmatprep.subr.mxu0 0.0
      %1707 = vmatpush2.xpose.msra.mxu0 %v342
      %1708 = vmatprep.mubr.f32.mxu0 0.0
      %1709 = vmatmul.mubr.f32.gmra.mxu0 %v1642
      %v1710 = vpop.f32.mrf.mxu0
      %v1711 = vadd.f32 %v1637, %v1710
      %v1712 = vpop.f32.mrf.mxu0
      %v1713 = vadd.f32 %v1639, %v1712
      %1714 = vdwg.mxu0
      %s1715 = scalar_lea.vmem %s1, 8
      %v1716 = vld [vmem:[%s1715] sm:$0x7]
      %v1718 = vsel %vm283, %v1716, 0
      %1720 = vmatprep.subr.mxu0 0.0
      %1721 = vmatpush1.xpose.msra.mxu0 %v345
      %1722 = vmatprep.subr.mxu0 0.0
      %1723 = vmatpush1.xpose.msra.mxu0 %v342
      %1724 = vmatprep.subr.mxu0 0.0
      %1725 = vmatpush1.xpose.msra.mxu0 %v339
      %1726 = vmatprep.subr.mxu0 0.0
      %1727 = vmatpush1.xpose.msra.mxu0 %v336
      %1728 = vmatprep.subr.mxu0 0.0
      %1729 = vmatpush1.xpose.msra.mxu0 %v333
      %1730 = vmatprep.subr.mxu0 0.0
      %1731 = vmatpush1.xpose.msra.mxu0 %v330
      %1732 = vmatprep.subr.mxu0 0.0
      %1733 = vmatpush1.xpose.msra.mxu0 %v327
      %1734 = vmatprep.subr.mxu0 0.0
      %1735 = vmatpush1.xpose.msra.mxu0 %v324
      %1736 = vmatprep.subr.mxu0 0.0
      %1737 = vmatpush1.xpose.msra.mxu0 %v321
      %1738 = vmatprep.subr.mxu0 0.0
      %1739 = vmatpush1.xpose.msra.mxu0 %v318
      %1740 = vmatprep.subr.mxu0 0.0
      %1741 = vmatpush1.xpose.msra.mxu0 %v315
      %1742 = vmatprep.subr.mxu0 0.0
      %1743 = vmatpush1.xpose.msra.mxu0 %v312
      %1744 = vmatprep.subr.mxu0 0.0
      %1745 = vmatpush1.xpose.msra.mxu0 %v309
      %1746 = vmatprep.subr.mxu0 0.0
      %1747 = vmatpush1.xpose.msra.mxu0 %v306
      %1748 = vmatprep.subr.mxu0 0.0
      %1749 = vmatpush1.xpose.msra.mxu0 %v303
      %1750 = vmatprep.subr.mxu0 0.0
      %1751 = vmatpush1.xpose.msra.mxu0 %v300
      %1752 = vmatprep.subr.mxu0 0.0
      %1753 = vmatpush2.xpose.msra.mxu0 %v1474
      %1754 = vmatprep.subr.mxu0 0.0
      %1755 = vmatpush2.xpose.msra.mxu0 %v1471
      %1756 = vmatprep.subr.mxu0 0.0
      %1757 = vmatpush2.xpose.msra.mxu0 %v717
      %1758 = vmatprep.subr.mxu0 0.0
      %1759 = vmatpush2.xpose.msra.mxu0 %v714
      %1760 = vmatprep.subr.mxu0 0.0
      %1761 = vmatpush2.xpose.msra.mxu0 %v381
      %1762 = vmatprep.subr.mxu0 0.0
      %1763 = vmatpush2.xpose.msra.mxu0 %v378
      %1764 = vmatprep.subr.mxu0 0.0
      %1765 = vmatpush2.xpose.msra.mxu0 %v375
      %1766 = vmatprep.subr.mxu0 0.0
      %1767 = vmatpush2.xpose.msra.mxu0 %v372
      %1768 = vmatprep.subr.mxu0 0.0
      %1769 = vmatpush2.xpose.msra.mxu0 %v369
      %1770 = vmatprep.subr.mxu0 0.0
      %1771 = vmatpush2.xpose.msra.mxu0 %v366
      %1772 = vmatprep.subr.mxu0 0.0
      %1773 = vmatpush2.xpose.msra.mxu0 %v363
      %1774 = vmatprep.subr.mxu0 0.0
      %1775 = vmatpush2.xpose.msra.mxu0 %v360
      %1776 = vmatprep.subr.mxu0 0.0
      %1777 = vmatpush2.xpose.msra.mxu0 %v357
      %1778 = vmatprep.subr.mxu0 0.0
      %1779 = vmatpush2.xpose.msra.mxu0 %v354
      %1780 = vmatprep.subr.mxu0 0.0
      %1781 = vmatpush2.xpose.msra.mxu0 %v351
      %1782 = vmatprep.subr.mxu0 0.0
      %1783 = vmatpush2.xpose.msra.mxu0 %v348
      %1784 = vmatprep.mubr.f32.mxu0 0.0
      %1785 = vmatmul.mubr.f32.gmra.mxu0 %v1718
      %v1786 = vpop.f32.mrf.mxu0
      %v1787 = vadd.f32 0.0, %v1786
      %v1788 = vpop.f32.mrf.mxu0
      %v1789 = vadd.f32 0.0, %v1788
      %1790 = vdwg.mxu0
      %v1791 = vadd.f32 %v1711, %v1787
      %v1792 = vadd.f32 %v1713, %v1789
      %v1793 = vld [vmem:[%s1] sm:$0x7]
      %v1795 = vsel %vm283, %v1793, 0
      %v1798 = vsel %vm283, %v277, 0
      %v1801 = vsel %vm283, %v278, 0
      %1803 = vmatprep.subr.mxu0 0.0
      %1804 = vmatpush1.xpose.msra.mxu0 %v870
      %1805 = vmatprep.subr.mxu0 0.0
      %1806 = vmatpush1.xpose.msra.mxu0 %v867
      %1807 = vmatprep.subr.mxu0 0.0
      %1808 = vmatpush1.xpose.msra.mxu0 %v864
      %1809 = vmatprep.subr.mxu0 0.0
      %1810 = vmatpush1.xpose.msra.mxu0 %v861
      %1811 = vmatprep.subr.mxu0 0.0
      %1812 = vmatpush1.xpose.msra.mxu0 %v858
      %1813 = vmatprep.subr.mxu0 0.0
      %1814 = vmatpush1.xpose.msra.mxu0 %v855
      %1815 = vmatprep.subr.mxu0 0.0
      %1816 = vmatpush1.xpose.msra.mxu0 %v852
      %1817 = vmatprep.subr.mxu0 0.0
      %1818 = vmatpush1.xpose.msra.mxu0 %v849
      %1819 = vmatprep.subr.mxu0 0.0
      %1820 = vmatpush1.xpose.msra.mxu0 %v846
      %1821 = vmatprep.subr.mxu0 0.0
      %1822 = vmatpush1.xpose.msra.mxu0 %v843
      %1823 = vmatprep.subr.mxu0 0.0
      %1824 = vmatpush1.xpose.msra.mxu0 %v840
      %1825 = vmatprep.subr.mxu0 0.0
      %1826 = vmatpush1.xpose.msra.mxu0 %v837
      %1827 = vmatprep.subr.mxu0 0.0
      %1828 = vmatpush1.xpose.msra.mxu0 %v834
      %1829 = vmatprep.subr.mxu0 0.0
      %1830 = vmatpush1.xpose.msra.mxu0 %v831
      %1831 = vmatprep.subr.mxu0 0.0
      %1832 = vmatpush1.xpose.msra.mxu0 %v828
      %1833 = vmatprep.subr.mxu0 0.0
      %1834 = vmatpush1.xpose.msra.mxu0 %v825
      %1835 = vmatprep.subr.mxu0 0.0
      %1836 = vmatpush2.xpose.msra.mxu0 %v1801
      %1837 = vmatprep.subr.mxu0 0.0
      %1838 = vmatpush2.xpose.msra.mxu0 %v1798
      %1839 = vmatprep.subr.mxu0 0.0
      %1840 = vmatpush2.xpose.msra.mxu0 %v1140
      %1841 = vmatprep.subr.mxu0 0.0
      %1842 = vmatpush2.xpose.msra.mxu0 %v1137
      %1843 = vmatprep.subr.mxu0 0.0
      %1844 = vmatpush2.xpose.msra.mxu0 %v906
      %1845 = vmatprep.subr.mxu0 0.0
      %1846 = vmatpush2.xpose.msra.mxu0 %v903
      %1847 = vmatprep.subr.mxu0 0.0
      %1848 = vmatpush2.xpose.msra.mxu0 %v900
      %1849 = vmatprep.subr.mxu0 0.0
      %1850 = vmatpush2.xpose.msra.mxu0 %v897
      %1851 = vmatprep.subr.mxu0 0.0
      %1852 = vmatpush2.xpose.msra.mxu0 %v894
      %1853 = vmatprep.subr.mxu0 0.0
      %1854 = vmatpush2.xpose.msra.mxu0 %v891
      %1855 = vmatprep.subr.mxu0 0.0
      %1856 = vmatpush2.xpose.msra.mxu0 %v888
      %1857 = vmatprep.subr.mxu0 0.0
      %1858 = vmatpush2.xpose.msra.mxu0 %v885
      %1859 = vmatprep.subr.mxu0 0.0
      %1860 = vmatpush2.xpose.msra.mxu0 %v882
      %1861 = vmatprep.subr.mxu0 0.0
      %1862 = vmatpush2.xpose.msra.mxu0 %v879
      %1863 = vmatprep.subr.mxu0 0.0
      %1864 = vmatpush2.xpose.msra.mxu0 %v876
      %1865 = vmatprep.subr.mxu0 0.0
      %1866 = vmatpush2.xpose.msra.mxu0 %v873
      %1867 = vmatprep.mubr.f32.mxu0 0.0
      %1868 = vmatmul.mubr.f32.gmra.mxu0 %v1795
      %v1869 = vpop.f32.mrf.mxu0
      %v1870 = vadd.f32 0.0, %v1869
      %v1871 = vpop.f32.mrf.mxu0
      %v1872 = vadd.f32 0.0, %v1871
      %1873 = vdwg.mxu0
      %v1874 = vadd.f32 %v1791, %v1870
      %v1875 = vadd.f32 %v1792, %v1872
      %v1876 = vld [vmem:[%s2] sm:$0x7]
      %1878 = vset.pattern.permute.xlu0 0
      %1879 = vperm.xlu0 %1878, %v1876
      %v1880 = vpop.permute.xlu0 %1879
      %v1882 = vadd.f32 %v1874, %v1880
      %v1883 = vadd.f32 %v1875, %v1880
      %v1886 = vcombine.low %v1882, %v1883
      %s1888 = scalar_lea.vmem %s170, 24
      %1889 = vst [vmem:[%s1888] sm:$0x77] %v1886
      %p1890 = scmp.lt.s32.totalorder %s14, 1
      %s1891 = scalar_select %p1890, %s14, 1
      %s1892 = smul.addr %s1891, 8
      %s1893 = smul.addr %s1892, 4
      %s1894 = scalar_lea.vmem %s3, %s1893
      // Predicated region
      $region33: #{decoder_forward.9} parent=31 // pred_check
        %p1895 = pneg %p100
      $region34: #{decoder_forward.9} parent=31 // pred_check_branch
        %1897 = sbr.rel (%p1895) target = $region36
      $region35: #{decoder_forward.9} parent=31 // pred_region
        _
      $region36: #{decoder_forward.9} parent=31 // pred_fallthru
        _
    $region32: #{decoder_forward.9} parent=5 // pred_fallthru
      _
    %p1898 = scmp.le.s32.totalorder 2, %s9
    // Predicated region
    $region37: #{decoder_forward.9} parent=5 // pred_check
      %p1899 = pneg %p1898
    $region38: #{decoder_forward.9} parent=5 // pred_check_branch
      %1901 = sbr.rel (%p1899) target = $region40
    $region39: #{decoder_forward.9} parent=5 // pred_region
      %s1902 = ssub.s32 %s9, 2
      // Predicated region
      $region41: #{decoder_forward.9} parent=39 // pred_check
        %p1903 = pneg %p106
      $region42: #{decoder_forward.9} parent=39 // pred_check_branch
        %1905 = sbr.rel (%p1903) target = $region44
      $region43: #{decoder_forward.9} parent=39 // pred_region
        %p1906 = scmp.lt.s32.totalorder %s15, 1
        %s1907 = scalar_select %p1906, %s15, 1
        %s1908 = smul.addr %s1907, 8
        %s1909 = smul.addr %s1908, 4
        %s1910 = scalar_lea.vmem %s3, %s1909
      $region44: #{decoder_forward.9} parent=39 // pred_fallthru
        _
    $region40: #{decoder_forward.9} parent=5 // pred_fallthru
      _
  $region6: #{decoder_forward.9} parent=0 // loop_footer
    %s13 = sadd.s32 1, %s9
  $region7: #{decoder_forward.9} parent=0 // loop_footer_branch
    %8 = sbr.rel target = $region3
  $region8: #{decoder_forward.9} parent=0 // loop_exit
    _

</llo_original>
